<compile_context>
chip_gen: v7x
topology: tpu7x:2x2x1
jax: 0.10.0
libtpu: 0.0.40
codegen_flags: <defaults>
</compile_context>

<pallas_src>
import jax
import jax.numpy as jnp
from jax.experimental import pallas as pl
from jax.experimental.pallas import tpu as pltpu

POS_PAD = 8  # pad 3-D coordinates to 8 columns (sublane friendliness, zeros are inert)


def _choose_tile(n, cap):
    """Largest multiple-of-8 divisor of n that is <= cap (or n itself if small/odd)."""
    if n <= cap or n % 8 != 0:
        return n
    t = cap
    while n % t != 0:
        t -= 8
    return t


# ---------------------------------------------------------------------------
# Kernel 1: pairwise squared distances with +inf diagonal (custom_knn_graph)
#   row-tiled, "parallel" grid axis; f32 throughout (distance-ordering precision).
#   sq_all (||p_j||^2 as a [1, N] row) is precomputed in the wrapper so the kernel
#   contains no cross-lane transpose.
# ---------------------------------------------------------------------------
def _pdist_kernel(pos_tile_ref, pos_all_ref, sq_all_ref, out_ref):
    pt = pos_tile_ref[...]                                       # [TR, 8]
    pa = pos_all_ref[...]                                        # [N, 8]
    sq_t = jnp.sum(pt * pt, axis=1, keepdims=True)               # [TR, 1]
    gram = jax.lax.dot_general(pt, pa, (((1,), (1,)), ((), ())),
                               preferred_element_type=jnp.float32)   # [TR, N]
    d2 = sq_t + sq_all_ref[...] - 2.0 * gram                     # [TR, N]
    tr, n = out_ref.shape
    row = pl.program_id(0) * tr + jax.lax.broadcasted_iota(jnp.int32, (tr, n), 0)
    col = jax.lax.broadcasted_iota(jnp.int32, (tr, n), 1)
    out_ref[...] = jnp.where(row == col, jnp.inf, d2)            # fill_diagonal_(inf)


def pairwise_dist(pos_pad, *, row_cap=256):
    n = pos_pad.shape[0]
    tr = _choose_tile(n, row_cap)
    sq_all = jnp.sum(pos_pad * pos_pad, axis=1)[None, :]         # [1, N] f32
    return pl.pallas_call(
        _pdist_kernel,
        out_shape=jax.ShapeDtypeStruct((n, n), jnp.float32),
        grid=(n // tr,),
        in_specs=[
            pl.BlockSpec((tr, POS_PAD), lambda i: (i, 0)),       # row tile
            pl.BlockSpec((n, POS_PAD), lambda i: (0, 0)),        # all points
            pl.BlockSpec((1, n), lambda i: (0, 0)),              # squared norms (row)
        ],
        out_specs=pl.BlockSpec((tr, n), lambda i: (i, 0)),
        compiler_params=pltpu.CompilerParams(dimension_semantics=("parallel",)),
    )(pos_pad, pos_pad, sq_all)


# ---------------------------------------------------------------------------
# Shared TriConv math (one layer + FaceClassifier's ReLU) for one target tile:
#   out[i] = relu( (sum_j A[i,j] * relu(x_j@W1x + (pos_j-pos_i)@W1p + b1)) @ W2
#                  + deg_i * b2 )
# MXU ops use bf16 operands with f32 accumulation; elementwise stays f32.
# ---------------------------------------------------------------------------
def _triconv_compute(x, pos_all, pos_tile, adj, w1x, w1p, b1, w2, b2):
    # x:[N,Din] bf16, pos_all:[N,8] bf16, pos_tile:[TI,8] bf16, adj:[TI,N] bf16
    # w1x:[Din,H] bf16, w1p:[8,H] bf16, w2:[H,H] bf16, b1/b2:[1,H] f32
    t = (jnp.dot(x, w1x, preferred_element_type=jnp.float32)
         + jnp.dot(pos_all, w1p, preferred_element_type=jnp.float32))       # [N, H]  per-source
    s = b1 - jnp.dot(pos_tile, w1p, preferred_element_type=jnp.float32)     # [TI, H] per-target
    # first MLP linear + internal ReLU, per (target i, source j) pair
    h1 = jnp.maximum(s[:, None, :] + t[None, :, :], 0.0)                    # [TI, N, H] f32

    # masked sum-aggregation over neighbors on the MXU (batched contraction over N)
    adj3 = adj[:, None, :]                                                  # [TI, 1, N] bf16
    agg3 = jnp.einsum("tqn,tnh->tqh", adj3, h1.astype(jnp.bfloat16),
                      preferred_element_type=jnp.float32)                   # [TI, 1, H]
    agg = jnp.sum(agg3, axis=1)                                             # [TI, H]
    deg = jnp.sum(adj.astype(jnp.float32), axis=1, keepdims=True)           # [TI, 1]

    # second MLP linear applied per edge == (sum over edges) @ W2 + deg * b2
    out = (jnp.dot(agg.astype(jnp.bfloat16), w2, preferred_element_type=jnp.float32)
           + deg * b2)
    return jnp.maximum(out, 0.0)   # ReLU applied by FaceClassifier after TriConv


# ---------------------------------------------------------------------------
# Kernel 2: one TriConv layer (intermediate layers), tiled over target nodes
# ---------------------------------------------------------------------------
def _triconv_kernel(x_ref, pos_all_ref, pos_tile_ref, adj_ref,
                    w1x_ref, w1p_ref, b1_ref, w2_ref, b2_ref, out_ref):
    out = _triconv_compute(x_ref[...], pos_all_ref[...], pos_tile_ref[...], adj_ref[...],
                           w1x_ref[...], w1p_ref[...], b1_ref[...], w2_ref[...], b2_ref[...])
    out_ref[...] = out.astype(out_ref.dtype)


def triconv_layer(x, pos_pad, adj, w1x, w1p, b1, w2, b2, *, tile):
    n, din = x.shape
    h = w1x.shape[1]
    return pl.pallas_call(
        _triconv_kernel,
        out_shape=jax.ShapeDtypeStruct((n, h), jnp.bfloat16),   # feeds next layer's matmuls
        grid=(n // tile,),
        in_specs=[
            pl.BlockSpec((n, din), lambda i: (0, 0)),           # x (all source nodes)
            pl.BlockSpec((n, POS_PAD), lambda i: (0, 0)),       # pos (all source nodes)
            pl.BlockSpec((tile, POS_PAD), lambda i: (i, 0)),    # pos (target tile)
            pl.BlockSpec((tile, n), lambda i: (i, 0)),          # adjacency rows (bf16)
            pl.BlockSpec((din, h), lambda i: (0, 0)),           # W1 (feature part)
            pl.BlockSpec((POS_PAD, h), lambda i: (0, 0)),       # W1 (rel-pos part, folded)
            pl.BlockSpec((1, h), lambda i: (0, 0)),             # b1
            pl.BlockSpec((h, h), lambda i: (0, 0)),             # W2
            pl.BlockSpec((1, h), lambda i: (0, 0)),             # b2
        ],
        out_specs=pl.BlockSpec((tile, h), lambda i: (i, 0)),
        compiler_params=pltpu.CompilerParams(dimension_semantics=("parallel",)),
    )(x, pos_pad, pos_pad, adj, w1x, w1p, b1, w2, b2)


# ---------------------------------------------------------------------------
# Kernel 3: LAST TriConv layer fused with Linear(H,1) + global softmax (batch=None)
#   whole node set in one tile; probs produced lane-dense as [1, N]
# ---------------------------------------------------------------------------
def _triconv_final_kernel(x_ref, pos_ref, adj_ref, w1x_ref, w1p_ref, b1_ref,
                          w2_ref, b2_ref, wf_ref, bf_ref, probs_ref):
    hfeat = _triconv_compute(x_ref[...], pos_ref[...], pos_ref[...], adj_ref[...],
                             w1x_ref[...], w1p_ref[...], b1_ref[...],
                             w2_ref[...], b2_ref[...])                      # [N, H] f32
    # lane-dense logits [1, N] = wf_row @ hfeat^T  (MXU, trans_b)
    logits = jnp.einsum("oh,nh->on", wf_ref[...], hfeat.astype(jnp.bfloat16),
                        preferred_element_type=jnp.float32) + bf_ref[0]
    m = jnp.max(logits, axis=-1, keepdims=True)
    e = jnp.exp(logits - m)
    denom = jnp.sum(e, axis=-1, keepdims=True)
    probs_ref[...] = e * pl.reciprocal(denom, approx=True)


def triconv_final(x, pos_pad, adj, w1x, w1p, b1, w2, b2, wf, bf):
    n, din = x.shape
    h = w1x.shape[1]
    return pl.pallas_call(
        _triconv_final_kernel,
        out_shape=jax.ShapeDtypeStruct((1, n), jnp.float32),
        grid=(1,),
        in_specs=[
            pl.BlockSpec((n, din), lambda i: (0, 0)),
            pl.BlockSpec((n, POS_PAD), lambda i: (0, 0)),
            pl.BlockSpec((n, n), lambda i: (0, 0)),
            pl.BlockSpec((din, h), lambda i: (0, 0)),
            pl.BlockSpec((POS_PAD, h), lambda i: (0, 0)),
            pl.BlockSpec((1, h), lambda i: (0, 0)),
            pl.BlockSpec((h, h), lambda i: (0, 0)),
            pl.BlockSpec((1, h), lambda i: (0, 0)),
            pl.BlockSpec((1, h), lambda i: (0, 0)),                          # wf (row)
            pl.BlockSpec(memory_space=pltpu.MemorySpace.SMEM),               # bf scalar
        ],
        out_specs=pl.BlockSpec((1, n), lambda i: (0, 0)),
        compiler_params=pltpu.CompilerParams(dimension_semantics=("arbitrary",)),
    )(x, pos_pad, adj, w1x, w1p, b1, w2, b2, wf, bf)


# ---------------------------------------------------------------------------
# Kernel 4 (fallback when N does not fit one tile): final Linear + global softmax
# ---------------------------------------------------------------------------
def _final_kernel(h_ref, wf_ref, bf_ref, out_ref):
    logits = jnp.einsum("oh,nh->on", wf_ref[...], h_ref[...],
                        preferred_element_type=jnp.float32) + bf_ref[0]      # [1, N]
    m = jnp.max(logits, axis=-1, keepdims=True)
    e = jnp.exp(logits - m)
    denom = jnp.sum(e, axis=-1, keepdims=True)
    out_ref[...] = e * pl.reciprocal(denom, approx=True)


def final_softmax(h, wf, bf):
    n, hd = h.shape
    return pl.pallas_call(
        _final_kernel,
        out_shape=jax.ShapeDtypeStruct((1, n), jnp.float32),
        grid=(1,),
        in_specs=[
            pl.BlockSpec((n, hd), lambda i: (0, 0)),
            pl.BlockSpec((1, hd), lambda i: (0, 0)),
            pl.BlockSpec(memory_space=pltpu.MemorySpace.SMEM),
        ],
        out_specs=pl.BlockSpec((1, n), lambda i: (0, 0)),
        compiler_params=pltpu.CompilerParams(dimension_semantics=("arbitrary",)),
    )(h, wf, bf)


# ---------------------------------------------------------------------------
# Parameter init (deterministic, matches shapes implied by the PyTorch module)
# ---------------------------------------------------------------------------
def init_params(key, input_dim, hidden_dim, num_layers):
    params = {"triconv": []}
    for i in range(num_layers):
        din = input_dim if i == 0 else hidden_dim
        key, k1, k2, k3, k4 = jax.random.split(key, 5)
        w1_full = jax.random.normal(k1, (din + 9, hidden_dim), jnp.float32) / jnp.sqrt(din + 9.0)
        b1 = jax.random.normal(k2, (1, hidden_dim), jnp.float32) * 0.01
        w2 = jax.random.normal(k3, (hidden_dim, hidden_dim), jnp.float32) / jnp.sqrt(float(hidden_dim))
        b2 = jax.random.normal(k4, (1, hidden_dim), jnp.float32) * 0.01
        w1x = w1_full[:din]                      # acts on x_j
        w1p9 = w1_full[din:]                     # acts on rel_pos9 = [d, d, 0]
        # TODO(synk): folding assumes barycenter_diff == edge_vec and zero last 3 cols.
        w1p_eff = w1p9[0:3] + w1p9[3:6]          # fold duplicated d-blocks   [3, H]
        w1p_eff = jnp.pad(w1p_eff, ((0, POS_PAD - 3), (0, 0)))
        params["triconv"].append(dict(w1x=w1x, w1p=w1p_eff, b1=b1, w2=w2, b2=b2))
    key, k5, k6 = jax.random.split(key, 3)
    params["wf"] = jax.random.normal(k5, (1, hidden_dim), jnp.float32) / jnp.sqrt(float(hidden_dim))
    params["bf"] = jax.random.normal(k6, (1,), jnp.float32) * 0.01
    return params


# ---------------------------------------------------------------------------
# FaceClassifier.forward (batch=None path)
# ---------------------------------------------------------------------------
def face_classifier_forward(x, pos, params, k, batch=None):
    if x.shape[0] == 0 or pos.shape[0] == 0:
        return jnp.zeros((0,), dtype=jnp.float32)
    if batch is not None:
        # TODO(synk): per-sample kNN grouping + per-sample softmax (batch != None) not implemented.
        raise NotImplementedError("batched path not implemented")
    if pos.ndim == 3:
        pos = jnp.mean(pos, axis=1)

    n = x.shape[0]
    pos = pos.astype(jnp.float32)
    pos_pad = jnp.pad(pos, ((0, 0), (0, POS_PAD - pos.shape[1])))

    # custom_knn_graph: k nearest neighbors, edges + flipped edges, unique
    # == dense symmetric {0,1} adjacency with no self edges (stored bf16).
    d2 = pairwise_dist(pos_pad)                       # Pallas kernel (row-tiled, parallel)
    kk = min(k, n - 1)
    _, idx = jax.lax.top_k(-d2, kk)                   # k smallest distances (self excluded)
    adj = jnp.zeros((n, n), jnp.float32).at[jnp.arange(n)[:, None], idx].set(1.0)
    adj = jnp.maximum(adj, adj.T).astype(jnp.bfloat16)

    pos_b = pos_pad.astype(jnp.bfloat16)              # bf16 matmul operand
    h = x.astype(jnp.bfloat16)
    tile = _choose_tile(n, 128)
    num_layers = len(params["triconv"])

    for li, layer in enumerate(params["triconv"]):
        w1x = layer["w1x"].astype(jnp.bfloat16)
        w1p = layer["w1p"].astype(jnp.bfloat16)
        w2 = layer["w2"].astype(jnp.bfloat16)
        b1, b2 = layer["b1"], layer["b2"]
        if li == num_layers - 1 and tile == n:
            # fuse last TriConv + final Linear + global softmax (lane-dense [1, N])
            probs = triconv_final(h, pos_b, adj, w1x, w1p, b1, w2, b2,
                                  params["wf"].astype(jnp.bfloat16), params["bf"])
            return probs[0]
        h = triconv_layer(h, pos_b, adj, w1x, w1p, b1, w2, b2, tile=tile)

    # fallback path (only when N > one tile): separate final kernel
    probs = final_softmax(h, params["wf"].astype(jnp.bfloat16), params["bf"])
    return probs[0]


if __name__ == "__main__":
    INPUT_DIM, HIDDEN_DIM, NUM_LAYERS, K = 16, 32, 2, 4
    N = 64

    key = jax.random.PRNGKey(0)
    kx, kp, kw = jax.random.split(key, 3)
    x = jax.random.normal(kx, (N, INPUT_DIM), jnp.float32)
    pos = jax.random.uniform(kp, (N, 3), jnp.float32)
    params = init_params(kw, INPUT_DIM, HIDDEN_DIM, NUM_LAYERS)

    fwd = jax.jit(face_classifier_forward, static_argnames=("k",))
    probs = fwd(x, pos, params, k=K)
    probs = jax.block_until_ready(probs)

    assert probs.shape == (N,)
    assert bool(jnp.all(jnp.isfinite(probs)))
    assert bool(jnp.all(probs >= 0.0))
    total = float(jnp.sum(probs))
    # bf16 matmul operands + approx-reciprocal softmax denominator => loose tolerance
    assert abs(total - 1.0) < 1e-2, f"softmax does not sum to 1: {total}"
    print("KERNEL_OK")
</pallas_src>

<mosaic_0001>
module attributes {stable_mosaic.version = 11 : i64} {
  func.func @_pdist_kernel(%arg0: i32, %arg1: memref<64x8xf32, #tpu.memory_space<vmem>>, %arg2: memref<64x8xf32, #tpu.memory_space<vmem>>, %arg3: memref<1x64xf32, #tpu.memory_space<vmem>>, %arg4: memref<64x64xf32, #tpu.memory_space<vmem>>) attributes {dimension_semantics = [#tpu.dimension_semantics<parallel>], iteration_bounds = array<i64: 1>, scalar_prefetch = 0 : i64, scratch_operands = 0 : i64, tpu.core_type = #tpu.core_type<tc>, window_params = [{transform_indices = @transform_0, window_bounds = array<i64: 64, 8>}, {pipeline_mode = #tpu.pipeline_mode<synchronous>, transform_indices = @transform_1, window_bounds = array<i64: 64, 8>}, {pipeline_mode = #tpu.pipeline_mode<synchronous>, transform_indices = @transform_2, window_bounds = array<i64: 1, 64>}, {transform_indices = @transform_3, window_bounds = array<i64: 64, 64>}]} {
    %c0 = arith.constant 0 : index
    %c0_0 = arith.constant 0 : index
    %0 = vector.load %arg1[%c0, %c0_0] : memref<64x8xf32, #tpu.memory_space<vmem>>, vector<64x8xf32>
    %c0_1 = arith.constant 0 : index
    %c0_2 = arith.constant 0 : index
    %1 = vector.load %arg2[%c0_1, %c0_2] : memref<64x8xf32, #tpu.memory_space<vmem>>, vector<64x8xf32>
    %2 = arith.mulf %0, %0 : vector<64x8xf32>
    %cst = arith.constant dense<0.000000e+00> : vector<64xf32>
    %3 = vector.multi_reduction <add>, %2, %cst [1] : vector<64x8xf32> to vector<64xf32>
    %4 = vector.shape_cast %3 : vector<64xf32> to vector<64x1xf32>
    %cst_3 = arith.constant dense<0.000000e+00> : vector<64x64xf32>
    %5 = tpu.matmul %0, %1, %cst_3 {dimension_numbers = #tpu.dot_dimension_numbers<[1], [1], [0], [0], [0, 0, 1, 0], [], []>} : vector<64x8xf32>, vector<64x8xf32>, vector<64x64xf32> -> vector<64x64xf32>
    %c0_4 = arith.constant 0 : index
    %c0_5 = arith.constant 0 : index
    %6 = vector.load %arg3[%c0_4, %c0_5] : memref<1x64xf32, #tpu.memory_space<vmem>>, vector<1x64xf32>
    %7 = vector.broadcast %4 : vector<64x1xf32> to vector<64x64xf32>
    %8 = vector.broadcast %6 : vector<1x64xf32> to vector<64x64xf32>
    %9 = arith.addf %7, %8 : vector<64x64xf32>
    %cst_6 = arith.constant 2.000000e+00 : f32
    %10 = vector.broadcast %cst_6 : f32 to vector<64x64xf32>
    %11 = arith.mulf %10, %5 : vector<64x64xf32>
    %12 = arith.subf %9, %11 : vector<64x64xf32>
    %c64_i32 = arith.constant 64 : i32
    %13 = arith.muli %arg0, %c64_i32 : i32
    %14 = tpu.iota {dimensions = array<i32: 0>} : vector<64x64xi32>
    %15 = vector.broadcast %13 : i32 to vector<64x64xi32>
    %16 = arith.addi %15, %14 : vector<64x64xi32>
    %17 = tpu.iota {dimensions = array<i32: 1>} : vector<64x64xi32>
    %18 = arith.cmpi eq, %16, %17 : vector<64x64xi32>
    %cst_7 = arith.constant 0x7F800000 : f32
    %19 = vector.broadcast %cst_7 : f32 to vector<64x64xf32>
    %20 = arith.select %18, %19, %12 : vector<64x64xi1>, vector<64x64xf32>
    %c0_8 = arith.constant 0 : index
    %c0_9 = arith.constant 0 : index
    %21 = vector.load %arg4[%c0_8, %c0_9] : memref<64x64xf32, #tpu.memory_space<vmem>>, vector<64x64xf32>
    tpu.vector_store %arg4[%c0_8, %c0_9], %20 {strides = array<i32>} : memref<64x64xf32, #tpu.memory_space<vmem>>, vector<64x64xf32>,
    return
  }
  func.func @transform_0(%arg0: i32) -> (i32, i32) {
    %c0_i32 = arith.constant 0 : i32
    %c0_i32_0 = arith.constant 0 : i32
    return %arg0, %c0_i32 : i32, i32
  }
  func.func @transform_1(%arg0: i32) -> (i32, i32) {
    %c0_i32 = arith.constant 0 : i32
    %c0_i32_0 = arith.constant 0 : i32
    %c0_i32_1 = arith.constant 0 : i32
    return %c0_i32, %c0_i32_0 : i32, i32
  }
  func.func @transform_2(%arg0: i32) -> (i32, i32) {
    %c0_i32 = arith.constant 0 : i32
    %c0_i32_0 = arith.constant 0 : i32
    %c0_i32_1 = arith.constant 0 : i32
    return %c0_i32, %c0_i32_0 : i32, i32
  }
  func.func @transform_3(%arg0: i32) -> (i32, i32) {
    %c0_i32 = arith.constant 0 : i32
    %c0_i32_0 = arith.constant 0 : i32
    return %arg0, %c0_i32 : i32, i32
  }
}

module attributes {stable_mosaic.version = 11 : i64} {
  func.func @_triconv_kernel(%arg0: i32, %arg1: memref<64x16xbf16, #tpu.memory_space<vmem>>, %arg2: memref<64x8xbf16, #tpu.memory_space<vmem>>, %arg3: memref<64x8xbf16, #tpu.memory_space<vmem>>, %arg4: memref<64x64xbf16, #tpu.memory_space<vmem>>, %arg5: memref<16x32xbf16, #tpu.memory_space<vmem>>, %arg6: memref<8x32xbf16, #tpu.memory_space<vmem>>, %arg7: memref<1x32xf32, #tpu.memory_space<vmem>>, %arg8: memref<32x32xbf16, #tpu.memory_space<vmem>>, %arg9: memref<1x32xf32, #tpu.memory_space<vmem>>, %arg10: memref<64x32xbf16, #tpu.memory_space<vmem>>) attributes {dimension_semantics = [#tpu.dimension_semantics<parallel>], iteration_bounds = array<i64: 1>, scalar_prefetch = 0 : i64, scratch_operands = 0 : i64, tpu.core_type = #tpu.core_type<tc>, window_params = [{pipeline_mode = #tpu.pipeline_mode<synchronous>, transform_indices = @transform_0, window_bounds = array<i64: 64, 16>}, {pipeline_mode = #tpu.pipeline_mode<synchronous>, transform_indices = @transform_1, window_bounds = array<i64: 64, 8>}, {transform_indices = @transform_2, window_bounds = array<i64: 64, 8>}, {transform_indices = @transform_3, window_bounds = array<i64: 64, 64>}, {pipeline_mode = #tpu.pipeline_mode<synchronous>, transform_indices = @transform_4, window_bounds = array<i64: 16, 32>}, {pipeline_mode = #tpu.pipeline_mode<synchronous>, transform_indices = @transform_5, window_bounds = array<i64: 8, 32>}, {pipeline_mode = #tpu.pipeline_mode<synchronous>, transform_indices = @transform_6, window_bounds = array<i64: 1, 32>}, {pipeline_mode = #tpu.pipeline_mode<synchronous>, transform_indices = @transform_7, window_bounds = array<i64: 32, 32>}, {pipeline_mode = #tpu.pipeline_mode<synchronous>, transform_indices = @transform_8, window_bounds = array<i64: 1, 32>}, {transform_indices = @transform_9, window_bounds = array<i64: 64, 32>}]} {
    %c0 = arith.constant 0 : index
    %c0_0 = arith.constant 0 : index
    %0 = vector.load %arg1[%c0, %c0_0] : memref<64x16xbf16, #tpu.memory_space<vmem>>, vector<64x16xbf16>
    %c0_1 = arith.constant 0 : index
    %c0_2 = arith.constant 0 : index
    %1 = vector.load %arg2[%c0_1, %c0_2] : memref<64x8xbf16, #tpu.memory_space<vmem>>, vector<64x8xbf16>
    %c0_3 = arith.constant 0 : index
    %c0_4 = arith.constant 0 : index
    %2 = vector.load %arg3[%c0_3, %c0_4] : memref<64x8xbf16, #tpu.memory_space<vmem>>, vector<64x8xbf16>
    %c0_5 = arith.constant 0 : index
    %c0_6 = arith.constant 0 : index
    %3 = vector.load %arg4[%c0_5, %c0_6] : memref<64x64xbf16, #tpu.memory_space<vmem>>, vector<64x64xbf16>
    %c0_7 = arith.constant 0 : index
    %c0_8 = arith.constant 0 : index
    %4 = vector.load %arg5[%c0_7, %c0_8] : memref<16x32xbf16, #tpu.memory_space<vmem>>, vector<16x32xbf16>
    %c0_9 = arith.constant 0 : index
    %c0_10 = arith.constant 0 : index
    %5 = vector.load %arg6[%c0_9, %c0_10] : memref<8x32xbf16, #tpu.memory_space<vmem>>, vector<8x32xbf16>
    %c0_11 = arith.constant 0 : index
    %c0_12 = arith.constant 0 : index
    %6 = vector.load %arg7[%c0_11, %c0_12] : memref<1x32xf32, #tpu.memory_space<vmem>>, vector<1x32xf32>
    %c0_13 = arith.constant 0 : index
    %c0_14 = arith.constant 0 : index
    %7 = vector.load %arg8[%c0_13, %c0_14] : memref<32x32xbf16, #tpu.memory_space<vmem>>, vector<32x32xbf16>
    %c0_15 = arith.constant 0 : index
    %c0_16 = arith.constant 0 : index
    %8 = vector.load %arg9[%c0_15, %c0_16] : memref<1x32xf32, #tpu.memory_space<vmem>>, vector<1x32xf32>
    %cst = arith.constant dense<0.000000e+00> : vector<64x32xf32>
    %9 = tpu.matmul %0, %4, %cst {dimension_numbers = #tpu.dot_dimension_numbers<[1], [0], [0], [1], [0, 0, 1, 1], [], []>} : vector<64x16xbf16>, vector<16x32xbf16>, vector<64x32xf32> -> vector<64x32xf32>
    %cst_17 = arith.constant dense<0.000000e+00> : vector<64x32xf32>
    %10 = tpu.matmul %1, %5, %cst_17 {dimension_numbers = #tpu.dot_dimension_numbers<[1], [0], [0], [1], [0, 0, 1, 1], [], []>} : vector<64x8xbf16>, vector<8x32xbf16>, vector<64x32xf32> -> vector<64x32xf32>
    %11 = arith.addf %9, %10 : vector<64x32xf32>
    %cst_18 = arith.constant dense<0.000000e+00> : vector<64x32xf32>
    %12 = tpu.matmul %2, %5, %cst_18 {dimension_numbers = #tpu.dot_dimension_numbers<[1], [0], [0], [1], [0, 0, 1, 1], [], []>} : vector<64x8xbf16>, vector<8x32xbf16>, vector<64x32xf32> -> vector<64x32xf32>
    %13 = vector.broadcast %6 : vector<1x32xf32> to vector<64x32xf32>
    %14 = arith.subf %13, %12 : vector<64x32xf32>
    %15 = vector.shape_cast %14 : vector<64x32xf32> to vector<64x1x32xf32>
    %16 = vector.shape_cast %11 : vector<64x32xf32> to vector<1x64x32xf32>
    %17 = vector.broadcast %15 : vector<64x1x32xf32> to vector<64x64x32xf32>
    %18 = vector.broadcast %16 : vector<1x64x32xf32> to vector<64x64x32xf32>
    %19 = arith.addf %17, %18 : vector<64x64x32xf32>
    %cst_19 = arith.constant 0.000000e+00 : f32
    %20 = vector.broadcast %cst_19 : f32 to vector<64x64x32xf32>
    %21 = arith.maximumf %19, %20 : vector<64x64x32xf32>
    %22 = vector.shape_cast %3 : vector<64x64xbf16> to vector<64x1x64xbf16>
    %23 = arith.truncf %21 : vector<64x64x32xf32> to vector<64x64x32xbf16>
    "tpu.trace_start"() <{level = 10 : i32, message = "tqn,tnh->tqh"}> : () -> ()
    %cst_20 = arith.constant dense<0.000000e+00> : vector<64x1x32xf32>
    %24 = tpu.matmul %22, %23, %cst_20 {dimension_numbers = #tpu.dot_dimension_numbers<[2], [1], [1], [2], [0, 0, 0, 1, 1, 2], [0], [0]>} : vector<64x1x64xbf16>, vector<64x64x32xbf16>, vector<64x1x32xf32> -> vector<64x1x32xf32>
    "tpu.trace_stop"() : () -> ()
    %cst_21 = arith.constant dense<0.000000e+00> : vector<64x32xf32>
    %25 = vector.multi_reduction <add>, %24, %cst_21 [1] : vector<64x1x32xf32> to vector<64x32xf32>
    %26 = arith.extf %3 : vector<64x64xbf16> to vector<64x64xf32>
    %cst_22 = arith.constant dense<0.000000e+00> : vector<64xf32>
    %27 = vector.multi_reduction <add>, %26, %cst_22 [1] : vector<64x64xf32> to vector<64xf32>
    %28 = vector.shape_cast %27 : vector<64xf32> to vector<64x1xf32>
    %29 = arith.truncf %25 : vector<64x32xf32> to vector<64x32xbf16>
    %cst_23 = arith.constant dense<0.000000e+00> : vector<64x32xf32>
    %30 = tpu.matmul %29, %7, %cst_23 {dimension_numbers = #tpu.dot_dimension_numbers<[1], [0], [0], [1], [0, 0, 1, 1], [], []>} : vector<64x32xbf16>, vector<32x32xbf16>, vector<64x32xf32> -> vector<64x32xf32>
    %31 = vector.broadcast %28 : vector<64x1xf32> to vector<64x32xf32>
    %32 = vector.broadcast %8 : vector<1x32xf32> to vector<64x32xf32>
    %33 = arith.mulf %31, %32 : vector<64x32xf32>
    %34 = arith.addf %30, %33 : vector<64x32xf32>
    %cst_24 = arith.constant 0.000000e+00 : f32
    %35 = vector.broadcast %cst_24 : f32 to vector<64x32xf32>
    %36 = arith.maximumf %34, %35 : vector<64x32xf32>
    %37 = arith.truncf %36 : vector<64x32xf32> to vector<64x32xbf16>
    %c0_25 = arith.constant 0 : index
    %c0_26 = arith.constant 0 : index
    %38 = vector.load %arg10[%c0_25, %c0_26] : memref<64x32xbf16, #tpu.memory_space<vmem>>, vector<64x32xbf16>
    tpu.vector_store %arg10[%c0_25, %c0_26], %37 {strides = array<i32>} : memref<64x32xbf16, #tpu.memory_space<vmem>>, vector<64x32xbf16>,
    return
  }
  func.func @transform_0(%arg0: i32) -> (i32, i32) {
    %c0_i32 = arith.constant 0 : i32
    %c0_i32_0 = arith.constant 0 : i32
    %c0_i32_1 = arith.constant 0 : i32
    return %c0_i32, %c0_i32_0 : i32, i32
  }
  func.func @transform_1(%arg0: i32) -> (i32, i32) {
    %c0_i32 = arith.constant 0 : i32
    %c0_i32_0 = arith.constant 0 : i32
    %c0_i32_1 = arith.constant 0 : i32
    return %c0_i32, %c0_i32_0 : i32, i32
  }
  func.func @transform_2(%arg0: i32) -> (i32, i32) {
    %c0_i32 = arith.constant 0 : i32
    %c0_i32_0 = arith.constant 0 : i32
    return %arg0, %c0_i32 : i32, i32
  }
  func.func @transform_3(%arg0: i32) -> (i32, i32) {
    %c0_i32 = arith.constant 0 : i32
    %c0_i32_0 = arith.constant 0 : i32
    return %arg0, %c0_i32 : i32, i32
  }
  func.func @transform_4(%arg0: i32) -> (i32, i32) {
    %c0_i32 = arith.constant 0 : i32
    %c0_i32_0 = arith.constant 0 : i32
    %c0_i32_1 = arith.constant 0 : i32
    return %c0_i32, %c0_i32_0 : i32, i32
  }
  func.func @transform_5(%arg0: i32) -> (i32, i32) {
    %c0_i32 = arith.constant 0 : i32
    %c0_i32_0 = arith.constant 0 : i32
    %c0_i32_1 = arith.constant 0 : i32
    return %c0_i32, %c0_i32_0 : i32, i32
  }
  func.func @transform_6(%arg0: i32) -> (i32, i32) {
    %c0_i32 = arith.constant 0 : i32
    %c0_i32_0 = arith.constant 0 : i32
    %c0_i32_1 = arith.constant 0 : i32
    return %c0_i32, %c0_i32_0 : i32, i32
  }
  func.func @transform_7(%arg0: i32) -> (i32, i32) {
    %c0_i32 = arith.constant 0 : i32
    %c0_i32_0 = arith.constant 0 : i32
    %c0_i32_1 = arith.constant 0 : i32
    return %c0_i32, %c0_i32_0 : i32, i32
  }
  func.func @transform_8(%arg0: i32) -> (i32, i32) {
    %c0_i32 = arith.constant 0 : i32
    %c0_i32_0 = arith.constant 0 : i32
    %c0_i32_1 = arith.constant 0 : i32
    return %c0_i32, %c0_i32_0 : i32, i32
  }
  func.func @transform_9(%arg0: i32) -> (i32, i32) {
    %c0_i32 = arith.constant 0 : i32
    %c0_i32_0 = arith.constant 0 : i32
    return %arg0, %c0_i32 : i32, i32
  }
}

module attributes {stable_mosaic.version = 11 : i64} {
  func.func @_triconv_final_kernel(%arg0: i32, %arg1: memref<64x32xbf16, #tpu.memory_space<vmem>>, %arg2: memref<64x8xbf16, #tpu.memory_space<vmem>>, %arg3: memref<64x64xbf16, #tpu.memory_space<vmem>>, %arg4: memref<32x32xbf16, #tpu.memory_space<vmem>>, %arg5: memref<8x32xbf16, #tpu.memory_space<vmem>>, %arg6: memref<1x32xf32, #tpu.memory_space<vmem>>, %arg7: memref<32x32xbf16, #tpu.memory_space<vmem>>, %arg8: memref<1x32xf32, #tpu.memory_space<vmem>>, %arg9: memref<1x32xbf16, #tpu.memory_space<vmem>>, %arg10: memref<1xf32, #tpu.memory_space<smem>>, %arg11: memref<1x64xf32, #tpu.memory_space<vmem>>) attributes {dimension_semantics = [#tpu.dimension_semantics<arbitrary>], iteration_bounds = array<i64: 1>, scalar_prefetch = 0 : i64, scratch_operands = 0 : i64, tpu.core_type = #tpu.core_type<tc>, window_params = [{pipeline_mode = #tpu.pipeline_mode<synchronous>, transform_indices = @transform_0, window_bounds = array<i64: 64, 32>}, {pipeline_mode = #tpu.pipeline_mode<synchronous>, transform_indices = @transform_1, window_bounds = array<i64: 64, 8>}, {pipeline_mode = #tpu.pipeline_mode<synchronous>, transform_indices = @transform_2, window_bounds = array<i64: 64, 64>}, {pipeline_mode = #tpu.pipeline_mode<synchronous>, transform_indices = @transform_3, window_bounds = array<i64: 32, 32>}, {pipeline_mode = #tpu.pipeline_mode<synchronous>, transform_indices = @transform_4, window_bounds = array<i64: 8, 32>}, {pipeline_mode = #tpu.pipeline_mode<synchronous>, transform_indices = @transform_5, window_bounds = array<i64: 1, 32>}, {pipeline_mode = #tpu.pipeline_mode<synchronous>, transform_indices = @transform_6, window_bounds = array<i64: 32, 32>}, {pipeline_mode = #tpu.pipeline_mode<synchronous>, transform_indices = @transform_7, window_bounds = array<i64: 1, 32>}, {pipeline_mode = #tpu.pipeline_mode<synchronous>, transform_indices = @transform_8, window_bounds = array<i64: 1, 32>}, {transform_indices = @transform_9, window_bounds = array<i64: 1>}, {pipeline_mode = #tpu.pipeline_mode<synchronous>, transform_indices = @transform_10, window_bounds = array<i64: 1, 64>}]} {
    %c0 = arith.constant 0 : index
    %c0_0 = arith.constant 0 : index
    %0 = vector.load %arg1[%c0, %c0_0] : memref<64x32xbf16, #tpu.memory_space<vmem>>, vector<64x32xbf16>
    %c0_1 = arith.constant 0 : index
    %c0_2 = arith.constant 0 : index
    %1 = vector.load %arg2[%c0_1, %c0_2] : memref<64x8xbf16, #tpu.memory_space<vmem>>, vector<64x8xbf16>
    %c0_3 = arith.constant 0 : index
    %c0_4 = arith.constant 0 : index
    %2 = vector.load %arg2[%c0_3, %c0_4] : memref<64x8xbf16, #tpu.memory_space<vmem>>, vector<64x8xbf16>
    %c0_5 = arith.constant 0 : index
    %c0_6 = arith.constant 0 : index
    %3 = vector.load %arg3[%c0_5, %c0_6] : memref<64x64xbf16, #tpu.memory_space<vmem>>, vector<64x64xbf16>
    %c0_7 = arith.constant 0 : index
    %c0_8 = arith.constant 0 : index
    %4 = vector.load %arg4[%c0_7, %c0_8] : memref<32x32xbf16, #tpu.memory_space<vmem>>, vector<32x32xbf16>
    %c0_9 = arith.constant 0 : index
    %c0_10 = arith.constant 0 : index
    %5 = vector.load %arg5[%c0_9, %c0_10] : memref<8x32xbf16, #tpu.memory_space<vmem>>, vector<8x32xbf16>
    %c0_11 = arith.constant 0 : index
    %c0_12 = arith.constant 0 : index
    %6 = vector.load %arg6[%c0_11, %c0_12] : memref<1x32xf32, #tpu.memory_space<vmem>>, vector<1x32xf32>
    %c0_13 = arith.constant 0 : index
    %c0_14 = arith.constant 0 : index
    %7 = vector.load %arg7[%c0_13, %c0_14] : memref<32x32xbf16, #tpu.memory_space<vmem>>, vector<32x32xbf16>
    %c0_15 = arith.constant 0 : index
    %c0_16 = arith.constant 0 : index
    %8 = vector.load %arg8[%c0_15, %c0_16] : memref<1x32xf32, #tpu.memory_space<vmem>>, vector<1x32xf32>
    %cst = arith.constant dense<0.000000e+00> : vector<64x32xf32>
    %9 = tpu.matmul %0, %4, %cst {dimension_numbers = #tpu.dot_dimension_numbers<[1], [0], [0], [1], [0, 0, 1, 1], [], []>} : vector<64x32xbf16>, vector<32x32xbf16>, vector<64x32xf32> -> vector<64x32xf32>
    %cst_17 = arith.constant dense<0.000000e+00> : vector<64x32xf32>
    %10 = tpu.matmul %1, %5, %cst_17 {dimension_numbers = #tpu.dot_dimension_numbers<[1], [0], [0], [1], [0, 0, 1, 1], [], []>} : vector<64x8xbf16>, vector<8x32xbf16>, vector<64x32xf32> -> vector<64x32xf32>
    %11 = arith.addf %9, %10 : vector<64x32xf32>
    %cst_18 = arith.constant dense<0.000000e+00> : vector<64x32xf32>
    %12 = tpu.matmul %2, %5, %cst_18 {dimension_numbers = #tpu.dot_dimension_numbers<[1], [0], [0], [1], [0, 0, 1, 1], [], []>} : vector<64x8xbf16>, vector<8x32xbf16>, vector<64x32xf32> -> vector<64x32xf32>
    %13 = vector.broadcast %6 : vector<1x32xf32> to vector<64x32xf32>
    %14 = arith.subf %13, %12 : vector<64x32xf32>
    %15 = vector.shape_cast %14 : vector<64x32xf32> to vector<64x1x32xf32>
    %16 = vector.shape_cast %11 : vector<64x32xf32> to vector<1x64x32xf32>
    %17 = vector.broadcast %15 : vector<64x1x32xf32> to vector<64x64x32xf32>
    %18 = vector.broadcast %16 : vector<1x64x32xf32> to vector<64x64x32xf32>
    %19 = arith.addf %17, %18 : vector<64x64x32xf32>
    %cst_19 = arith.constant 0.000000e+00 : f32
    %20 = vector.broadcast %cst_19 : f32 to vector<64x64x32xf32>
    %21 = arith.maximumf %19, %20 : vector<64x64x32xf32>
    %22 = vector.shape_cast %3 : vector<64x64xbf16> to vector<64x1x64xbf16>
    %23 = arith.truncf %21 : vector<64x64x32xf32> to vector<64x64x32xbf16>
    "tpu.trace_start"() <{level = 10 : i32, message = "tqn,tnh->tqh"}> : () -> ()
    %cst_20 = arith.constant dense<0.000000e+00> : vector<64x1x32xf32>
    %24 = tpu.matmul %22, %23, %cst_20 {dimension_numbers = #tpu.dot_dimension_numbers<[2], [1], [1], [2], [0, 0, 0, 1, 1, 2], [0], [0]>} : vector<64x1x64xbf16>, vector<64x64x32xbf16>, vector<64x1x32xf32> -> vector<64x1x32xf32>
    "tpu.trace_stop"() : () -> ()
    %cst_21 = arith.constant dense<0.000000e+00> : vector<64x32xf32>
    %25 = vector.multi_reduction <add>, %24, %cst_21 [1] : vector<64x1x32xf32> to vector<64x32xf32>
    %26 = arith.extf %3 : vector<64x64xbf16> to vector<64x64xf32>
    %cst_22 = arith.constant dense<0.000000e+00> : vector<64xf32>
    %27 = vector.multi_reduction <add>, %26, %cst_22 [1] : vector<64x64xf32> to vector<64xf32>
    %28 = vector.shape_cast %27 : vector<64xf32> to vector<64x1xf32>
    %29 = arith.truncf %25 : vector<64x32xf32> to vector<64x32xbf16>
    %cst_23 = arith.constant dense<0.000000e+00> : vector<64x32xf32>
    %30 = tpu.matmul %29, %7, %cst_23 {dimension_numbers = #tpu.dot_dimension_numbers<[1], [0], [0], [1], [0, 0, 1, 1], [], []>} : vector<64x32xbf16>, vector<32x32xbf16>, vector<64x32xf32> -> vector<64x32xf32>
    %31 = vector.broadcast %28 : vector<64x1xf32> to vector<64x32xf32>
    %32 = vector.broadcast %8 : vector<1x32xf32> to vector<64x32xf32>
    %33 = arith.mulf %31, %32 : vector<64x32xf32>
    %34 = arith.addf %30, %33 : vector<64x32xf32>
    %cst_24 = arith.constant 0.000000e+00 : f32
    %35 = vector.broadcast %cst_24 : f32 to vector<64x32xf32>
    %36 = arith.maximumf %34, %35 : vector<64x32xf32>
    %c0_25 = arith.constant 0 : index
    %c0_26 = arith.constant 0 : index
    %37 = vector.load %arg9[%c0_25, %c0_26] : memref<1x32xbf16, #tpu.memory_space<vmem>>, vector<1x32xbf16>
    %38 = arith.truncf %36 : vector<64x32xf32> to vector<64x32xbf16>
    "tpu.trace_start"() <{level = 10 : i32, message = "oh,nh->on"}> : () -> ()
    %cst_27 = arith.constant dense<0.000000e+00> : vector<1x64xf32>
    %39 = tpu.matmul %37, %38, %cst_27 {dimension_numbers = #tpu.dot_dimension_numbers<[1], [1], [0], [0], [0, 0, 1, 0], [], []>} : vector<1x32xbf16>, vector<64x32xbf16>, vector<1x64xf32> -> vector<1x64xf32>
    "tpu.trace_stop"() : () -> ()
    %c0_28 = arith.constant 0 : index
    %40 = memref.load %arg10[%c0_28] : memref<1xf32, #tpu.memory_space<smem>>
    %41 = vector.broadcast %40 : f32 to vector<1x64xf32>
    %42 = arith.addf %39, %41 : vector<1x64xf32>
    %cst_29 = arith.constant dense<0xFF800000> : vector<1xf32>
    %43 = vector.multi_reduction <maximumf>, %42, %cst_29 [1] : vector<1x64xf32> to vector<1xf32>
    %44 = vector.shape_cast %43 : vector<1xf32> to vector<1x1xf32>
    %45 = vector.broadcast %44 : vector<1x1xf32> to vector<1x64xf32>
    %46 = arith.subf %42, %45 : vector<1x64xf32>
    %47 = math.exp %46 : vector<1x64xf32>
    %cst_30 = arith.constant dense<0.000000e+00> : vector<1xf32>
    %48 = vector.multi_reduction <add>, %47, %cst_30 [1] : vector<1x64xf32> to vector<1xf32>
    %49 = vector.shape_cast %48 : vector<1xf32> to vector<1x1xf32>
    %50 = tpu.reciprocal %49 {approx = true} : vector<1x1xf32> -> vector<1x1xf32>
    %51 = vector.broadcast %50 : vector<1x1xf32> to vector<1x64xf32>
    %52 = arith.mulf %47, %51 : vector<1x64xf32>
    %c0_31 = arith.constant 0 : index
    %c0_32 = arith.constant 0 : index
    %53 = vector.load %arg11[%c0_31, %c0_32] : memref<1x64xf32, #tpu.memory_space<vmem>>, vector<1x64xf32>
    tpu.vector_store %arg11[%c0_31, %c0_32], %52 {strides = array<i32>} : memref<1x64xf32, #tpu.memory_space<vmem>>, vector<1x64xf32>,
    return
  }
  func.func @transform_0(%arg0: i32) -> (i32, i32) {
    %c0_i32 = arith.constant 0 : i32
    %c0_i32_0 = arith.constant 0 : i32
    %c0_i32_1 = arith.constant 0 : i32
    return %c0_i32, %c0_i32_0 : i32, i32
  }
  func.func @transform_1(%arg0: i32) -> (i32, i32) {
    %c0_i32 = arith.constant 0 : i32
    %c0_i32_0 = arith.constant 0 : i32
    %c0_i32_1 = arith.constant 0 : i32
    return %c0_i32, %c0_i32_0 : i32, i32
  }
  func.func @transform_2(%arg0: i32) -> (i32, i32) {
    %c0_i32 = arith.constant 0 : i32
    %c0_i32_0 = arith.constant 0 : i32
    %c0_i32_1 = arith.constant 0 : i32
    return %c0_i32, %c0_i32_0 : i32, i32
  }
  func.func @transform_3(%arg0: i32) -> (i32, i32) {
    %c0_i32 = arith.constant 0 : i32
    %c0_i32_0 = arith.constant 0 : i32
    %c0_i32_1 = arith.constant 0 : i32
    return %c0_i32, %c0_i32_0 : i32, i32
  }
  func.func @transform_4(%arg0: i32) -> (i32, i32) {
    %c0_i32 = arith.constant 0 : i32
    %c0_i32_0 = arith.constant 0 : i32
    %c0_i32_1 = arith.constant 0 : i32
    return %c0_i32, %c0_i32_0 : i32, i32
  }
  func.func @transform_5(%arg0: i32) -> (i32, i32) {
    %c0_i32 = arith.constant 0 : i32
    %c0_i32_0 = arith.constant 0 : i32
    %c0_i32_1 = arith.constant 0 : i32
    return %c0_i32, %c0_i32_0 : i32, i32
  }
  func.func @transform_6(%arg0: i32) -> (i32, i32) {
    %c0_i32 = arith.constant 0 : i32
    %c0_i32_0 = arith.constant 0 : i32
    %c0_i32_1 = arith.constant 0 : i32
    return %c0_i32, %c0_i32_0 : i32, i32
  }
  func.func @transform_7(%arg0: i32) -> (i32, i32) {
    %c0_i32 = arith.constant 0 : i32
    %c0_i32_0 = arith.constant 0 : i32
    %c0_i32_1 = arith.constant 0 : i32
    return %c0_i32, %c0_i32_0 : i32, i32
  }
  func.func @transform_8(%arg0: i32) -> (i32, i32) {
    %c0_i32 = arith.constant 0 : i32
    %c0_i32_0 = arith.constant 0 : i32
    %c0_i32_1 = arith.constant 0 : i32
    return %c0_i32, %c0_i32_0 : i32, i32
  }
  func.func @transform_9(%arg0: i32) -> i32 {
    %c0_i32 = arith.constant 0 : i32
    %c0_i32_0 = arith.constant 0 : i32
    return %c0_i32 : i32
  }
  func.func @transform_10(%arg0: i32) -> (i32, i32) {
    %c0_i32 = arith.constant 0 : i32
    %c0_i32_0 = arith.constant 0 : i32
    %c0_i32_1 = arith.constant 0 : i32
    return %c0_i32, %c0_i32_0 : i32, i32
  }
}

</mosaic_0001>

<llo_original>
// kernel: neg.1
$region0: #{neg.1}
  #allocation0 [shape = 's32[1]{0}', space=sflag, size = 0x4, scoped, tag = 'scoped memory for neg.1']
  %s0 = inlined_call_operand.vmem [shape: f32[64,64], index: 0, kind: input, shape index: {}]
  %s1 = inlined_call_operand.vmem [shape: f32[64,64], index: 1, kind: output, shape index: {}]
  %v2 = vld [vmem:[%s0] sm:$0xff]
  %3 = xla_tuple %v2
  %4 = xla_tuple %3
  %v5 = vxor.u32 %v2, 2147483648
  %6 = xla_tuple %v5
  %7 = vst [vmem:[%s1] sm:$0xff] %v5
  %s8 = scalar_lea.vmem %s0, 8
  %v9 = vld [vmem:[%s8] sm:$0xff]
  %10 = xla_tuple %v9
  %11 = xla_tuple %10
  %v12 = vxor.u32 %v9, 2147483648
  %13 = xla_tuple %v12
  %s14 = scalar_lea.vmem %s1, 8
  %15 = vst [vmem:[%s14] sm:$0xff] %v12
  %s16 = scalar_lea.vmem %s0, 16
  %v17 = vld [vmem:[%s16] sm:$0xff]
  %18 = xla_tuple %v17
  %19 = xla_tuple %18
  %v20 = vxor.u32 %v17, 2147483648
  %21 = xla_tuple %v20
  %s22 = scalar_lea.vmem %s1, 16
  %23 = vst [vmem:[%s22] sm:$0xff] %v20
  %s24 = scalar_lea.vmem %s0, 24
  %v25 = vld [vmem:[%s24] sm:$0xff]
  %26 = xla_tuple %v25
  %27 = xla_tuple %26
  %v28 = vxor.u32 %v25, 2147483648
  %29 = xla_tuple %v28
  %s30 = scalar_lea.vmem %s1, 24
  %31 = vst [vmem:[%s30] sm:$0xff] %v28
  %s32 = scalar_lea.vmem %s0, 32
  %v33 = vld [vmem:[%s32] sm:$0xff]
  %34 = xla_tuple %v33
  %35 = xla_tuple %34
  %v36 = vxor.u32 %v33, 2147483648
  %37 = xla_tuple %v36
  %s38 = scalar_lea.vmem %s1, 32
  %39 = vst [vmem:[%s38] sm:$0xff] %v36
  %s40 = scalar_lea.vmem %s0, 40
  %v41 = vld [vmem:[%s40] sm:$0xff]
  %42 = xla_tuple %v41
  %43 = xla_tuple %42
  %v44 = vxor.u32 %v41, 2147483648
  %45 = xla_tuple %v44
  %s46 = scalar_lea.vmem %s1, 40
  %47 = vst [vmem:[%s46] sm:$0xff] %v44
  %s48 = scalar_lea.vmem %s0, 48
  %v49 = vld [vmem:[%s48] sm:$0xff]
  %50 = xla_tuple %v49
  %51 = xla_tuple %50
  %v52 = vxor.u32 %v49, 2147483648
  %53 = xla_tuple %v52
  %s54 = scalar_lea.vmem %s1, 48
  %55 = vst [vmem:[%s54] sm:$0xff] %v52
  %s56 = scalar_lea.vmem %s0, 56
  %v57 = vld [vmem:[%s56] sm:$0xff]
  %58 = xla_tuple %v57
  %59 = xla_tuple %58
  %v60 = vxor.u32 %v57, 2147483648
  %61 = xla_tuple %v60
  %s62 = scalar_lea.vmem %s1, 56
  %63 = vst [vmem:[%s62] sm:$0xff] %v60

// kernel: face_classifier_forward.3
$region0: #{face_classifier_forward.3}
  #allocation0 [shape = 'u32[]', space=smem, size = 0x4, offset = 0x4, fixed_abs, tag = 'smem constant byte address 0x4 - core index']
  #allocation1 [shape = 'u32[144,128]{1,0:T(1,128)}', space=vmem, size = 0x12000, scoped, tag = 'internal scratch']
  %s0 = inlined_call_operand.vmem [shape: f32[64,8], index: 0, kind: input, shape index: {}, may-alias: {0,1}]
  %s1 = inlined_call_operand.vmem [shape: f32[64,8], index: 1, kind: input, shape index: {}, may-alias: {0,1}]
  %s2 = inlined_call_operand.vmem [shape: f32[1,64], index: 2, kind: input, shape index: {}]
  %s3 = inlined_call_operand.vmem [shape: f32[64,64], index: 3, kind: output, shape index: {}]
  %s4 = sld [smem:[#allocation0]]
  $region22: #{face_classifier_forward.3} parent=0
    _
  %s6 = ssub.s32 1, %s4
  %s7 = scalar_select 0, %s6, %s4
  // Predicated region
  $region2: #{face_classifier_forward.3} parent=0 // pred_check
    _
  $region3: #{face_classifier_forward.3} parent=0 // pred_check_branch
    %9 = sbr.rel (0) target = $region5
  $region4: #{face_classifier_forward.3} parent=0 // pred_region
    _
  $region5: #{face_classifier_forward.3} parent=0 // pred_fallthru
    _
  // Predicated region
  $region6: #{face_classifier_forward.3} parent=0 // pred_check
    _
  $region7: #{face_classifier_forward.3} parent=0 // pred_check_branch
    %11 = sbr.rel (0) target = $region9
  $region8: #{face_classifier_forward.3} parent=0 // pred_region
    _
  $region9: #{face_classifier_forward.3} parent=0 // pred_fallthru
    _
  // Predicated region
  $region10: #{face_classifier_forward.3} parent=0 // pred_check
    _
  $region11: #{face_classifier_forward.3} parent=0 // pred_check_branch
    %13 = sbr.rel (0) target = $region13
  $region12: #{face_classifier_forward.3} parent=0 // pred_region
    _
  $region13: #{face_classifier_forward.3} parent=0 // pred_fallthru
    _
  %v14 = vld [vmem:[%s0] sm:$0xff]
  %v15 = vld [vmem:[%s0 + $0x8] sm:$0xff]
  %v16 = vld [vmem:[%s0 + $0x10] sm:$0xff]
  %v17 = vld [vmem:[%s0 + $0x18] sm:$0xff]
  %v18 = vld [vmem:[%s0 + $0x20] sm:$0xff]
  %v19 = vld [vmem:[%s0 + $0x28] sm:$0xff]
  %v20 = vld [vmem:[%s0 + $0x30] sm:$0xff]
  %v21 = vld [vmem:[%s0 + $0x38] sm:$0xff]
  %v22 = vld [vmem:[%s1] sm:$0xff]
  %v23 = vld [vmem:[%s1 + $0x8] sm:$0xff]
  %v24 = vld [vmem:[%s1 + $0x10] sm:$0xff]
  %v25 = vld [vmem:[%s1 + $0x18] sm:$0xff]
  %v26 = vld [vmem:[%s1 + $0x20] sm:$0xff]
  %v27 = vld [vmem:[%s1 + $0x28] sm:$0xff]
  %v28 = vld [vmem:[%s1 + $0x30] sm:$0xff]
  %v29 = vld [vmem:[%s1 + $0x38] sm:$0xff]
  %v30 = vmul.f32 %v14, %v14
  %v31 = vmul.f32 %v15, %v15
  %v32 = vmul.f32 %v16, %v16
  %v33 = vmul.f32 %v17, %v17
  %v34 = vmul.f32 %v18, %v18
  %v35 = vmul.f32 %v19, %v19
  %v36 = vmul.f32 %v20, %v20
  %v37 = vmul.f32 %v21, %v21
  %vm38 = vcmask 64512
  %v39 = vsel %vm38, %v30, 0.0
  %40 = vadd.xlane.f32.xlu0 %v39
  %v41 = vpop.xlane.xlu0 %40
  %v42 = vsel %vm38, %v31, 0.0
  %43 = vadd.xlane.f32.xlu0 %v42
  %v44 = vpop.xlane.xlu0 %43
  %v45 = vsel %vm38, %v32, 0.0
  %46 = vadd.xlane.f32.xlu0 %v45
  %v47 = vpop.xlane.xlu0 %46
  %v48 = vsel %vm38, %v33, 0.0
  %49 = vadd.xlane.f32.xlu0 %v48
  %v50 = vpop.xlane.xlu0 %49
  %v51 = vsel %vm38, %v34, 0.0
  %52 = vadd.xlane.f32.xlu0 %v51
  %v53 = vpop.xlane.xlu0 %52
  %v54 = vsel %vm38, %v35, 0.0
  %55 = vadd.xlane.f32.xlu0 %v54
  %v56 = vpop.xlane.xlu0 %55
  %v57 = vsel %vm38, %v36, 0.0
  %58 = vadd.xlane.f32.xlu0 %v57
  %v59 = vpop.xlane.xlu0 %58
  %v60 = vsel %vm38, %v37, 0.0
  %61 = vadd.xlane.f32.xlu0 %v60
  %v62 = vpop.xlane.xlu0 %61
  %v64 = vsel %vm38, %v14, 0
  %v67 = vsel %vm38, %v15, 0
  %v70 = vsel %vm38, %v16, 0
  %v73 = vsel %vm38, %v17, 0
  %v76 = vsel %vm38, %v18, 0
  %v79 = vsel %vm38, %v19, 0
  %v82 = vsel %vm38, %v20, 0
  %v85 = vsel %vm38, %v21, 0
  %v88 = vsel %vm38, %v22, 0
  %v91 = vsel %vm38, %v23, 0
  %v94 = vsel %vm38, %v24, 0
  %v97 = vsel %vm38, %v25, 0
  %v100 = vsel %vm38, %v26, 0
  %v103 = vsel %vm38, %v27, 0
  %v106 = vsel %vm38, %v28, 0
  %v109 = vsel %vm38, %v29, 0
  %111 = vmatprep.subr.mxu0 0.0
  %112 = vmatpush1.xpose.msra.mxu0 %v88
  %113 = vmatprep.subr.mxu0 0.0
  %114 = vmatpush1.xpose.msra.mxu0 %v91
  %115 = vmatprep.subr.mxu0 0.0
  %116 = vmatpush1.xpose.msra.mxu0 %v94
  %117 = vmatprep.subr.mxu0 0.0
  %118 = vmatpush1.xpose.msra.mxu0 %v97
  %119 = vmatprep.subr.mxu0 0.0
  %120 = vmatpush1.xpose.msra.mxu0 %v100
  %121 = vmatprep.subr.mxu0 0.0
  %122 = vmatpush1.xpose.msra.mxu0 %v103
  %123 = vmatprep.subr.mxu0 0.0
  %124 = vmatpush1.xpose.msra.mxu0 %v106
  %125 = vmatprep.subr.mxu0 0.0
  %126 = vmatpush1.xpose.msra.mxu0 %v109
  %127 = vmatprep.subr.mxu0 0.0
  %128 = vmatpush1.xpose.msra.mxu0 0.0
  %129 = vmatprep.subr.mxu0 0.0
  %130 = vmatpush1.xpose.msra.mxu0 0.0
  %131 = vmatprep.subr.mxu0 0.0
  %132 = vmatpush1.xpose.msra.mxu0 0.0
  %133 = vmatprep.subr.mxu0 0.0
  %134 = vmatpush1.xpose.msra.mxu0 0.0
  %135 = vmatprep.subr.mxu0 0.0
  %136 = vmatpush1.xpose.msra.mxu0 0.0
  %137 = vmatprep.subr.mxu0 0.0
  %138 = vmatpush1.xpose.msra.mxu0 0.0
  %139 = vmatprep.subr.mxu0 0.0
  %140 = vmatpush1.xpose.msra.mxu0 0.0
  %141 = vmatprep.subr.mxu0 0.0
  %142 = vmatpush1.xpose.msra.mxu0 0.0
  %143 = vmatprep.subr.mxu0 0.0
  %144 = vmatpush1.xpose.msra.mxu0 0.0
  %145 = vmatprep.subr.mxu0 0.0
  %146 = vmatpush1.xpose.msra.mxu0 0.0
  %147 = vmatprep.subr.mxu0 0.0
  %148 = vmatpush1.xpose.msra.mxu0 0.0
  %149 = vmatprep.subr.mxu0 0.0
  %150 = vmatpush1.xpose.msra.mxu0 0.0
  %151 = vmatprep.subr.mxu0 0.0
  %152 = vmatpush1.xpose.msra.mxu0 0.0
  %153 = vmatprep.subr.mxu0 0.0
  %154 = vmatpush1.xpose.msra.mxu0 0.0
  %155 = vmatprep.subr.mxu0 0.0
  %156 = vmatpush1.xpose.msra.mxu0 0.0
  %157 = vmatprep.subr.mxu0 0.0
  %158 = vmatpush1.xpose.msra.mxu0 0.0
  %159 = vmatprep.subr.mxu0 0.0
  %160 = vmatpush1.xpose.msra.mxu0 0.0
  %161 = vmatprep.subr.mxu0 0.0
  %162 = vmatpush1.xpose.msra.mxu0 0.0
  %163 = vmatprep.subr.mxu0 0.0
  %164 = vmatpush1.xpose.msra.mxu0 0.0
  %165 = vmatprep.subr.mxu0 0.0
  %166 = vmatpush1.xpose.msra.mxu0 0.0
  %167 = vmatprep.subr.mxu0 0.0
  %168 = vmatpush1.xpose.msra.mxu0 0.0
  %169 = vmatprep.subr.mxu0 0.0
  %170 = vmatpush1.xpose.msra.mxu0 0.0
  %171 = vmatprep.subr.mxu0 0.0
  %172 = vmatpush1.xpose.msra.mxu0 0.0
  %173 = vmatprep.subr.mxu0 0.0
  %174 = vmatpush1.xpose.msra.mxu0 0.0
  %175 = vmatprep.mubr.f32.mxu0 0.0
  %176 = vmatmul.mubr.f32.gmra.mrb[0].mxu0 %v64
  %v177 = vpop.f32.mrb[0].mxu0
  %v178 = vadd.f32 0.0, %v177
  %v179 = vpop.f32.mrb[0].mxu0
  %180 = vmatprep.mubr.f32.mxu0 0.0
  %181 = vmatmul.mubr.f32.gmra.mrb[0].mxu0 %v67
  %v182 = vpop.f32.mrb[0].mxu0
  %v183 = vadd.f32 0.0, %v182
  %v184 = vpop.f32.mrb[0].mxu0
  %185 = vmatprep.mubr.f32.mxu0 0.0
  %186 = vmatmul.mubr.f32.gmra.mrb[0].mxu0 %v70
  %v187 = vpop.f32.mrb[0].mxu0
  %v188 = vadd.f32 0.0, %v187
  %v189 = vpop.f32.mrb[0].mxu0
  %190 = vmatprep.mubr.f32.mxu0 0.0
  %191 = vmatmul.mubr.f32.gmra.mrb[0].mxu0 %v73
  %v192 = vpop.f32.mrb[0].mxu0
  %v193 = vadd.f32 0.0, %v192
  %v194 = vpop.f32.mrb[0].mxu0
  %195 = vmatprep.mubr.f32.mxu0 0.0
  %196 = vmatmul.mubr.f32.gmra.mrb[0].mxu0 %v76
  %v197 = vpop.f32.mrb[0].mxu0
  %v198 = vadd.f32 0.0, %v197
  %v199 = vpop.f32.mrb[0].mxu0
  %200 = vmatprep.mubr.f32.mxu0 0.0
  %201 = vmatmul.mubr.f32.gmra.mrb[0].mxu0 %v79
  %v202 = vpop.f32.mrb[0].mxu0
  %v203 = vadd.f32 0.0, %v202
  %v204 = vpop.f32.mrb[0].mxu0
  %205 = vmatprep.mubr.f32.mxu0 0.0
  %206 = vmatmul.mubr.f32.gmra.mrb[0].mxu0 %v82
  %v207 = vpop.f32.mrb[0].mxu0
  %v208 = vadd.f32 0.0, %v207
  %v209 = vpop.f32.mrb[0].mxu0
  %210 = vmatprep.mubr.f32.mxu0 0.0
  %211 = vmatmul.mubr.f32.gmra.mrb[0].mxu0 %v85
  %v212 = vpop.f32.mrb[0].mxu0
  %v213 = vadd.f32 0.0, %v212
  %v214 = vpop.f32.mrb[0].mxu0
  %215 = vdwg.mxu0
  %v216 = vld [vmem:[%s2] sm:$0x1]
  %v218 = vlaneseq
  %v219 = vshrl.u32 %v218, 7
  %v220 = vsub.s32 0, %v219
  %v221 = vrot.slane %v216, %v220
  %v223 = vadd.f32 %v41, %v221
  %v224 = vadd.f32 %v44, %v221
  %v225 = vadd.f32 %v47, %v221
  %v226 = vadd.f32 %v50, %v221
  %v227 = vadd.f32 %v53, %v221
  %v228 = vadd.f32 %v56, %v221
  %v229 = vadd.f32 %v59, %v221
  %v230 = vadd.f32 %v62, %v221
  %v231 = vmul.f32 %v178, 2.0
  %v232 = vmul.f32 %v183, 2.0
  %v233 = vmul.f32 %v188, 2.0
  %v234 = vmul.f32 %v193, 2.0
  %v235 = vmul.f32 %v198, 2.0
  %v236 = vmul.f32 %v203, 2.0
  %v237 = vmul.f32 %v208, 2.0
  %v238 = vmul.f32 %v213, 2.0
  %v239 = vsub.f32 %v223, %v231
  %v240 = vsub.f32 %v224, %v232
  %v241 = vsub.f32 %v225, %v233
  %v242 = vsub.f32 %v226, %v234
  %v243 = vsub.f32 %v227, %v235
  %v244 = vsub.f32 %v228, %v236
  %v245 = vsub.f32 %v229, %v237
  %v246 = vsub.f32 %v230, %v238
  %s247 = smul.u32 0, 64
  %v248 = vlaneseq
  %v249 = vshrl.u32 %v248, 7
  %v250 = vadd.s32 %v249, 8
  %v251 = vadd.s32 %v249, 16
  %v252 = vadd.s32 %v249, 24
  %v253 = vadd.s32 %v249, 32
  %v254 = vadd.s32 %v249, 40
  %v255 = vadd.s32 %v249, 48
  %v256 = vadd.s32 %v249, 56
  %v257 = vstv %s247
  %v258 = vadd.s32 %v257, %v249
  %v259 = vadd.s32 %v257, %v250
  %v260 = vadd.s32 %v257, %v251
  %v261 = vadd.s32 %v257, %v252
  %v262 = vadd.s32 %v257, %v253
  %v263 = vadd.s32 %v257, %v254
  %v264 = vadd.s32 %v257, %v255
  %v265 = vadd.s32 %v257, %v256
  %v266 = vlaneseq
  %v267 = vand.u32 %v266, 127
  %vm268 = vcmp.eq.s32.totalorder %v258, %v267
  %vm269 = vcmp.eq.s32.totalorder %v259, %v267
  %vm270 = vcmp.eq.s32.totalorder %v260, %v267
  %vm271 = vcmp.eq.s32.totalorder %v261, %v267
  %vm272 = vcmp.eq.s32.totalorder %v262, %v267
  %vm273 = vcmp.eq.s32.totalorder %v263, %v267
  %vm274 = vcmp.eq.s32.totalorder %v264, %v267
  %vm275 = vcmp.eq.s32.totalorder %v265, %v267
  %v276 = vsel %vm268, inf, %v239
  %v277 = vsel %vm269, inf, %v240
  %v278 = vsel %vm270, inf, %v241
  %v279 = vsel %vm271, inf, %v242
  %v280 = vsel %vm272, inf, %v243
  %v281 = vsel %vm273, inf, %v244
  %v282 = vsel %vm274, inf, %v245
  %v283 = vsel %vm275, inf, %v246
  %vm284 = vcmask 523264
  %285 = vst.msk [vmem:[%s3] sm:$0xff] %vm284, %v276
  %286 = vst.msk [vmem:[%s3 + $0x8] sm:$0xff] %vm284, %v277
  %287 = vst.msk [vmem:[%s3 + $0x10] sm:$0xff] %vm284, %v278
  %288 = vst.msk [vmem:[%s3 + $0x18] sm:$0xff] %vm284, %v279
  %289 = vst.msk [vmem:[%s3 + $0x20] sm:$0xff] %vm284, %v280
  %290 = vst.msk [vmem:[%s3 + $0x28] sm:$0xff] %vm284, %v281
  %291 = vst.msk [vmem:[%s3 + $0x30] sm:$0xff] %vm284, %v282
  %292 = vst.msk [vmem:[%s3 + $0x38] sm:$0xff] %vm284, %v283
  // Predicated region
  $region14: #{face_classifier_forward.3} parent=0 // pred_check
    _
  $region15: #{face_classifier_forward.3} parent=0 // pred_check_branch
    %294 = sbr.rel (0) target = $region17
  $region16: #{face_classifier_forward.3} parent=0 // pred_region
    _
  $region17: #{face_classifier_forward.3} parent=0 // pred_fallthru
    _
  // Predicated region
  $region18: #{face_classifier_forward.3} parent=0 // pred_check
    _
  $region19: #{face_classifier_forward.3} parent=0 // pred_check_branch
    %296 = sbr.rel (0) target = $region21
  $region20: #{face_classifier_forward.3} parent=0 // pred_region
    _
  $region21: #{face_classifier_forward.3} parent=0 // pred_fallthru
    _

// kernel: face_classifier_forward.4
$region0: #{face_classifier_forward.4}
  #allocation0 [shape = 'u32[]', space=smem, size = 0x4, offset = 0x4, fixed_abs, tag = 'smem constant byte address 0x4 - core index']
  #allocation1 [shape = 'u32[144,128]{1,0:T(1,128)}', space=vmem, size = 0x12000, scoped, tag = 'internal scratch']
  %s0 = inlined_call_operand.vmem [shape: bf16[64,16], index: 0, kind: input, shape index: {}]
  %s1 = inlined_call_operand.vmem [shape: bf16[64,8], index: 1, kind: input, shape index: {}, may-alias: {1,2}]
  %s2 = inlined_call_operand.vmem [shape: bf16[64,8], index: 2, kind: input, shape index: {}, may-alias: {1,2}]
  %s3 = inlined_call_operand.vmem [shape: bf16[64,64], index: 3, kind: input, shape index: {}]
  %s4 = inlined_call_operand.vmem [shape: bf16[16,32], index: 4, kind: input, shape index: {}]
  %s5 = inlined_call_operand.vmem [shape: bf16[8,32], index: 5, kind: input, shape index: {}]
  %s6 = inlined_call_operand.vmem [shape: f32[1,32], index: 6, kind: input, shape index: {}]
  %s7 = inlined_call_operand.vmem [shape: bf16[32,32], index: 7, kind: input, shape index: {}]
  %s8 = inlined_call_operand.vmem [shape: f32[1,32], index: 8, kind: input, shape index: {}]
  %s9 = inlined_call_operand.vmem [shape: bf16[64,32], index: 9, kind: output, shape index: {}]
  %s10 = sld [smem:[#allocation0]]
  $region46: #{face_classifier_forward.4} parent=0
    _
  %s12 = ssub.s32 1, %s10
  %s13 = scalar_select 0, %s12, %s10
  // Predicated region
  $region2: #{face_classifier_forward.4} parent=0 // pred_check
    _
  $region3: #{face_classifier_forward.4} parent=0 // pred_check_branch
    %15 = sbr.rel (0) target = $region5
  $region4: #{face_classifier_forward.4} parent=0 // pred_region
    _
  $region5: #{face_classifier_forward.4} parent=0 // pred_fallthru
    _
  // Predicated region
  $region6: #{face_classifier_forward.4} parent=0 // pred_check
    _
  $region7: #{face_classifier_forward.4} parent=0 // pred_check_branch
    %17 = sbr.rel (0) target = $region9
  $region8: #{face_classifier_forward.4} parent=0 // pred_region
    _
  $region9: #{face_classifier_forward.4} parent=0 // pred_fallthru
    _
  // Predicated region
  $region10: #{face_classifier_forward.4} parent=0 // pred_check
    _
  $region11: #{face_classifier_forward.4} parent=0 // pred_check_branch
    %19 = sbr.rel (0) target = $region13
  $region12: #{face_classifier_forward.4} parent=0 // pred_region
    _
  $region13: #{face_classifier_forward.4} parent=0 // pred_fallthru
    _
  // Predicated region
  $region14: #{face_classifier_forward.4} parent=0 // pred_check
    _
  $region15: #{face_classifier_forward.4} parent=0 // pred_check_branch
    %21 = sbr.rel (0) target = $region17
  $region16: #{face_classifier_forward.4} parent=0 // pred_region
    _
  $region17: #{face_classifier_forward.4} parent=0 // pred_fallthru
    _
  // Predicated region
  $region18: #{face_classifier_forward.4} parent=0 // pred_check
    _
  $region19: #{face_classifier_forward.4} parent=0 // pred_check_branch
    %23 = sbr.rel (0) target = $region21
  $region20: #{face_classifier_forward.4} parent=0 // pred_region
    _
  $region21: #{face_classifier_forward.4} parent=0 // pred_fallthru
    _
  // Predicated region
  $region22: #{face_classifier_forward.4} parent=0 // pred_check
    _
  $region23: #{face_classifier_forward.4} parent=0 // pred_check_branch
    %25 = sbr.rel (0) target = $region25
  $region24: #{face_classifier_forward.4} parent=0 // pred_region
    _
  $region25: #{face_classifier_forward.4} parent=0 // pred_fallthru
    _
  // Predicated region
  $region26: #{face_classifier_forward.4} parent=0 // pred_check
    _
  $region27: #{face_classifier_forward.4} parent=0 // pred_check_branch
    %27 = sbr.rel (0) target = $region29
  $region28: #{face_classifier_forward.4} parent=0 // pred_region
    _
  $region29: #{face_classifier_forward.4} parent=0 // pred_fallthru
    _
  // Predicated region
  $region30: #{face_classifier_forward.4} parent=0 // pred_check
    _
  $region31: #{face_classifier_forward.4} parent=0 // pred_check_branch
    %29 = sbr.rel (0) target = $region33
  $region32: #{face_classifier_forward.4} parent=0 // pred_region
    _
  $region33: #{face_classifier_forward.4} parent=0 // pred_fallthru
    _
  // Predicated region
  $region34: #{face_classifier_forward.4} parent=0 // pred_check
    _
  $region35: #{face_classifier_forward.4} parent=0 // pred_check_branch
    %31 = sbr.rel (0) target = $region37
  $region36: #{face_classifier_forward.4} parent=0 // pred_region
    _
  $region37: #{face_classifier_forward.4} parent=0 // pred_fallthru
    _
  %v33 = vld [vmem:[%s0] sm:$0xf]
  %v34 = vld [vmem:[%s0 + $0x4] sm:$0xf]
  %v35 = vld [vmem:[%s0 + $0x8] sm:$0xf]
  %v36 = vld [vmem:[%s0 + $0xc] sm:$0xf]
  %v37 = vld [vmem:[%s0 + $0x10] sm:$0xf]
  %v38 = vld [vmem:[%s0 + $0x14] sm:$0xf]
  %v39 = vld [vmem:[%s0 + $0x18] sm:$0xf]
  %v40 = vld [vmem:[%s0 + $0x1c] sm:$0xf]
  %v41 = vld [vmem:[%s1] sm:$0xf]
  %v42 = vld [vmem:[%s1 + $0x4] sm:$0xf]
  %v43 = vld [vmem:[%s1 + $0x8] sm:$0xf]
  %v44 = vld [vmem:[%s1 + $0xc] sm:$0xf]
  %v45 = vld [vmem:[%s1 + $0x10] sm:$0xf]
  %v46 = vld [vmem:[%s1 + $0x14] sm:$0xf]
  %v47 = vld [vmem:[%s1 + $0x18] sm:$0xf]
  %v48 = vld [vmem:[%s1 + $0x1c] sm:$0xf]
  %v49 = vld [vmem:[%s2] sm:$0xf]
  %v50 = vld [vmem:[%s2 + $0x4] sm:$0xf]
  %v51 = vld [vmem:[%s2 + $0x8] sm:$0xf]
  %v52 = vld [vmem:[%s2 + $0xc] sm:$0xf]
  %v53 = vld [vmem:[%s2 + $0x10] sm:$0xf]
  %v54 = vld [vmem:[%s2 + $0x14] sm:$0xf]
  %v55 = vld [vmem:[%s2 + $0x18] sm:$0xf]
  %v56 = vld [vmem:[%s2 + $0x1c] sm:$0xf]
  %v57 = vld [vmem:[%s3] sm:$0xf]
  %v58 = vld [vmem:[%s3 + $0x4] sm:$0xf]
  %v59 = vld [vmem:[%s3 + $0x8] sm:$0xf]
  %v60 = vld [vmem:[%s3 + $0xc] sm:$0xf]
  %v61 = vld [vmem:[%s3 + $0x10] sm:$0xf]
  %v62 = vld [vmem:[%s3 + $0x14] sm:$0xf]
  %v63 = vld [vmem:[%s3 + $0x18] sm:$0xf]
  %v64 = vld [vmem:[%s3 + $0x1c] sm:$0xf]
  %v65 = vld [vmem:[%s4] sm:$0xf]
  %v66 = vld [vmem:[%s4 + $0x4] sm:$0xf]
  %v67 = vld [vmem:[%s5] sm:$0xf]
  %v68 = vld [vmem:[%s6] sm:$0x1]
  %v69 = vld [vmem:[%s7] sm:$0xf]
  %v70 = vld [vmem:[%s7 + $0x4] sm:$0xf]
  %v71 = vld [vmem:[%s7 + $0x8] sm:$0xf]
  %v72 = vld [vmem:[%s7 + $0xc] sm:$0xf]
  %v73 = vld [vmem:[%s8] sm:$0x1]
  %v82 = vunpack.c.l.b16 %v41
  %v83 = vunpack.c.l.b16 %v42
  %v84 = vunpack.c.l.b16 %v43
  %v85 = vunpack.c.l.b16 %v44
  %v86 = vunpack.c.l.b16 %v45
  %v87 = vunpack.c.l.b16 %v46
  %v88 = vunpack.c.l.b16 %v47
  %v89 = vunpack.c.l.b16 %v48
  %v90 = vpack.c.b16 %v83, %v82
  %v91 = vpack.c.b16 %v85, %v84
  %v92 = vpack.c.b16 %v87, %v86
  %v93 = vpack.c.b16 %v89, %v88
  %vm94 = vcmask 64512
  %v96 = vsel %vm94, %v90, 0
  %v99 = vsel %vm94, %v91, 0
  %v102 = vsel %vm94, %v92, 0
  %v105 = vsel %vm94, %v93, 0
  %vm107 = vcmask 1043456
  %v109 = vsel %vm107, %v67, 0
  %111 = vmatprep.subr.bf16.mxu0 0
  %112 = vmatpush1.bf16.msra.mxu0 %v109
  %113 = vmatprep.subr.bf16.mxu0 0
  %114 = vmatpush1.bf16.msra.mxu0 0
  %115 = vmatprep.subr.bf16.mxu0 0
  %116 = vmatpush1.bf16.msra.mxu0 0
  %117 = vmatprep.subr.bf16.mxu0 0
  %118 = vmatpush1.bf16.msra.mxu0 0
  %119 = vmatprep.subr.bf16.mxu0 0
  %120 = vmatpush1.bf16.msra.mxu0 0
  %121 = vmatprep.subr.bf16.mxu0 0
  %122 = vmatpush1.bf16.msra.mxu0 0
  %123 = vmatprep.subr.bf16.mxu0 0
  %124 = vmatpush1.bf16.msra.mxu0 0
  %125 = vmatprep.subr.bf16.mxu0 0
  %126 = vmatpush1.bf16.msra.mxu0 0
  %127 = vmatprep.subr.bf16.mxu0 0
  %128 = vmatpush1.bf16.msra.mxu0 0
  %129 = vmatprep.subr.bf16.mxu0 0
  %130 = vmatpush1.bf16.msra.mxu0 0
  %131 = vmatprep.subr.bf16.mxu0 0
  %132 = vmatpush1.bf16.msra.mxu0 0
  %133 = vmatprep.subr.bf16.mxu0 0
  %134 = vmatpush1.bf16.msra.mxu0 0
  %135 = vmatprep.subr.bf16.mxu0 0
  %136 = vmatpush1.bf16.msra.mxu0 0
  %137 = vmatprep.subr.bf16.mxu0 0
  %138 = vmatpush1.bf16.msra.mxu0 0
  %139 = vmatprep.subr.bf16.mxu0 0
  %140 = vmatpush1.bf16.msra.mxu0 0
  %141 = vmatprep.subr.bf16.mxu0 0
  %142 = vmatpush1.bf16.msra.mxu0 0
  %143 = vmatprep.mubr.bf16.mxu0 0
  %144 = vmatmul.mubr.bf16.gmra.mrb[0].mxu0 %v96
  %v145 = vpop.f32.mrb[0].mxu0
  %v146 = vadd.f32 0.0, %v145
  %v147 = vpop.f32.mrb[0].mxu0
  %v148 = vpop.f32.mrb[0].mxu0
  %v149 = vadd.f32 0.0, %v148
  %v150 = vpop.f32.mrb[0].mxu0
  %151 = vmatprep.mubr.bf16.mxu0 0
  %152 = vmatmul.mubr.bf16.gmra.mrb[0].mxu0 %v99
  %v153 = vpop.f32.mrb[0].mxu0
  %v154 = vadd.f32 0.0, %v153
  %v155 = vpop.f32.mrb[0].mxu0
  %v156 = vpop.f32.mrb[0].mxu0
  %v157 = vadd.f32 0.0, %v156
  %v158 = vpop.f32.mrb[0].mxu0
  %159 = vmatprep.mubr.bf16.mxu0 0
  %160 = vmatmul.mubr.bf16.gmra.mrb[0].mxu0 %v102
  %v161 = vpop.f32.mrb[0].mxu0
  %v162 = vadd.f32 0.0, %v161
  %v163 = vpop.f32.mrb[0].mxu0
  %v164 = vpop.f32.mrb[0].mxu0
  %v165 = vadd.f32 0.0, %v164
  %v166 = vpop.f32.mrb[0].mxu0
  %167 = vmatprep.mubr.bf16.mxu0 0
  %168 = vmatmul.mubr.bf16.gmra.mrb[0].mxu0 %v105
  %v169 = vpop.f32.mrb[0].mxu0
  %v170 = vadd.f32 0.0, %v169
  %v171 = vpop.f32.mrb[0].mxu0
  %v172 = vpop.f32.mrb[0].mxu0
  %v173 = vadd.f32 0.0, %v172
  %v174 = vpop.f32.mrb[0].mxu0
  %175 = vdwg.mxu0
  %v184 = vunpack.c.l.b16 %v33
  %v185 = vunpack.c.l.b16 %v34
  %v186 = vunpack.c.l.b16 %v35
  %v187 = vunpack.c.l.b16 %v36
  %v188 = vunpack.c.l.b16 %v37
  %v189 = vunpack.c.l.b16 %v38
  %v190 = vunpack.c.l.b16 %v39
  %v191 = vunpack.c.l.b16 %v40
  %v192 = vpack.c.b16 %v185, %v184
  %v193 = vpack.c.b16 %v187, %v186
  %v194 = vpack.c.b16 %v189, %v188
  %v195 = vpack.c.b16 %v191, %v190
  %v198 = vunpack.c.l.b16 %v65
  %v199 = vunpack.c.l.b16 %v66
  %v200 = vpack.c.b16 %v199, %v198
  %vm202 = vcmask 130048
  %v204 = vsel %vm202, %v192, 0
  %v207 = vsel %vm202, %v193, 0
  %v210 = vsel %vm202, %v194, 0
  %v213 = vsel %vm202, %v195, 0
  %215 = vmatprep.subr.bf16.mxu0 0
  %216 = vmatpush1.bf16.msra.mxu0 %v200
  %217 = vmatprep.subr.bf16.mxu0 0
  %218 = vmatpush1.bf16.msra.mxu0 0
  %219 = vmatprep.subr.bf16.mxu0 0
  %220 = vmatpush1.bf16.msra.mxu0 0
  %221 = vmatprep.subr.bf16.mxu0 0
  %222 = vmatpush1.bf16.msra.mxu0 0
  %223 = vmatprep.subr.bf16.mxu0 0
  %224 = vmatpush1.bf16.msra.mxu0 0
  %225 = vmatprep.subr.bf16.mxu0 0
  %226 = vmatpush1.bf16.msra.mxu0 0
  %227 = vmatprep.subr.bf16.mxu0 0
  %228 = vmatpush1.bf16.msra.mxu0 0
  %229 = vmatprep.subr.bf16.mxu0 0
  %230 = vmatpush1.bf16.msra.mxu0 0
  %231 = vmatprep.subr.bf16.mxu0 0
  %232 = vmatpush1.bf16.msra.mxu0 0
  %233 = vmatprep.subr.bf16.mxu0 0
  %234 = vmatpush1.bf16.msra.mxu0 0
  %235 = vmatprep.subr.bf16.mxu0 0
  %236 = vmatpush1.bf16.msra.mxu0 0
  %237 = vmatprep.subr.bf16.mxu0 0
  %238 = vmatpush1.bf16.msra.mxu0 0
  %239 = vmatprep.subr.bf16.mxu0 0
  %240 = vmatpush1.bf16.msra.mxu0 0
  %241 = vmatprep.subr.bf16.mxu0 0
  %242 = vmatpush1.bf16.msra.mxu0 0
  %243 = vmatprep.subr.bf16.mxu0 0
  %244 = vmatpush1.bf16.msra.mxu0 0
  %245 = vmatprep.subr.bf16.mxu0 0
  %246 = vmatpush1.bf16.msra.mxu0 0
  %247 = vmatprep.mubr.bf16.mxu0 0
  %248 = vmatmul.mubr.bf16.gmra.mrb[0].mxu0 %v204
  %v249 = vpop.f32.mrb[0].mxu0
  %v250 = vadd.f32 %v146, %v249
  %v251 = vpop.f32.mrb[0].mxu0
  %v252 = vpop.f32.mrb[0].mxu0
  %v253 = vadd.f32 %v149, %v252
  %v254 = vpop.f32.mrb[0].mxu0
  %255 = vmatprep.mubr.bf16.mxu0 0
  %256 = vmatmul.mubr.bf16.gmra.mrb[0].mxu0 %v207
  %v257 = vpop.f32.mrb[0].mxu0
  %v258 = vadd.f32 %v154, %v257
  %v259 = vpop.f32.mrb[0].mxu0
  %v260 = vpop.f32.mrb[0].mxu0
  %v261 = vadd.f32 %v157, %v260
  %v262 = vpop.f32.mrb[0].mxu0
  %263 = vmatprep.mubr.bf16.mxu0 0
  %264 = vmatmul.mubr.bf16.gmra.mrb[0].mxu0 %v210
  %v265 = vpop.f32.mrb[0].mxu0
  %v266 = vadd.f32 %v162, %v265
  %v267 = vpop.f32.mrb[0].mxu0
  %v268 = vpop.f32.mrb[0].mxu0
  %v269 = vadd.f32 %v165, %v268
  %v270 = vpop.f32.mrb[0].mxu0
  %271 = vmatprep.mubr.bf16.mxu0 0
  %272 = vmatmul.mubr.bf16.gmra.mrb[0].mxu0 %v213
  %v273 = vpop.f32.mrb[0].mxu0
  %v274 = vadd.f32 %v170, %v273
  %v275 = vpop.f32.mrb[0].mxu0
  %v276 = vpop.f32.mrb[0].mxu0
  %v277 = vadd.f32 %v173, %v276
  %v278 = vpop.f32.mrb[0].mxu0
  %279 = vdwg.mxu0
  %v288 = vunpack.c.l.b16 %v49
  %v289 = vunpack.c.l.b16 %v50
  %v290 = vunpack.c.l.b16 %v51
  %v291 = vunpack.c.l.b16 %v52
  %v292 = vunpack.c.l.b16 %v53
  %v293 = vunpack.c.l.b16 %v54
  %v294 = vunpack.c.l.b16 %v55
  %v295 = vunpack.c.l.b16 %v56
  %v296 = vpack.c.b16 %v289, %v288
  %v297 = vpack.c.b16 %v291, %v290
  %v298 = vpack.c.b16 %v293, %v292
  %v299 = vpack.c.b16 %v295, %v294
  %v301 = vsel %vm94, %v296, 0
  %v304 = vsel %vm94, %v297, 0
  %v307 = vsel %vm94, %v298, 0
  %v310 = vsel %vm94, %v299, 0
  %312 = vmatprep.subr.bf16.mxu0 0
  %313 = vmatpush1.bf16.msra.mxu0 %v109
  %314 = vmatprep.subr.bf16.mxu0 0
  %315 = vmatpush1.bf16.msra.mxu0 0
  %316 = vmatprep.subr.bf16.mxu0 0
  %317 = vmatpush1.bf16.msra.mxu0 0
  %318 = vmatprep.subr.bf16.mxu0 0
  %319 = vmatpush1.bf16.msra.mxu0 0
  %320 = vmatprep.subr.bf16.mxu0 0
  %321 = vmatpush1.bf16.msra.mxu0 0
  %322 = vmatprep.subr.bf16.mxu0 0
  %323 = vmatpush1.bf16.msra.mxu0 0
  %324 = vmatprep.subr.bf16.mxu0 0
  %325 = vmatpush1.bf16.msra.mxu0 0
  %326 = vmatprep.subr.bf16.mxu0 0
  %327 = vmatpush1.bf16.msra.mxu0 0
  %328 = vmatprep.subr.bf16.mxu0 0
  %329 = vmatpush1.bf16.msra.mxu0 0
  %330 = vmatprep.subr.bf16.mxu0 0
  %331 = vmatpush1.bf16.msra.mxu0 0
  %332 = vmatprep.subr.bf16.mxu0 0
  %333 = vmatpush1.bf16.msra.mxu0 0
  %334 = vmatprep.subr.bf16.mxu0 0
  %335 = vmatpush1.bf16.msra.mxu0 0
  %336 = vmatprep.subr.bf16.mxu0 0
  %337 = vmatpush1.bf16.msra.mxu0 0
  %338 = vmatprep.subr.bf16.mxu0 0
  %339 = vmatpush1.bf16.msra.mxu0 0
  %340 = vmatprep.subr.bf16.mxu0 0
  %341 = vmatpush1.bf16.msra.mxu0 0
  %342 = vmatprep.subr.bf16.mxu0 0
  %343 = vmatpush1.bf16.msra.mxu0 0
  %344 = vmatprep.mubr.bf16.mxu0 0
  %345 = vmatmul.mubr.bf16.gmra.mrb[0].mxu0 %v301
  %v346 = vpop.f32.mrb[0].mxu0
  %v347 = vadd.f32 0.0, %v346
  %v348 = vpop.f32.mrb[0].mxu0
  %v349 = vpop.f32.mrb[0].mxu0
  %v350 = vadd.f32 0.0, %v349
  %v351 = vpop.f32.mrb[0].mxu0
  %352 = vmatprep.mubr.bf16.mxu0 0
  %353 = vmatmul.mubr.bf16.gmra.mrb[0].mxu0 %v304
  %v354 = vpop.f32.mrb[0].mxu0
  %v355 = vadd.f32 0.0, %v354
  %v356 = vpop.f32.mrb[0].mxu0
  %v357 = vpop.f32.mrb[0].mxu0
  %v358 = vadd.f32 0.0, %v357
  %v359 = vpop.f32.mrb[0].mxu0
  %360 = vmatprep.mubr.bf16.mxu0 0
  %361 = vmatmul.mubr.bf16.gmra.mrb[0].mxu0 %v307
  %v362 = vpop.f32.mrb[0].mxu0
  %v363 = vadd.f32 0.0, %v362
  %v364 = vpop.f32.mrb[0].mxu0
  %v365 = vpop.f32.mrb[0].mxu0
  %v366 = vadd.f32 0.0, %v365
  %v367 = vpop.f32.mrb[0].mxu0
  %368 = vmatprep.mubr.bf16.mxu0 0
  %369 = vmatmul.mubr.bf16.gmra.mrb[0].mxu0 %v310
  %v370 = vpop.f32.mrb[0].mxu0
  %v371 = vadd.f32 0.0, %v370
  %v372 = vpop.f32.mrb[0].mxu0
  %v373 = vpop.f32.mrb[0].mxu0
  %v374 = vadd.f32 0.0, %v373
  %v375 = vpop.f32.mrb[0].mxu0
  %376 = vdwg.mxu0
  %v378 = vlaneseq
  %v379 = vshrl.u32 %v378, 7
  %v380 = vsub.s32 0, %v379
  %v381 = vrot.slane %v68, %v380
  %v383 = vsub.f32 %v381, %v347
  %v384 = vsub.f32 %v381, %v350
  %v385 = vsub.f32 %v381, %v355
  %v386 = vsub.f32 %v381, %v358
  %v387 = vsub.f32 %v381, %v363
  %v388 = vsub.f32 %v381, %v366
  %v389 = vsub.f32 %v381, %v371
  %v390 = vsub.f32 %v381, %v374
  %v399 = vcombine.high %v383, %v383
  %v401 = vunpack.c.l.s4 1966171168
  %v402 = vunpack.c.0.s8 %v401
  %v403 = vlaneseq
  %v404 = vshrl.u32 %v403, 7
  %v405 = vsub.s32 %v402, %v404
  %v406 = vrot.slane %v383, %v405
  %v408 = vunpack.c.l.s4 1966171168
  %v409 = vunpack.c.0.s8 %v408
  %v410 = vlaneseq
  %v411 = vshrl.u32 %v410, 7
  %v412 = vsub.s32 %v409, %v411
  %v413 = vrot.slane %v399, %v412
  %v414 = vcombine.high %v406, %v406
  %v415 = vcombine.high %v413, %v413
  %v417 = vunpack.c.l.s4 1966171168
  %v418 = vunpack.c.0.s8 %v417
  %v419 = vlaneseq
  %v420 = vshrl.u32 %v419, 7
  %v421 = vsub.s32 %v418, %v420
  %v422 = vrot.slane %v406, %v421
  %v424 = vunpack.c.l.s4 1966171168
  %v425 = vunpack.c.0.s8 %v424
  %v426 = vlaneseq
  %v427 = vshrl.u32 %v426, 7
  %v428 = vsub.s32 %v425, %v427
  %v429 = vrot.slane %v413, %v428
  %v431 = vunpack.c.l.s4 1966171168
  %v432 = vunpack.c.0.s8 %v431
  %v433 = vlaneseq
  %v434 = vshrl.u32 %v433, 7
  %v435 = vsub.s32 %v432, %v434
  %v436 = vrot.slane %v414, %v435
  %v438 = vunpack.c.l.s4 1966171168
  %v439 = vunpack.c.0.s8 %v438
  %v440 = vlaneseq
  %v441 = vshrl.u32 %v440, 7
  %v442 = vsub.s32 %v439, %v441
  %v443 = vrot.slane %v415, %v442
  %v444 = vcombine.high %v422, %v422
  %v445 = vcombine.high %v429, %v429
  %v446 = vcombine.high %v436, %v436
  %v447 = vcombine.high %v443, %v443
  %v448 = vcombine.high %v384, %v384
  %v450 = vunpack.c.l.s4 1966171168
  %v451 = vunpack.c.0.s8 %v450
  %v452 = vlaneseq
  %v453 = vshrl.u32 %v452, 7
  %v454 = vsub.s32 %v451, %v453
  %v455 = vrot.slane %v384, %v454
  %v457 = vunpack.c.l.s4 1966171168
  %v458 = vunpack.c.0.s8 %v457
  %v459 = vlaneseq
  %v460 = vshrl.u32 %v459, 7
  %v461 = vsub.s32 %v458, %v460
  %v462 = vrot.slane %v448, %v461
  %v463 = vcombine.high %v455, %v455
  %v464 = vcombine.high %v462, %v462
  %v466 = vunpack.c.l.s4 1966171168
  %v467 = vunpack.c.0.s8 %v466
  %v468 = vlaneseq
  %v469 = vshrl.u32 %v468, 7
  %v470 = vsub.s32 %v467, %v469
  %v471 = vrot.slane %v455, %v470
  %v473 = vunpack.c.l.s4 1966171168
  %v474 = vunpack.c.0.s8 %v473
  %v475 = vlaneseq
  %v476 = vshrl.u32 %v475, 7
  %v477 = vsub.s32 %v474, %v476
  %v478 = vrot.slane %v462, %v477
  %v480 = vunpack.c.l.s4 1966171168
  %v481 = vunpack.c.0.s8 %v480
  %v482 = vlaneseq
  %v483 = vshrl.u32 %v482, 7
  %v484 = vsub.s32 %v481, %v483
  %v485 = vrot.slane %v463, %v484
  %v487 = vunpack.c.l.s4 1966171168
  %v488 = vunpack.c.0.s8 %v487
  %v489 = vlaneseq
  %v490 = vshrl.u32 %v489, 7
  %v491 = vsub.s32 %v488, %v490
  %v492 = vrot.slane %v464, %v491
  %v493 = vcombine.high %v471, %v471
  %v494 = vcombine.high %v478, %v478
  %v495 = vcombine.high %v485, %v485
  %v496 = vcombine.high %v492, %v492
  %v497 = vcombine.high %v385, %v385
  %v499 = vunpack.c.l.s4 1966171168
  %v500 = vunpack.c.0.s8 %v499
  %v501 = vlaneseq
  %v502 = vshrl.u32 %v501, 7
  %v503 = vsub.s32 %v500, %v502
  %v504 = vrot.slane %v385, %v503
  %v506 = vunpack.c.l.s4 1966171168
  %v507 = vunpack.c.0.s8 %v506
  %v508 = vlaneseq
  %v509 = vshrl.u32 %v508, 7
  %v510 = vsub.s32 %v507, %v509
  %v511 = vrot.slane %v497, %v510
  %v512 = vcombine.high %v504, %v504
  %v513 = vcombine.high %v511, %v511
  %v515 = vunpack.c.l.s4 1966171168
  %v516 = vunpack.c.0.s8 %v515
  %v517 = vlaneseq
  %v518 = vshrl.u32 %v517, 7
  %v519 = vsub.s32 %v516, %v518
  %v520 = vrot.slane %v504, %v519
  %v522 = vunpack.c.l.s4 1966171168
  %v523 = vunpack.c.0.s8 %v522
  %v524 = vlaneseq
  %v525 = vshrl.u32 %v524, 7
  %v526 = vsub.s32 %v523, %v525
  %v527 = vrot.slane %v511, %v526
  %v529 = vunpack.c.l.s4 1966171168
  %v530 = vunpack.c.0.s8 %v529
  %v531 = vlaneseq
  %v532 = vshrl.u32 %v531, 7
  %v533 = vsub.s32 %v530, %v532
  %v534 = vrot.slane %v512, %v533
  %v536 = vunpack.c.l.s4 1966171168
  %v537 = vunpack.c.0.s8 %v536
  %v538 = vlaneseq
  %v539 = vshrl.u32 %v538, 7
  %v540 = vsub.s32 %v537, %v539
  %v541 = vrot.slane %v513, %v540
  %v542 = vcombine.high %v520, %v520
  %v543 = vcombine.high %v527, %v527
  %v544 = vcombine.high %v534, %v534
  %v545 = vcombine.high %v541, %v541
  %v546 = vcombine.high %v386, %v386
  %v548 = vunpack.c.l.s4 1966171168
  %v549 = vunpack.c.0.s8 %v548
  %v550 = vlaneseq
  %v551 = vshrl.u32 %v550, 7
  %v552 = vsub.s32 %v549, %v551
  %v553 = vrot.slane %v386, %v552
  %v555 = vunpack.c.l.s4 1966171168
  %v556 = vunpack.c.0.s8 %v555
  %v557 = vlaneseq
  %v558 = vshrl.u32 %v557, 7
  %v559 = vsub.s32 %v556, %v558
  %v560 = vrot.slane %v546, %v559
  %v561 = vcombine.high %v553, %v553
  %v562 = vcombine.high %v560, %v560
  %v564 = vunpack.c.l.s4 1966171168
  %v565 = vunpack.c.0.s8 %v564
  %v566 = vlaneseq
  %v567 = vshrl.u32 %v566, 7
  %v568 = vsub.s32 %v565, %v567
  %v569 = vrot.slane %v553, %v568
  %v571 = vunpack.c.l.s4 1966171168
  %v572 = vunpack.c.0.s8 %v571
  %v573 = vlaneseq
  %v574 = vshrl.u32 %v573, 7
  %v575 = vsub.s32 %v572, %v574
  %v576 = vrot.slane %v560, %v575
  %v578 = vunpack.c.l.s4 1966171168
  %v579 = vunpack.c.0.s8 %v578
  %v580 = vlaneseq
  %v581 = vshrl.u32 %v580, 7
  %v582 = vsub.s32 %v579, %v581
  %v583 = vrot.slane %v561, %v582
  %v585 = vunpack.c.l.s4 1966171168
  %v586 = vunpack.c.0.s8 %v585
  %v587 = vlaneseq
  %v588 = vshrl.u32 %v587, 7
  %v589 = vsub.s32 %v586, %v588
  %v590 = vrot.slane %v562, %v589
  %v591 = vcombine.high %v569, %v569
  %v592 = vcombine.high %v576, %v576
  %v593 = vcombine.high %v583, %v583
  %v594 = vcombine.high %v590, %v590
  %v595 = vcombine.high %v387, %v387
  %v597 = vunpack.c.l.s4 1966171168
  %v598 = vunpack.c.0.s8 %v597
  %v599 = vlaneseq
  %v600 = vshrl.u32 %v599, 7
  %v601 = vsub.s32 %v598, %v600
  %v602 = vrot.slane %v387, %v601
  %v604 = vunpack.c.l.s4 1966171168
  %v605 = vunpack.c.0.s8 %v604
  %v606 = vlaneseq
  %v607 = vshrl.u32 %v606, 7
  %v608 = vsub.s32 %v605, %v607
  %v609 = vrot.slane %v595, %v608
  %v610 = vcombine.high %v602, %v602
  %v611 = vcombine.high %v609, %v609
  %v613 = vunpack.c.l.s4 1966171168
  %v614 = vunpack.c.0.s8 %v613
  %v615 = vlaneseq
  %v616 = vshrl.u32 %v615, 7
  %v617 = vsub.s32 %v614, %v616
  %v618 = vrot.slane %v602, %v617
  %v620 = vunpack.c.l.s4 1966171168
  %v621 = vunpack.c.0.s8 %v620
  %v622 = vlaneseq
  %v623 = vshrl.u32 %v622, 7
  %v624 = vsub.s32 %v621, %v623
  %v625 = vrot.slane %v609, %v624
  %v627 = vunpack.c.l.s4 1966171168
  %v628 = vunpack.c.0.s8 %v627
  %v629 = vlaneseq
  %v630 = vshrl.u32 %v629, 7
  %v631 = vsub.s32 %v628, %v630
  %v632 = vrot.slane %v610, %v631
  %v634 = vunpack.c.l.s4 1966171168
  %v635 = vunpack.c.0.s8 %v634
  %v636 = vlaneseq
  %v637 = vshrl.u32 %v636, 7
  %v638 = vsub.s32 %v635, %v637
  %v639 = vrot.slane %v611, %v638
  %v640 = vcombine.high %v618, %v618
  %v641 = vcombine.high %v625, %v625
  %v642 = vcombine.high %v632, %v632
  %v643 = vcombine.high %v639, %v639
  %v644 = vcombine.high %v388, %v388
  %v646 = vunpack.c.l.s4 1966171168
  %v647 = vunpack.c.0.s8 %v646
  %v648 = vlaneseq
  %v649 = vshrl.u32 %v648, 7
  %v650 = vsub.s32 %v647, %v649
  %v651 = vrot.slane %v388, %v650
  %v653 = vunpack.c.l.s4 1966171168
  %v654 = vunpack.c.0.s8 %v653
  %v655 = vlaneseq
  %v656 = vshrl.u32 %v655, 7
  %v657 = vsub.s32 %v654, %v656
  %v658 = vrot.slane %v644, %v657
  %v659 = vcombine.high %v651, %v651
  %v660 = vcombine.high %v658, %v658
  %v662 = vunpack.c.l.s4 1966171168
  %v663 = vunpack.c.0.s8 %v662
  %v664 = vlaneseq
  %v665 = vshrl.u32 %v664, 7
  %v666 = vsub.s32 %v663, %v665
  %v667 = vrot.slane %v651, %v666
  %v669 = vunpack.c.l.s4 1966171168
  %v670 = vunpack.c.0.s8 %v669
  %v671 = vlaneseq
  %v672 = vshrl.u32 %v671, 7
  %v673 = vsub.s32 %v670, %v672
  %v674 = vrot.slane %v658, %v673
  %v676 = vunpack.c.l.s4 1966171168
  %v677 = vunpack.c.0.s8 %v676
  %v678 = vlaneseq
  %v679 = vshrl.u32 %v678, 7
  %v680 = vsub.s32 %v677, %v679
  %v681 = vrot.slane %v659, %v680
  %v683 = vunpack.c.l.s4 1966171168
  %v684 = vunpack.c.0.s8 %v683
  %v685 = vlaneseq
  %v686 = vshrl.u32 %v685, 7
  %v687 = vsub.s32 %v684, %v686
  %v688 = vrot.slane %v660, %v687
  %v689 = vcombine.high %v667, %v667
  %v690 = vcombine.high %v674, %v674
  %v691 = vcombine.high %v681, %v681
  %v692 = vcombine.high %v688, %v688
  %v693 = vcombine.high %v389, %v389
  %v695 = vunpack.c.l.s4 1966171168
  %v696 = vunpack.c.0.s8 %v695
  %v697 = vlaneseq
  %v698 = vshrl.u32 %v697, 7
  %v699 = vsub.s32 %v696, %v698
  %v700 = vrot.slane %v389, %v699
  %v702 = vunpack.c.l.s4 1966171168
  %v703 = vunpack.c.0.s8 %v702
  %v704 = vlaneseq
  %v705 = vshrl.u32 %v704, 7
  %v706 = vsub.s32 %v703, %v705
  %v707 = vrot.slane %v693, %v706
  %v708 = vcombine.high %v700, %v700
  %v709 = vcombine.high %v707, %v707
  %v711 = vunpack.c.l.s4 1966171168
  %v712 = vunpack.c.0.s8 %v711
  %v713 = vlaneseq
  %v714 = vshrl.u32 %v713, 7
  %v715 = vsub.s32 %v712, %v714
  %v716 = vrot.slane %v700, %v715
  %v718 = vunpack.c.l.s4 1966171168
  %v719 = vunpack.c.0.s8 %v718
  %v720 = vlaneseq
  %v721 = vshrl.u32 %v720, 7
  %v722 = vsub.s32 %v719, %v721
  %v723 = vrot.slane %v707, %v722
  %v725 = vunpack.c.l.s4 1966171168
  %v726 = vunpack.c.0.s8 %v725
  %v727 = vlaneseq
  %v728 = vshrl.u32 %v727, 7
  %v729 = vsub.s32 %v726, %v728
  %v730 = vrot.slane %v708, %v729
  %v732 = vunpack.c.l.s4 1966171168
  %v733 = vunpack.c.0.s8 %v732
  %v734 = vlaneseq
  %v735 = vshrl.u32 %v734, 7
  %v736 = vsub.s32 %v733, %v735
  %v737 = vrot.slane %v709, %v736
  %v738 = vcombine.high %v716, %v716
  %v739 = vcombine.high %v723, %v723
  %v740 = vcombine.high %v730, %v730
  %v741 = vcombine.high %v737, %v737
  %v742 = vcombine.high %v390, %v390
  %v744 = vunpack.c.l.s4 1966171168
  %v745 = vunpack.c.0.s8 %v744
  %v746 = vlaneseq
  %v747 = vshrl.u32 %v746, 7
  %v748 = vsub.s32 %v745, %v747
  %v749 = vrot.slane %v390, %v748
  %v751 = vunpack.c.l.s4 1966171168
  %v752 = vunpack.c.0.s8 %v751
  %v753 = vlaneseq
  %v754 = vshrl.u32 %v753, 7
  %v755 = vsub.s32 %v752, %v754
  %v756 = vrot.slane %v742, %v755
  %v757 = vcombine.high %v749, %v749
  %v758 = vcombine.high %v756, %v756
  %v760 = vunpack.c.l.s4 1966171168
  %v761 = vunpack.c.0.s8 %v760
  %v762 = vlaneseq
  %v763 = vshrl.u32 %v762, 7
  %v764 = vsub.s32 %v761, %v763
  %v765 = vrot.slane %v749, %v764
  %v767 = vunpack.c.l.s4 1966171168
  %v768 = vunpack.c.0.s8 %v767
  %v769 = vlaneseq
  %v770 = vshrl.u32 %v769, 7
  %v771 = vsub.s32 %v768, %v770
  %v772 = vrot.slane %v756, %v771
  %v774 = vunpack.c.l.s4 1966171168
  %v775 = vunpack.c.0.s8 %v774
  %v776 = vlaneseq
  %v777 = vshrl.u32 %v776, 7
  %v778 = vsub.s32 %v775, %v777
  %v779 = vrot.slane %v757, %v778
  %v781 = vunpack.c.l.s4 1966171168
  %v782 = vunpack.c.0.s8 %v781
  %v783 = vlaneseq
  %v784 = vshrl.u32 %v783, 7
  %v785 = vsub.s32 %v782, %v784
  %v786 = vrot.slane %v758, %v785
  %v787 = vcombine.high %v765, %v765
  %v788 = vcombine.high %v772, %v772
  %v789 = vcombine.high %v779, %v779
  %v790 = vcombine.high %v786, %v786
  %v791 = vlaneseq
  %v792 = vshrl.u32 %v791, 7
  %v793 = vsub.s32 0, %v792
  %v794 = vrot.slane %v422, %v793
  %v795 = vlaneseq
  %v796 = vshrl.u32 %v795, 7
  %v797 = vsub.s32 0, %v796
  %v798 = vrot.slane %v436, %v797
  %v799 = vlaneseq
  %v800 = vshrl.u32 %v799, 7
  %v801 = vsub.s32 0, %v800
  %v802 = vrot.slane %v444, %v801
  %v803 = vlaneseq
  %v804 = vshrl.u32 %v803, 7
  %v805 = vsub.s32 0, %v804
  %v806 = vrot.slane %v446, %v805
  %v807 = vlaneseq
  %v808 = vshrl.u32 %v807, 7
  %v809 = vsub.s32 0, %v808
  %v810 = vrot.slane %v429, %v809
  %v811 = vlaneseq
  %v812 = vshrl.u32 %v811, 7
  %v813 = vsub.s32 0, %v812
  %v814 = vrot.slane %v443, %v813
  %v815 = vlaneseq
  %v816 = vshrl.u32 %v815, 7
  %v817 = vsub.s32 0, %v816
  %v818 = vrot.slane %v445, %v817
  %v819 = vlaneseq
  %v820 = vshrl.u32 %v819, 7
  %v821 = vsub.s32 0, %v820
  %v822 = vrot.slane %v447, %v821
  %v823 = vlaneseq
  %v824 = vshrl.u32 %v823, 7
  %v825 = vsub.s32 0, %v824
  %v826 = vrot.slane %v471, %v825
  %v827 = vlaneseq
  %v828 = vshrl.u32 %v827, 7
  %v829 = vsub.s32 0, %v828
  %v830 = vrot.slane %v485, %v829
  %v831 = vlaneseq
  %v832 = vshrl.u32 %v831, 7
  %v833 = vsub.s32 0, %v832
  %v834 = vrot.slane %v493, %v833
  %v835 = vlaneseq
  %v836 = vshrl.u32 %v835, 7
  %v837 = vsub.s32 0, %v836
  %v838 = vrot.slane %v495, %v837
  %v839 = vlaneseq
  %v840 = vshrl.u32 %v839, 7
  %v841 = vsub.s32 0, %v840
  %v842 = vrot.slane %v478, %v841
  %v843 = vlaneseq
  %v844 = vshrl.u32 %v843, 7
  %v845 = vsub.s32 0, %v844
  %v846 = vrot.slane %v492, %v845
  %v847 = vlaneseq
  %v848 = vshrl.u32 %v847, 7
  %v849 = vsub.s32 0, %v848
  %v850 = vrot.slane %v494, %v849
  %v851 = vlaneseq
  %v852 = vshrl.u32 %v851, 7
  %v853 = vsub.s32 0, %v852
  %v854 = vrot.slane %v496, %v853
  %v855 = vlaneseq
  %v856 = vshrl.u32 %v855, 7
  %v857 = vsub.s32 0, %v856
  %v858 = vrot.slane %v520, %v857
  %v859 = vlaneseq
  %v860 = vshrl.u32 %v859, 7
  %v861 = vsub.s32 0, %v860
  %v862 = vrot.slane %v534, %v861
  %v863 = vlaneseq
  %v864 = vshrl.u32 %v863, 7
  %v865 = vsub.s32 0, %v864
  %v866 = vrot.slane %v542, %v865
  %v867 = vlaneseq
  %v868 = vshrl.u32 %v867, 7
  %v869 = vsub.s32 0, %v868
  %v870 = vrot.slane %v544, %v869
  %v871 = vlaneseq
  %v872 = vshrl.u32 %v871, 7
  %v873 = vsub.s32 0, %v872
  %v874 = vrot.slane %v527, %v873
  %v875 = vlaneseq
  %v876 = vshrl.u32 %v875, 7
  %v877 = vsub.s32 0, %v876
  %v878 = vrot.slane %v541, %v877
  %v879 = vlaneseq
  %v880 = vshrl.u32 %v879, 7
  %v881 = vsub.s32 0, %v880
  %v882 = vrot.slane %v543, %v881
  %v883 = vlaneseq
  %v884 = vshrl.u32 %v883, 7
  %v885 = vsub.s32 0, %v884
  %v886 = vrot.slane %v545, %v885
  %v887 = vlaneseq
  %v888 = vshrl.u32 %v887, 7
  %v889 = vsub.s32 0, %v888
  %v890 = vrot.slane %v569, %v889
  %v891 = vlaneseq
  %v892 = vshrl.u32 %v891, 7
  %v893 = vsub.s32 0, %v892
  %v894 = vrot.slane %v583, %v893
  %v895 = vlaneseq
  %v896 = vshrl.u32 %v895, 7
  %v897 = vsub.s32 0, %v896
  %v898 = vrot.slane %v591, %v897
  %v899 = vlaneseq
  %v900 = vshrl.u32 %v899, 7
  %v901 = vsub.s32 0, %v900
  %v902 = vrot.slane %v593, %v901
  %v903 = vlaneseq
  %v904 = vshrl.u32 %v903, 7
  %v905 = vsub.s32 0, %v904
  %v906 = vrot.slane %v576, %v905
  %v907 = vlaneseq
  %v908 = vshrl.u32 %v907, 7
  %v909 = vsub.s32 0, %v908
  %v910 = vrot.slane %v590, %v909
  %v911 = vlaneseq
  %v912 = vshrl.u32 %v911, 7
  %v913 = vsub.s32 0, %v912
  %v914 = vrot.slane %v592, %v913
  %v915 = vlaneseq
  %v916 = vshrl.u32 %v915, 7
  %v917 = vsub.s32 0, %v916
  %v918 = vrot.slane %v594, %v917
  %v919 = vlaneseq
  %v920 = vshrl.u32 %v919, 7
  %v921 = vsub.s32 0, %v920
  %v922 = vrot.slane %v618, %v921
  %v923 = vlaneseq
  %v924 = vshrl.u32 %v923, 7
  %v925 = vsub.s32 0, %v924
  %v926 = vrot.slane %v632, %v925
  %v927 = vlaneseq
  %v928 = vshrl.u32 %v927, 7
  %v929 = vsub.s32 0, %v928
  %v930 = vrot.slane %v640, %v929
  %v931 = vlaneseq
  %v932 = vshrl.u32 %v931, 7
  %v933 = vsub.s32 0, %v932
  %v934 = vrot.slane %v642, %v933
  %v935 = vlaneseq
  %v936 = vshrl.u32 %v935, 7
  %v937 = vsub.s32 0, %v936
  %v938 = vrot.slane %v625, %v937
  %v939 = vlaneseq
  %v940 = vshrl.u32 %v939, 7
  %v941 = vsub.s32 0, %v940
  %v942 = vrot.slane %v639, %v941
  %v943 = vlaneseq
  %v944 = vshrl.u32 %v943, 7
  %v945 = vsub.s32 0, %v944
  %v946 = vrot.slane %v641, %v945
  %v947 = vlaneseq
  %v948 = vshrl.u32 %v947, 7
  %v949 = vsub.s32 0, %v948
  %v950 = vrot.slane %v643, %v949
  %v951 = vlaneseq
  %v952 = vshrl.u32 %v951, 7
  %v953 = vsub.s32 0, %v952
  %v954 = vrot.slane %v667, %v953
  %v955 = vlaneseq
  %v956 = vshrl.u32 %v955, 7
  %v957 = vsub.s32 0, %v956
  %v958 = vrot.slane %v681, %v957
  %v959 = vlaneseq
  %v960 = vshrl.u32 %v959, 7
  %v961 = vsub.s32 0, %v960
  %v962 = vrot.slane %v689, %v961
  %v963 = vlaneseq
  %v964 = vshrl.u32 %v963, 7
  %v965 = vsub.s32 0, %v964
  %v966 = vrot.slane %v691, %v965
  %v967 = vlaneseq
  %v968 = vshrl.u32 %v967, 7
  %v969 = vsub.s32 0, %v968
  %v970 = vrot.slane %v674, %v969
  %v971 = vlaneseq
  %v972 = vshrl.u32 %v971, 7
  %v973 = vsub.s32 0, %v972
  %v974 = vrot.slane %v688, %v973
  %v975 = vlaneseq
  %v976 = vshrl.u32 %v975, 7
  %v977 = vsub.s32 0, %v976
  %v978 = vrot.slane %v690, %v977
  %v979 = vlaneseq
  %v980 = vshrl.u32 %v979, 7
  %v981 = vsub.s32 0, %v980
  %v982 = vrot.slane %v692, %v981
  %v983 = vlaneseq
  %v984 = vshrl.u32 %v983, 7
  %v985 = vsub.s32 0, %v984
  %v986 = vrot.slane %v716, %v985
  %v987 = vlaneseq
  %v988 = vshrl.u32 %v987, 7
  %v989 = vsub.s32 0, %v988
  %v990 = vrot.slane %v730, %v989
  %v991 = vlaneseq
  %v992 = vshrl.u32 %v991, 7
  %v993 = vsub.s32 0, %v992
  %v994 = vrot.slane %v738, %v993
  %v995 = vlaneseq
  %v996 = vshrl.u32 %v995, 7
  %v997 = vsub.s32 0, %v996
  %v998 = vrot.slane %v740, %v997
  %v999 = vlaneseq
  %v1000 = vshrl.u32 %v999, 7
  %v1001 = vsub.s32 0, %v1000
  %v1002 = vrot.slane %v723, %v1001
  %v1003 = vlaneseq
  %v1004 = vshrl.u32 %v1003, 7
  %v1005 = vsub.s32 0, %v1004
  %v1006 = vrot.slane %v737, %v1005
  %v1007 = vlaneseq
  %v1008 = vshrl.u32 %v1007, 7
  %v1009 = vsub.s32 0, %v1008
  %v1010 = vrot.slane %v739, %v1009
  %v1011 = vlaneseq
  %v1012 = vshrl.u32 %v1011, 7
  %v1013 = vsub.s32 0, %v1012
  %v1014 = vrot.slane %v741, %v1013
  %v1015 = vlaneseq
  %v1016 = vshrl.u32 %v1015, 7
  %v1017 = vsub.s32 0, %v1016
  %v1018 = vrot.slane %v765, %v1017
  %v1019 = vlaneseq
  %v1020 = vshrl.u32 %v1019, 7
  %v1021 = vsub.s32 0, %v1020
  %v1022 = vrot.slane %v779, %v1021
  %v1023 = vlaneseq
  %v1024 = vshrl.u32 %v1023, 7
  %v1025 = vsub.s32 0, %v1024
  %v1026 = vrot.slane %v787, %v1025
  %v1027 = vlaneseq
  %v1028 = vshrl.u32 %v1027, 7
  %v1029 = vsub.s32 0, %v1028
  %v1030 = vrot.slane %v789, %v1029
  %v1031 = vlaneseq
  %v1032 = vshrl.u32 %v1031, 7
  %v1033 = vsub.s32 0, %v1032
  %v1034 = vrot.slane %v772, %v1033
  %v1035 = vlaneseq
  %v1036 = vshrl.u32 %v1035, 7
  %v1037 = vsub.s32 0, %v1036
  %v1038 = vrot.slane %v786, %v1037
  %v1039 = vlaneseq
  %v1040 = vshrl.u32 %v1039, 7
  %v1041 = vsub.s32 0, %v1040
  %v1042 = vrot.slane %v788, %v1041
  %v1043 = vlaneseq
  %v1044 = vshrl.u32 %v1043, 7
  %v1045 = vsub.s32 0, %v1044
  %v1046 = vrot.slane %v790, %v1045
  %v1111 = vadd.f32 %v794, %v250
  %v1112 = vadd.f32 %v794, %v253
  %v1113 = vadd.f32 %v794, %v258
  %v1114 = vadd.f32 %v794, %v261
  %v1115 = vadd.f32 %v794, %v266
  %v1116 = vadd.f32 %v794, %v269
  %v1117 = vadd.f32 %v794, %v274
  %v1118 = vadd.f32 %v794, %v277
  %v1119 = vadd.f32 %v798, %v250
  %v1120 = vadd.f32 %v798, %v253
  %v1121 = vadd.f32 %v798, %v258
  %v1122 = vadd.f32 %v798, %v261
  %v1123 = vadd.f32 %v798, %v266
  %v1124 = vadd.f32 %v798, %v269
  %v1125 = vadd.f32 %v798, %v274
  %v1126 = vadd.f32 %v798, %v277
  %v1127 = vadd.f32 %v802, %v250
  %v1128 = vadd.f32 %v802, %v253
  %v1129 = vadd.f32 %v802, %v258
  %v1130 = vadd.f32 %v802, %v261
  %v1131 = vadd.f32 %v802, %v266
  %v1132 = vadd.f32 %v802, %v269
  %v1133 = vadd.f32 %v802, %v274
  %v1134 = vadd.f32 %v802, %v277
  %v1135 = vadd.f32 %v806, %v250
  %v1136 = vadd.f32 %v806, %v253
  %v1137 = vadd.f32 %v806, %v258
  %v1138 = vadd.f32 %v806, %v261
  %v1139 = vadd.f32 %v806, %v266
  %v1140 = vadd.f32 %v806, %v269
  %v1141 = vadd.f32 %v806, %v274
  %v1142 = vadd.f32 %v806, %v277
  %v1143 = vadd.f32 %v810, %v250
  %v1144 = vadd.f32 %v810, %v253
  %v1145 = vadd.f32 %v810, %v258
  %v1146 = vadd.f32 %v810, %v261
  %v1147 = vadd.f32 %v810, %v266
  %v1148 = vadd.f32 %v810, %v269
  %v1149 = vadd.f32 %v810, %v274
  %v1150 = vadd.f32 %v810, %v277
  %v1151 = vadd.f32 %v814, %v250
  %v1152 = vadd.f32 %v814, %v253
  %v1153 = vadd.f32 %v814, %v258
  %v1154 = vadd.f32 %v814, %v261
  %v1155 = vadd.f32 %v814, %v266
  %v1156 = vadd.f32 %v814, %v269
  %v1157 = vadd.f32 %v814, %v274
  %v1158 = vadd.f32 %v814, %v277
  %v1159 = vadd.f32 %v818, %v250
  %v1160 = vadd.f32 %v818, %v253
  %v1161 = vadd.f32 %v818, %v258
  %v1162 = vadd.f32 %v818, %v261
  %v1163 = vadd.f32 %v818, %v266
  %v1164 = vadd.f32 %v818, %v269
  %v1165 = vadd.f32 %v818, %v274
  %v1166 = vadd.f32 %v818, %v277
  %v1167 = vadd.f32 %v822, %v250
  %v1168 = vadd.f32 %v822, %v253
  %v1169 = vadd.f32 %v822, %v258
  %v1170 = vadd.f32 %v822, %v261
  %v1171 = vadd.f32 %v822, %v266
  %v1172 = vadd.f32 %v822, %v269
  %v1173 = vadd.f32 %v822, %v274
  %v1174 = vadd.f32 %v822, %v277
  %v1175 = vadd.f32 %v826, %v250
  %v1176 = vadd.f32 %v826, %v253
  %v1177 = vadd.f32 %v826, %v258
  %v1178 = vadd.f32 %v826, %v261
  %v1179 = vadd.f32 %v826, %v266
  %v1180 = vadd.f32 %v826, %v269
  %v1181 = vadd.f32 %v826, %v274
  %v1182 = vadd.f32 %v826, %v277
  %v1183 = vadd.f32 %v830, %v250
  %v1184 = vadd.f32 %v830, %v253
  %v1185 = vadd.f32 %v830, %v258
  %v1186 = vadd.f32 %v830, %v261
  %v1187 = vadd.f32 %v830, %v266
  %v1188 = vadd.f32 %v830, %v269
  %v1189 = vadd.f32 %v830, %v274
  %v1190 = vadd.f32 %v830, %v277
  %v1191 = vadd.f32 %v834, %v250
  %v1192 = vadd.f32 %v834, %v253
  %v1193 = vadd.f32 %v834, %v258
  %v1194 = vadd.f32 %v834, %v261
  %v1195 = vadd.f32 %v834, %v266
  %v1196 = vadd.f32 %v834, %v269
  %v1197 = vadd.f32 %v834, %v274
  %v1198 = vadd.f32 %v834, %v277
  %v1199 = vadd.f32 %v838, %v250
  %v1200 = vadd.f32 %v838, %v253
  %v1201 = vadd.f32 %v838, %v258
  %v1202 = vadd.f32 %v838, %v261
  %v1203 = vadd.f32 %v838, %v266
  %v1204 = vadd.f32 %v838, %v269
  %v1205 = vadd.f32 %v838, %v274
  %v1206 = vadd.f32 %v838, %v277
  %v1207 = vadd.f32 %v842, %v250
  %v1208 = vadd.f32 %v842, %v253
  %v1209 = vadd.f32 %v842, %v258
  %v1210 = vadd.f32 %v842, %v261
  %v1211 = vadd.f32 %v842, %v266
  %v1212 = vadd.f32 %v842, %v269
  %v1213 = vadd.f32 %v842, %v274
  %v1214 = vadd.f32 %v842, %v277
  %v1215 = vadd.f32 %v846, %v250
  %v1216 = vadd.f32 %v846, %v253
  %v1217 = vadd.f32 %v846, %v258
  %v1218 = vadd.f32 %v846, %v261
  %v1219 = vadd.f32 %v846, %v266
  %v1220 = vadd.f32 %v846, %v269
  %v1221 = vadd.f32 %v846, %v274
  %v1222 = vadd.f32 %v846, %v277
  %v1223 = vadd.f32 %v850, %v250
  %v1224 = vadd.f32 %v850, %v253
  %v1225 = vadd.f32 %v850, %v258
  %v1226 = vadd.f32 %v850, %v261
  %v1227 = vadd.f32 %v850, %v266
  %v1228 = vadd.f32 %v850, %v269
  %v1229 = vadd.f32 %v850, %v274
  %v1230 = vadd.f32 %v850, %v277
  %v1231 = vadd.f32 %v854, %v250
  %v1232 = vadd.f32 %v854, %v253
  %v1233 = vadd.f32 %v854, %v258
  %v1234 = vadd.f32 %v854, %v261
  %v1235 = vadd.f32 %v854, %v266
  %v1236 = vadd.f32 %v854, %v269
  %v1237 = vadd.f32 %v854, %v274
  %v1238 = vadd.f32 %v854, %v277
  %v1239 = vadd.f32 %v858, %v250
  %v1240 = vadd.f32 %v858, %v253
  %v1241 = vadd.f32 %v858, %v258
  %v1242 = vadd.f32 %v858, %v261
  %v1243 = vadd.f32 %v858, %v266
  %v1244 = vadd.f32 %v858, %v269
  %v1245 = vadd.f32 %v858, %v274
  %v1246 = vadd.f32 %v858, %v277
  %v1247 = vadd.f32 %v862, %v250
  %v1248 = vadd.f32 %v862, %v253
  %v1249 = vadd.f32 %v862, %v258
  %v1250 = vadd.f32 %v862, %v261
  %v1251 = vadd.f32 %v862, %v266
  %v1252 = vadd.f32 %v862, %v269
  %v1253 = vadd.f32 %v862, %v274
  %v1254 = vadd.f32 %v862, %v277
  %v1255 = vadd.f32 %v866, %v250
  %v1256 = vadd.f32 %v866, %v253
  %v1257 = vadd.f32 %v866, %v258
  %v1258 = vadd.f32 %v866, %v261
  %v1259 = vadd.f32 %v866, %v266
  %v1260 = vadd.f32 %v866, %v269
  %v1261 = vadd.f32 %v866, %v274
  %v1262 = vadd.f32 %v866, %v277
  %v1263 = vadd.f32 %v870, %v250
  %v1264 = vadd.f32 %v870, %v253
  %v1265 = vadd.f32 %v870, %v258
  %v1266 = vadd.f32 %v870, %v261
  %v1267 = vadd.f32 %v870, %v266
  %v1268 = vadd.f32 %v870, %v269
  %v1269 = vadd.f32 %v870, %v274
  %v1270 = vadd.f32 %v870, %v277
  %v1271 = vadd.f32 %v874, %v250
  %v1272 = vadd.f32 %v874, %v253
  %v1273 = vadd.f32 %v874, %v258
  %v1274 = vadd.f32 %v874, %v261
  %v1275 = vadd.f32 %v874, %v266
  %v1276 = vadd.f32 %v874, %v269
  %v1277 = vadd.f32 %v874, %v274
  %v1278 = vadd.f32 %v874, %v277
  %v1279 = vadd.f32 %v878, %v250
  %v1280 = vadd.f32 %v878, %v253
  %v1281 = vadd.f32 %v878, %v258
  %v1282 = vadd.f32 %v878, %v261
  %v1283 = vadd.f32 %v878, %v266
  %v1284 = vadd.f32 %v878, %v269
  %v1285 = vadd.f32 %v878, %v274
  %v1286 = vadd.f32 %v878, %v277
  %v1287 = vadd.f32 %v882, %v250
  %v1288 = vadd.f32 %v882, %v253
  %v1289 = vadd.f32 %v882, %v258
  %v1290 = vadd.f32 %v882, %v261
  %v1291 = vadd.f32 %v882, %v266
  %v1292 = vadd.f32 %v882, %v269
  %v1293 = vadd.f32 %v882, %v274
  %v1294 = vadd.f32 %v882, %v277
  %v1295 = vadd.f32 %v886, %v250
  %v1296 = vadd.f32 %v886, %v253
  %v1297 = vadd.f32 %v886, %v258
  %v1298 = vadd.f32 %v886, %v261
  %v1299 = vadd.f32 %v886, %v266
  %v1300 = vadd.f32 %v886, %v269
  %v1301 = vadd.f32 %v886, %v274
  %v1302 = vadd.f32 %v886, %v277
  %v1303 = vadd.f32 %v890, %v250
  %v1304 = vadd.f32 %v890, %v253
  %v1305 = vadd.f32 %v890, %v258
  %v1306 = vadd.f32 %v890, %v261
  %v1307 = vadd.f32 %v890, %v266
  %v1308 = vadd.f32 %v890, %v269
  %v1309 = vadd.f32 %v890, %v274
  %v1310 = vadd.f32 %v890, %v277
  %v1311 = vadd.f32 %v894, %v250
  %v1312 = vadd.f32 %v894, %v253
  %v1313 = vadd.f32 %v894, %v258
  %v1314 = vadd.f32 %v894, %v261
  %v1315 = vadd.f32 %v894, %v266
  %v1316 = vadd.f32 %v894, %v269
  %v1317 = vadd.f32 %v894, %v274
  %v1318 = vadd.f32 %v894, %v277
  %v1319 = vadd.f32 %v898, %v250
  %v1320 = vadd.f32 %v898, %v253
  %v1321 = vadd.f32 %v898, %v258
  %v1322 = vadd.f32 %v898, %v261
  %v1323 = vadd.f32 %v898, %v266
  %v1324 = vadd.f32 %v898, %v269
  %v1325 = vadd.f32 %v898, %v274
  %v1326 = vadd.f32 %v898, %v277
  %v1327 = vadd.f32 %v902, %v250
  %v1328 = vadd.f32 %v902, %v253
  %v1329 = vadd.f32 %v902, %v258
  %v1330 = vadd.f32 %v902, %v261
  %v1331 = vadd.f32 %v902, %v266
  %v1332 = vadd.f32 %v902, %v269
  %v1333 = vadd.f32 %v902, %v274
  %v1334 = vadd.f32 %v902, %v277
  %v1335 = vadd.f32 %v906, %v250
  %v1336 = vadd.f32 %v906, %v253
  %v1337 = vadd.f32 %v906, %v258
  %v1338 = vadd.f32 %v906, %v261
  %v1339 = vadd.f32 %v906, %v266
  %v1340 = vadd.f32 %v906, %v269
  %v1341 = vadd.f32 %v906, %v274
  %v1342 = vadd.f32 %v906, %v277
  %v1343 = vadd.f32 %v910, %v250
  %v1344 = vadd.f32 %v910, %v253
  %v1345 = vadd.f32 %v910, %v258
  %v1346 = vadd.f32 %v910, %v261
  %v1347 = vadd.f32 %v910, %v266
  %v1348 = vadd.f32 %v910, %v269
  %v1349 = vadd.f32 %v910, %v274
  %v1350 = vadd.f32 %v910, %v277
  %v1351 = vadd.f32 %v914, %v250
  %v1352 = vadd.f32 %v914, %v253
  %v1353 = vadd.f32 %v914, %v258
  %v1354 = vadd.f32 %v914, %v261
  %v1355 = vadd.f32 %v914, %v266
  %v1356 = vadd.f32 %v914, %v269
  %v1357 = vadd.f32 %v914, %v274
  %v1358 = vadd.f32 %v914, %v277
  %v1359 = vadd.f32 %v918, %v250
  %v1360 = vadd.f32 %v918, %v253
  %v1361 = vadd.f32 %v918, %v258
  %v1362 = vadd.f32 %v918, %v261
  %v1363 = vadd.f32 %v918, %v266
  %v1364 = vadd.f32 %v918, %v269
  %v1365 = vadd.f32 %v918, %v274
  %v1366 = vadd.f32 %v918, %v277
  %v1367 = vadd.f32 %v922, %v250
  %v1368 = vadd.f32 %v922, %v253
  %v1369 = vadd.f32 %v922, %v258
  %v1370 = vadd.f32 %v922, %v261
  %v1371 = vadd.f32 %v922, %v266
  %v1372 = vadd.f32 %v922, %v269
  %v1373 = vadd.f32 %v922, %v274
  %v1374 = vadd.f32 %v922, %v277
  %v1375 = vadd.f32 %v926, %v250
  %v1376 = vadd.f32 %v926, %v253
  %v1377 = vadd.f32 %v926, %v258
  %v1378 = vadd.f32 %v926, %v261
  %v1379 = vadd.f32 %v926, %v266
  %v1380 = vadd.f32 %v926, %v269
  %v1381 = vadd.f32 %v926, %v274
  %v1382 = vadd.f32 %v926, %v277
  %v1383 = vadd.f32 %v930, %v250
  %v1384 = vadd.f32 %v930, %v253
  %v1385 = vadd.f32 %v930, %v258
  %v1386 = vadd.f32 %v930, %v261
  %v1387 = vadd.f32 %v930, %v266
  %v1388 = vadd.f32 %v930, %v269
  %v1389 = vadd.f32 %v930, %v274
  %v1390 = vadd.f32 %v930, %v277
  %v1391 = vadd.f32 %v934, %v250
  %v1392 = vadd.f32 %v934, %v253
  %v1393 = vadd.f32 %v934, %v258
  %v1394 = vadd.f32 %v934, %v261
  %v1395 = vadd.f32 %v934, %v266
  %v1396 = vadd.f32 %v934, %v269
  %v1397 = vadd.f32 %v934, %v274
  %v1398 = vadd.f32 %v934, %v277
  %v1399 = vadd.f32 %v938, %v250
  %v1400 = vadd.f32 %v938, %v253
  %v1401 = vadd.f32 %v938, %v258
  %v1402 = vadd.f32 %v938, %v261
  %v1403 = vadd.f32 %v938, %v266
  %v1404 = vadd.f32 %v938, %v269
  %v1405 = vadd.f32 %v938, %v274
  %v1406 = vadd.f32 %v938, %v277
  %v1407 = vadd.f32 %v942, %v250
  %v1408 = vadd.f32 %v942, %v253
  %v1409 = vadd.f32 %v942, %v258
  %v1410 = vadd.f32 %v942, %v261
  %v1411 = vadd.f32 %v942, %v266
  %v1412 = vadd.f32 %v942, %v269
  %v1413 = vadd.f32 %v942, %v274
  %v1414 = vadd.f32 %v942, %v277
  %v1415 = vadd.f32 %v946, %v250
  %v1416 = vadd.f32 %v946, %v253
  %v1417 = vadd.f32 %v946, %v258
  %v1418 = vadd.f32 %v946, %v261
  %v1419 = vadd.f32 %v946, %v266
  %v1420 = vadd.f32 %v946, %v269
  %v1421 = vadd.f32 %v946, %v274
  %v1422 = vadd.f32 %v946, %v277
  %v1423 = vadd.f32 %v950, %v250
  %v1424 = vadd.f32 %v950, %v253
  %v1425 = vadd.f32 %v950, %v258
  %v1426 = vadd.f32 %v950, %v261
  %v1427 = vadd.f32 %v950, %v266
  %v1428 = vadd.f32 %v950, %v269
  %v1429 = vadd.f32 %v950, %v274
  %v1430 = vadd.f32 %v950, %v277
  %v1431 = vadd.f32 %v954, %v250
  %v1432 = vadd.f32 %v954, %v253
  %v1433 = vadd.f32 %v954, %v258
  %v1434 = vadd.f32 %v954, %v261
  %v1435 = vadd.f32 %v954, %v266
  %v1436 = vadd.f32 %v954, %v269
  %v1437 = vadd.f32 %v954, %v274
  %v1438 = vadd.f32 %v954, %v277
  %v1439 = vadd.f32 %v958, %v250
  %v1440 = vadd.f32 %v958, %v253
  %v1441 = vadd.f32 %v958, %v258
  %v1442 = vadd.f32 %v958, %v261
  %v1443 = vadd.f32 %v958, %v266
  %v1444 = vadd.f32 %v958, %v269
  %v1445 = vadd.f32 %v958, %v274
  %v1446 = vadd.f32 %v958, %v277
  %v1447 = vadd.f32 %v962, %v250
  %v1448 = vadd.f32 %v962, %v253
  %v1449 = vadd.f32 %v962, %v258
  %v1450 = vadd.f32 %v962, %v261
  %v1451 = vadd.f32 %v962, %v266
  %v1452 = vadd.f32 %v962, %v269
  %v1453 = vadd.f32 %v962, %v274
  %v1454 = vadd.f32 %v962, %v277
  %v1455 = vadd.f32 %v966, %v250
  %v1456 = vadd.f32 %v966, %v253
  %v1457 = vadd.f32 %v966, %v258
  %v1458 = vadd.f32 %v966, %v261
  %v1459 = vadd.f32 %v966, %v266
  %v1460 = vadd.f32 %v966, %v269
  %v1461 = vadd.f32 %v966, %v274
  %v1462 = vadd.f32 %v966, %v277
  %v1463 = vadd.f32 %v970, %v250
  %v1464 = vadd.f32 %v970, %v253
  %v1465 = vadd.f32 %v970, %v258
  %v1466 = vadd.f32 %v970, %v261
  %v1467 = vadd.f32 %v970, %v266
  %v1468 = vadd.f32 %v970, %v269
  %v1469 = vadd.f32 %v970, %v274
  %v1470 = vadd.f32 %v970, %v277
  %v1471 = vadd.f32 %v974, %v250
  %v1472 = vadd.f32 %v974, %v253
  %v1473 = vadd.f32 %v974, %v258
  %v1474 = vadd.f32 %v974, %v261
  %v1475 = vadd.f32 %v974, %v266
  %v1476 = vadd.f32 %v974, %v269
  %v1477 = vadd.f32 %v974, %v274
  %v1478 = vadd.f32 %v974, %v277
  %v1479 = vadd.f32 %v978, %v250
  %v1480 = vadd.f32 %v978, %v253
  %v1481 = vadd.f32 %v978, %v258
  %v1482 = vadd.f32 %v978, %v261
  %v1483 = vadd.f32 %v978, %v266
  %v1484 = vadd.f32 %v978, %v269
  %v1485 = vadd.f32 %v978, %v274
  %v1486 = vadd.f32 %v978, %v277
  %v1487 = vadd.f32 %v982, %v250
  %v1488 = vadd.f32 %v982, %v253
  %v1489 = vadd.f32 %v982, %v258
  %v1490 = vadd.f32 %v982, %v261
  %v1491 = vadd.f32 %v982, %v266
  %v1492 = vadd.f32 %v982, %v269
  %v1493 = vadd.f32 %v982, %v274
  %v1494 = vadd.f32 %v982, %v277
  %v1495 = vadd.f32 %v986, %v250
  %v1496 = vadd.f32 %v986, %v253
  %v1497 = vadd.f32 %v986, %v258
  %v1498 = vadd.f32 %v986, %v261
  %v1499 = vadd.f32 %v986, %v266
  %v1500 = vadd.f32 %v986, %v269
  %v1501 = vadd.f32 %v986, %v274
  %v1502 = vadd.f32 %v986, %v277
  %v1503 = vadd.f32 %v990, %v250
  %v1504 = vadd.f32 %v990, %v253
  %v1505 = vadd.f32 %v990, %v258
  %v1506 = vadd.f32 %v990, %v261
  %v1507 = vadd.f32 %v990, %v266
  %v1508 = vadd.f32 %v990, %v269
  %v1509 = vadd.f32 %v990, %v274
  %v1510 = vadd.f32 %v990, %v277
  %v1511 = vadd.f32 %v994, %v250
  %v1512 = vadd.f32 %v994, %v253
  %v1513 = vadd.f32 %v994, %v258
  %v1514 = vadd.f32 %v994, %v261
  %v1515 = vadd.f32 %v994, %v266
  %v1516 = vadd.f32 %v994, %v269
  %v1517 = vadd.f32 %v994, %v274
  %v1518 = vadd.f32 %v994, %v277
  %v1519 = vadd.f32 %v998, %v250
  %v1520 = vadd.f32 %v998, %v253
  %v1521 = vadd.f32 %v998, %v258
  %v1522 = vadd.f32 %v998, %v261
  %v1523 = vadd.f32 %v998, %v266
  %v1524 = vadd.f32 %v998, %v269
  %v1525 = vadd.f32 %v998, %v274
  %v1526 = vadd.f32 %v998, %v277
  %v1527 = vadd.f32 %v1002, %v250
  %v1528 = vadd.f32 %v1002, %v253
  %v1529 = vadd.f32 %v1002, %v258
  %v1530 = vadd.f32 %v1002, %v261
  %v1531 = vadd.f32 %v1002, %v266
  %v1532 = vadd.f32 %v1002, %v269
  %v1533 = vadd.f32 %v1002, %v274
  %v1534 = vadd.f32 %v1002, %v277
  %v1535 = vadd.f32 %v1006, %v250
  %v1536 = vadd.f32 %v1006, %v253
  %v1537 = vadd.f32 %v1006, %v258
  %v1538 = vadd.f32 %v1006, %v261
  %v1539 = vadd.f32 %v1006, %v266
  %v1540 = vadd.f32 %v1006, %v269
  %v1541 = vadd.f32 %v1006, %v274
  %v1542 = vadd.f32 %v1006, %v277
  %v1543 = vadd.f32 %v1010, %v250
  %v1544 = vadd.f32 %v1010, %v253
  %v1545 = vadd.f32 %v1010, %v258
  %v1546 = vadd.f32 %v1010, %v261
  %v1547 = vadd.f32 %v1010, %v266
  %v1548 = vadd.f32 %v1010, %v269
  %v1549 = vadd.f32 %v1010, %v274
  %v1550 = vadd.f32 %v1010, %v277
  %v1551 = vadd.f32 %v1014, %v250
  %v1552 = vadd.f32 %v1014, %v253
  %v1553 = vadd.f32 %v1014, %v258
  %v1554 = vadd.f32 %v1014, %v261
  %v1555 = vadd.f32 %v1014, %v266
  %v1556 = vadd.f32 %v1014, %v269
  %v1557 = vadd.f32 %v1014, %v274
  %v1558 = vadd.f32 %v1014, %v277
  %v1559 = vadd.f32 %v1018, %v250
  %v1560 = vadd.f32 %v1018, %v253
  %v1561 = vadd.f32 %v1018, %v258
  %v1562 = vadd.f32 %v1018, %v261
  %v1563 = vadd.f32 %v1018, %v266
  %v1564 = vadd.f32 %v1018, %v269
  %v1565 = vadd.f32 %v1018, %v274
  %v1566 = vadd.f32 %v1018, %v277
  %v1567 = vadd.f32 %v1022, %v250
  %v1568 = vadd.f32 %v1022, %v253
  %v1569 = vadd.f32 %v1022, %v258
  %v1570 = vadd.f32 %v1022, %v261
  %v1571 = vadd.f32 %v1022, %v266
  %v1572 = vadd.f32 %v1022, %v269
  %v1573 = vadd.f32 %v1022, %v274
  %v1574 = vadd.f32 %v1022, %v277
  %v1575 = vadd.f32 %v1026, %v250
  %v1576 = vadd.f32 %v1026, %v253
  %v1577 = vadd.f32 %v1026, %v258
  %v1578 = vadd.f32 %v1026, %v261
  %v1579 = vadd.f32 %v1026, %v266
  %v1580 = vadd.f32 %v1026, %v269
  %v1581 = vadd.f32 %v1026, %v274
  %v1582 = vadd.f32 %v1026, %v277
  %v1583 = vadd.f32 %v1030, %v250
  %v1584 = vadd.f32 %v1030, %v253
  %v1585 = vadd.f32 %v1030, %v258
  %v1586 = vadd.f32 %v1030, %v261
  %v1587 = vadd.f32 %v1030, %v266
  %v1588 = vadd.f32 %v1030, %v269
  %v1589 = vadd.f32 %v1030, %v274
  %v1590 = vadd.f32 %v1030, %v277
  %v1591 = vadd.f32 %v1034, %v250
  %v1592 = vadd.f32 %v1034, %v253
  %v1593 = vadd.f32 %v1034, %v258
  %v1594 = vadd.f32 %v1034, %v261
  %v1595 = vadd.f32 %v1034, %v266
  %v1596 = vadd.f32 %v1034, %v269
  %v1597 = vadd.f32 %v1034, %v274
  %v1598 = vadd.f32 %v1034, %v277
  %v1599 = vadd.f32 %v1038, %v250
  %v1600 = vadd.f32 %v1038, %v253
  %v1601 = vadd.f32 %v1038, %v258
  %v1602 = vadd.f32 %v1038, %v261
  %v1603 = vadd.f32 %v1038, %v266
  %v1604 = vadd.f32 %v1038, %v269
  %v1605 = vadd.f32 %v1038, %v274
  %v1606 = vadd.f32 %v1038, %v277
  %v1607 = vadd.f32 %v1042, %v250
  %v1608 = vadd.f32 %v1042, %v253
  %v1609 = vadd.f32 %v1042, %v258
  %v1610 = vadd.f32 %v1042, %v261
  %v1611 = vadd.f32 %v1042, %v266
  %v1612 = vadd.f32 %v1042, %v269
  %v1613 = vadd.f32 %v1042, %v274
  %v1614 = vadd.f32 %v1042, %v277
  %v1615 = vadd.f32 %v1046, %v250
  %v1616 = vadd.f32 %v1046, %v253
  %v1617 = vadd.f32 %v1046, %v258
  %v1618 = vadd.f32 %v1046, %v261
  %v1619 = vadd.f32 %v1046, %v266
  %v1620 = vadd.f32 %v1046, %v269
  %v1621 = vadd.f32 %v1046, %v274
  %v1622 = vadd.f32 %v1046, %v277
  %v1623 = vmax.f32 %v1111, 0.0
  %v1624 = vmax.f32 %v1112, 0.0
  %v1625 = vmax.f32 %v1113, 0.0
  %v1626 = vmax.f32 %v1114, 0.0
  %v1627 = vmax.f32 %v1115, 0.0
  %v1628 = vmax.f32 %v1116, 0.0
  %v1629 = vmax.f32 %v1117, 0.0
  %v1630 = vmax.f32 %v1118, 0.0
  %v1631 = vmax.f32 %v1119, 0.0
  %v1632 = vmax.f32 %v1120, 0.0
  %v1633 = vmax.f32 %v1121, 0.0
  %v1634 = vmax.f32 %v1122, 0.0
  %v1635 = vmax.f32 %v1123, 0.0
  %v1636 = vmax.f32 %v1124, 0.0
  %v1637 = vmax.f32 %v1125, 0.0
  %v1638 = vmax.f32 %v1126, 0.0
  %v1639 = vmax.f32 %v1127, 0.0
  %v1640 = vmax.f32 %v1128, 0.0
  %v1641 = vmax.f32 %v1129, 0.0
  %v1642 = vmax.f32 %v1130, 0.0
  %v1643 = vmax.f32 %v1131, 0.0
  %v1644 = vmax.f32 %v1132, 0.0
  %v1645 = vmax.f32 %v1133, 0.0
  %v1646 = vmax.f32 %v1134, 0.0
  %v1647 = vmax.f32 %v1135, 0.0
  %v1648 = vmax.f32 %v1136, 0.0
  %v1649 = vmax.f32 %v1137, 0.0
  %v1650 = vmax.f32 %v1138, 0.0
  %v1651 = vmax.f32 %v1139, 0.0
  %v1652 = vmax.f32 %v1140, 0.0
  %v1653 = vmax.f32 %v1141, 0.0
  %v1654 = vmax.f32 %v1142, 0.0
  %v1655 = vmax.f32 %v1143, 0.0
  %v1656 = vmax.f32 %v1144, 0.0
  %v1657 = vmax.f32 %v1145, 0.0
  %v1658 = vmax.f32 %v1146, 0.0
  %v1659 = vmax.f32 %v1147, 0.0
  %v1660 = vmax.f32 %v1148, 0.0
  %v1661 = vmax.f32 %v1149, 0.0
  %v1662 = vmax.f32 %v1150, 0.0
  %v1663 = vmax.f32 %v1151, 0.0
  %v1664 = vmax.f32 %v1152, 0.0
  %v1665 = vmax.f32 %v1153, 0.0
  %v1666 = vmax.f32 %v1154, 0.0
  %v1667 = vmax.f32 %v1155, 0.0
  %v1668 = vmax.f32 %v1156, 0.0
  %v1669 = vmax.f32 %v1157, 0.0
  %v1670 = vmax.f32 %v1158, 0.0
  %v1671 = vmax.f32 %v1159, 0.0
  %v1672 = vmax.f32 %v1160, 0.0
  %v1673 = vmax.f32 %v1161, 0.0
  %v1674 = vmax.f32 %v1162, 0.0
  %v1675 = vmax.f32 %v1163, 0.0
  %v1676 = vmax.f32 %v1164, 0.0
  %v1677 = vmax.f32 %v1165, 0.0
  %v1678 = vmax.f32 %v1166, 0.0
  %v1679 = vmax.f32 %v1167, 0.0
  %v1680 = vmax.f32 %v1168, 0.0
  %v1681 = vmax.f32 %v1169, 0.0
  %v1682 = vmax.f32 %v1170, 0.0
  %v1683 = vmax.f32 %v1171, 0.0
  %v1684 = vmax.f32 %v1172, 0.0
  %v1685 = vmax.f32 %v1173, 0.0
  %v1686 = vmax.f32 %v1174, 0.0
  %v1687 = vmax.f32 %v1175, 0.0
  %v1688 = vmax.f32 %v1176, 0.0
  %v1689 = vmax.f32 %v1177, 0.0
  %v1690 = vmax.f32 %v1178, 0.0
  %v1691 = vmax.f32 %v1179, 0.0
  %v1692 = vmax.f32 %v1180, 0.0
  %v1693 = vmax.f32 %v1181, 0.0
  %v1694 = vmax.f32 %v1182, 0.0
  %v1695 = vmax.f32 %v1183, 0.0
  %v1696 = vmax.f32 %v1184, 0.0
  %v1697 = vmax.f32 %v1185, 0.0
  %v1698 = vmax.f32 %v1186, 0.0
  %v1699 = vmax.f32 %v1187, 0.0
  %v1700 = vmax.f32 %v1188, 0.0
  %v1701 = vmax.f32 %v1189, 0.0
  %v1702 = vmax.f32 %v1190, 0.0
  %v1703 = vmax.f32 %v1191, 0.0
  %v1704 = vmax.f32 %v1192, 0.0
  %v1705 = vmax.f32 %v1193, 0.0
  %v1706 = vmax.f32 %v1194, 0.0
  %v1707 = vmax.f32 %v1195, 0.0
  %v1708 = vmax.f32 %v1196, 0.0
  %v1709 = vmax.f32 %v1197, 0.0
  %v1710 = vmax.f32 %v1198, 0.0
  %v1711 = vmax.f32 %v1199, 0.0
  %v1712 = vmax.f32 %v1200, 0.0
  %v1713 = vmax.f32 %v1201, 0.0
  %v1714 = vmax.f32 %v1202, 0.0
  %v1715 = vmax.f32 %v1203, 0.0
  %v1716 = vmax.f32 %v1204, 0.0
  %v1717 = vmax.f32 %v1205, 0.0
  %v1718 = vmax.f32 %v1206, 0.0
  %v1719 = vmax.f32 %v1207, 0.0
  %v1720 = vmax.f32 %v1208, 0.0
  %v1721 = vmax.f32 %v1209, 0.0
  %v1722 = vmax.f32 %v1210, 0.0
  %v1723 = vmax.f32 %v1211, 0.0
  %v1724 = vmax.f32 %v1212, 0.0
  %v1725 = vmax.f32 %v1213, 0.0
  %v1726 = vmax.f32 %v1214, 0.0
  %v1727 = vmax.f32 %v1215, 0.0
  %v1728 = vmax.f32 %v1216, 0.0
  %v1729 = vmax.f32 %v1217, 0.0
  %v1730 = vmax.f32 %v1218, 0.0
  %v1731 = vmax.f32 %v1219, 0.0
  %v1732 = vmax.f32 %v1220, 0.0
  %v1733 = vmax.f32 %v1221, 0.0
  %v1734 = vmax.f32 %v1222, 0.0
  %v1735 = vmax.f32 %v1223, 0.0
  %v1736 = vmax.f32 %v1224, 0.0
  %v1737 = vmax.f32 %v1225, 0.0
  %v1738 = vmax.f32 %v1226, 0.0
  %v1739 = vmax.f32 %v1227, 0.0
  %v1740 = vmax.f32 %v1228, 0.0
  %v1741 = vmax.f32 %v1229, 0.0
  %v1742 = vmax.f32 %v1230, 0.0
  %v1743 = vmax.f32 %v1231, 0.0
  %v1744 = vmax.f32 %v1232, 0.0
  %v1745 = vmax.f32 %v1233, 0.0
  %v1746 = vmax.f32 %v1234, 0.0
  %v1747 = vmax.f32 %v1235, 0.0
  %v1748 = vmax.f32 %v1236, 0.0
  %v1749 = vmax.f32 %v1237, 0.0
  %v1750 = vmax.f32 %v1238, 0.0
  %v1751 = vmax.f32 %v1239, 0.0
  %v1752 = vmax.f32 %v1240, 0.0
  %v1753 = vmax.f32 %v1241, 0.0
  %v1754 = vmax.f32 %v1242, 0.0
  %v1755 = vmax.f32 %v1243, 0.0
  %v1756 = vmax.f32 %v1244, 0.0
  %v1757 = vmax.f32 %v1245, 0.0
  %v1758 = vmax.f32 %v1246, 0.0
  %v1759 = vmax.f32 %v1247, 0.0
  %v1760 = vmax.f32 %v1248, 0.0
  %v1761 = vmax.f32 %v1249, 0.0
  %v1762 = vmax.f32 %v1250, 0.0
  %v1763 = vmax.f32 %v1251, 0.0
  %v1764 = vmax.f32 %v1252, 0.0
  %v1765 = vmax.f32 %v1253, 0.0
  %v1766 = vmax.f32 %v1254, 0.0
  %v1767 = vmax.f32 %v1255, 0.0
  %v1768 = vmax.f32 %v1256, 0.0
  %v1769 = vmax.f32 %v1257, 0.0
  %v1770 = vmax.f32 %v1258, 0.0
  %v1771 = vmax.f32 %v1259, 0.0
  %v1772 = vmax.f32 %v1260, 0.0
  %v1773 = vmax.f32 %v1261, 0.0
  %v1774 = vmax.f32 %v1262, 0.0
  %v1775 = vmax.f32 %v1263, 0.0
  %v1776 = vmax.f32 %v1264, 0.0
  %v1777 = vmax.f32 %v1265, 0.0
  %v1778 = vmax.f32 %v1266, 0.0
  %v1779 = vmax.f32 %v1267, 0.0
  %v1780 = vmax.f32 %v1268, 0.0
  %v1781 = vmax.f32 %v1269, 0.0
  %v1782 = vmax.f32 %v1270, 0.0
  %v1783 = vmax.f32 %v1271, 0.0
  %v1784 = vmax.f32 %v1272, 0.0
  %v1785 = vmax.f32 %v1273, 0.0
  %v1786 = vmax.f32 %v1274, 0.0
  %v1787 = vmax.f32 %v1275, 0.0
  %v1788 = vmax.f32 %v1276, 0.0
  %v1789 = vmax.f32 %v1277, 0.0
  %v1790 = vmax.f32 %v1278, 0.0
  %v1791 = vmax.f32 %v1279, 0.0
  %v1792 = vmax.f32 %v1280, 0.0
  %v1793 = vmax.f32 %v1281, 0.0
  %v1794 = vmax.f32 %v1282, 0.0
  %v1795 = vmax.f32 %v1283, 0.0
  %v1796 = vmax.f32 %v1284, 0.0
  %v1797 = vmax.f32 %v1285, 0.0
  %v1798 = vmax.f32 %v1286, 0.0
  %v1799 = vmax.f32 %v1287, 0.0
  %v1800 = vmax.f32 %v1288, 0.0
  %v1801 = vmax.f32 %v1289, 0.0
  %v1802 = vmax.f32 %v1290, 0.0
  %v1803 = vmax.f32 %v1291, 0.0
  %v1804 = vmax.f32 %v1292, 0.0
  %v1805 = vmax.f32 %v1293, 0.0
  %v1806 = vmax.f32 %v1294, 0.0
  %v1807 = vmax.f32 %v1295, 0.0
  %v1808 = vmax.f32 %v1296, 0.0
  %v1809 = vmax.f32 %v1297, 0.0
  %v1810 = vmax.f32 %v1298, 0.0
  %v1811 = vmax.f32 %v1299, 0.0
  %v1812 = vmax.f32 %v1300, 0.0
  %v1813 = vmax.f32 %v1301, 0.0
  %v1814 = vmax.f32 %v1302, 0.0
  %v1815 = vmax.f32 %v1303, 0.0
  %v1816 = vmax.f32 %v1304, 0.0
  %v1817 = vmax.f32 %v1305, 0.0
  %v1818 = vmax.f32 %v1306, 0.0
  %v1819 = vmax.f32 %v1307, 0.0
  %v1820 = vmax.f32 %v1308, 0.0
  %v1821 = vmax.f32 %v1309, 0.0
  %v1822 = vmax.f32 %v1310, 0.0
  %v1823 = vmax.f32 %v1311, 0.0
  %v1824 = vmax.f32 %v1312, 0.0
  %v1825 = vmax.f32 %v1313, 0.0
  %v1826 = vmax.f32 %v1314, 0.0
  %v1827 = vmax.f32 %v1315, 0.0
  %v1828 = vmax.f32 %v1316, 0.0
  %v1829 = vmax.f32 %v1317, 0.0
  %v1830 = vmax.f32 %v1318, 0.0
  %v1831 = vmax.f32 %v1319, 0.0
  %v1832 = vmax.f32 %v1320, 0.0
  %v1833 = vmax.f32 %v1321, 0.0
  %v1834 = vmax.f32 %v1322, 0.0
  %v1835 = vmax.f32 %v1323, 0.0
  %v1836 = vmax.f32 %v1324, 0.0
  %v1837 = vmax.f32 %v1325, 0.0
  %v1838 = vmax.f32 %v1326, 0.0
  %v1839 = vmax.f32 %v1327, 0.0
  %v1840 = vmax.f32 %v1328, 0.0
  %v1841 = vmax.f32 %v1329, 0.0
  %v1842 = vmax.f32 %v1330, 0.0
  %v1843 = vmax.f32 %v1331, 0.0
  %v1844 = vmax.f32 %v1332, 0.0
  %v1845 = vmax.f32 %v1333, 0.0
  %v1846 = vmax.f32 %v1334, 0.0
  %v1847 = vmax.f32 %v1335, 0.0
  %v1848 = vmax.f32 %v1336, 0.0
  %v1849 = vmax.f32 %v1337, 0.0
  %v1850 = vmax.f32 %v1338, 0.0
  %v1851 = vmax.f32 %v1339, 0.0
  %v1852 = vmax.f32 %v1340, 0.0
  %v1853 = vmax.f32 %v1341, 0.0
  %v1854 = vmax.f32 %v1342, 0.0
  %v1855 = vmax.f32 %v1343, 0.0
  %v1856 = vmax.f32 %v1344, 0.0
  %v1857 = vmax.f32 %v1345, 0.0
  %v1858 = vmax.f32 %v1346, 0.0
  %v1859 = vmax.f32 %v1347, 0.0
  %v1860 = vmax.f32 %v1348, 0.0
  %v1861 = vmax.f32 %v1349, 0.0
  %v1862 = vmax.f32 %v1350, 0.0
  %v1863 = vmax.f32 %v1351, 0.0
  %v1864 = vmax.f32 %v1352, 0.0
  %v1865 = vmax.f32 %v1353, 0.0
  %v1866 = vmax.f32 %v1354, 0.0
  %v1867 = vmax.f32 %v1355, 0.0
  %v1868 = vmax.f32 %v1356, 0.0
  %v1869 = vmax.f32 %v1357, 0.0
  %v1870 = vmax.f32 %v1358, 0.0
  %v1871 = vmax.f32 %v1359, 0.0
  %v1872 = vmax.f32 %v1360, 0.0
  %v1873 = vmax.f32 %v1361, 0.0
  %v1874 = vmax.f32 %v1362, 0.0
  %v1875 = vmax.f32 %v1363, 0.0
  %v1876 = vmax.f32 %v1364, 0.0
  %v1877 = vmax.f32 %v1365, 0.0
  %v1878 = vmax.f32 %v1366, 0.0
  %v1879 = vmax.f32 %v1367, 0.0
  %v1880 = vmax.f32 %v1368, 0.0
  %v1881 = vmax.f32 %v1369, 0.0
  %v1882 = vmax.f32 %v1370, 0.0
  %v1883 = vmax.f32 %v1371, 0.0
  %v1884 = vmax.f32 %v1372, 0.0
  %v1885 = vmax.f32 %v1373, 0.0
  %v1886 = vmax.f32 %v1374, 0.0
  %v1887 = vmax.f32 %v1375, 0.0
  %v1888 = vmax.f32 %v1376, 0.0
  %v1889 = vmax.f32 %v1377, 0.0
  %v1890 = vmax.f32 %v1378, 0.0
  %v1891 = vmax.f32 %v1379, 0.0
  %v1892 = vmax.f32 %v1380, 0.0
  %v1893 = vmax.f32 %v1381, 0.0
  %v1894 = vmax.f32 %v1382, 0.0
  %v1895 = vmax.f32 %v1383, 0.0
  %v1896 = vmax.f32 %v1384, 0.0
  %v1897 = vmax.f32 %v1385, 0.0
  %v1898 = vmax.f32 %v1386, 0.0
  %v1899 = vmax.f32 %v1387, 0.0
  %v1900 = vmax.f32 %v1388, 0.0
  %v1901 = vmax.f32 %v1389, 0.0
  %v1902 = vmax.f32 %v1390, 0.0
  %v1903 = vmax.f32 %v1391, 0.0
  %v1904 = vmax.f32 %v1392, 0.0
  %v1905 = vmax.f32 %v1393, 0.0
  %v1906 = vmax.f32 %v1394, 0.0
  %v1907 = vmax.f32 %v1395, 0.0
  %v1908 = vmax.f32 %v1396, 0.0
  %v1909 = vmax.f32 %v1397, 0.0
  %v1910 = vmax.f32 %v1398, 0.0
  %v1911 = vmax.f32 %v1399, 0.0
  %v1912 = vmax.f32 %v1400, 0.0
  %v1913 = vmax.f32 %v1401, 0.0
  %v1914 = vmax.f32 %v1402, 0.0
  %v1915 = vmax.f32 %v1403, 0.0
  %v1916 = vmax.f32 %v1404, 0.0
  %v1917 = vmax.f32 %v1405, 0.0
  %v1918 = vmax.f32 %v1406, 0.0
  %v1919 = vmax.f32 %v1407, 0.0
  %v1920 = vmax.f32 %v1408, 0.0
  %v1921 = vmax.f32 %v1409, 0.0
  %v1922 = vmax.f32 %v1410, 0.0
  %v1923 = vmax.f32 %v1411, 0.0
  %v1924 = vmax.f32 %v1412, 0.0
  %v1925 = vmax.f32 %v1413, 0.0
  %v1926 = vmax.f32 %v1414, 0.0
  %v1927 = vmax.f32 %v1415, 0.0
  %v1928 = vmax.f32 %v1416, 0.0
  %v1929 = vmax.f32 %v1417, 0.0
  %v1930 = vmax.f32 %v1418, 0.0
  %v1931 = vmax.f32 %v1419, 0.0
  %v1932 = vmax.f32 %v1420, 0.0
  %v1933 = vmax.f32 %v1421, 0.0
  %v1934 = vmax.f32 %v1422, 0.0
  %v1935 = vmax.f32 %v1423, 0.0
  %v1936 = vmax.f32 %v1424, 0.0
  %v1937 = vmax.f32 %v1425, 0.0
  %v1938 = vmax.f32 %v1426, 0.0
  %v1939 = vmax.f32 %v1427, 0.0
  %v1940 = vmax.f32 %v1428, 0.0
  %v1941 = vmax.f32 %v1429, 0.0
  %v1942 = vmax.f32 %v1430, 0.0
  %v1943 = vmax.f32 %v1431, 0.0
  %v1944 = vmax.f32 %v1432, 0.0
  %v1945 = vmax.f32 %v1433, 0.0
  %v1946 = vmax.f32 %v1434, 0.0
  %v1947 = vmax.f32 %v1435, 0.0
  %v1948 = vmax.f32 %v1436, 0.0
  %v1949 = vmax.f32 %v1437, 0.0
  %v1950 = vmax.f32 %v1438, 0.0
  %v1951 = vmax.f32 %v1439, 0.0
  %v1952 = vmax.f32 %v1440, 0.0
  %v1953 = vmax.f32 %v1441, 0.0
  %v1954 = vmax.f32 %v1442, 0.0
  %v1955 = vmax.f32 %v1443, 0.0
  %v1956 = vmax.f32 %v1444, 0.0
  %v1957 = vmax.f32 %v1445, 0.0
  %v1958 = vmax.f32 %v1446, 0.0
  %v1959 = vmax.f32 %v1447, 0.0
  %v1960 = vmax.f32 %v1448, 0.0
  %v1961 = vmax.f32 %v1449, 0.0
  %v1962 = vmax.f32 %v1450, 0.0
  %v1963 = vmax.f32 %v1451, 0.0
  %v1964 = vmax.f32 %v1452, 0.0
  %v1965 = vmax.f32 %v1453, 0.0
  %v1966 = vmax.f32 %v1454, 0.0
  %v1967 = vmax.f32 %v1455, 0.0
  %v1968 = vmax.f32 %v1456, 0.0
  %v1969 = vmax.f32 %v1457, 0.0
  %v1970 = vmax.f32 %v1458, 0.0
  %v1971 = vmax.f32 %v1459, 0.0
  %v1972 = vmax.f32 %v1460, 0.0
  %v1973 = vmax.f32 %v1461, 0.0
  %v1974 = vmax.f32 %v1462, 0.0
  %v1975 = vmax.f32 %v1463, 0.0
  %v1976 = vmax.f32 %v1464, 0.0
  %v1977 = vmax.f32 %v1465, 0.0
  %v1978 = vmax.f32 %v1466, 0.0
  %v1979 = vmax.f32 %v1467, 0.0
  %v1980 = vmax.f32 %v1468, 0.0
  %v1981 = vmax.f32 %v1469, 0.0
  %v1982 = vmax.f32 %v1470, 0.0
  %v1983 = vmax.f32 %v1471, 0.0
  %v1984 = vmax.f32 %v1472, 0.0
  %v1985 = vmax.f32 %v1473, 0.0
  %v1986 = vmax.f32 %v1474, 0.0
  %v1987 = vmax.f32 %v1475, 0.0
  %v1988 = vmax.f32 %v1476, 0.0
  %v1989 = vmax.f32 %v1477, 0.0
  %v1990 = vmax.f32 %v1478, 0.0
  %v1991 = vmax.f32 %v1479, 0.0
  %v1992 = vmax.f32 %v1480, 0.0
  %v1993 = vmax.f32 %v1481, 0.0
  %v1994 = vmax.f32 %v1482, 0.0
  %v1995 = vmax.f32 %v1483, 0.0
  %v1996 = vmax.f32 %v1484, 0.0
  %v1997 = vmax.f32 %v1485, 0.0
  %v1998 = vmax.f32 %v1486, 0.0
  %v1999 = vmax.f32 %v1487, 0.0
  %v2000 = vmax.f32 %v1488, 0.0
  %v2001 = vmax.f32 %v1489, 0.0
  %v2002 = vmax.f32 %v1490, 0.0
  %v2003 = vmax.f32 %v1491, 0.0
  %v2004 = vmax.f32 %v1492, 0.0
  %v2005 = vmax.f32 %v1493, 0.0
  %v2006 = vmax.f32 %v1494, 0.0
  %v2007 = vmax.f32 %v1495, 0.0
  %v2008 = vmax.f32 %v1496, 0.0
  %v2009 = vmax.f32 %v1497, 0.0
  %v2010 = vmax.f32 %v1498, 0.0
  %v2011 = vmax.f32 %v1499, 0.0
  %v2012 = vmax.f32 %v1500, 0.0
  %v2013 = vmax.f32 %v1501, 0.0
  %v2014 = vmax.f32 %v1502, 0.0
  %v2015 = vmax.f32 %v1503, 0.0
  %v2016 = vmax.f32 %v1504, 0.0
  %v2017 = vmax.f32 %v1505, 0.0
  %v2018 = vmax.f32 %v1506, 0.0
  %v2019 = vmax.f32 %v1507, 0.0
  %v2020 = vmax.f32 %v1508, 0.0
  %v2021 = vmax.f32 %v1509, 0.0
  %v2022 = vmax.f32 %v1510, 0.0
  %v2023 = vmax.f32 %v1511, 0.0
  %v2024 = vmax.f32 %v1512, 0.0
  %v2025 = vmax.f32 %v1513, 0.0
  %v2026 = vmax.f32 %v1514, 0.0
  %v2027 = vmax.f32 %v1515, 0.0
  %v2028 = vmax.f32 %v1516, 0.0
  %v2029 = vmax.f32 %v1517, 0.0
  %v2030 = vmax.f32 %v1518, 0.0
  %v2031 = vmax.f32 %v1519, 0.0
  %v2032 = vmax.f32 %v1520, 0.0
  %v2033 = vmax.f32 %v1521, 0.0
  %v2034 = vmax.f32 %v1522, 0.0
  %v2035 = vmax.f32 %v1523, 0.0
  %v2036 = vmax.f32 %v1524, 0.0
  %v2037 = vmax.f32 %v1525, 0.0
  %v2038 = vmax.f32 %v1526, 0.0
  %v2039 = vmax.f32 %v1527, 0.0
  %v2040 = vmax.f32 %v1528, 0.0
  %v2041 = vmax.f32 %v1529, 0.0
  %v2042 = vmax.f32 %v1530, 0.0
  %v2043 = vmax.f32 %v1531, 0.0
  %v2044 = vmax.f32 %v1532, 0.0
  %v2045 = vmax.f32 %v1533, 0.0
  %v2046 = vmax.f32 %v1534, 0.0
  %v2047 = vmax.f32 %v1535, 0.0
  %v2048 = vmax.f32 %v1536, 0.0
  %v2049 = vmax.f32 %v1537, 0.0
  %v2050 = vmax.f32 %v1538, 0.0
  %v2051 = vmax.f32 %v1539, 0.0
  %v2052 = vmax.f32 %v1540, 0.0
  %v2053 = vmax.f32 %v1541, 0.0
  %v2054 = vmax.f32 %v1542, 0.0
  %v2055 = vmax.f32 %v1543, 0.0
  %v2056 = vmax.f32 %v1544, 0.0
  %v2057 = vmax.f32 %v1545, 0.0
  %v2058 = vmax.f32 %v1546, 0.0
  %v2059 = vmax.f32 %v1547, 0.0
  %v2060 = vmax.f32 %v1548, 0.0
  %v2061 = vmax.f32 %v1549, 0.0
  %v2062 = vmax.f32 %v1550, 0.0
  %v2063 = vmax.f32 %v1551, 0.0
  %v2064 = vmax.f32 %v1552, 0.0
  %v2065 = vmax.f32 %v1553, 0.0
  %v2066 = vmax.f32 %v1554, 0.0
  %v2067 = vmax.f32 %v1555, 0.0
  %v2068 = vmax.f32 %v1556, 0.0
  %v2069 = vmax.f32 %v1557, 0.0
  %v2070 = vmax.f32 %v1558, 0.0
  %v2071 = vmax.f32 %v1559, 0.0
  %v2072 = vmax.f32 %v1560, 0.0
  %v2073 = vmax.f32 %v1561, 0.0
  %v2074 = vmax.f32 %v1562, 0.0
  %v2075 = vmax.f32 %v1563, 0.0
  %v2076 = vmax.f32 %v1564, 0.0
  %v2077 = vmax.f32 %v1565, 0.0
  %v2078 = vmax.f32 %v1566, 0.0
  %v2079 = vmax.f32 %v1567, 0.0
  %v2080 = vmax.f32 %v1568, 0.0
  %v2081 = vmax.f32 %v1569, 0.0
  %v2082 = vmax.f32 %v1570, 0.0
  %v2083 = vmax.f32 %v1571, 0.0
  %v2084 = vmax.f32 %v1572, 0.0
  %v2085 = vmax.f32 %v1573, 0.0
  %v2086 = vmax.f32 %v1574, 0.0
  %v2087 = vmax.f32 %v1575, 0.0
  %v2088 = vmax.f32 %v1576, 0.0
  %v2089 = vmax.f32 %v1577, 0.0
  %v2090 = vmax.f32 %v1578, 0.0
  %v2091 = vmax.f32 %v1579, 0.0
  %v2092 = vmax.f32 %v1580, 0.0
  %v2093 = vmax.f32 %v1581, 0.0
  %v2094 = vmax.f32 %v1582, 0.0
  %v2095 = vmax.f32 %v1583, 0.0
  %v2096 = vmax.f32 %v1584, 0.0
  %v2097 = vmax.f32 %v1585, 0.0
  %v2098 = vmax.f32 %v1586, 0.0
  %v2099 = vmax.f32 %v1587, 0.0
  %v2100 = vmax.f32 %v1588, 0.0
  %v2101 = vmax.f32 %v1589, 0.0
  %v2102 = vmax.f32 %v1590, 0.0
  %v2103 = vmax.f32 %v1591, 0.0
  %v2104 = vmax.f32 %v1592, 0.0
  %v2105 = vmax.f32 %v1593, 0.0
  %v2106 = vmax.f32 %v1594, 0.0
  %v2107 = vmax.f32 %v1595, 0.0
  %v2108 = vmax.f32 %v1596, 0.0
  %v2109 = vmax.f32 %v1597, 0.0
  %v2110 = vmax.f32 %v1598, 0.0
  %v2111 = vmax.f32 %v1599, 0.0
  %v2112 = vmax.f32 %v1600, 0.0
  %v2113 = vmax.f32 %v1601, 0.0
  %v2114 = vmax.f32 %v1602, 0.0
  %v2115 = vmax.f32 %v1603, 0.0
  %v2116 = vmax.f32 %v1604, 0.0
  %v2117 = vmax.f32 %v1605, 0.0
  %v2118 = vmax.f32 %v1606, 0.0
  %v2119 = vmax.f32 %v1607, 0.0
  %v2120 = vmax.f32 %v1608, 0.0
  %v2121 = vmax.f32 %v1609, 0.0
  %v2122 = vmax.f32 %v1610, 0.0
  %v2123 = vmax.f32 %v1611, 0.0
  %v2124 = vmax.f32 %v1612, 0.0
  %v2125 = vmax.f32 %v1613, 0.0
  %v2126 = vmax.f32 %v1614, 0.0
  %v2127 = vmax.f32 %v1615, 0.0
  %v2128 = vmax.f32 %v1616, 0.0
  %v2129 = vmax.f32 %v1617, 0.0
  %v2130 = vmax.f32 %v1618, 0.0
  %v2131 = vmax.f32 %v1619, 0.0
  %v2132 = vmax.f32 %v1620, 0.0
  %v2133 = vmax.f32 %v1621, 0.0
  %v2134 = vmax.f32 %v1622, 0.0
  %v2144 = vunpack.c.l.s4 1966171168
  %v2145 = vunpack.c.0.s8 %v2144
  %v2146 = vlaneseq
  %v2147 = vshrl.u32 %v2146, 7
  %v2148 = vsub.s32 %v2145, %v2147
  %v2149 = vrot.slane %v57, %v2148
  %v2150 = vcombine.high %v2149, %v2149
  %v2152 = vunpack.c.l.s4 1966171168
  %v2153 = vunpack.c.0.s8 %v2152
  %v2154 = vlaneseq
  %v2155 = vshrl.u32 %v2154, 7
  %v2156 = vsub.s32 %v2153, %v2155
  %v2157 = vrot.slane %v2149, %v2156
  %v2159 = vunpack.c.l.s4 1966171168
  %v2160 = vunpack.c.0.s8 %v2159
  %v2161 = vlaneseq
  %v2162 = vshrl.u32 %v2161, 7
  %v2163 = vsub.s32 %v2160, %v2162
  %v2164 = vrot.slane %v2150, %v2163
  %v2165 = vcombine.high %v2157, %v2157
  %v2166 = vcombine.high %v2164, %v2164
  %v2168 = vunpack.c.l.s4 1966171168
  %v2169 = vunpack.c.0.s8 %v2168
  %v2170 = vlaneseq
  %v2171 = vshrl.u32 %v2170, 7
  %v2172 = vsub.s32 %v2169, %v2171
  %v2173 = vrot.slane %v58, %v2172
  %v2174 = vcombine.high %v2173, %v2173
  %v2176 = vunpack.c.l.s4 1966171168
  %v2177 = vunpack.c.0.s8 %v2176
  %v2178 = vlaneseq
  %v2179 = vshrl.u32 %v2178, 7
  %v2180 = vsub.s32 %v2177, %v2179
  %v2181 = vrot.slane %v2173, %v2180
  %v2183 = vunpack.c.l.s4 1966171168
  %v2184 = vunpack.c.0.s8 %v2183
  %v2185 = vlaneseq
  %v2186 = vshrl.u32 %v2185, 7
  %v2187 = vsub.s32 %v2184, %v2186
  %v2188 = vrot.slane %v2174, %v2187
  %v2189 = vcombine.high %v2181, %v2181
  %v2190 = vcombine.high %v2188, %v2188
  %v2192 = vunpack.c.l.s4 1966171168
  %v2193 = vunpack.c.0.s8 %v2192
  %v2194 = vlaneseq
  %v2195 = vshrl.u32 %v2194, 7
  %v2196 = vsub.s32 %v2193, %v2195
  %v2197 = vrot.slane %v59, %v2196
  %v2198 = vcombine.high %v2197, %v2197
  %v2200 = vunpack.c.l.s4 1966171168
  %v2201 = vunpack.c.0.s8 %v2200
  %v2202 = vlaneseq
  %v2203 = vshrl.u32 %v2202, 7
  %v2204 = vsub.s32 %v2201, %v2203
  %v2205 = vrot.slane %v2197, %v2204
  %v2207 = vunpack.c.l.s4 1966171168
  %v2208 = vunpack.c.0.s8 %v2207
  %v2209 = vlaneseq
  %v2210 = vshrl.u32 %v2209, 7
  %v2211 = vsub.s32 %v2208, %v2210
  %v2212 = vrot.slane %v2198, %v2211
  %v2213 = vcombine.high %v2205, %v2205
  %v2214 = vcombine.high %v2212, %v2212
  %v2216 = vunpack.c.l.s4 1966171168
  %v2217 = vunpack.c.0.s8 %v2216
  %v2218 = vlaneseq
  %v2219 = vshrl.u32 %v2218, 7
  %v2220 = vsub.s32 %v2217, %v2219
  %v2221 = vrot.slane %v60, %v2220
  %v2222 = vcombine.high %v2221, %v2221
  %v2224 = vunpack.c.l.s4 1966171168
  %v2225 = vunpack.c.0.s8 %v2224
  %v2226 = vlaneseq
  %v2227 = vshrl.u32 %v2226, 7
  %v2228 = vsub.s32 %v2225, %v2227
  %v2229 = vrot.slane %v2221, %v2228
  %v2231 = vunpack.c.l.s4 1966171168
  %v2232 = vunpack.c.0.s8 %v2231
  %v2233 = vlaneseq
  %v2234 = vshrl.u32 %v2233, 7
  %v2235 = vsub.s32 %v2232, %v2234
  %v2236 = vrot.slane %v2222, %v2235
  %v2237 = vcombine.high %v2229, %v2229
  %v2238 = vcombine.high %v2236, %v2236
  %v2240 = vunpack.c.l.s4 1966171168
  %v2241 = vunpack.c.0.s8 %v2240
  %v2242 = vlaneseq
  %v2243 = vshrl.u32 %v2242, 7
  %v2244 = vsub.s32 %v2241, %v2243
  %v2245 = vrot.slane %v61, %v2244
  %v2246 = vcombine.high %v2245, %v2245
  %v2248 = vunpack.c.l.s4 1966171168
  %v2249 = vunpack.c.0.s8 %v2248
  %v2250 = vlaneseq
  %v2251 = vshrl.u32 %v2250, 7
  %v2252 = vsub.s32 %v2249, %v2251
  %v2253 = vrot.slane %v2245, %v2252
  %v2255 = vunpack.c.l.s4 1966171168
  %v2256 = vunpack.c.0.s8 %v2255
  %v2257 = vlaneseq
  %v2258 = vshrl.u32 %v2257, 7
  %v2259 = vsub.s32 %v2256, %v2258
  %v2260 = vrot.slane %v2246, %v2259
  %v2261 = vcombine.high %v2253, %v2253
  %v2262 = vcombine.high %v2260, %v2260
  %v2264 = vunpack.c.l.s4 1966171168
  %v2265 = vunpack.c.0.s8 %v2264
  %v2266 = vlaneseq
  %v2267 = vshrl.u32 %v2266, 7
  %v2268 = vsub.s32 %v2265, %v2267
  %v2269 = vrot.slane %v62, %v2268
  %v2270 = vcombine.high %v2269, %v2269
  %v2272 = vunpack.c.l.s4 1966171168
  %v2273 = vunpack.c.0.s8 %v2272
  %v2274 = vlaneseq
  %v2275 = vshrl.u32 %v2274, 7
  %v2276 = vsub.s32 %v2273, %v2275
  %v2277 = vrot.slane %v2269, %v2276
  %v2279 = vunpack.c.l.s4 1966171168
  %v2280 = vunpack.c.0.s8 %v2279
  %v2281 = vlaneseq
  %v2282 = vshrl.u32 %v2281, 7
  %v2283 = vsub.s32 %v2280, %v2282
  %v2284 = vrot.slane %v2270, %v2283
  %v2285 = vcombine.high %v2277, %v2277
  %v2286 = vcombine.high %v2284, %v2284
  %v2288 = vunpack.c.l.s4 1966171168
  %v2289 = vunpack.c.0.s8 %v2288
  %v2290 = vlaneseq
  %v2291 = vshrl.u32 %v2290, 7
  %v2292 = vsub.s32 %v2289, %v2291
  %v2293 = vrot.slane %v63, %v2292
  %v2294 = vcombine.high %v2293, %v2293
  %v2296 = vunpack.c.l.s4 1966171168
  %v2297 = vunpack.c.0.s8 %v2296
  %v2298 = vlaneseq
  %v2299 = vshrl.u32 %v2298, 7
  %v2300 = vsub.s32 %v2297, %v2299
  %v2301 = vrot.slane %v2293, %v2300
  %v2303 = vunpack.c.l.s4 1966171168
  %v2304 = vunpack.c.0.s8 %v2303
  %v2305 = vlaneseq
  %v2306 = vshrl.u32 %v2305, 7
  %v2307 = vsub.s32 %v2304, %v2306
  %v2308 = vrot.slane %v2294, %v2307
  %v2309 = vcombine.high %v2301, %v2301
  %v2310 = vcombine.high %v2308, %v2308
  %v2312 = vunpack.c.l.s4 1966171168
  %v2313 = vunpack.c.0.s8 %v2312
  %v2314 = vlaneseq
  %v2315 = vshrl.u32 %v2314, 7
  %v2316 = vsub.s32 %v2313, %v2315
  %v2317 = vrot.slane %v64, %v2316
  %v2318 = vcombine.high %v2317, %v2317
  %v2320 = vunpack.c.l.s4 1966171168
  %v2321 = vunpack.c.0.s8 %v2320
  %v2322 = vlaneseq
  %v2323 = vshrl.u32 %v2322, 7
  %v2324 = vsub.s32 %v2321, %v2323
  %v2325 = vrot.slane %v2317, %v2324
  %v2327 = vunpack.c.l.s4 1966171168
  %v2328 = vunpack.c.0.s8 %v2327
  %v2329 = vlaneseq
  %v2330 = vshrl.u32 %v2329, 7
  %v2331 = vsub.s32 %v2328, %v2330
  %v2332 = vrot.slane %v2318, %v2331
  %v2333 = vcombine.high %v2325, %v2325
  %v2334 = vcombine.high %v2332, %v2332
  %v2335 = vunpack.i.l.s16 %v2157
  %v2336 = vunpack.i.h.s16 %v2157
  %v2337 = vunpack.i.l.s16 %v2164
  %v2338 = vunpack.i.h.s16 %v2164
  %v2339 = vunpack.i.l.s16 %v2165
  %v2340 = vunpack.i.h.s16 %v2165
  %v2341 = vunpack.i.l.s16 %v2166
  %v2342 = vunpack.i.h.s16 %v2166
  %v2343 = vunpack.i.l.s16 %v2181
  %v2344 = vunpack.i.h.s16 %v2181
  %v2345 = vunpack.i.l.s16 %v2188
  %v2346 = vunpack.i.h.s16 %v2188
  %v2347 = vunpack.i.l.s16 %v2189
  %v2348 = vunpack.i.h.s16 %v2189
  %v2349 = vunpack.i.l.s16 %v2190
  %v2350 = vunpack.i.h.s16 %v2190
  %v2351 = vunpack.i.l.s16 %v2205
  %v2352 = vunpack.i.h.s16 %v2205
  %v2353 = vunpack.i.l.s16 %v2212
  %v2354 = vunpack.i.h.s16 %v2212
  %v2355 = vunpack.i.l.s16 %v2213
  %v2356 = vunpack.i.h.s16 %v2213
  %v2357 = vunpack.i.l.s16 %v2214
  %v2358 = vunpack.i.h.s16 %v2214
  %v2359 = vunpack.i.l.s16 %v2229
  %v2360 = vunpack.i.h.s16 %v2229
  %v2361 = vunpack.i.l.s16 %v2236
  %v2362 = vunpack.i.h.s16 %v2236
  %v2363 = vunpack.i.l.s16 %v2237
  %v2364 = vunpack.i.h.s16 %v2237
  %v2365 = vunpack.i.l.s16 %v2238
  %v2366 = vunpack.i.h.s16 %v2238
  %v2367 = vunpack.i.l.s16 %v2253
  %v2368 = vunpack.i.h.s16 %v2253
  %v2369 = vunpack.i.l.s16 %v2260
  %v2370 = vunpack.i.h.s16 %v2260
  %v2371 = vunpack.i.l.s16 %v2261
  %v2372 = vunpack.i.h.s16 %v2261
  %v2373 = vunpack.i.l.s16 %v2262
  %v2374 = vunpack.i.h.s16 %v2262
  %v2375 = vunpack.i.l.s16 %v2277
  %v2376 = vunpack.i.h.s16 %v2277
  %v2377 = vunpack.i.l.s16 %v2284
  %v2378 = vunpack.i.h.s16 %v2284
  %v2379 = vunpack.i.l.s16 %v2285
  %v2380 = vunpack.i.h.s16 %v2285
  %v2381 = vunpack.i.l.s16 %v2286
  %v2382 = vunpack.i.h.s16 %v2286
  %v2383 = vunpack.i.l.s16 %v2301
  %v2384 = vunpack.i.h.s16 %v2301
  %v2385 = vunpack.i.l.s16 %v2308
  %v2386 = vunpack.i.h.s16 %v2308
  %v2387 = vunpack.i.l.s16 %v2309
  %v2388 = vunpack.i.h.s16 %v2309
  %v2389 = vunpack.i.l.s16 %v2310
  %v2390 = vunpack.i.h.s16 %v2310
  %v2391 = vunpack.i.l.s16 %v2325
  %v2392 = vunpack.i.h.s16 %v2325
  %v2393 = vunpack.i.l.s16 %v2332
  %v2394 = vunpack.i.h.s16 %v2332
  %v2395 = vunpack.i.l.s16 %v2333
  %v2396 = vunpack.i.h.s16 %v2333
  %v2397 = vunpack.i.l.s16 %v2334
  %v2398 = vunpack.i.h.s16 %v2334
  %v2399 = vpack.c.bf16 %v1624, %v1623
  %v2400 = vpack.c.bf16 %v1626, %v1625
  %v2401 = vpack.c.bf16 %v1628, %v1627
  %v2402 = vpack.c.bf16 %v1630, %v1629
  %v2403 = vpack.c.bf16 %v1632, %v1631
  %v2404 = vpack.c.bf16 %v1634, %v1633
  %v2405 = vpack.c.bf16 %v1636, %v1635
  %v2406 = vpack.c.bf16 %v1638, %v1637
  %v2407 = vpack.c.bf16 %v1640, %v1639
  %v2408 = vpack.c.bf16 %v1642, %v1641
  %v2409 = vpack.c.bf16 %v1644, %v1643
  %v2410 = vpack.c.bf16 %v1646, %v1645
  %v2411 = vpack.c.bf16 %v1648, %v1647
  %v2412 = vpack.c.bf16 %v1650, %v1649
  %v2413 = vpack.c.bf16 %v1652, %v1651
  %v2414 = vpack.c.bf16 %v1654, %v1653
  %v2415 = vpack.c.bf16 %v1656, %v1655
  %v2416 = vpack.c.bf16 %v1658, %v1657
  %v2417 = vpack.c.bf16 %v1660, %v1659
  %v2418 = vpack.c.bf16 %v1662, %v1661
  %v2419 = vpack.c.bf16 %v1664, %v1663
  %v2420 = vpack.c.bf16 %v1666, %v1665
  %v2421 = vpack.c.bf16 %v1668, %v1667
  %v2422 = vpack.c.bf16 %v1670, %v1669
  %v2423 = vpack.c.bf16 %v1672, %v1671
  %v2424 = vpack.c.bf16 %v1674, %v1673
  %v2425 = vpack.c.bf16 %v1676, %v1675
  %v2426 = vpack.c.bf16 %v1678, %v1677
  %v2427 = vpack.c.bf16 %v1680, %v1679
  %v2428 = vpack.c.bf16 %v1682, %v1681
  %v2429 = vpack.c.bf16 %v1684, %v1683
  %v2430 = vpack.c.bf16 %v1686, %v1685
  %v2431 = vpack.c.bf16 %v1688, %v1687
  %v2432 = vpack.c.bf16 %v1690, %v1689
  %v2433 = vpack.c.bf16 %v1692, %v1691
  %v2434 = vpack.c.bf16 %v1694, %v1693
  %v2435 = vpack.c.bf16 %v1696, %v1695
  %v2436 = vpack.c.bf16 %v1698, %v1697
  %v2437 = vpack.c.bf16 %v1700, %v1699
  %v2438 = vpack.c.bf16 %v1702, %v1701
  %v2439 = vpack.c.bf16 %v1704, %v1703
  %v2440 = vpack.c.bf16 %v1706, %v1705
  %v2441 = vpack.c.bf16 %v1708, %v1707
  %v2442 = vpack.c.bf16 %v1710, %v1709
  %v2443 = vpack.c.bf16 %v1712, %v1711
  %v2444 = vpack.c.bf16 %v1714, %v1713
  %v2445 = vpack.c.bf16 %v1716, %v1715
  %v2446 = vpack.c.bf16 %v1718, %v1717
  %v2447 = vpack.c.bf16 %v1720, %v1719
  %v2448 = vpack.c.bf16 %v1722, %v1721
  %v2449 = vpack.c.bf16 %v1724, %v1723
  %v2450 = vpack.c.bf16 %v1726, %v1725
  %v2451 = vpack.c.bf16 %v1728, %v1727
  %v2452 = vpack.c.bf16 %v1730, %v1729
  %v2453 = vpack.c.bf16 %v1732, %v1731
  %v2454 = vpack.c.bf16 %v1734, %v1733
  %v2455 = vpack.c.bf16 %v1736, %v1735
  %v2456 = vpack.c.bf16 %v1738, %v1737
  %v2457 = vpack.c.bf16 %v1740, %v1739
  %v2458 = vpack.c.bf16 %v1742, %v1741
  %v2459 = vpack.c.bf16 %v1744, %v1743
  %v2460 = vpack.c.bf16 %v1746, %v1745
  %v2461 = vpack.c.bf16 %v1748, %v1747
  %v2462 = vpack.c.bf16 %v1750, %v1749
  %v2463 = vpack.c.bf16 %v1752, %v1751
  %v2464 = vpack.c.bf16 %v1754, %v1753
  %v2465 = vpack.c.bf16 %v1756, %v1755
  %v2466 = vpack.c.bf16 %v1758, %v1757
  %v2467 = vpack.c.bf16 %v1760, %v1759
  %v2468 = vpack.c.bf16 %v1762, %v1761
  %v2469 = vpack.c.bf16 %v1764, %v1763
  %v2470 = vpack.c.bf16 %v1766, %v1765
  %v2471 = vpack.c.bf16 %v1768, %v1767
  %v2472 = vpack.c.bf16 %v1770, %v1769
  %v2473 = vpack.c.bf16 %v1772, %v1771
  %v2474 = vpack.c.bf16 %v1774, %v1773
  %v2475 = vpack.c.bf16 %v1776, %v1775
  %v2476 = vpack.c.bf16 %v1778, %v1777
  %v2477 = vpack.c.bf16 %v1780, %v1779
  %v2478 = vpack.c.bf16 %v1782, %v1781
  %v2479 = vpack.c.bf16 %v1784, %v1783
  %v2480 = vpack.c.bf16 %v1786, %v1785
  %v2481 = vpack.c.bf16 %v1788, %v1787
  %v2482 = vpack.c.bf16 %v1790, %v1789
  %v2483 = vpack.c.bf16 %v1792, %v1791
  %v2484 = vpack.c.bf16 %v1794, %v1793
  %v2485 = vpack.c.bf16 %v1796, %v1795
  %v2486 = vpack.c.bf16 %v1798, %v1797
  %v2487 = vpack.c.bf16 %v1800, %v1799
  %v2488 = vpack.c.bf16 %v1802, %v1801
  %v2489 = vpack.c.bf16 %v1804, %v1803
  %v2490 = vpack.c.bf16 %v1806, %v1805
  %v2491 = vpack.c.bf16 %v1808, %v1807
  %v2492 = vpack.c.bf16 %v1810, %v1809
  %v2493 = vpack.c.bf16 %v1812, %v1811
  %v2494 = vpack.c.bf16 %v1814, %v1813
  %v2495 = vpack.c.bf16 %v1816, %v1815
  %v2496 = vpack.c.bf16 %v1818, %v1817
  %v2497 = vpack.c.bf16 %v1820, %v1819
  %v2498 = vpack.c.bf16 %v1822, %v1821
  %v2499 = vpack.c.bf16 %v1824, %v1823
  %v2500 = vpack.c.bf16 %v1826, %v1825
  %v2501 = vpack.c.bf16 %v1828, %v1827
  %v2502 = vpack.c.bf16 %v1830, %v1829
  %v2503 = vpack.c.bf16 %v1832, %v1831
  %v2504 = vpack.c.bf16 %v1834, %v1833
  %v2505 = vpack.c.bf16 %v1836, %v1835
  %v2506 = vpack.c.bf16 %v1838, %v1837
  %v2507 = vpack.c.bf16 %v1840, %v1839
  %v2508 = vpack.c.bf16 %v1842, %v1841
  %v2509 = vpack.c.bf16 %v1844, %v1843
  %v2510 = vpack.c.bf16 %v1846, %v1845
  %v2511 = vpack.c.bf16 %v1848, %v1847
  %v2512 = vpack.c.bf16 %v1850, %v1849
  %v2513 = vpack.c.bf16 %v1852, %v1851
  %v2514 = vpack.c.bf16 %v1854, %v1853
  %v2515 = vpack.c.bf16 %v1856, %v1855
  %v2516 = vpack.c.bf16 %v1858, %v1857
  %v2517 = vpack.c.bf16 %v1860, %v1859
  %v2518 = vpack.c.bf16 %v1862, %v1861
  %v2519 = vpack.c.bf16 %v1864, %v1863
  %v2520 = vpack.c.bf16 %v1866, %v1865
  %v2521 = vpack.c.bf16 %v1868, %v1867
  %v2522 = vpack.c.bf16 %v1870, %v1869
  %v2523 = vpack.c.bf16 %v1872, %v1871
  %v2524 = vpack.c.bf16 %v1874, %v1873
  %v2525 = vpack.c.bf16 %v1876, %v1875
  %v2526 = vpack.c.bf16 %v1878, %v1877
  %v2527 = vpack.c.bf16 %v1880, %v1879
  %v2528 = vpack.c.bf16 %v1882, %v1881
  %v2529 = vpack.c.bf16 %v1884, %v1883
  %v2530 = vpack.c.bf16 %v1886, %v1885
  %v2531 = vpack.c.bf16 %v1888, %v1887
  %v2532 = vpack.c.bf16 %v1890, %v1889
  %v2533 = vpack.c.bf16 %v1892, %v1891
  %v2534 = vpack.c.bf16 %v1894, %v1893
  %v2535 = vpack.c.bf16 %v1896, %v1895
  %v2536 = vpack.c.bf16 %v1898, %v1897
  %v2537 = vpack.c.bf16 %v1900, %v1899
  %v2538 = vpack.c.bf16 %v1902, %v1901
  %v2539 = vpack.c.bf16 %v1904, %v1903
  %v2540 = vpack.c.bf16 %v1906, %v1905
  %v2541 = vpack.c.bf16 %v1908, %v1907
  %v2542 = vpack.c.bf16 %v1910, %v1909
  %v2543 = vpack.c.bf16 %v1912, %v1911
  %v2544 = vpack.c.bf16 %v1914, %v1913
  %v2545 = vpack.c.bf16 %v1916, %v1915
  %v2546 = vpack.c.bf16 %v1918, %v1917
  %v2547 = vpack.c.bf16 %v1920, %v1919
  %v2548 = vpack.c.bf16 %v1922, %v1921
  %v2549 = vpack.c.bf16 %v1924, %v1923
  %v2550 = vpack.c.bf16 %v1926, %v1925
  %v2551 = vpack.c.bf16 %v1928, %v1927
  %v2552 = vpack.c.bf16 %v1930, %v1929
  %v2553 = vpack.c.bf16 %v1932, %v1931
  %v2554 = vpack.c.bf16 %v1934, %v1933
  %v2555 = vpack.c.bf16 %v1936, %v1935
  %v2556 = vpack.c.bf16 %v1938, %v1937
  %v2557 = vpack.c.bf16 %v1940, %v1939
  %v2558 = vpack.c.bf16 %v1942, %v1941
  %v2559 = vpack.c.bf16 %v1944, %v1943
  %v2560 = vpack.c.bf16 %v1946, %v1945
  %v2561 = vpack.c.bf16 %v1948, %v1947
  %v2562 = vpack.c.bf16 %v1950, %v1949
  %v2563 = vpack.c.bf16 %v1952, %v1951
  %v2564 = vpack.c.bf16 %v1954, %v1953
  %v2565 = vpack.c.bf16 %v1956, %v1955
  %v2566 = vpack.c.bf16 %v1958, %v1957
  %v2567 = vpack.c.bf16 %v1960, %v1959
  %v2568 = vpack.c.bf16 %v1962, %v1961
  %v2569 = vpack.c.bf16 %v1964, %v1963
  %v2570 = vpack.c.bf16 %v1966, %v1965
  %v2571 = vpack.c.bf16 %v1968, %v1967
  %v2572 = vpack.c.bf16 %v1970, %v1969
  %v2573 = vpack.c.bf16 %v1972, %v1971
  %v2574 = vpack.c.bf16 %v1974, %v1973
  %v2575 = vpack.c.bf16 %v1976, %v1975
  %v2576 = vpack.c.bf16 %v1978, %v1977
  %v2577 = vpack.c.bf16 %v1980, %v1979
  %v2578 = vpack.c.bf16 %v1982, %v1981
  %v2579 = vpack.c.bf16 %v1984, %v1983
  %v2580 = vpack.c.bf16 %v1986, %v1985
  %v2581 = vpack.c.bf16 %v1988, %v1987
  %v2582 = vpack.c.bf16 %v1990, %v1989
  %v2583 = vpack.c.bf16 %v1992, %v1991
  %v2584 = vpack.c.bf16 %v1994, %v1993
  %v2585 = vpack.c.bf16 %v1996, %v1995
  %v2586 = vpack.c.bf16 %v1998, %v1997
  %v2587 = vpack.c.bf16 %v2000, %v1999
  %v2588 = vpack.c.bf16 %v2002, %v2001
  %v2589 = vpack.c.bf16 %v2004, %v2003
  %v2590 = vpack.c.bf16 %v2006, %v2005
  %v2591 = vpack.c.bf16 %v2008, %v2007
  %v2592 = vpack.c.bf16 %v2010, %v2009
  %v2593 = vpack.c.bf16 %v2012, %v2011
  %v2594 = vpack.c.bf16 %v2014, %v2013
  %v2595 = vpack.c.bf16 %v2016, %v2015
  %v2596 = vpack.c.bf16 %v2018, %v2017
  %v2597 = vpack.c.bf16 %v2020, %v2019
  %v2598 = vpack.c.bf16 %v2022, %v2021
  %v2599 = vpack.c.bf16 %v2024, %v2023
  %v2600 = vpack.c.bf16 %v2026, %v2025
  %v2601 = vpack.c.bf16 %v2028, %v2027
  %v2602 = vpack.c.bf16 %v2030, %v2029
  %v2603 = vpack.c.bf16 %v2032, %v2031
  %v2604 = vpack.c.bf16 %v2034, %v2033
  %v2605 = vpack.c.bf16 %v2036, %v2035
  %v2606 = vpack.c.bf16 %v2038, %v2037
  %v2607 = vpack.c.bf16 %v2040, %v2039
  %v2608 = vpack.c.bf16 %v2042, %v2041
  %v2609 = vpack.c.bf16 %v2044, %v2043
  %v2610 = vpack.c.bf16 %v2046, %v2045
  %v2611 = vpack.c.bf16 %v2048, %v2047
  %v2612 = vpack.c.bf16 %v2050, %v2049
  %v2613 = vpack.c.bf16 %v2052, %v2051
  %v2614 = vpack.c.bf16 %v2054, %v2053
  %v2615 = vpack.c.bf16 %v2056, %v2055
  %v2616 = vpack.c.bf16 %v2058, %v2057
  %v2617 = vpack.c.bf16 %v2060, %v2059
  %v2618 = vpack.c.bf16 %v2062, %v2061
  %v2619 = vpack.c.bf16 %v2064, %v2063
  %v2620 = vpack.c.bf16 %v2066, %v2065
  %v2621 = vpack.c.bf16 %v2068, %v2067
  %v2622 = vpack.c.bf16 %v2070, %v2069
  %v2623 = vpack.c.bf16 %v2072, %v2071
  %v2624 = vpack.c.bf16 %v2074, %v2073
  %v2625 = vpack.c.bf16 %v2076, %v2075
  %v2626 = vpack.c.bf16 %v2078, %v2077
  %v2627 = vpack.c.bf16 %v2080, %v2079
  %v2628 = vpack.c.bf16 %v2082, %v2081
  %v2629 = vpack.c.bf16 %v2084, %v2083
  %v2630 = vpack.c.bf16 %v2086, %v2085
  %v2631 = vpack.c.bf16 %v2088, %v2087
  %v2632 = vpack.c.bf16 %v2090, %v2089
  %v2633 = vpack.c.bf16 %v2092, %v2091
  %v2634 = vpack.c.bf16 %v2094, %v2093
  %v2635 = vpack.c.bf16 %v2096, %v2095
  %v2636 = vpack.c.bf16 %v2098, %v2097
  %v2637 = vpack.c.bf16 %v2100, %v2099
  %v2638 = vpack.c.bf16 %v2102, %v2101
  %v2639 = vpack.c.bf16 %v2104, %v2103
  %v2640 = vpack.c.bf16 %v2106, %v2105
  %v2641 = vpack.c.bf16 %v2108, %v2107
  %v2642 = vpack.c.bf16 %v2110, %v2109
  %v2643 = vpack.c.bf16 %v2112, %v2111
  %v2644 = vpack.c.bf16 %v2114, %v2113
  %v2645 = vpack.c.bf16 %v2116, %v2115
  %v2646 = vpack.c.bf16 %v2118, %v2117
  %v2647 = vpack.c.bf16 %v2120, %v2119
  %v2648 = vpack.c.bf16 %v2122, %v2121
  %v2649 = vpack.c.bf16 %v2124, %v2123
  %v2650 = vpack.c.bf16 %v2126, %v2125
  %v2651 = vpack.c.bf16 %v2128, %v2127
  %v2652 = vpack.c.bf16 %v2130, %v2129
  %v2653 = vpack.c.bf16 %v2132, %v2131
  %v2654 = vpack.c.bf16 %v2134, %v2133
  %v2655 = vpack.i.b16 %v2335, %v2335
  %v2656 = vlaneseq
  %v2657 = vshrl.u32 %v2656, 7
  %v2658 = vsub.s32 0, %v2657
  %v2659 = vrot.slane %v2655, %v2658
  %vm2660 = vcmask 523264
  %v2662 = vsel %vm2660, %v2659, 0
  %2664 = vmatprep.subr.bf16.mxu0 0
  %2665 = vmatpush1.bf16.msra.mxu0 %v2399
  %2666 = vmatprep.subr.bf16.mxu0 0
  %2667 = vmatpush1.bf16.msra.mxu0 %v2400
  %2668 = vmatprep.subr.bf16.mxu0 0
  %2669 = vmatpush1.bf16.msra.mxu0 %v2401
  %2670 = vmatprep.subr.bf16.mxu0 0
  %2671 = vmatpush1.bf16.msra.mxu0 %v2402
  %2672 = vmatprep.subr.bf16.mxu0 0
  %2673 = vmatpush1.bf16.msra.mxu0 0
  %2674 = vmatprep.subr.bf16.mxu0 0
  %2675 = vmatpush1.bf16.msra.mxu0 0
  %2676 = vmatprep.subr.bf16.mxu0 0
  %2677 = vmatpush1.bf16.msra.mxu0 0
  %2678 = vmatprep.subr.bf16.mxu0 0
  %2679 = vmatpush1.bf16.msra.mxu0 0
  %2680 = vmatprep.subr.bf16.mxu0 0
  %2681 = vmatpush1.bf16.msra.mxu0 0
  %2682 = vmatprep.subr.bf16.mxu0 0
  %2683 = vmatpush1.bf16.msra.mxu0 0
  %2684 = vmatprep.subr.bf16.mxu0 0
  %2685 = vmatpush1.bf16.msra.mxu0 0
  %2686 = vmatprep.subr.bf16.mxu0 0
  %2687 = vmatpush1.bf16.msra.mxu0 0
  %2688 = vmatprep.subr.bf16.mxu0 0
  %2689 = vmatpush1.bf16.msra.mxu0 0
  %2690 = vmatprep.subr.bf16.mxu0 0
  %2691 = vmatpush1.bf16.msra.mxu0 0
  %2692 = vmatprep.subr.bf16.mxu0 0
  %2693 = vmatpush1.bf16.msra.mxu0 0
  %2694 = vmatprep.subr.bf16.mxu0 0
  %2695 = vmatpush1.bf16.msra.mxu0 0
  %2696 = vmatprep.mubr.bf16.mxu0 0
  %2697 = vmatmul.mubr.bf16.gmra.mrb[0].mxu0 %v2662
  %v2698 = vpop.f32.mrb[0].mxu0
  %v2699 = vadd.f32 0.0, %v2698
  %v2700 = vpop.f32.mrb[0].mxu0
  %v2701 = vpop.f32.mrb[0].mxu0
  %v2702 = vpop.f32.mrb[0].mxu0
  %2703 = vdwg.mxu0
  %v2704 = vpack.i.b16 %v2336, %v2336
  %v2705 = vlaneseq
  %v2706 = vshrl.u32 %v2705, 7
  %v2707 = vsub.s32 0, %v2706
  %v2708 = vrot.slane %v2704, %v2707
  %v2710 = vsel %vm2660, %v2708, 0
  %2712 = vmatprep.subr.bf16.mxu0 0
  %2713 = vmatpush1.bf16.msra.mxu0 %v2403
  %2714 = vmatprep.subr.bf16.mxu0 0
  %2715 = vmatpush1.bf16.msra.mxu0 %v2404
  %2716 = vmatprep.subr.bf16.mxu0 0
  %2717 = vmatpush1.bf16.msra.mxu0 %v2405
  %2718 = vmatprep.subr.bf16.mxu0 0
  %2719 = vmatpush1.bf16.msra.mxu0 %v2406
  %2720 = vmatprep.subr.bf16.mxu0 0
  %2721 = vmatpush1.bf16.msra.mxu0 0
  %2722 = vmatprep.subr.bf16.mxu0 0
  %2723 = vmatpush1.bf16.msra.mxu0 0
  %2724 = vmatprep.subr.bf16.mxu0 0
  %2725 = vmatpush1.bf16.msra.mxu0 0
  %2726 = vmatprep.subr.bf16.mxu0 0
  %2727 = vmatpush1.bf16.msra.mxu0 0
  %2728 = vmatprep.subr.bf16.mxu0 0
  %2729 = vmatpush1.bf16.msra.mxu0 0
  %2730 = vmatprep.subr.bf16.mxu0 0
  %2731 = vmatpush1.bf16.msra.mxu0 0
  %2732 = vmatprep.subr.bf16.mxu0 0
  %2733 = vmatpush1.bf16.msra.mxu0 0
  %2734 = vmatprep.subr.bf16.mxu0 0
  %2735 = vmatpush1.bf16.msra.mxu0 0
  %2736 = vmatprep.subr.bf16.mxu0 0
  %2737 = vmatpush1.bf16.msra.mxu0 0
  %2738 = vmatprep.subr.bf16.mxu0 0
  %2739 = vmatpush1.bf16.msra.mxu0 0
  %2740 = vmatprep.subr.bf16.mxu0 0
  %2741 = vmatpush1.bf16.msra.mxu0 0
  %2742 = vmatprep.subr.bf16.mxu0 0
  %2743 = vmatpush1.bf16.msra.mxu0 0
  %2744 = vmatprep.mubr.bf16.mxu0 0
  %2745 = vmatmul.mubr.bf16.gmra.mrb[0].mxu0 %v2710
  %v2746 = vpop.f32.mrb[0].mxu0
  %v2747 = vadd.f32 0.0, %v2746
  %v2748 = vpop.f32.mrb[0].mxu0
  %v2749 = vpop.f32.mrb[0].mxu0
  %v2750 = vpop.f32.mrb[0].mxu0
  %2751 = vdwg.mxu0
  %v2752 = vpack.i.b16 %v2337, %v2337
  %v2753 = vlaneseq
  %v2754 = vshrl.u32 %v2753, 7
  %v2755 = vsub.s32 0, %v2754
  %v2756 = vrot.slane %v2752, %v2755
  %v2758 = vsel %vm2660, %v2756, 0
  %2760 = vmatprep.subr.bf16.mxu0 0
  %2761 = vmatpush1.bf16.msra.mxu0 %v2407
  %2762 = vmatprep.subr.bf16.mxu0 0
  %2763 = vmatpush1.bf16.msra.mxu0 %v2408
  %2764 = vmatprep.subr.bf16.mxu0 0
  %2765 = vmatpush1.bf16.msra.mxu0 %v2409
  %2766 = vmatprep.subr.bf16.mxu0 0
  %2767 = vmatpush1.bf16.msra.mxu0 %v2410
  %2768 = vmatprep.subr.bf16.mxu0 0
  %2769 = vmatpush1.bf16.msra.mxu0 0
  %2770 = vmatprep.subr.bf16.mxu0 0
  %2771 = vmatpush1.bf16.msra.mxu0 0
  %2772 = vmatprep.subr.bf16.mxu0 0
  %2773 = vmatpush1.bf16.msra.mxu0 0
  %2774 = vmatprep.subr.bf16.mxu0 0
  %2775 = vmatpush1.bf16.msra.mxu0 0
  %2776 = vmatprep.subr.bf16.mxu0 0
  %2777 = vmatpush1.bf16.msra.mxu0 0
  %2778 = vmatprep.subr.bf16.mxu0 0
  %2779 = vmatpush1.bf16.msra.mxu0 0
  %2780 = vmatprep.subr.bf16.mxu0 0
  %2781 = vmatpush1.bf16.msra.mxu0 0
  %2782 = vmatprep.subr.bf16.mxu0 0
  %2783 = vmatpush1.bf16.msra.mxu0 0
  %2784 = vmatprep.subr.bf16.mxu0 0
  %2785 = vmatpush1.bf16.msra.mxu0 0
  %2786 = vmatprep.subr.bf16.mxu0 0
  %2787 = vmatpush1.bf16.msra.mxu0 0
  %2788 = vmatprep.subr.bf16.mxu0 0
  %2789 = vmatpush1.bf16.msra.mxu0 0
  %2790 = vmatprep.subr.bf16.mxu0 0
  %2791 = vmatpush1.bf16.msra.mxu0 0
  %2792 = vmatprep.mubr.bf16.mxu0 0
  %2793 = vmatmul.mubr.bf16.gmra.mrb[0].mxu0 %v2758
  %v2794 = vpop.f32.mrb[0].mxu0
  %v2795 = vadd.f32 0.0, %v2794
  %v2796 = vpop.f32.mrb[0].mxu0
  %v2797 = vpop.f32.mrb[0].mxu0
  %v2798 = vpop.f32.mrb[0].mxu0
  %2799 = vdwg.mxu0
  %v2800 = vpack.i.b16 %v2338, %v2338
  %v2801 = vlaneseq
  %v2802 = vshrl.u32 %v2801, 7
  %v2803 = vsub.s32 0, %v2802
  %v2804 = vrot.slane %v2800, %v2803
  %v2806 = vsel %vm2660, %v2804, 0
  %2808 = vmatprep.subr.bf16.mxu0 0
  %2809 = vmatpush1.bf16.msra.mxu0 %v2411
  %2810 = vmatprep.subr.bf16.mxu0 0
  %2811 = vmatpush1.bf16.msra.mxu0 %v2412
  %2812 = vmatprep.subr.bf16.mxu0 0
  %2813 = vmatpush1.bf16.msra.mxu0 %v2413
  %2814 = vmatprep.subr.bf16.mxu0 0
  %2815 = vmatpush1.bf16.msra.mxu0 %v2414
  %2816 = vmatprep.subr.bf16.mxu0 0
  %2817 = vmatpush1.bf16.msra.mxu0 0
  %2818 = vmatprep.subr.bf16.mxu0 0
  %2819 = vmatpush1.bf16.msra.mxu0 0
  %2820 = vmatprep.subr.bf16.mxu0 0
  %2821 = vmatpush1.bf16.msra.mxu0 0
  %2822 = vmatprep.subr.bf16.mxu0 0
  %2823 = vmatpush1.bf16.msra.mxu0 0
  %2824 = vmatprep.subr.bf16.mxu0 0
  %2825 = vmatpush1.bf16.msra.mxu0 0
  %2826 = vmatprep.subr.bf16.mxu0 0
  %2827 = vmatpush1.bf16.msra.mxu0 0
  %2828 = vmatprep.subr.bf16.mxu0 0
  %2829 = vmatpush1.bf16.msra.mxu0 0
  %2830 = vmatprep.subr.bf16.mxu0 0
  %2831 = vmatpush1.bf16.msra.mxu0 0
  %2832 = vmatprep.subr.bf16.mxu0 0
  %2833 = vmatpush1.bf16.msra.mxu0 0
  %2834 = vmatprep.subr.bf16.mxu0 0
  %2835 = vmatpush1.bf16.msra.mxu0 0
  %2836 = vmatprep.subr.bf16.mxu0 0
  %2837 = vmatpush1.bf16.msra.mxu0 0
  %2838 = vmatprep.subr.bf16.mxu0 0
  %2839 = vmatpush1.bf16.msra.mxu0 0
  %2840 = vmatprep.mubr.bf16.mxu0 0
  %2841 = vmatmul.mubr.bf16.gmra.mrb[0].mxu0 %v2806
  %v2842 = vpop.f32.mrb[0].mxu0
  %v2843 = vadd.f32 0.0, %v2842
  %v2844 = vpop.f32.mrb[0].mxu0
  %v2845 = vpop.f32.mrb[0].mxu0
  %v2846 = vpop.f32.mrb[0].mxu0
  %2847 = vdwg.mxu0
  %v2848 = vpack.i.b16 %v2339, %v2339
  %v2849 = vlaneseq
  %v2850 = vshrl.u32 %v2849, 7
  %v2851 = vsub.s32 0, %v2850
  %v2852 = vrot.slane %v2848, %v2851
  %v2854 = vsel %vm2660, %v2852, 0
  %2856 = vmatprep.subr.bf16.mxu0 0
  %2857 = vmatpush1.bf16.msra.mxu0 %v2415
  %2858 = vmatprep.subr.bf16.mxu0 0
  %2859 = vmatpush1.bf16.msra.mxu0 %v2416
  %2860 = vmatprep.subr.bf16.mxu0 0
  %2861 = vmatpush1.bf16.msra.mxu0 %v2417
  %2862 = vmatprep.subr.bf16.mxu0 0
  %2863 = vmatpush1.bf16.msra.mxu0 %v2418
  %2864 = vmatprep.subr.bf16.mxu0 0
  %2865 = vmatpush1.bf16.msra.mxu0 0
  %2866 = vmatprep.subr.bf16.mxu0 0
  %2867 = vmatpush1.bf16.msra.mxu0 0
  %2868 = vmatprep.subr.bf16.mxu0 0
  %2869 = vmatpush1.bf16.msra.mxu0 0
  %2870 = vmatprep.subr.bf16.mxu0 0
  %2871 = vmatpush1.bf16.msra.mxu0 0
  %2872 = vmatprep.subr.bf16.mxu0 0
  %2873 = vmatpush1.bf16.msra.mxu0 0
  %2874 = vmatprep.subr.bf16.mxu0 0
  %2875 = vmatpush1.bf16.msra.mxu0 0
  %2876 = vmatprep.subr.bf16.mxu0 0
  %2877 = vmatpush1.bf16.msra.mxu0 0
  %2878 = vmatprep.subr.bf16.mxu0 0
  %2879 = vmatpush1.bf16.msra.mxu0 0
  %2880 = vmatprep.subr.bf16.mxu0 0
  %2881 = vmatpush1.bf16.msra.mxu0 0
  %2882 = vmatprep.subr.bf16.mxu0 0
  %2883 = vmatpush1.bf16.msra.mxu0 0
  %2884 = vmatprep.subr.bf16.mxu0 0
  %2885 = vmatpush1.bf16.msra.mxu0 0
  %2886 = vmatprep.subr.bf16.mxu0 0
  %2887 = vmatpush1.bf16.msra.mxu0 0
  %2888 = vmatprep.mubr.bf16.mxu0 0
  %2889 = vmatmul.mubr.bf16.gmra.mrb[0].mxu0 %v2854
  %v2890 = vpop.f32.mrb[0].mxu0
  %v2891 = vadd.f32 0.0, %v2890
  %v2892 = vpop.f32.mrb[0].mxu0
  %v2893 = vpop.f32.mrb[0].mxu0
  %v2894 = vpop.f32.mrb[0].mxu0
  %2895 = vdwg.mxu0
  %v2896 = vpack.i.b16 %v2340, %v2340
  %v2897 = vlaneseq
  %v2898 = vshrl.u32 %v2897, 7
  %v2899 = vsub.s32 0, %v2898
  %v2900 = vrot.slane %v2896, %v2899
  %v2902 = vsel %vm2660, %v2900, 0
  %2904 = vmatprep.subr.bf16.mxu0 0
  %2905 = vmatpush1.bf16.msra.mxu0 %v2419
  %2906 = vmatprep.subr.bf16.mxu0 0
  %2907 = vmatpush1.bf16.msra.mxu0 %v2420
  %2908 = vmatprep.subr.bf16.mxu0 0
  %2909 = vmatpush1.bf16.msra.mxu0 %v2421
  %2910 = vmatprep.subr.bf16.mxu0 0
  %2911 = vmatpush1.bf16.msra.mxu0 %v2422
  %2912 = vmatprep.subr.bf16.mxu0 0
  %2913 = vmatpush1.bf16.msra.mxu0 0
  %2914 = vmatprep.subr.bf16.mxu0 0
  %2915 = vmatpush1.bf16.msra.mxu0 0
  %2916 = vmatprep.subr.bf16.mxu0 0
  %2917 = vmatpush1.bf16.msra.mxu0 0
  %2918 = vmatprep.subr.bf16.mxu0 0
  %2919 = vmatpush1.bf16.msra.mxu0 0
  %2920 = vmatprep.subr.bf16.mxu0 0
  %2921 = vmatpush1.bf16.msra.mxu0 0
  %2922 = vmatprep.subr.bf16.mxu0 0
  %2923 = vmatpush1.bf16.msra.mxu0 0
  %2924 = vmatprep.subr.bf16.mxu0 0
  %2925 = vmatpush1.bf16.msra.mxu0 0
  %2926 = vmatprep.subr.bf16.mxu0 0
  %2927 = vmatpush1.bf16.msra.mxu0 0
  %2928 = vmatprep.subr.bf16.mxu0 0
  %2929 = vmatpush1.bf16.msra.mxu0 0
  %2930 = vmatprep.subr.bf16.mxu0 0
  %2931 = vmatpush1.bf16.msra.mxu0 0
  %2932 = vmatprep.subr.bf16.mxu0 0
  %2933 = vmatpush1.bf16.msra.mxu0 0
  %2934 = vmatprep.subr.bf16.mxu0 0
  %2935 = vmatpush1.bf16.msra.mxu0 0
  %2936 = vmatprep.mubr.bf16.mxu0 0
  %2937 = vmatmul.mubr.bf16.gmra.mrb[0].mxu0 %v2902
  %v2938 = vpop.f32.mrb[0].mxu0
  %v2939 = vadd.f32 0.0, %v2938
  %v2940 = vpop.f32.mrb[0].mxu0
  %v2941 = vpop.f32.mrb[0].mxu0
  %v2942 = vpop.f32.mrb[0].mxu0
  %2943 = vdwg.mxu0
  %v2944 = vpack.i.b16 %v2341, %v2341
  %v2945 = vlaneseq
  %v2946 = vshrl.u32 %v2945, 7
  %v2947 = vsub.s32 0, %v2946
  %v2948 = vrot.slane %v2944, %v2947
  %v2950 = vsel %vm2660, %v2948, 0
  %2952 = vmatprep.subr.bf16.mxu0 0
  %2953 = vmatpush1.bf16.msra.mxu0 %v2423
  %2954 = vmatprep.subr.bf16.mxu0 0
  %2955 = vmatpush1.bf16.msra.mxu0 %v2424
  %2956 = vmatprep.subr.bf16.mxu0 0
  %2957 = vmatpush1.bf16.msra.mxu0 %v2425
  %2958 = vmatprep.subr.bf16.mxu0 0
  %2959 = vmatpush1.bf16.msra.mxu0 %v2426
  %2960 = vmatprep.subr.bf16.mxu0 0
  %2961 = vmatpush1.bf16.msra.mxu0 0
  %2962 = vmatprep.subr.bf16.mxu0 0
  %2963 = vmatpush1.bf16.msra.mxu0 0
  %2964 = vmatprep.subr.bf16.mxu0 0
  %2965 = vmatpush1.bf16.msra.mxu0 0
  %2966 = vmatprep.subr.bf16.mxu0 0
  %2967 = vmatpush1.bf16.msra.mxu0 0
  %2968 = vmatprep.subr.bf16.mxu0 0
  %2969 = vmatpush1.bf16.msra.mxu0 0
  %2970 = vmatprep.subr.bf16.mxu0 0
  %2971 = vmatpush1.bf16.msra.mxu0 0
  %2972 = vmatprep.subr.bf16.mxu0 0
  %2973 = vmatpush1.bf16.msra.mxu0 0
  %2974 = vmatprep.subr.bf16.mxu0 0
  %2975 = vmatpush1.bf16.msra.mxu0 0
  %2976 = vmatprep.subr.bf16.mxu0 0
  %2977 = vmatpush1.bf16.msra.mxu0 0
  %2978 = vmatprep.subr.bf16.mxu0 0
  %2979 = vmatpush1.bf16.msra.mxu0 0
  %2980 = vmatprep.subr.bf16.mxu0 0
  %2981 = vmatpush1.bf16.msra.mxu0 0
  %2982 = vmatprep.subr.bf16.mxu0 0
  %2983 = vmatpush1.bf16.msra.mxu0 0
  %2984 = vmatprep.mubr.bf16.mxu0 0
  %2985 = vmatmul.mubr.bf16.gmra.mrb[0].mxu0 %v2950
  %v2986 = vpop.f32.mrb[0].mxu0
  %v2987 = vadd.f32 0.0, %v2986
  %v2988 = vpop.f32.mrb[0].mxu0
  %v2989 = vpop.f32.mrb[0].mxu0
  %v2990 = vpop.f32.mrb[0].mxu0
  %2991 = vdwg.mxu0
  %v2992 = vpack.i.b16 %v2342, %v2342
  %v2993 = vlaneseq
  %v2994 = vshrl.u32 %v2993, 7
  %v2995 = vsub.s32 0, %v2994
  %v2996 = vrot.slane %v2992, %v2995
  %v2998 = vsel %vm2660, %v2996, 0
  %3000 = vmatprep.subr.bf16.mxu0 0
  %3001 = vmatpush1.bf16.msra.mxu0 %v2427
  %3002 = vmatprep.subr.bf16.mxu0 0
  %3003 = vmatpush1.bf16.msra.mxu0 %v2428
  %3004 = vmatprep.subr.bf16.mxu0 0
  %3005 = vmatpush1.bf16.msra.mxu0 %v2429
  %3006 = vmatprep.subr.bf16.mxu0 0
  %3007 = vmatpush1.bf16.msra.mxu0 %v2430
  %3008 = vmatprep.subr.bf16.mxu0 0
  %3009 = vmatpush1.bf16.msra.mxu0 0
  %3010 = vmatprep.subr.bf16.mxu0 0
  %3011 = vmatpush1.bf16.msra.mxu0 0
  %3012 = vmatprep.subr.bf16.mxu0 0
  %3013 = vmatpush1.bf16.msra.mxu0 0
  %3014 = vmatprep.subr.bf16.mxu0 0
  %3015 = vmatpush1.bf16.msra.mxu0 0
  %3016 = vmatprep.subr.bf16.mxu0 0
  %3017 = vmatpush1.bf16.msra.mxu0 0
  %3018 = vmatprep.subr.bf16.mxu0 0
  %3019 = vmatpush1.bf16.msra.mxu0 0
  %3020 = vmatprep.subr.bf16.mxu0 0
  %3021 = vmatpush1.bf16.msra.mxu0 0
  %3022 = vmatprep.subr.bf16.mxu0 0
  %3023 = vmatpush1.bf16.msra.mxu0 0
  %3024 = vmatprep.subr.bf16.mxu0 0
  %3025 = vmatpush1.bf16.msra.mxu0 0
  %3026 = vmatprep.subr.bf16.mxu0 0
  %3027 = vmatpush1.bf16.msra.mxu0 0
  %3028 = vmatprep.subr.bf16.mxu0 0
  %3029 = vmatpush1.bf16.msra.mxu0 0
  %3030 = vmatprep.subr.bf16.mxu0 0
  %3031 = vmatpush1.bf16.msra.mxu0 0
  %3032 = vmatprep.mubr.bf16.mxu0 0
  %3033 = vmatmul.mubr.bf16.gmra.mrb[0].mxu0 %v2998
  %v3034 = vpop.f32.mrb[0].mxu0
  %v3035 = vadd.f32 0.0, %v3034
  %v3036 = vpop.f32.mrb[0].mxu0
  %v3037 = vpop.f32.mrb[0].mxu0
  %v3038 = vpop.f32.mrb[0].mxu0
  %3039 = vdwg.mxu0
  %v3040 = vpack.i.b16 %v2343, %v2343
  %v3041 = vlaneseq
  %v3042 = vshrl.u32 %v3041, 7
  %v3043 = vsub.s32 0, %v3042
  %v3044 = vrot.slane %v3040, %v3043
  %v3046 = vsel %vm2660, %v3044, 0
  %3048 = vmatprep.subr.bf16.mxu0 0
  %3049 = vmatpush1.bf16.msra.mxu0 %v2431
  %3050 = vmatprep.subr.bf16.mxu0 0
  %3051 = vmatpush1.bf16.msra.mxu0 %v2432
  %3052 = vmatprep.subr.bf16.mxu0 0
  %3053 = vmatpush1.bf16.msra.mxu0 %v2433
  %3054 = vmatprep.subr.bf16.mxu0 0
  %3055 = vmatpush1.bf16.msra.mxu0 %v2434
  %3056 = vmatprep.subr.bf16.mxu0 0
  %3057 = vmatpush1.bf16.msra.mxu0 0
  %3058 = vmatprep.subr.bf16.mxu0 0
  %3059 = vmatpush1.bf16.msra.mxu0 0
  %3060 = vmatprep.subr.bf16.mxu0 0
  %3061 = vmatpush1.bf16.msra.mxu0 0
  %3062 = vmatprep.subr.bf16.mxu0 0
  %3063 = vmatpush1.bf16.msra.mxu0 0
  %3064 = vmatprep.subr.bf16.mxu0 0
  %3065 = vmatpush1.bf16.msra.mxu0 0
  %3066 = vmatprep.subr.bf16.mxu0 0
  %3067 = vmatpush1.bf16.msra.mxu0 0
  %3068 = vmatprep.subr.bf16.mxu0 0
  %3069 = vmatpush1.bf16.msra.mxu0 0
  %3070 = vmatprep.subr.bf16.mxu0 0
  %3071 = vmatpush1.bf16.msra.mxu0 0
  %3072 = vmatprep.subr.bf16.mxu0 0
  %3073 = vmatpush1.bf16.msra.mxu0 0
  %3074 = vmatprep.subr.bf16.mxu0 0
  %3075 = vmatpush1.bf16.msra.mxu0 0
  %3076 = vmatprep.subr.bf16.mxu0 0
  %3077 = vmatpush1.bf16.msra.mxu0 0
  %3078 = vmatprep.subr.bf16.mxu0 0
  %3079 = vmatpush1.bf16.msra.mxu0 0
  %3080 = vmatprep.mubr.bf16.mxu0 0
  %3081 = vmatmul.mubr.bf16.gmra.mrb[0].mxu0 %v3046
  %v3082 = vpop.f32.mrb[0].mxu0
  %v3083 = vadd.f32 0.0, %v3082
  %v3084 = vpop.f32.mrb[0].mxu0
  %v3085 = vpop.f32.mrb[0].mxu0
  %v3086 = vpop.f32.mrb[0].mxu0
  %3087 = vdwg.mxu0
  %v3088 = vpack.i.b16 %v2344, %v2344
  %v3089 = vlaneseq
  %v3090 = vshrl.u32 %v3089, 7
  %v3091 = vsub.s32 0, %v3090
  %v3092 = vrot.slane %v3088, %v3091
  %v3094 = vsel %vm2660, %v3092, 0
  %3096 = vmatprep.subr.bf16.mxu0 0
  %3097 = vmatpush1.bf16.msra.mxu0 %v2435
  %3098 = vmatprep.subr.bf16.mxu0 0
  %3099 = vmatpush1.bf16.msra.mxu0 %v2436
  %3100 = vmatprep.subr.bf16.mxu0 0
  %3101 = vmatpush1.bf16.msra.mxu0 %v2437
  %3102 = vmatprep.subr.bf16.mxu0 0
  %3103 = vmatpush1.bf16.msra.mxu0 %v2438
  %3104 = vmatprep.subr.bf16.mxu0 0
  %3105 = vmatpush1.bf16.msra.mxu0 0
  %3106 = vmatprep.subr.bf16.mxu0 0
  %3107 = vmatpush1.bf16.msra.mxu0 0
  %3108 = vmatprep.subr.bf16.mxu0 0
  %3109 = vmatpush1.bf16.msra.mxu0 0
  %3110 = vmatprep.subr.bf16.mxu0 0
  %3111 = vmatpush1.bf16.msra.mxu0 0
  %3112 = vmatprep.subr.bf16.mxu0 0
  %3113 = vmatpush1.bf16.msra.mxu0 0
  %3114 = vmatprep.subr.bf16.mxu0 0
  %3115 = vmatpush1.bf16.msra.mxu0 0
  %3116 = vmatprep.subr.bf16.mxu0 0
  %3117 = vmatpush1.bf16.msra.mxu0 0
  %3118 = vmatprep.subr.bf16.mxu0 0
  %3119 = vmatpush1.bf16.msra.mxu0 0
  %3120 = vmatprep.subr.bf16.mxu0 0
  %3121 = vmatpush1.bf16.msra.mxu0 0
  %3122 = vmatprep.subr.bf16.mxu0 0
  %3123 = vmatpush1.bf16.msra.mxu0 0
  %3124 = vmatprep.subr.bf16.mxu0 0
  %3125 = vmatpush1.bf16.msra.mxu0 0
  %3126 = vmatprep.subr.bf16.mxu0 0
  %3127 = vmatpush1.bf16.msra.mxu0 0
  %3128 = vmatprep.mubr.bf16.mxu0 0
  %3129 = vmatmul.mubr.bf16.gmra.mrb[0].mxu0 %v3094
  %v3130 = vpop.f32.mrb[0].mxu0
  %v3131 = vadd.f32 0.0, %v3130
  %v3132 = vpop.f32.mrb[0].mxu0
  %v3133 = vpop.f32.mrb[0].mxu0
  %v3134 = vpop.f32.mrb[0].mxu0
  %3135 = vdwg.mxu0
  %v3136 = vpack.i.b16 %v2345, %v2345
  %v3137 = vlaneseq
  %v3138 = vshrl.u32 %v3137, 7
  %v3139 = vsub.s32 0, %v3138
  %v3140 = vrot.slane %v3136, %v3139
  %v3142 = vsel %vm2660, %v3140, 0
  %3144 = vmatprep.subr.bf16.mxu0 0
  %3145 = vmatpush1.bf16.msra.mxu0 %v2439
  %3146 = vmatprep.subr.bf16.mxu0 0
  %3147 = vmatpush1.bf16.msra.mxu0 %v2440
  %3148 = vmatprep.subr.bf16.mxu0 0
  %3149 = vmatpush1.bf16.msra.mxu0 %v2441
  %3150 = vmatprep.subr.bf16.mxu0 0
  %3151 = vmatpush1.bf16.msra.mxu0 %v2442
  %3152 = vmatprep.subr.bf16.mxu0 0
  %3153 = vmatpush1.bf16.msra.mxu0 0
  %3154 = vmatprep.subr.bf16.mxu0 0
  %3155 = vmatpush1.bf16.msra.mxu0 0
  %3156 = vmatprep.subr.bf16.mxu0 0
  %3157 = vmatpush1.bf16.msra.mxu0 0
  %3158 = vmatprep.subr.bf16.mxu0 0
  %3159 = vmatpush1.bf16.msra.mxu0 0
  %3160 = vmatprep.subr.bf16.mxu0 0
  %3161 = vmatpush1.bf16.msra.mxu0 0
  %3162 = vmatprep.subr.bf16.mxu0 0
  %3163 = vmatpush1.bf16.msra.mxu0 0
  %3164 = vmatprep.subr.bf16.mxu0 0
  %3165 = vmatpush1.bf16.msra.mxu0 0
  %3166 = vmatprep.subr.bf16.mxu0 0
  %3167 = vmatpush1.bf16.msra.mxu0 0
  %3168 = vmatprep.subr.bf16.mxu0 0
  %3169 = vmatpush1.bf16.msra.mxu0 0
  %3170 = vmatprep.subr.bf16.mxu0 0
  %3171 = vmatpush1.bf16.msra.mxu0 0
  %3172 = vmatprep.subr.bf16.mxu0 0
  %3173 = vmatpush1.bf16.msra.mxu0 0
  %3174 = vmatprep.subr.bf16.mxu0 0
  %3175 = vmatpush1.bf16.msra.mxu0 0
  %3176 = vmatprep.mubr.bf16.mxu0 0
  %3177 = vmatmul.mubr.bf16.gmra.mrb[0].mxu0 %v3142
  %v3178 = vpop.f32.mrb[0].mxu0
  %v3179 = vadd.f32 0.0, %v3178
  %v3180 = vpop.f32.mrb[0].mxu0
  %v3181 = vpop.f32.mrb[0].mxu0
  %v3182 = vpop.f32.mrb[0].mxu0
  %3183 = vdwg.mxu0
  %v3184 = vpack.i.b16 %v2346, %v2346
  %v3185 = vlaneseq
  %v3186 = vshrl.u32 %v3185, 7
  %v3187 = vsub.s32 0, %v3186
  %v3188 = vrot.slane %v3184, %v3187
  %v3190 = vsel %vm2660, %v3188, 0
  %3192 = vmatprep.subr.bf16.mxu0 0
  %3193 = vmatpush1.bf16.msra.mxu0 %v2443
  %3194 = vmatprep.subr.bf16.mxu0 0
  %3195 = vmatpush1.bf16.msra.mxu0 %v2444
  %3196 = vmatprep.subr.bf16.mxu0 0
  %3197 = vmatpush1.bf16.msra.mxu0 %v2445
  %3198 = vmatprep.subr.bf16.mxu0 0
  %3199 = vmatpush1.bf16.msra.mxu0 %v2446
  %3200 = vmatprep.subr.bf16.mxu0 0
  %3201 = vmatpush1.bf16.msra.mxu0 0
  %3202 = vmatprep.subr.bf16.mxu0 0
  %3203 = vmatpush1.bf16.msra.mxu0 0
  %3204 = vmatprep.subr.bf16.mxu0 0
  %3205 = vmatpush1.bf16.msra.mxu0 0
  %3206 = vmatprep.subr.bf16.mxu0 0
  %3207 = vmatpush1.bf16.msra.mxu0 0
  %3208 = vmatprep.subr.bf16.mxu0 0
  %3209 = vmatpush1.bf16.msra.mxu0 0
  %3210 = vmatprep.subr.bf16.mxu0 0
  %3211 = vmatpush1.bf16.msra.mxu0 0
  %3212 = vmatprep.subr.bf16.mxu0 0
  %3213 = vmatpush1.bf16.msra.mxu0 0
  %3214 = vmatprep.subr.bf16.mxu0 0
  %3215 = vmatpush1.bf16.msra.mxu0 0
  %3216 = vmatprep.subr.bf16.mxu0 0
  %3217 = vmatpush1.bf16.msra.mxu0 0
  %3218 = vmatprep.subr.bf16.mxu0 0
  %3219 = vmatpush1.bf16.msra.mxu0 0
  %3220 = vmatprep.subr.bf16.mxu0 0
  %3221 = vmatpush1.bf16.msra.mxu0 0
  %3222 = vmatprep.subr.bf16.mxu0 0
  %3223 = vmatpush1.bf16.msra.mxu0 0
  %3224 = vmatprep.mubr.bf16.mxu0 0
  %3225 = vmatmul.mubr.bf16.gmra.mrb[0].mxu0 %v3190
  %v3226 = vpop.f32.mrb[0].mxu0
  %v3227 = vadd.f32 0.0, %v3226
  %v3228 = vpop.f32.mrb[0].mxu0
  %v3229 = vpop.f32.mrb[0].mxu0
  %v3230 = vpop.f32.mrb[0].mxu0
  %3231 = vdwg.mxu0
  %v3232 = vpack.i.b16 %v2347, %v2347
  %v3233 = vlaneseq
  %v3234 = vshrl.u32 %v3233, 7
  %v3235 = vsub.s32 0, %v3234
  %v3236 = vrot.slane %v3232, %v3235
  %v3238 = vsel %vm2660, %v3236, 0
  %3240 = vmatprep.subr.bf16.mxu0 0
  %3241 = vmatpush1.bf16.msra.mxu0 %v2447
  %3242 = vmatprep.subr.bf16.mxu0 0
  %3243 = vmatpush1.bf16.msra.mxu0 %v2448
  %3244 = vmatprep.subr.bf16.mxu0 0
  %3245 = vmatpush1.bf16.msra.mxu0 %v2449
  %3246 = vmatprep.subr.bf16.mxu0 0
  %3247 = vmatpush1.bf16.msra.mxu0 %v2450
  %3248 = vmatprep.subr.bf16.mxu0 0
  %3249 = vmatpush1.bf16.msra.mxu0 0
  %3250 = vmatprep.subr.bf16.mxu0 0
  %3251 = vmatpush1.bf16.msra.mxu0 0
  %3252 = vmatprep.subr.bf16.mxu0 0
  %3253 = vmatpush1.bf16.msra.mxu0 0
  %3254 = vmatprep.subr.bf16.mxu0 0
  %3255 = vmatpush1.bf16.msra.mxu0 0
  %3256 = vmatprep.subr.bf16.mxu0 0
  %3257 = vmatpush1.bf16.msra.mxu0 0
  %3258 = vmatprep.subr.bf16.mxu0 0
  %3259 = vmatpush1.bf16.msra.mxu0 0
  %3260 = vmatprep.subr.bf16.mxu0 0
  %3261 = vmatpush1.bf16.msra.mxu0 0
  %3262 = vmatprep.subr.bf16.mxu0 0
  %3263 = vmatpush1.bf16.msra.mxu0 0
  %3264 = vmatprep.subr.bf16.mxu0 0
  %3265 = vmatpush1.bf16.msra.mxu0 0
  %3266 = vmatprep.subr.bf16.mxu0 0
  %3267 = vmatpush1.bf16.msra.mxu0 0
  %3268 = vmatprep.subr.bf16.mxu0 0
  %3269 = vmatpush1.bf16.msra.mxu0 0
  %3270 = vmatprep.subr.bf16.mxu0 0
  %3271 = vmatpush1.bf16.msra.mxu0 0
  %3272 = vmatprep.mubr.bf16.mxu0 0
  %3273 = vmatmul.mubr.bf16.gmra.mrb[0].mxu0 %v3238
  %v3274 = vpop.f32.mrb[0].mxu0
  %v3275 = vadd.f32 0.0, %v3274
  %v3276 = vpop.f32.mrb[0].mxu0
  %v3277 = vpop.f32.mrb[0].mxu0
  %v3278 = vpop.f32.mrb[0].mxu0
  %3279 = vdwg.mxu0
  %v3280 = vpack.i.b16 %v2348, %v2348
  %v3281 = vlaneseq
  %v3282 = vshrl.u32 %v3281, 7
  %v3283 = vsub.s32 0, %v3282
  %v3284 = vrot.slane %v3280, %v3283
  %v3286 = vsel %vm2660, %v3284, 0
  %3288 = vmatprep.subr.bf16.mxu0 0
  %3289 = vmatpush1.bf16.msra.mxu0 %v2451
  %3290 = vmatprep.subr.bf16.mxu0 0
  %3291 = vmatpush1.bf16.msra.mxu0 %v2452
  %3292 = vmatprep.subr.bf16.mxu0 0
  %3293 = vmatpush1.bf16.msra.mxu0 %v2453
  %3294 = vmatprep.subr.bf16.mxu0 0
  %3295 = vmatpush1.bf16.msra.mxu0 %v2454
  %3296 = vmatprep.subr.bf16.mxu0 0
  %3297 = vmatpush1.bf16.msra.mxu0 0
  %3298 = vmatprep.subr.bf16.mxu0 0
  %3299 = vmatpush1.bf16.msra.mxu0 0
  %3300 = vmatprep.subr.bf16.mxu0 0
  %3301 = vmatpush1.bf16.msra.mxu0 0
  %3302 = vmatprep.subr.bf16.mxu0 0
  %3303 = vmatpush1.bf16.msra.mxu0 0
  %3304 = vmatprep.subr.bf16.mxu0 0
  %3305 = vmatpush1.bf16.msra.mxu0 0
  %3306 = vmatprep.subr.bf16.mxu0 0
  %3307 = vmatpush1.bf16.msra.mxu0 0
  %3308 = vmatprep.subr.bf16.mxu0 0
  %3309 = vmatpush1.bf16.msra.mxu0 0
  %3310 = vmatprep.subr.bf16.mxu0 0
  %3311 = vmatpush1.bf16.msra.mxu0 0
  %3312 = vmatprep.subr.bf16.mxu0 0
  %3313 = vmatpush1.bf16.msra.mxu0 0
  %3314 = vmatprep.subr.bf16.mxu0 0
  %3315 = vmatpush1.bf16.msra.mxu0 0
  %3316 = vmatprep.subr.bf16.mxu0 0
  %3317 = vmatpush1.bf16.msra.mxu0 0
  %3318 = vmatprep.subr.bf16.mxu0 0
  %3319 = vmatpush1.bf16.msra.mxu0 0
  %3320 = vmatprep.mubr.bf16.mxu0 0
  %3321 = vmatmul.mubr.bf16.gmra.mrb[0].mxu0 %v3286
  %v3322 = vpop.f32.mrb[0].mxu0
  %v3323 = vadd.f32 0.0, %v3322
  %v3324 = vpop.f32.mrb[0].mxu0
  %v3325 = vpop.f32.mrb[0].mxu0
  %v3326 = vpop.f32.mrb[0].mxu0
  %3327 = vdwg.mxu0
  %v3328 = vpack.i.b16 %v2349, %v2349
  %v3329 = vlaneseq
  %v3330 = vshrl.u32 %v3329, 7
  %v3331 = vsub.s32 0, %v3330
  %v3332 = vrot.slane %v3328, %v3331
  %v3334 = vsel %vm2660, %v3332, 0
  %3336 = vmatprep.subr.bf16.mxu0 0
  %3337 = vmatpush1.bf16.msra.mxu0 %v2455
  %3338 = vmatprep.subr.bf16.mxu0 0
  %3339 = vmatpush1.bf16.msra.mxu0 %v2456
  %3340 = vmatprep.subr.bf16.mxu0 0
  %3341 = vmatpush1.bf16.msra.mxu0 %v2457
  %3342 = vmatprep.subr.bf16.mxu0 0
  %3343 = vmatpush1.bf16.msra.mxu0 %v2458
  %3344 = vmatprep.subr.bf16.mxu0 0
  %3345 = vmatpush1.bf16.msra.mxu0 0
  %3346 = vmatprep.subr.bf16.mxu0 0
  %3347 = vmatpush1.bf16.msra.mxu0 0
  %3348 = vmatprep.subr.bf16.mxu0 0
  %3349 = vmatpush1.bf16.msra.mxu0 0
  %3350 = vmatprep.subr.bf16.mxu0 0
  %3351 = vmatpush1.bf16.msra.mxu0 0
  %3352 = vmatprep.subr.bf16.mxu0 0
  %3353 = vmatpush1.bf16.msra.mxu0 0
  %3354 = vmatprep.subr.bf16.mxu0 0
  %3355 = vmatpush1.bf16.msra.mxu0 0
  %3356 = vmatprep.subr.bf16.mxu0 0
  %3357 = vmatpush1.bf16.msra.mxu0 0
  %3358 = vmatprep.subr.bf16.mxu0 0
  %3359 = vmatpush1.bf16.msra.mxu0 0
  %3360 = vmatprep.subr.bf16.mxu0 0
  %3361 = vmatpush1.bf16.msra.mxu0 0
  %3362 = vmatprep.subr.bf16.mxu0 0
  %3363 = vmatpush1.bf16.msra.mxu0 0
  %3364 = vmatprep.subr.bf16.mxu0 0
  %3365 = vmatpush1.bf16.msra.mxu0 0
  %3366 = vmatprep.subr.bf16.mxu0 0
  %3367 = vmatpush1.bf16.msra.mxu0 0
  %3368 = vmatprep.mubr.bf16.mxu0 0
  %3369 = vmatmul.mubr.bf16.gmra.mrb[0].mxu0 %v3334
  %v3370 = vpop.f32.mrb[0].mxu0
  %v3371 = vadd.f32 0.0, %v3370
  %v3372 = vpop.f32.mrb[0].mxu0
  %v3373 = vpop.f32.mrb[0].mxu0
  %v3374 = vpop.f32.mrb[0].mxu0
  %3375 = vdwg.mxu0
  %v3376 = vpack.i.b16 %v2350, %v2350
  %v3377 = vlaneseq
  %v3378 = vshrl.u32 %v3377, 7
  %v3379 = vsub.s32 0, %v3378
  %v3380 = vrot.slane %v3376, %v3379
  %v3382 = vsel %vm2660, %v3380, 0
  %3384 = vmatprep.subr.bf16.mxu0 0
  %3385 = vmatpush1.bf16.msra.mxu0 %v2459
  %3386 = vmatprep.subr.bf16.mxu0 0
  %3387 = vmatpush1.bf16.msra.mxu0 %v2460
  %3388 = vmatprep.subr.bf16.mxu0 0
  %3389 = vmatpush1.bf16.msra.mxu0 %v2461
  %3390 = vmatprep.subr.bf16.mxu0 0
  %3391 = vmatpush1.bf16.msra.mxu0 %v2462
  %3392 = vmatprep.subr.bf16.mxu0 0
  %3393 = vmatpush1.bf16.msra.mxu0 0
  %3394 = vmatprep.subr.bf16.mxu0 0
  %3395 = vmatpush1.bf16.msra.mxu0 0
  %3396 = vmatprep.subr.bf16.mxu0 0
  %3397 = vmatpush1.bf16.msra.mxu0 0
  %3398 = vmatprep.subr.bf16.mxu0 0
  %3399 = vmatpush1.bf16.msra.mxu0 0
  %3400 = vmatprep.subr.bf16.mxu0 0
  %3401 = vmatpush1.bf16.msra.mxu0 0
  %3402 = vmatprep.subr.bf16.mxu0 0
  %3403 = vmatpush1.bf16.msra.mxu0 0
  %3404 = vmatprep.subr.bf16.mxu0 0
  %3405 = vmatpush1.bf16.msra.mxu0 0
  %3406 = vmatprep.subr.bf16.mxu0 0
  %3407 = vmatpush1.bf16.msra.mxu0 0
  %3408 = vmatprep.subr.bf16.mxu0 0
  %3409 = vmatpush1.bf16.msra.mxu0 0
  %3410 = vmatprep.subr.bf16.mxu0 0
  %3411 = vmatpush1.bf16.msra.mxu0 0
  %3412 = vmatprep.subr.bf16.mxu0 0
  %3413 = vmatpush1.bf16.msra.mxu0 0
  %3414 = vmatprep.subr.bf16.mxu0 0
  %3415 = vmatpush1.bf16.msra.mxu0 0
  %3416 = vmatprep.mubr.bf16.mxu0 0
  %3417 = vmatmul.mubr.bf16.gmra.mrb[0].mxu0 %v3382
  %v3418 = vpop.f32.mrb[0].mxu0
  %v3419 = vadd.f32 0.0, %v3418
  %v3420 = vpop.f32.mrb[0].mxu0
  %v3421 = vpop.f32.mrb[0].mxu0
  %v3422 = vpop.f32.mrb[0].mxu0
  %3423 = vdwg.mxu0
  %v3424 = vpack.i.b16 %v2351, %v2351
  %v3425 = vlaneseq
  %v3426 = vshrl.u32 %v3425, 7
  %v3427 = vsub.s32 0, %v3426
  %v3428 = vrot.slane %v3424, %v3427
  %v3430 = vsel %vm2660, %v3428, 0
  %3432 = vmatprep.subr.bf16.mxu0 0
  %3433 = vmatpush1.bf16.msra.mxu0 %v2463
  %3434 = vmatprep.subr.bf16.mxu0 0
  %3435 = vmatpush1.bf16.msra.mxu0 %v2464
  %3436 = vmatprep.subr.bf16.mxu0 0
  %3437 = vmatpush1.bf16.msra.mxu0 %v2465
  %3438 = vmatprep.subr.bf16.mxu0 0
  %3439 = vmatpush1.bf16.msra.mxu0 %v2466
  %3440 = vmatprep.subr.bf16.mxu0 0
  %3441 = vmatpush1.bf16.msra.mxu0 0
  %3442 = vmatprep.subr.bf16.mxu0 0
  %3443 = vmatpush1.bf16.msra.mxu0 0
  %3444 = vmatprep.subr.bf16.mxu0 0
  %3445 = vmatpush1.bf16.msra.mxu0 0
  %3446 = vmatprep.subr.bf16.mxu0 0
  %3447 = vmatpush1.bf16.msra.mxu0 0
  %3448 = vmatprep.subr.bf16.mxu0 0
  %3449 = vmatpush1.bf16.msra.mxu0 0
  %3450 = vmatprep.subr.bf16.mxu0 0
  %3451 = vmatpush1.bf16.msra.mxu0 0
  %3452 = vmatprep.subr.bf16.mxu0 0
  %3453 = vmatpush1.bf16.msra.mxu0 0
  %3454 = vmatprep.subr.bf16.mxu0 0
  %3455 = vmatpush1.bf16.msra.mxu0 0
  %3456 = vmatprep.subr.bf16.mxu0 0
  %3457 = vmatpush1.bf16.msra.mxu0 0
  %3458 = vmatprep.subr.bf16.mxu0 0
  %3459 = vmatpush1.bf16.msra.mxu0 0
  %3460 = vmatprep.subr.bf16.mxu0 0
  %3461 = vmatpush1.bf16.msra.mxu0 0
  %3462 = vmatprep.subr.bf16.mxu0 0
  %3463 = vmatpush1.bf16.msra.mxu0 0
  %3464 = vmatprep.mubr.bf16.mxu0 0
  %3465 = vmatmul.mubr.bf16.gmra.mrb[0].mxu0 %v3430
  %v3466 = vpop.f32.mrb[0].mxu0
  %v3467 = vadd.f32 0.0, %v3466
  %v3468 = vpop.f32.mrb[0].mxu0
  %v3469 = vpop.f32.mrb[0].mxu0
  %v3470 = vpop.f32.mrb[0].mxu0
  %3471 = vdwg.mxu0
  %v3472 = vpack.i.b16 %v2352, %v2352
  %v3473 = vlaneseq
  %v3474 = vshrl.u32 %v3473, 7
  %v3475 = vsub.s32 0, %v3474
  %v3476 = vrot.slane %v3472, %v3475
  %v3478 = vsel %vm2660, %v3476, 0
  %3480 = vmatprep.subr.bf16.mxu0 0
  %3481 = vmatpush1.bf16.msra.mxu0 %v2467
  %3482 = vmatprep.subr.bf16.mxu0 0
  %3483 = vmatpush1.bf16.msra.mxu0 %v2468
  %3484 = vmatprep.subr.bf16.mxu0 0
  %3485 = vmatpush1.bf16.msra.mxu0 %v2469
  %3486 = vmatprep.subr.bf16.mxu0 0
  %3487 = vmatpush1.bf16.msra.mxu0 %v2470
  %3488 = vmatprep.subr.bf16.mxu0 0
  %3489 = vmatpush1.bf16.msra.mxu0 0
  %3490 = vmatprep.subr.bf16.mxu0 0
  %3491 = vmatpush1.bf16.msra.mxu0 0
  %3492 = vmatprep.subr.bf16.mxu0 0
  %3493 = vmatpush1.bf16.msra.mxu0 0
  %3494 = vmatprep.subr.bf16.mxu0 0
  %3495 = vmatpush1.bf16.msra.mxu0 0
  %3496 = vmatprep.subr.bf16.mxu0 0
  %3497 = vmatpush1.bf16.msra.mxu0 0
  %3498 = vmatprep.subr.bf16.mxu0 0
  %3499 = vmatpush1.bf16.msra.mxu0 0
  %3500 = vmatprep.subr.bf16.mxu0 0
  %3501 = vmatpush1.bf16.msra.mxu0 0
  %3502 = vmatprep.subr.bf16.mxu0 0
  %3503 = vmatpush1.bf16.msra.mxu0 0
  %3504 = vmatprep.subr.bf16.mxu0 0
  %3505 = vmatpush1.bf16.msra.mxu0 0
  %3506 = vmatprep.subr.bf16.mxu0 0
  %3507 = vmatpush1.bf16.msra.mxu0 0
  %3508 = vmatprep.subr.bf16.mxu0 0
  %3509 = vmatpush1.bf16.msra.mxu0 0
  %3510 = vmatprep.subr.bf16.mxu0 0
  %3511 = vmatpush1.bf16.msra.mxu0 0
  %3512 = vmatprep.mubr.bf16.mxu0 0
  %3513 = vmatmul.mubr.bf16.gmra.mrb[0].mxu0 %v3478
  %v3514 = vpop.f32.mrb[0].mxu0
  %v3515 = vadd.f32 0.0, %v3514
  %v3516 = vpop.f32.mrb[0].mxu0
  %v3517 = vpop.f32.mrb[0].mxu0
  %v3518 = vpop.f32.mrb[0].mxu0
  %3519 = vdwg.mxu0
  %v3520 = vpack.i.b16 %v2353, %v2353
  %v3521 = vlaneseq
  %v3522 = vshrl.u32 %v3521, 7
  %v3523 = vsub.s32 0, %v3522
  %v3524 = vrot.slane %v3520, %v3523
  %v3526 = vsel %vm2660, %v3524, 0
  %3528 = vmatprep.subr.bf16.mxu0 0
  %3529 = vmatpush1.bf16.msra.mxu0 %v2471
  %3530 = vmatprep.subr.bf16.mxu0 0
  %3531 = vmatpush1.bf16.msra.mxu0 %v2472
  %3532 = vmatprep.subr.bf16.mxu0 0
  %3533 = vmatpush1.bf16.msra.mxu0 %v2473
  %3534 = vmatprep.subr.bf16.mxu0 0
  %3535 = vmatpush1.bf16.msra.mxu0 %v2474
  %3536 = vmatprep.subr.bf16.mxu0 0
  %3537 = vmatpush1.bf16.msra.mxu0 0
  %3538 = vmatprep.subr.bf16.mxu0 0
  %3539 = vmatpush1.bf16.msra.mxu0 0
  %3540 = vmatprep.subr.bf16.mxu0 0
  %3541 = vmatpush1.bf16.msra.mxu0 0
  %3542 = vmatprep.subr.bf16.mxu0 0
  %3543 = vmatpush1.bf16.msra.mxu0 0
  %3544 = vmatprep.subr.bf16.mxu0 0
  %3545 = vmatpush1.bf16.msra.mxu0 0
  %3546 = vmatprep.subr.bf16.mxu0 0
  %3547 = vmatpush1.bf16.msra.mxu0 0
  %3548 = vmatprep.subr.bf16.mxu0 0
  %3549 = vmatpush1.bf16.msra.mxu0 0
  %3550 = vmatprep.subr.bf16.mxu0 0
  %3551 = vmatpush1.bf16.msra.mxu0 0
  %3552 = vmatprep.subr.bf16.mxu0 0
  %3553 = vmatpush1.bf16.msra.mxu0 0
  %3554 = vmatprep.subr.bf16.mxu0 0
  %3555 = vmatpush1.bf16.msra.mxu0 0
  %3556 = vmatprep.subr.bf16.mxu0 0
  %3557 = vmatpush1.bf16.msra.mxu0 0
  %3558 = vmatprep.subr.bf16.mxu0 0
  %3559 = vmatpush1.bf16.msra.mxu0 0
  %3560 = vmatprep.mubr.bf16.mxu0 0
  %3561 = vmatmul.mubr.bf16.gmra.mrb[0].mxu0 %v3526
  %v3562 = vpop.f32.mrb[0].mxu0
  %v3563 = vadd.f32 0.0, %v3562
  %v3564 = vpop.f32.mrb[0].mxu0
  %v3565 = vpop.f32.mrb[0].mxu0
  %v3566 = vpop.f32.mrb[0].mxu0
  %3567 = vdwg.mxu0
  %v3568 = vpack.i.b16 %v2354, %v2354
  %v3569 = vlaneseq
  %v3570 = vshrl.u32 %v3569, 7
  %v3571 = vsub.s32 0, %v3570
  %v3572 = vrot.slane %v3568, %v3571
  %v3574 = vsel %vm2660, %v3572, 0
  %3576 = vmatprep.subr.bf16.mxu0 0
  %3577 = vmatpush1.bf16.msra.mxu0 %v2475
  %3578 = vmatprep.subr.bf16.mxu0 0
  %3579 = vmatpush1.bf16.msra.mxu0 %v2476
  %3580 = vmatprep.subr.bf16.mxu0 0
  %3581 = vmatpush1.bf16.msra.mxu0 %v2477
  %3582 = vmatprep.subr.bf16.mxu0 0
  %3583 = vmatpush1.bf16.msra.mxu0 %v2478
  %3584 = vmatprep.subr.bf16.mxu0 0
  %3585 = vmatpush1.bf16.msra.mxu0 0
  %3586 = vmatprep.subr.bf16.mxu0 0
  %3587 = vmatpush1.bf16.msra.mxu0 0
  %3588 = vmatprep.subr.bf16.mxu0 0
  %3589 = vmatpush1.bf16.msra.mxu0 0
  %3590 = vmatprep.subr.bf16.mxu0 0
  %3591 = vmatpush1.bf16.msra.mxu0 0
  %3592 = vmatprep.subr.bf16.mxu0 0
  %3593 = vmatpush1.bf16.msra.mxu0 0
  %3594 = vmatprep.subr.bf16.mxu0 0
  %3595 = vmatpush1.bf16.msra.mxu0 0
  %3596 = vmatprep.subr.bf16.mxu0 0
  %3597 = vmatpush1.bf16.msra.mxu0 0
  %3598 = vmatprep.subr.bf16.mxu0 0
  %3599 = vmatpush1.bf16.msra.mxu0 0
  %3600 = vmatprep.subr.bf16.mxu0 0
  %3601 = vmatpush1.bf16.msra.mxu0 0
  %3602 = vmatprep.subr.bf16.mxu0 0
  %3603 = vmatpush1.bf16.msra.mxu0 0
  %3604 = vmatprep.subr.bf16.mxu0 0
  %3605 = vmatpush1.bf16.msra.mxu0 0
  %3606 = vmatprep.subr.bf16.mxu0 0
  %3607 = vmatpush1.bf16.msra.mxu0 0
  %3608 = vmatprep.mubr.bf16.mxu0 0
  %3609 = vmatmul.mubr.bf16.gmra.mrb[0].mxu0 %v3574
  %v3610 = vpop.f32.mrb[0].mxu0
  %v3611 = vadd.f32 0.0, %v3610
  %v3612 = vpop.f32.mrb[0].mxu0
  %v3613 = vpop.f32.mrb[0].mxu0
  %v3614 = vpop.f32.mrb[0].mxu0
  %3615 = vdwg.mxu0
  %v3616 = vpack.i.b16 %v2355, %v2355
  %v3617 = vlaneseq
  %v3618 = vshrl.u32 %v3617, 7
  %v3619 = vsub.s32 0, %v3618
  %v3620 = vrot.slane %v3616, %v3619
  %v3622 = vsel %vm2660, %v3620, 0
  %3624 = vmatprep.subr.bf16.mxu0 0
  %3625 = vmatpush1.bf16.msra.mxu0 %v2479
  %3626 = vmatprep.subr.bf16.mxu0 0
  %3627 = vmatpush1.bf16.msra.mxu0 %v2480
  %3628 = vmatprep.subr.bf16.mxu0 0
  %3629 = vmatpush1.bf16.msra.mxu0 %v2481
  %3630 = vmatprep.subr.bf16.mxu0 0
  %3631 = vmatpush1.bf16.msra.mxu0 %v2482
  %3632 = vmatprep.subr.bf16.mxu0 0
  %3633 = vmatpush1.bf16.msra.mxu0 0
  %3634 = vmatprep.subr.bf16.mxu0 0
  %3635 = vmatpush1.bf16.msra.mxu0 0
  %3636 = vmatprep.subr.bf16.mxu0 0
  %3637 = vmatpush1.bf16.msra.mxu0 0
  %3638 = vmatprep.subr.bf16.mxu0 0
  %3639 = vmatpush1.bf16.msra.mxu0 0
  %3640 = vmatprep.subr.bf16.mxu0 0
  %3641 = vmatpush1.bf16.msra.mxu0 0
  %3642 = vmatprep.subr.bf16.mxu0 0
  %3643 = vmatpush1.bf16.msra.mxu0 0
  %3644 = vmatprep.subr.bf16.mxu0 0
  %3645 = vmatpush1.bf16.msra.mxu0 0
  %3646 = vmatprep.subr.bf16.mxu0 0
  %3647 = vmatpush1.bf16.msra.mxu0 0
  %3648 = vmatprep.subr.bf16.mxu0 0
  %3649 = vmatpush1.bf16.msra.mxu0 0
  %3650 = vmatprep.subr.bf16.mxu0 0
  %3651 = vmatpush1.bf16.msra.mxu0 0
  %3652 = vmatprep.subr.bf16.mxu0 0
  %3653 = vmatpush1.bf16.msra.mxu0 0
  %3654 = vmatprep.subr.bf16.mxu0 0
  %3655 = vmatpush1.bf16.msra.mxu0 0
  %3656 = vmatprep.mubr.bf16.mxu0 0
  %3657 = vmatmul.mubr.bf16.gmra.mrb[0].mxu0 %v3622
  %v3658 = vpop.f32.mrb[0].mxu0
  %v3659 = vadd.f32 0.0, %v3658
  %v3660 = vpop.f32.mrb[0].mxu0
  %v3661 = vpop.f32.mrb[0].mxu0
  %v3662 = vpop.f32.mrb[0].mxu0
  %3663 = vdwg.mxu0
  %v3664 = vpack.i.b16 %v2356, %v2356
  %v3665 = vlaneseq
  %v3666 = vshrl.u32 %v3665, 7
  %v3667 = vsub.s32 0, %v3666
  %v3668 = vrot.slane %v3664, %v3667
  %v3670 = vsel %vm2660, %v3668, 0
  %3672 = vmatprep.subr.bf16.mxu0 0
  %3673 = vmatpush1.bf16.msra.mxu0 %v2483
  %3674 = vmatprep.subr.bf16.mxu0 0
  %3675 = vmatpush1.bf16.msra.mxu0 %v2484
  %3676 = vmatprep.subr.bf16.mxu0 0
  %3677 = vmatpush1.bf16.msra.mxu0 %v2485
  %3678 = vmatprep.subr.bf16.mxu0 0
  %3679 = vmatpush1.bf16.msra.mxu0 %v2486
  %3680 = vmatprep.subr.bf16.mxu0 0
  %3681 = vmatpush1.bf16.msra.mxu0 0
  %3682 = vmatprep.subr.bf16.mxu0 0
  %3683 = vmatpush1.bf16.msra.mxu0 0
  %3684 = vmatprep.subr.bf16.mxu0 0
  %3685 = vmatpush1.bf16.msra.mxu0 0
  %3686 = vmatprep.subr.bf16.mxu0 0
  %3687 = vmatpush1.bf16.msra.mxu0 0
  %3688 = vmatprep.subr.bf16.mxu0 0
  %3689 = vmatpush1.bf16.msra.mxu0 0
  %3690 = vmatprep.subr.bf16.mxu0 0
  %3691 = vmatpush1.bf16.msra.mxu0 0
  %3692 = vmatprep.subr.bf16.mxu0 0
  %3693 = vmatpush1.bf16.msra.mxu0 0
  %3694 = vmatprep.subr.bf16.mxu0 0
  %3695 = vmatpush1.bf16.msra.mxu0 0
  %3696 = vmatprep.subr.bf16.mxu0 0
  %3697 = vmatpush1.bf16.msra.mxu0 0
  %3698 = vmatprep.subr.bf16.mxu0 0
  %3699 = vmatpush1.bf16.msra.mxu0 0
  %3700 = vmatprep.subr.bf16.mxu0 0
  %3701 = vmatpush1.bf16.msra.mxu0 0
  %3702 = vmatprep.subr.bf16.mxu0 0
  %3703 = vmatpush1.bf16.msra.mxu0 0
  %3704 = vmatprep.mubr.bf16.mxu0 0
  %3705 = vmatmul.mubr.bf16.gmra.mrb[0].mxu0 %v3670
  %v3706 = vpop.f32.mrb[0].mxu0
  %v3707 = vadd.f32 0.0, %v3706
  %v3708 = vpop.f32.mrb[0].mxu0
  %v3709 = vpop.f32.mrb[0].mxu0
  %v3710 = vpop.f32.mrb[0].mxu0
  %3711 = vdwg.mxu0
  %v3712 = vpack.i.b16 %v2357, %v2357
  %v3713 = vlaneseq
  %v3714 = vshrl.u32 %v3713, 7
  %v3715 = vsub.s32 0, %v3714
  %v3716 = vrot.slane %v3712, %v3715
  %v3718 = vsel %vm2660, %v3716, 0
  %3720 = vmatprep.subr.bf16.mxu0 0
  %3721 = vmatpush1.bf16.msra.mxu0 %v2487
  %3722 = vmatprep.subr.bf16.mxu0 0
  %3723 = vmatpush1.bf16.msra.mxu0 %v2488
  %3724 = vmatprep.subr.bf16.mxu0 0
  %3725 = vmatpush1.bf16.msra.mxu0 %v2489
  %3726 = vmatprep.subr.bf16.mxu0 0
  %3727 = vmatpush1.bf16.msra.mxu0 %v2490
  %3728 = vmatprep.subr.bf16.mxu0 0
  %3729 = vmatpush1.bf16.msra.mxu0 0
  %3730 = vmatprep.subr.bf16.mxu0 0
  %3731 = vmatpush1.bf16.msra.mxu0 0
  %3732 = vmatprep.subr.bf16.mxu0 0
  %3733 = vmatpush1.bf16.msra.mxu0 0
  %3734 = vmatprep.subr.bf16.mxu0 0
  %3735 = vmatpush1.bf16.msra.mxu0 0
  %3736 = vmatprep.subr.bf16.mxu0 0
  %3737 = vmatpush1.bf16.msra.mxu0 0
  %3738 = vmatprep.subr.bf16.mxu0 0
  %3739 = vmatpush1.bf16.msra.mxu0 0
  %3740 = vmatprep.subr.bf16.mxu0 0
  %3741 = vmatpush1.bf16.msra.mxu0 0
  %3742 = vmatprep.subr.bf16.mxu0 0
  %3743 = vmatpush1.bf16.msra.mxu0 0
  %3744 = vmatprep.subr.bf16.mxu0 0
  %3745 = vmatpush1.bf16.msra.mxu0 0
  %3746 = vmatprep.subr.bf16.mxu0 0
  %3747 = vmatpush1.bf16.msra.mxu0 0
  %3748 = vmatprep.subr.bf16.mxu0 0
  %3749 = vmatpush1.bf16.msra.mxu0 0
  %3750 = vmatprep.subr.bf16.mxu0 0
  %3751 = vmatpush1.bf16.msra.mxu0 0
  %3752 = vmatprep.mubr.bf16.mxu0 0
  %3753 = vmatmul.mubr.bf16.gmra.mrb[0].mxu0 %v3718
  %v3754 = vpop.f32.mrb[0].mxu0
  %v3755 = vadd.f32 0.0, %v3754
  %v3756 = vpop.f32.mrb[0].mxu0
  %v3757 = vpop.f32.mrb[0].mxu0
  %v3758 = vpop.f32.mrb[0].mxu0
  %3759 = vdwg.mxu0
  %v3760 = vpack.i.b16 %v2358, %v2358
  %v3761 = vlaneseq
  %v3762 = vshrl.u32 %v3761, 7
  %v3763 = vsub.s32 0, %v3762
  %v3764 = vrot.slane %v3760, %v3763
  %v3766 = vsel %vm2660, %v3764, 0
  %3768 = vmatprep.subr.bf16.mxu0 0
  %3769 = vmatpush1.bf16.msra.mxu0 %v2491
  %3770 = vmatprep.subr.bf16.mxu0 0
  %3771 = vmatpush1.bf16.msra.mxu0 %v2492
  %3772 = vmatprep.subr.bf16.mxu0 0
  %3773 = vmatpush1.bf16.msra.mxu0 %v2493
  %3774 = vmatprep.subr.bf16.mxu0 0
  %3775 = vmatpush1.bf16.msra.mxu0 %v2494
  %3776 = vmatprep.subr.bf16.mxu0 0
  %3777 = vmatpush1.bf16.msra.mxu0 0
  %3778 = vmatprep.subr.bf16.mxu0 0
  %3779 = vmatpush1.bf16.msra.mxu0 0
  %3780 = vmatprep.subr.bf16.mxu0 0
  %3781 = vmatpush1.bf16.msra.mxu0 0
  %3782 = vmatprep.subr.bf16.mxu0 0
  %3783 = vmatpush1.bf16.msra.mxu0 0
  %3784 = vmatprep.subr.bf16.mxu0 0
  %3785 = vmatpush1.bf16.msra.mxu0 0
  %3786 = vmatprep.subr.bf16.mxu0 0
  %3787 = vmatpush1.bf16.msra.mxu0 0
  %3788 = vmatprep.subr.bf16.mxu0 0
  %3789 = vmatpush1.bf16.msra.mxu0 0
  %3790 = vmatprep.subr.bf16.mxu0 0
  %3791 = vmatpush1.bf16.msra.mxu0 0
  %3792 = vmatprep.subr.bf16.mxu0 0
  %3793 = vmatpush1.bf16.msra.mxu0 0
  %3794 = vmatprep.subr.bf16.mxu0 0
  %3795 = vmatpush1.bf16.msra.mxu0 0
  %3796 = vmatprep.subr.bf16.mxu0 0
  %3797 = vmatpush1.bf16.msra.mxu0 0
  %3798 = vmatprep.subr.bf16.mxu0 0
  %3799 = vmatpush1.bf16.msra.mxu0 0
  %3800 = vmatprep.mubr.bf16.mxu0 0
  %3801 = vmatmul.mubr.bf16.gmra.mrb[0].mxu0 %v3766
  %v3802 = vpop.f32.mrb[0].mxu0
  %v3803 = vadd.f32 0.0, %v3802
  %v3804 = vpop.f32.mrb[0].mxu0
  %v3805 = vpop.f32.mrb[0].mxu0
  %v3806 = vpop.f32.mrb[0].mxu0
  %3807 = vdwg.mxu0
  %v3808 = vpack.i.b16 %v2359, %v2359
  %v3809 = vlaneseq
  %v3810 = vshrl.u32 %v3809, 7
  %v3811 = vsub.s32 0, %v3810
  %v3812 = vrot.slane %v3808, %v3811
  %v3814 = vsel %vm2660, %v3812, 0
  %3816 = vmatprep.subr.bf16.mxu0 0
  %3817 = vmatpush1.bf16.msra.mxu0 %v2495
  %3818 = vmatprep.subr.bf16.mxu0 0
  %3819 = vmatpush1.bf16.msra.mxu0 %v2496
  %3820 = vmatprep.subr.bf16.mxu0 0
  %3821 = vmatpush1.bf16.msra.mxu0 %v2497
  %3822 = vmatprep.subr.bf16.mxu0 0
  %3823 = vmatpush1.bf16.msra.mxu0 %v2498
  %3824 = vmatprep.subr.bf16.mxu0 0
  %3825 = vmatpush1.bf16.msra.mxu0 0
  %3826 = vmatprep.subr.bf16.mxu0 0
  %3827 = vmatpush1.bf16.msra.mxu0 0
  %3828 = vmatprep.subr.bf16.mxu0 0
  %3829 = vmatpush1.bf16.msra.mxu0 0
  %3830 = vmatprep.subr.bf16.mxu0 0
  %3831 = vmatpush1.bf16.msra.mxu0 0
  %3832 = vmatprep.subr.bf16.mxu0 0
  %3833 = vmatpush1.bf16.msra.mxu0 0
  %3834 = vmatprep.subr.bf16.mxu0 0
  %3835 = vmatpush1.bf16.msra.mxu0 0
  %3836 = vmatprep.subr.bf16.mxu0 0
  %3837 = vmatpush1.bf16.msra.mxu0 0
  %3838 = vmatprep.subr.bf16.mxu0 0
  %3839 = vmatpush1.bf16.msra.mxu0 0
  %3840 = vmatprep.subr.bf16.mxu0 0
  %3841 = vmatpush1.bf16.msra.mxu0 0
  %3842 = vmatprep.subr.bf16.mxu0 0
  %3843 = vmatpush1.bf16.msra.mxu0 0
  %3844 = vmatprep.subr.bf16.mxu0 0
  %3845 = vmatpush1.bf16.msra.mxu0 0
  %3846 = vmatprep.subr.bf16.mxu0 0
  %3847 = vmatpush1.bf16.msra.mxu0 0
  %3848 = vmatprep.mubr.bf16.mxu0 0
  %3849 = vmatmul.mubr.bf16.gmra.mrb[0].mxu0 %v3814
  %v3850 = vpop.f32.mrb[0].mxu0
  %v3851 = vadd.f32 0.0, %v3850
  %v3852 = vpop.f32.mrb[0].mxu0
  %v3853 = vpop.f32.mrb[0].mxu0
  %v3854 = vpop.f32.mrb[0].mxu0
  %3855 = vdwg.mxu0
  %v3856 = vpack.i.b16 %v2360, %v2360
  %v3857 = vlaneseq
  %v3858 = vshrl.u32 %v3857, 7
  %v3859 = vsub.s32 0, %v3858
  %v3860 = vrot.slane %v3856, %v3859
  %v3862 = vsel %vm2660, %v3860, 0
  %3864 = vmatprep.subr.bf16.mxu0 0
  %3865 = vmatpush1.bf16.msra.mxu0 %v2499
  %3866 = vmatprep.subr.bf16.mxu0 0
  %3867 = vmatpush1.bf16.msra.mxu0 %v2500
  %3868 = vmatprep.subr.bf16.mxu0 0
  %3869 = vmatpush1.bf16.msra.mxu0 %v2501
  %3870 = vmatprep.subr.bf16.mxu0 0
  %3871 = vmatpush1.bf16.msra.mxu0 %v2502
  %3872 = vmatprep.subr.bf16.mxu0 0
  %3873 = vmatpush1.bf16.msra.mxu0 0
  %3874 = vmatprep.subr.bf16.mxu0 0
  %3875 = vmatpush1.bf16.msra.mxu0 0
  %3876 = vmatprep.subr.bf16.mxu0 0
  %3877 = vmatpush1.bf16.msra.mxu0 0
  %3878 = vmatprep.subr.bf16.mxu0 0
  %3879 = vmatpush1.bf16.msra.mxu0 0
  %3880 = vmatprep.subr.bf16.mxu0 0
  %3881 = vmatpush1.bf16.msra.mxu0 0
  %3882 = vmatprep.subr.bf16.mxu0 0
  %3883 = vmatpush1.bf16.msra.mxu0 0
  %3884 = vmatprep.subr.bf16.mxu0 0
  %3885 = vmatpush1.bf16.msra.mxu0 0
  %3886 = vmatprep.subr.bf16.mxu0 0
  %3887 = vmatpush1.bf16.msra.mxu0 0
  %3888 = vmatprep.subr.bf16.mxu0 0
  %3889 = vmatpush1.bf16.msra.mxu0 0
  %3890 = vmatprep.subr.bf16.mxu0 0
  %3891 = vmatpush1.bf16.msra.mxu0 0
  %3892 = vmatprep.subr.bf16.mxu0 0
  %3893 = vmatpush1.bf16.msra.mxu0 0
  %3894 = vmatprep.subr.bf16.mxu0 0
  %3895 = vmatpush1.bf16.msra.mxu0 0
  %3896 = vmatprep.mubr.bf16.mxu0 0
  %3897 = vmatmul.mubr.bf16.gmra.mrb[0].mxu0 %v3862
  %v3898 = vpop.f32.mrb[0].mxu0
  %v3899 = vadd.f32 0.0, %v3898
  %v3900 = vpop.f32.mrb[0].mxu0
  %v3901 = vpop.f32.mrb[0].mxu0
  %v3902 = vpop.f32.mrb[0].mxu0
  %3903 = vdwg.mxu0
  %v3904 = vpack.i.b16 %v2361, %v2361
  %v3905 = vlaneseq
  %v3906 = vshrl.u32 %v3905, 7
  %v3907 = vsub.s32 0, %v3906
  %v3908 = vrot.slane %v3904, %v3907
  %v3910 = vsel %vm2660, %v3908, 0
  %3912 = vmatprep.subr.bf16.mxu0 0
  %3913 = vmatpush1.bf16.msra.mxu0 %v2503
  %3914 = vmatprep.subr.bf16.mxu0 0
  %3915 = vmatpush1.bf16.msra.mxu0 %v2504
  %3916 = vmatprep.subr.bf16.mxu0 0
  %3917 = vmatpush1.bf16.msra.mxu0 %v2505
  %3918 = vmatprep.subr.bf16.mxu0 0
  %3919 = vmatpush1.bf16.msra.mxu0 %v2506
  %3920 = vmatprep.subr.bf16.mxu0 0
  %3921 = vmatpush1.bf16.msra.mxu0 0
  %3922 = vmatprep.subr.bf16.mxu0 0
  %3923 = vmatpush1.bf16.msra.mxu0 0
  %3924 = vmatprep.subr.bf16.mxu0 0
  %3925 = vmatpush1.bf16.msra.mxu0 0
  %3926 = vmatprep.subr.bf16.mxu0 0
  %3927 = vmatpush1.bf16.msra.mxu0 0
  %3928 = vmatprep.subr.bf16.mxu0 0
  %3929 = vmatpush1.bf16.msra.mxu0 0
  %3930 = vmatprep.subr.bf16.mxu0 0
  %3931 = vmatpush1.bf16.msra.mxu0 0
  %3932 = vmatprep.subr.bf16.mxu0 0
  %3933 = vmatpush1.bf16.msra.mxu0 0
  %3934 = vmatprep.subr.bf16.mxu0 0
  %3935 = vmatpush1.bf16.msra.mxu0 0
  %3936 = vmatprep.subr.bf16.mxu0 0
  %3937 = vmatpush1.bf16.msra.mxu0 0
  %3938 = vmatprep.subr.bf16.mxu0 0
  %3939 = vmatpush1.bf16.msra.mxu0 0
  %3940 = vmatprep.subr.bf16.mxu0 0
  %3941 = vmatpush1.bf16.msra.mxu0 0
  %3942 = vmatprep.subr.bf16.mxu0 0
  %3943 = vmatpush1.bf16.msra.mxu0 0
  %3944 = vmatprep.mubr.bf16.mxu0 0
  %3945 = vmatmul.mubr.bf16.gmra.mrb[0].mxu0 %v3910
  %v3946 = vpop.f32.mrb[0].mxu0
  %v3947 = vadd.f32 0.0, %v3946
  %v3948 = vpop.f32.mrb[0].mxu0
  %v3949 = vpop.f32.mrb[0].mxu0
  %v3950 = vpop.f32.mrb[0].mxu0
  %3951 = vdwg.mxu0
  %v3952 = vpack.i.b16 %v2362, %v2362
  %v3953 = vlaneseq
  %v3954 = vshrl.u32 %v3953, 7
  %v3955 = vsub.s32 0, %v3954
  %v3956 = vrot.slane %v3952, %v3955
  %v3958 = vsel %vm2660, %v3956, 0
  %3960 = vmatprep.subr.bf16.mxu0 0
  %3961 = vmatpush1.bf16.msra.mxu0 %v2507
  %3962 = vmatprep.subr.bf16.mxu0 0
  %3963 = vmatpush1.bf16.msra.mxu0 %v2508
  %3964 = vmatprep.subr.bf16.mxu0 0
  %3965 = vmatpush1.bf16.msra.mxu0 %v2509
  %3966 = vmatprep.subr.bf16.mxu0 0
  %3967 = vmatpush1.bf16.msra.mxu0 %v2510
  %3968 = vmatprep.subr.bf16.mxu0 0
  %3969 = vmatpush1.bf16.msra.mxu0 0
  %3970 = vmatprep.subr.bf16.mxu0 0
  %3971 = vmatpush1.bf16.msra.mxu0 0
  %3972 = vmatprep.subr.bf16.mxu0 0
  %3973 = vmatpush1.bf16.msra.mxu0 0
  %3974 = vmatprep.subr.bf16.mxu0 0
  %3975 = vmatpush1.bf16.msra.mxu0 0
  %3976 = vmatprep.subr.bf16.mxu0 0
  %3977 = vmatpush1.bf16.msra.mxu0 0
  %3978 = vmatprep.subr.bf16.mxu0 0
  %3979 = vmatpush1.bf16.msra.mxu0 0
  %3980 = vmatprep.subr.bf16.mxu0 0
  %3981 = vmatpush1.bf16.msra.mxu0 0
  %3982 = vmatprep.subr.bf16.mxu0 0
  %3983 = vmatpush1.bf16.msra.mxu0 0
  %3984 = vmatprep.subr.bf16.mxu0 0
  %3985 = vmatpush1.bf16.msra.mxu0 0
  %3986 = vmatprep.subr.bf16.mxu0 0
  %3987 = vmatpush1.bf16.msra.mxu0 0
  %3988 = vmatprep.subr.bf16.mxu0 0
  %3989 = vmatpush1.bf16.msra.mxu0 0
  %3990 = vmatprep.subr.bf16.mxu0 0
  %3991 = vmatpush1.bf16.msra.mxu0 0
  %3992 = vmatprep.mubr.bf16.mxu0 0
  %3993 = vmatmul.mubr.bf16.gmra.mrb[0].mxu0 %v3958
  %v3994 = vpop.f32.mrb[0].mxu0
  %v3995 = vadd.f32 0.0, %v3994
  %v3996 = vpop.f32.mrb[0].mxu0
  %v3997 = vpop.f32.mrb[0].mxu0
  %v3998 = vpop.f32.mrb[0].mxu0
  %3999 = vdwg.mxu0
  %v4000 = vpack.i.b16 %v2363, %v2363
  %v4001 = vlaneseq
  %v4002 = vshrl.u32 %v4001, 7
  %v4003 = vsub.s32 0, %v4002
  %v4004 = vrot.slane %v4000, %v4003
  %v4006 = vsel %vm2660, %v4004, 0
  %4008 = vmatprep.subr.bf16.mxu0 0
  %4009 = vmatpush1.bf16.msra.mxu0 %v2511
  %4010 = vmatprep.subr.bf16.mxu0 0
  %4011 = vmatpush1.bf16.msra.mxu0 %v2512
  %4012 = vmatprep.subr.bf16.mxu0 0
  %4013 = vmatpush1.bf16.msra.mxu0 %v2513
  %4014 = vmatprep.subr.bf16.mxu0 0
  %4015 = vmatpush1.bf16.msra.mxu0 %v2514
  %4016 = vmatprep.subr.bf16.mxu0 0
  %4017 = vmatpush1.bf16.msra.mxu0 0
  %4018 = vmatprep.subr.bf16.mxu0 0
  %4019 = vmatpush1.bf16.msra.mxu0 0
  %4020 = vmatprep.subr.bf16.mxu0 0
  %4021 = vmatpush1.bf16.msra.mxu0 0
  %4022 = vmatprep.subr.bf16.mxu0 0
  %4023 = vmatpush1.bf16.msra.mxu0 0
  %4024 = vmatprep.subr.bf16.mxu0 0
  %4025 = vmatpush1.bf16.msra.mxu0 0
  %4026 = vmatprep.subr.bf16.mxu0 0
  %4027 = vmatpush1.bf16.msra.mxu0 0
  %4028 = vmatprep.subr.bf16.mxu0 0
  %4029 = vmatpush1.bf16.msra.mxu0 0
  %4030 = vmatprep.subr.bf16.mxu0 0
  %4031 = vmatpush1.bf16.msra.mxu0 0
  %4032 = vmatprep.subr.bf16.mxu0 0
  %4033 = vmatpush1.bf16.msra.mxu0 0
  %4034 = vmatprep.subr.bf16.mxu0 0
  %4035 = vmatpush1.bf16.msra.mxu0 0
  %4036 = vmatprep.subr.bf16.mxu0 0
  %4037 = vmatpush1.bf16.msra.mxu0 0
  %4038 = vmatprep.subr.bf16.mxu0 0
  %4039 = vmatpush1.bf16.msra.mxu0 0
  %4040 = vmatprep.mubr.bf16.mxu0 0
  %4041 = vmatmul.mubr.bf16.gmra.mrb[0].mxu0 %v4006
  %v4042 = vpop.f32.mrb[0].mxu0
  %v4043 = vadd.f32 0.0, %v4042
  %v4044 = vpop.f32.mrb[0].mxu0
  %v4045 = vpop.f32.mrb[0].mxu0
  %v4046 = vpop.f32.mrb[0].mxu0
  %4047 = vdwg.mxu0
  %v4048 = vpack.i.b16 %v2364, %v2364
  %v4049 = vlaneseq
  %v4050 = vshrl.u32 %v4049, 7
  %v4051 = vsub.s32 0, %v4050
  %v4052 = vrot.slane %v4048, %v4051
  %v4054 = vsel %vm2660, %v4052, 0
  %4056 = vmatprep.subr.bf16.mxu0 0
  %4057 = vmatpush1.bf16.msra.mxu0 %v2515
  %4058 = vmatprep.subr.bf16.mxu0 0
  %4059 = vmatpush1.bf16.msra.mxu0 %v2516
  %4060 = vmatprep.subr.bf16.mxu0 0
  %4061 = vmatpush1.bf16.msra.mxu0 %v2517
  %4062 = vmatprep.subr.bf16.mxu0 0
  %4063 = vmatpush1.bf16.msra.mxu0 %v2518
  %4064 = vmatprep.subr.bf16.mxu0 0
  %4065 = vmatpush1.bf16.msra.mxu0 0
  %4066 = vmatprep.subr.bf16.mxu0 0
  %4067 = vmatpush1.bf16.msra.mxu0 0
  %4068 = vmatprep.subr.bf16.mxu0 0
  %4069 = vmatpush1.bf16.msra.mxu0 0
  %4070 = vmatprep.subr.bf16.mxu0 0
  %4071 = vmatpush1.bf16.msra.mxu0 0
  %4072 = vmatprep.subr.bf16.mxu0 0
  %4073 = vmatpush1.bf16.msra.mxu0 0
  %4074 = vmatprep.subr.bf16.mxu0 0
  %4075 = vmatpush1.bf16.msra.mxu0 0
  %4076 = vmatprep.subr.bf16.mxu0 0
  %4077 = vmatpush1.bf16.msra.mxu0 0
  %4078 = vmatprep.subr.bf16.mxu0 0
  %4079 = vmatpush1.bf16.msra.mxu0 0
  %4080 = vmatprep.subr.bf16.mxu0 0
  %4081 = vmatpush1.bf16.msra.mxu0 0
  %4082 = vmatprep.subr.bf16.mxu0 0
  %4083 = vmatpush1.bf16.msra.mxu0 0
  %4084 = vmatprep.subr.bf16.mxu0 0
  %4085 = vmatpush1.bf16.msra.mxu0 0
  %4086 = vmatprep.subr.bf16.mxu0 0
  %4087 = vmatpush1.bf16.msra.mxu0 0
  %4088 = vmatprep.mubr.bf16.mxu0 0
  %4089 = vmatmul.mubr.bf16.gmra.mrb[0].mxu0 %v4054
  %v4090 = vpop.f32.mrb[0].mxu0
  %v4091 = vadd.f32 0.0, %v4090
  %v4092 = vpop.f32.mrb[0].mxu0
  %v4093 = vpop.f32.mrb[0].mxu0
  %v4094 = vpop.f32.mrb[0].mxu0
  %4095 = vdwg.mxu0
  %v4096 = vpack.i.b16 %v2365, %v2365
  %v4097 = vlaneseq
  %v4098 = vshrl.u32 %v4097, 7
  %v4099 = vsub.s32 0, %v4098
  %v4100 = vrot.slane %v4096, %v4099
  %v4102 = vsel %vm2660, %v4100, 0
  %4104 = vmatprep.subr.bf16.mxu0 0
  %4105 = vmatpush1.bf16.msra.mxu0 %v2519
  %4106 = vmatprep.subr.bf16.mxu0 0
  %4107 = vmatpush1.bf16.msra.mxu0 %v2520
  %4108 = vmatprep.subr.bf16.mxu0 0
  %4109 = vmatpush1.bf16.msra.mxu0 %v2521
  %4110 = vmatprep.subr.bf16.mxu0 0
  %4111 = vmatpush1.bf16.msra.mxu0 %v2522
  %4112 = vmatprep.subr.bf16.mxu0 0
  %4113 = vmatpush1.bf16.msra.mxu0 0
  %4114 = vmatprep.subr.bf16.mxu0 0
  %4115 = vmatpush1.bf16.msra.mxu0 0
  %4116 = vmatprep.subr.bf16.mxu0 0
  %4117 = vmatpush1.bf16.msra.mxu0 0
  %4118 = vmatprep.subr.bf16.mxu0 0
  %4119 = vmatpush1.bf16.msra.mxu0 0
  %4120 = vmatprep.subr.bf16.mxu0 0
  %4121 = vmatpush1.bf16.msra.mxu0 0
  %4122 = vmatprep.subr.bf16.mxu0 0
  %4123 = vmatpush1.bf16.msra.mxu0 0
  %4124 = vmatprep.subr.bf16.mxu0 0
  %4125 = vmatpush1.bf16.msra.mxu0 0
  %4126 = vmatprep.subr.bf16.mxu0 0
  %4127 = vmatpush1.bf16.msra.mxu0 0
  %4128 = vmatprep.subr.bf16.mxu0 0
  %4129 = vmatpush1.bf16.msra.mxu0 0
  %4130 = vmatprep.subr.bf16.mxu0 0
  %4131 = vmatpush1.bf16.msra.mxu0 0
  %4132 = vmatprep.subr.bf16.mxu0 0
  %4133 = vmatpush1.bf16.msra.mxu0 0
  %4134 = vmatprep.subr.bf16.mxu0 0
  %4135 = vmatpush1.bf16.msra.mxu0 0
  %4136 = vmatprep.mubr.bf16.mxu0 0
  %4137 = vmatmul.mubr.bf16.gmra.mrb[0].mxu0 %v4102
  %v4138 = vpop.f32.mrb[0].mxu0
  %v4139 = vadd.f32 0.0, %v4138
  %v4140 = vpop.f32.mrb[0].mxu0
  %v4141 = vpop.f32.mrb[0].mxu0
  %v4142 = vpop.f32.mrb[0].mxu0
  %4143 = vdwg.mxu0
  %v4144 = vpack.i.b16 %v2366, %v2366
  %v4145 = vlaneseq
  %v4146 = vshrl.u32 %v4145, 7
  %v4147 = vsub.s32 0, %v4146
  %v4148 = vrot.slane %v4144, %v4147
  %v4150 = vsel %vm2660, %v4148, 0
  %4152 = vmatprep.subr.bf16.mxu0 0
  %4153 = vmatpush1.bf16.msra.mxu0 %v2523
  %4154 = vmatprep.subr.bf16.mxu0 0
  %4155 = vmatpush1.bf16.msra.mxu0 %v2524
  %4156 = vmatprep.subr.bf16.mxu0 0
  %4157 = vmatpush1.bf16.msra.mxu0 %v2525
  %4158 = vmatprep.subr.bf16.mxu0 0
  %4159 = vmatpush1.bf16.msra.mxu0 %v2526
  %4160 = vmatprep.subr.bf16.mxu0 0
  %4161 = vmatpush1.bf16.msra.mxu0 0
  %4162 = vmatprep.subr.bf16.mxu0 0
  %4163 = vmatpush1.bf16.msra.mxu0 0
  %4164 = vmatprep.subr.bf16.mxu0 0
  %4165 = vmatpush1.bf16.msra.mxu0 0
  %4166 = vmatprep.subr.bf16.mxu0 0
  %4167 = vmatpush1.bf16.msra.mxu0 0
  %4168 = vmatprep.subr.bf16.mxu0 0
  %4169 = vmatpush1.bf16.msra.mxu0 0
  %4170 = vmatprep.subr.bf16.mxu0 0
  %4171 = vmatpush1.bf16.msra.mxu0 0
  %4172 = vmatprep.subr.bf16.mxu0 0
  %4173 = vmatpush1.bf16.msra.mxu0 0
  %4174 = vmatprep.subr.bf16.mxu0 0
  %4175 = vmatpush1.bf16.msra.mxu0 0
  %4176 = vmatprep.subr.bf16.mxu0 0
  %4177 = vmatpush1.bf16.msra.mxu0 0
  %4178 = vmatprep.subr.bf16.mxu0 0
  %4179 = vmatpush1.bf16.msra.mxu0 0
  %4180 = vmatprep.subr.bf16.mxu0 0
  %4181 = vmatpush1.bf16.msra.mxu0 0
  %4182 = vmatprep.subr.bf16.mxu0 0
  %4183 = vmatpush1.bf16.msra.mxu0 0
  %4184 = vmatprep.mubr.bf16.mxu0 0
  %4185 = vmatmul.mubr.bf16.gmra.mrb[0].mxu0 %v4150
  %v4186 = vpop.f32.mrb[0].mxu0
  %v4187 = vadd.f32 0.0, %v4186
  %v4188 = vpop.f32.mrb[0].mxu0
  %v4189 = vpop.f32.mrb[0].mxu0
  %v4190 = vpop.f32.mrb[0].mxu0
  %4191 = vdwg.mxu0
  %v4192 = vpack.i.b16 %v2367, %v2367
  %v4193 = vlaneseq
  %v4194 = vshrl.u32 %v4193, 7
  %v4195 = vsub.s32 0, %v4194
  %v4196 = vrot.slane %v4192, %v4195
  %v4198 = vsel %vm2660, %v4196, 0
  %4200 = vmatprep.subr.bf16.mxu0 0
  %4201 = vmatpush1.bf16.msra.mxu0 %v2527
  %4202 = vmatprep.subr.bf16.mxu0 0
  %4203 = vmatpush1.bf16.msra.mxu0 %v2528
  %4204 = vmatprep.subr.bf16.mxu0 0
  %4205 = vmatpush1.bf16.msra.mxu0 %v2529
  %4206 = vmatprep.subr.bf16.mxu0 0
  %4207 = vmatpush1.bf16.msra.mxu0 %v2530
  %4208 = vmatprep.subr.bf16.mxu0 0
  %4209 = vmatpush1.bf16.msra.mxu0 0
  %4210 = vmatprep.subr.bf16.mxu0 0
  %4211 = vmatpush1.bf16.msra.mxu0 0
  %4212 = vmatprep.subr.bf16.mxu0 0
  %4213 = vmatpush1.bf16.msra.mxu0 0
  %4214 = vmatprep.subr.bf16.mxu0 0
  %4215 = vmatpush1.bf16.msra.mxu0 0
  %4216 = vmatprep.subr.bf16.mxu0 0
  %4217 = vmatpush1.bf16.msra.mxu0 0
  %4218 = vmatprep.subr.bf16.mxu0 0
  %4219 = vmatpush1.bf16.msra.mxu0 0
  %4220 = vmatprep.subr.bf16.mxu0 0
  %4221 = vmatpush1.bf16.msra.mxu0 0
  %4222 = vmatprep.subr.bf16.mxu0 0
  %4223 = vmatpush1.bf16.msra.mxu0 0
  %4224 = vmatprep.subr.bf16.mxu0 0
  %4225 = vmatpush1.bf16.msra.mxu0 0
  %4226 = vmatprep.subr.bf16.mxu0 0
  %4227 = vmatpush1.bf16.msra.mxu0 0
  %4228 = vmatprep.subr.bf16.mxu0 0
  %4229 = vmatpush1.bf16.msra.mxu0 0
  %4230 = vmatprep.subr.bf16.mxu0 0
  %4231 = vmatpush1.bf16.msra.mxu0 0
  %4232 = vmatprep.mubr.bf16.mxu0 0
  %4233 = vmatmul.mubr.bf16.gmra.mrb[0].mxu0 %v4198
  %v4234 = vpop.f32.mrb[0].mxu0
  %v4235 = vadd.f32 0.0, %v4234
  %v4236 = vpop.f32.mrb[0].mxu0
  %v4237 = vpop.f32.mrb[0].mxu0
  %v4238 = vpop.f32.mrb[0].mxu0
  %4239 = vdwg.mxu0
  %v4240 = vpack.i.b16 %v2368, %v2368
  %v4241 = vlaneseq
  %v4242 = vshrl.u32 %v4241, 7
  %v4243 = vsub.s32 0, %v4242
  %v4244 = vrot.slane %v4240, %v4243
  %v4246 = vsel %vm2660, %v4244, 0
  %4248 = vmatprep.subr.bf16.mxu0 0
  %4249 = vmatpush1.bf16.msra.mxu0 %v2531
  %4250 = vmatprep.subr.bf16.mxu0 0
  %4251 = vmatpush1.bf16.msra.mxu0 %v2532
  %4252 = vmatprep.subr.bf16.mxu0 0
  %4253 = vmatpush1.bf16.msra.mxu0 %v2533
  %4254 = vmatprep.subr.bf16.mxu0 0
  %4255 = vmatpush1.bf16.msra.mxu0 %v2534
  %4256 = vmatprep.subr.bf16.mxu0 0
  %4257 = vmatpush1.bf16.msra.mxu0 0
  %4258 = vmatprep.subr.bf16.mxu0 0
  %4259 = vmatpush1.bf16.msra.mxu0 0
  %4260 = vmatprep.subr.bf16.mxu0 0
  %4261 = vmatpush1.bf16.msra.mxu0 0
  %4262 = vmatprep.subr.bf16.mxu0 0
  %4263 = vmatpush1.bf16.msra.mxu0 0
  %4264 = vmatprep.subr.bf16.mxu0 0
  %4265 = vmatpush1.bf16.msra.mxu0 0
  %4266 = vmatprep.subr.bf16.mxu0 0
  %4267 = vmatpush1.bf16.msra.mxu0 0
  %4268 = vmatprep.subr.bf16.mxu0 0
  %4269 = vmatpush1.bf16.msra.mxu0 0
  %4270 = vmatprep.subr.bf16.mxu0 0
  %4271 = vmatpush1.bf16.msra.mxu0 0
  %4272 = vmatprep.subr.bf16.mxu0 0
  %4273 = vmatpush1.bf16.msra.mxu0 0
  %4274 = vmatprep.subr.bf16.mxu0 0
  %4275 = vmatpush1.bf16.msra.mxu0 0
  %4276 = vmatprep.subr.bf16.mxu0 0
  %4277 = vmatpush1.bf16.msra.mxu0 0
  %4278 = vmatprep.subr.bf16.mxu0 0
  %4279 = vmatpush1.bf16.msra.mxu0 0
  %4280 = vmatprep.mubr.bf16.mxu0 0
  %4281 = vmatmul.mubr.bf16.gmra.mrb[0].mxu0 %v4246
  %v4282 = vpop.f32.mrb[0].mxu0
  %v4283 = vadd.f32 0.0, %v4282
  %v4284 = vpop.f32.mrb[0].mxu0
  %v4285 = vpop.f32.mrb[0].mxu0
  %v4286 = vpop.f32.mrb[0].mxu0
  %4287 = vdwg.mxu0
  %v4288 = vpack.i.b16 %v2369, %v2369
  %v4289 = vlaneseq
  %v4290 = vshrl.u32 %v4289, 7
  %v4291 = vsub.s32 0, %v4290
  %v4292 = vrot.slane %v4288, %v4291
  %v4294 = vsel %vm2660, %v4292, 0
  %4296 = vmatprep.subr.bf16.mxu0 0
  %4297 = vmatpush1.bf16.msra.mxu0 %v2535
  %4298 = vmatprep.subr.bf16.mxu0 0
  %4299 = vmatpush1.bf16.msra.mxu0 %v2536
  %4300 = vmatprep.subr.bf16.mxu0 0
  %4301 = vmatpush1.bf16.msra.mxu0 %v2537
  %4302 = vmatprep.subr.bf16.mxu0 0
  %4303 = vmatpush1.bf16.msra.mxu0 %v2538
  %4304 = vmatprep.subr.bf16.mxu0 0
  %4305 = vmatpush1.bf16.msra.mxu0 0
  %4306 = vmatprep.subr.bf16.mxu0 0
  %4307 = vmatpush1.bf16.msra.mxu0 0
  %4308 = vmatprep.subr.bf16.mxu0 0
  %4309 = vmatpush1.bf16.msra.mxu0 0
  %4310 = vmatprep.subr.bf16.mxu0 0
  %4311 = vmatpush1.bf16.msra.mxu0 0
  %4312 = vmatprep.subr.bf16.mxu0 0
  %4313 = vmatpush1.bf16.msra.mxu0 0
  %4314 = vmatprep.subr.bf16.mxu0 0
  %4315 = vmatpush1.bf16.msra.mxu0 0
  %4316 = vmatprep.subr.bf16.mxu0 0
  %4317 = vmatpush1.bf16.msra.mxu0 0
  %4318 = vmatprep.subr.bf16.mxu0 0
  %4319 = vmatpush1.bf16.msra.mxu0 0
  %4320 = vmatprep.subr.bf16.mxu0 0
  %4321 = vmatpush1.bf16.msra.mxu0 0
  %4322 = vmatprep.subr.bf16.mxu0 0
  %4323 = vmatpush1.bf16.msra.mxu0 0
  %4324 = vmatprep.subr.bf16.mxu0 0
  %4325 = vmatpush1.bf16.msra.mxu0 0
  %4326 = vmatprep.subr.bf16.mxu0 0
  %4327 = vmatpush1.bf16.msra.mxu0 0
  %4328 = vmatprep.mubr.bf16.mxu0 0
  %4329 = vmatmul.mubr.bf16.gmra.mrb[0].mxu0 %v4294
  %v4330 = vpop.f32.mrb[0].mxu0
  %v4331 = vadd.f32 0.0, %v4330
  %v4332 = vpop.f32.mrb[0].mxu0
  %v4333 = vpop.f32.mrb[0].mxu0
  %v4334 = vpop.f32.mrb[0].mxu0
  %4335 = vdwg.mxu0
  %v4336 = vpack.i.b16 %v2370, %v2370
  %v4337 = vlaneseq
  %v4338 = vshrl.u32 %v4337, 7
  %v4339 = vsub.s32 0, %v4338
  %v4340 = vrot.slane %v4336, %v4339
  %v4342 = vsel %vm2660, %v4340, 0
  %4344 = vmatprep.subr.bf16.mxu0 0
  %4345 = vmatpush1.bf16.msra.mxu0 %v2539
  %4346 = vmatprep.subr.bf16.mxu0 0
  %4347 = vmatpush1.bf16.msra.mxu0 %v2540
  %4348 = vmatprep.subr.bf16.mxu0 0
  %4349 = vmatpush1.bf16.msra.mxu0 %v2541
  %4350 = vmatprep.subr.bf16.mxu0 0
  %4351 = vmatpush1.bf16.msra.mxu0 %v2542
  %4352 = vmatprep.subr.bf16.mxu0 0
  %4353 = vmatpush1.bf16.msra.mxu0 0
  %4354 = vmatprep.subr.bf16.mxu0 0
  %4355 = vmatpush1.bf16.msra.mxu0 0
  %4356 = vmatprep.subr.bf16.mxu0 0
  %4357 = vmatpush1.bf16.msra.mxu0 0
  %4358 = vmatprep.subr.bf16.mxu0 0
  %4359 = vmatpush1.bf16.msra.mxu0 0
  %4360 = vmatprep.subr.bf16.mxu0 0
  %4361 = vmatpush1.bf16.msra.mxu0 0
  %4362 = vmatprep.subr.bf16.mxu0 0
  %4363 = vmatpush1.bf16.msra.mxu0 0
  %4364 = vmatprep.subr.bf16.mxu0 0
  %4365 = vmatpush1.bf16.msra.mxu0 0
  %4366 = vmatprep.subr.bf16.mxu0 0
  %4367 = vmatpush1.bf16.msra.mxu0 0
  %4368 = vmatprep.subr.bf16.mxu0 0
  %4369 = vmatpush1.bf16.msra.mxu0 0
  %4370 = vmatprep.subr.bf16.mxu0 0
  %4371 = vmatpush1.bf16.msra.mxu0 0
  %4372 = vmatprep.subr.bf16.mxu0 0
  %4373 = vmatpush1.bf16.msra.mxu0 0
  %4374 = vmatprep.subr.bf16.mxu0 0
  %4375 = vmatpush1.bf16.msra.mxu0 0
  %4376 = vmatprep.mubr.bf16.mxu0 0
  %4377 = vmatmul.mubr.bf16.gmra.mrb[0].mxu0 %v4342
  %v4378 = vpop.f32.mrb[0].mxu0
  %v4379 = vadd.f32 0.0, %v4378
  %v4380 = vpop.f32.mrb[0].mxu0
  %v4381 = vpop.f32.mrb[0].mxu0
  %v4382 = vpop.f32.mrb[0].mxu0
  %4383 = vdwg.mxu0
  %v4384 = vpack.i.b16 %v2371, %v2371
  %v4385 = vlaneseq
  %v4386 = vshrl.u32 %v4385, 7
  %v4387 = vsub.s32 0, %v4386
  %v4388 = vrot.slane %v4384, %v4387
  %v4390 = vsel %vm2660, %v4388, 0
  %4392 = vmatprep.subr.bf16.mxu0 0
  %4393 = vmatpush1.bf16.msra.mxu0 %v2543
  %4394 = vmatprep.subr.bf16.mxu0 0
  %4395 = vmatpush1.bf16.msra.mxu0 %v2544
  %4396 = vmatprep.subr.bf16.mxu0 0
  %4397 = vmatpush1.bf16.msra.mxu0 %v2545
  %4398 = vmatprep.subr.bf16.mxu0 0
  %4399 = vmatpush1.bf16.msra.mxu0 %v2546
  %4400 = vmatprep.subr.bf16.mxu0 0
  %4401 = vmatpush1.bf16.msra.mxu0 0
  %4402 = vmatprep.subr.bf16.mxu0 0
  %4403 = vmatpush1.bf16.msra.mxu0 0
  %4404 = vmatprep.subr.bf16.mxu0 0
  %4405 = vmatpush1.bf16.msra.mxu0 0
  %4406 = vmatprep.subr.bf16.mxu0 0
  %4407 = vmatpush1.bf16.msra.mxu0 0
  %4408 = vmatprep.subr.bf16.mxu0 0
  %4409 = vmatpush1.bf16.msra.mxu0 0
  %4410 = vmatprep.subr.bf16.mxu0 0
  %4411 = vmatpush1.bf16.msra.mxu0 0
  %4412 = vmatprep.subr.bf16.mxu0 0
  %4413 = vmatpush1.bf16.msra.mxu0 0
  %4414 = vmatprep.subr.bf16.mxu0 0
  %4415 = vmatpush1.bf16.msra.mxu0 0
  %4416 = vmatprep.subr.bf16.mxu0 0
  %4417 = vmatpush1.bf16.msra.mxu0 0
  %4418 = vmatprep.subr.bf16.mxu0 0
  %4419 = vmatpush1.bf16.msra.mxu0 0
  %4420 = vmatprep.subr.bf16.mxu0 0
  %4421 = vmatpush1.bf16.msra.mxu0 0
  %4422 = vmatprep.subr.bf16.mxu0 0
  %4423 = vmatpush1.bf16.msra.mxu0 0
  %4424 = vmatprep.mubr.bf16.mxu0 0
  %4425 = vmatmul.mubr.bf16.gmra.mrb[0].mxu0 %v4390
  %v4426 = vpop.f32.mrb[0].mxu0
  %v4427 = vadd.f32 0.0, %v4426
  %v4428 = vpop.f32.mrb[0].mxu0
  %v4429 = vpop.f32.mrb[0].mxu0
  %v4430 = vpop.f32.mrb[0].mxu0
  %4431 = vdwg.mxu0
  %v4432 = vpack.i.b16 %v2372, %v2372
  %v4433 = vlaneseq
  %v4434 = vshrl.u32 %v4433, 7
  %v4435 = vsub.s32 0, %v4434
  %v4436 = vrot.slane %v4432, %v4435
  %v4438 = vsel %vm2660, %v4436, 0
  %4440 = vmatprep.subr.bf16.mxu0 0
  %4441 = vmatpush1.bf16.msra.mxu0 %v2547
  %4442 = vmatprep.subr.bf16.mxu0 0
  %4443 = vmatpush1.bf16.msra.mxu0 %v2548
  %4444 = vmatprep.subr.bf16.mxu0 0
  %4445 = vmatpush1.bf16.msra.mxu0 %v2549
  %4446 = vmatprep.subr.bf16.mxu0 0
  %4447 = vmatpush1.bf16.msra.mxu0 %v2550
  %4448 = vmatprep.subr.bf16.mxu0 0
  %4449 = vmatpush1.bf16.msra.mxu0 0
  %4450 = vmatprep.subr.bf16.mxu0 0
  %4451 = vmatpush1.bf16.msra.mxu0 0
  %4452 = vmatprep.subr.bf16.mxu0 0
  %4453 = vmatpush1.bf16.msra.mxu0 0
  %4454 = vmatprep.subr.bf16.mxu0 0
  %4455 = vmatpush1.bf16.msra.mxu0 0
  %4456 = vmatprep.subr.bf16.mxu0 0
  %4457 = vmatpush1.bf16.msra.mxu0 0
  %4458 = vmatprep.subr.bf16.mxu0 0
  %4459 = vmatpush1.bf16.msra.mxu0 0
  %4460 = vmatprep.subr.bf16.mxu0 0
  %4461 = vmatpush1.bf16.msra.mxu0 0
  %4462 = vmatprep.subr.bf16.mxu0 0
  %4463 = vmatpush1.bf16.msra.mxu0 0
  %4464 = vmatprep.subr.bf16.mxu0 0
  %4465 = vmatpush1.bf16.msra.mxu0 0
  %4466 = vmatprep.subr.bf16.mxu0 0
  %4467 = vmatpush1.bf16.msra.mxu0 0
  %4468 = vmatprep.subr.bf16.mxu0 0
  %4469 = vmatpush1.bf16.msra.mxu0 0
  %4470 = vmatprep.subr.bf16.mxu0 0
  %4471 = vmatpush1.bf16.msra.mxu0 0
  %4472 = vmatprep.mubr.bf16.mxu0 0
  %4473 = vmatmul.mubr.bf16.gmra.mrb[0].mxu0 %v4438
  %v4474 = vpop.f32.mrb[0].mxu0
  %v4475 = vadd.f32 0.0, %v4474
  %v4476 = vpop.f32.mrb[0].mxu0
  %v4477 = vpop.f32.mrb[0].mxu0
  %v4478 = vpop.f32.mrb[0].mxu0
  %4479 = vdwg.mxu0
  %v4480 = vpack.i.b16 %v2373, %v2373
  %v4481 = vlaneseq
  %v4482 = vshrl.u32 %v4481, 7
  %v4483 = vsub.s32 0, %v4482
  %v4484 = vrot.slane %v4480, %v4483
  %v4486 = vsel %vm2660, %v4484, 0
  %4488 = vmatprep.subr.bf16.mxu0 0
  %4489 = vmatpush1.bf16.msra.mxu0 %v2551
  %4490 = vmatprep.subr.bf16.mxu0 0
  %4491 = vmatpush1.bf16.msra.mxu0 %v2552
  %4492 = vmatprep.subr.bf16.mxu0 0
  %4493 = vmatpush1.bf16.msra.mxu0 %v2553
  %4494 = vmatprep.subr.bf16.mxu0 0
  %4495 = vmatpush1.bf16.msra.mxu0 %v2554
  %4496 = vmatprep.subr.bf16.mxu0 0
  %4497 = vmatpush1.bf16.msra.mxu0 0
  %4498 = vmatprep.subr.bf16.mxu0 0
  %4499 = vmatpush1.bf16.msra.mxu0 0
  %4500 = vmatprep.subr.bf16.mxu0 0
  %4501 = vmatpush1.bf16.msra.mxu0 0
  %4502 = vmatprep.subr.bf16.mxu0 0
  %4503 = vmatpush1.bf16.msra.mxu0 0
  %4504 = vmatprep.subr.bf16.mxu0 0
  %4505 = vmatpush1.bf16.msra.mxu0 0
  %4506 = vmatprep.subr.bf16.mxu0 0
  %4507 = vmatpush1.bf16.msra.mxu0 0
  %4508 = vmatprep.subr.bf16.mxu0 0
  %4509 = vmatpush1.bf16.msra.mxu0 0
  %4510 = vmatprep.subr.bf16.mxu0 0
  %4511 = vmatpush1.bf16.msra.mxu0 0
  %4512 = vmatprep.subr.bf16.mxu0 0
  %4513 = vmatpush1.bf16.msra.mxu0 0
  %4514 = vmatprep.subr.bf16.mxu0 0
  %4515 = vmatpush1.bf16.msra.mxu0 0
  %4516 = vmatprep.subr.bf16.mxu0 0
  %4517 = vmatpush1.bf16.msra.mxu0 0
  %4518 = vmatprep.subr.bf16.mxu0 0
  %4519 = vmatpush1.bf16.msra.mxu0 0
  %4520 = vmatprep.mubr.bf16.mxu0 0
  %4521 = vmatmul.mubr.bf16.gmra.mrb[0].mxu0 %v4486
  %v4522 = vpop.f32.mrb[0].mxu0
  %v4523 = vadd.f32 0.0, %v4522
  %v4524 = vpop.f32.mrb[0].mxu0
  %v4525 = vpop.f32.mrb[0].mxu0
  %v4526 = vpop.f32.mrb[0].mxu0
  %4527 = vdwg.mxu0
  %v4528 = vpack.i.b16 %v2374, %v2374
  %v4529 = vlaneseq
  %v4530 = vshrl.u32 %v4529, 7
  %v4531 = vsub.s32 0, %v4530
  %v4532 = vrot.slane %v4528, %v4531
  %v4534 = vsel %vm2660, %v4532, 0
  %4536 = vmatprep.subr.bf16.mxu0 0
  %4537 = vmatpush1.bf16.msra.mxu0 %v2555
  %4538 = vmatprep.subr.bf16.mxu0 0
  %4539 = vmatpush1.bf16.msra.mxu0 %v2556
  %4540 = vmatprep.subr.bf16.mxu0 0
  %4541 = vmatpush1.bf16.msra.mxu0 %v2557
  %4542 = vmatprep.subr.bf16.mxu0 0
  %4543 = vmatpush1.bf16.msra.mxu0 %v2558
  %4544 = vmatprep.subr.bf16.mxu0 0
  %4545 = vmatpush1.bf16.msra.mxu0 0
  %4546 = vmatprep.subr.bf16.mxu0 0
  %4547 = vmatpush1.bf16.msra.mxu0 0
  %4548 = vmatprep.subr.bf16.mxu0 0
  %4549 = vmatpush1.bf16.msra.mxu0 0
  %4550 = vmatprep.subr.bf16.mxu0 0
  %4551 = vmatpush1.bf16.msra.mxu0 0
  %4552 = vmatprep.subr.bf16.mxu0 0
  %4553 = vmatpush1.bf16.msra.mxu0 0
  %4554 = vmatprep.subr.bf16.mxu0 0
  %4555 = vmatpush1.bf16.msra.mxu0 0
  %4556 = vmatprep.subr.bf16.mxu0 0
  %4557 = vmatpush1.bf16.msra.mxu0 0
  %4558 = vmatprep.subr.bf16.mxu0 0
  %4559 = vmatpush1.bf16.msra.mxu0 0
  %4560 = vmatprep.subr.bf16.mxu0 0
  %4561 = vmatpush1.bf16.msra.mxu0 0
  %4562 = vmatprep.subr.bf16.mxu0 0
  %4563 = vmatpush1.bf16.msra.mxu0 0
  %4564 = vmatprep.subr.bf16.mxu0 0
  %4565 = vmatpush1.bf16.msra.mxu0 0
  %4566 = vmatprep.subr.bf16.mxu0 0
  %4567 = vmatpush1.bf16.msra.mxu0 0
  %4568 = vmatprep.mubr.bf16.mxu0 0
  %4569 = vmatmul.mubr.bf16.gmra.mrb[0].mxu0 %v4534
  %v4570 = vpop.f32.mrb[0].mxu0
  %v4571 = vadd.f32 0.0, %v4570
  %v4572 = vpop.f32.mrb[0].mxu0
  %v4573 = vpop.f32.mrb[0].mxu0
  %v4574 = vpop.f32.mrb[0].mxu0
  %4575 = vdwg.mxu0
  %v4576 = vpack.i.b16 %v2375, %v2375
  %v4577 = vlaneseq
  %v4578 = vshrl.u32 %v4577, 7
  %v4579 = vsub.s32 0, %v4578
  %v4580 = vrot.slane %v4576, %v4579
  %v4582 = vsel %vm2660, %v4580, 0
  %4584 = vmatprep.subr.bf16.mxu0 0
  %4585 = vmatpush1.bf16.msra.mxu0 %v2559
  %4586 = vmatprep.subr.bf16.mxu0 0
  %4587 = vmatpush1.bf16.msra.mxu0 %v2560
  %4588 = vmatprep.subr.bf16.mxu0 0
  %4589 = vmatpush1.bf16.msra.mxu0 %v2561
  %4590 = vmatprep.subr.bf16.mxu0 0
  %4591 = vmatpush1.bf16.msra.mxu0 %v2562
  %4592 = vmatprep.subr.bf16.mxu0 0
  %4593 = vmatpush1.bf16.msra.mxu0 0
  %4594 = vmatprep.subr.bf16.mxu0 0
  %4595 = vmatpush1.bf16.msra.mxu0 0
  %4596 = vmatprep.subr.bf16.mxu0 0
  %4597 = vmatpush1.bf16.msra.mxu0 0
  %4598 = vmatprep.subr.bf16.mxu0 0
  %4599 = vmatpush1.bf16.msra.mxu0 0
  %4600 = vmatprep.subr.bf16.mxu0 0
  %4601 = vmatpush1.bf16.msra.mxu0 0
  %4602 = vmatprep.subr.bf16.mxu0 0
  %4603 = vmatpush1.bf16.msra.mxu0 0
  %4604 = vmatprep.subr.bf16.mxu0 0
  %4605 = vmatpush1.bf16.msra.mxu0 0
  %4606 = vmatprep.subr.bf16.mxu0 0
  %4607 = vmatpush1.bf16.msra.mxu0 0
  %4608 = vmatprep.subr.bf16.mxu0 0
  %4609 = vmatpush1.bf16.msra.mxu0 0
  %4610 = vmatprep.subr.bf16.mxu0 0
  %4611 = vmatpush1.bf16.msra.mxu0 0
  %4612 = vmatprep.subr.bf16.mxu0 0
  %4613 = vmatpush1.bf16.msra.mxu0 0
  %4614 = vmatprep.subr.bf16.mxu0 0
  %4615 = vmatpush1.bf16.msra.mxu0 0
  %4616 = vmatprep.mubr.bf16.mxu0 0
  %4617 = vmatmul.mubr.bf16.gmra.mrb[0].mxu0 %v4582
  %v4618 = vpop.f32.mrb[0].mxu0
  %v4619 = vadd.f32 0.0, %v4618
  %v4620 = vpop.f32.mrb[0].mxu0
  %v4621 = vpop.f32.mrb[0].mxu0
  %v4622 = vpop.f32.mrb[0].mxu0
  %4623 = vdwg.mxu0
  %v4624 = vpack.i.b16 %v2376, %v2376
  %v4625 = vlaneseq
  %v4626 = vshrl.u32 %v4625, 7
  %v4627 = vsub.s32 0, %v4626
  %v4628 = vrot.slane %v4624, %v4627
  %v4630 = vsel %vm2660, %v4628, 0
  %4632 = vmatprep.subr.bf16.mxu0 0
  %4633 = vmatpush1.bf16.msra.mxu0 %v2563
  %4634 = vmatprep.subr.bf16.mxu0 0
  %4635 = vmatpush1.bf16.msra.mxu0 %v2564
  %4636 = vmatprep.subr.bf16.mxu0 0
  %4637 = vmatpush1.bf16.msra.mxu0 %v2565
  %4638 = vmatprep.subr.bf16.mxu0 0
  %4639 = vmatpush1.bf16.msra.mxu0 %v2566
  %4640 = vmatprep.subr.bf16.mxu0 0
  %4641 = vmatpush1.bf16.msra.mxu0 0
  %4642 = vmatprep.subr.bf16.mxu0 0
  %4643 = vmatpush1.bf16.msra.mxu0 0
  %4644 = vmatprep.subr.bf16.mxu0 0
  %4645 = vmatpush1.bf16.msra.mxu0 0
  %4646 = vmatprep.subr.bf16.mxu0 0
  %4647 = vmatpush1.bf16.msra.mxu0 0
  %4648 = vmatprep.subr.bf16.mxu0 0
  %4649 = vmatpush1.bf16.msra.mxu0 0
  %4650 = vmatprep.subr.bf16.mxu0 0
  %4651 = vmatpush1.bf16.msra.mxu0 0
  %4652 = vmatprep.subr.bf16.mxu0 0
  %4653 = vmatpush1.bf16.msra.mxu0 0
  %4654 = vmatprep.subr.bf16.mxu0 0
  %4655 = vmatpush1.bf16.msra.mxu0 0
  %4656 = vmatprep.subr.bf16.mxu0 0
  %4657 = vmatpush1.bf16.msra.mxu0 0
  %4658 = vmatprep.subr.bf16.mxu0 0
  %4659 = vmatpush1.bf16.msra.mxu0 0
  %4660 = vmatprep.subr.bf16.mxu0 0
  %4661 = vmatpush1.bf16.msra.mxu0 0
  %4662 = vmatprep.subr.bf16.mxu0 0
  %4663 = vmatpush1.bf16.msra.mxu0 0
  %4664 = vmatprep.mubr.bf16.mxu0 0
  %4665 = vmatmul.mubr.bf16.gmra.mrb[0].mxu0 %v4630
  %v4666 = vpop.f32.mrb[0].mxu0
  %v4667 = vadd.f32 0.0, %v4666
  %v4668 = vpop.f32.mrb[0].mxu0
  %v4669 = vpop.f32.mrb[0].mxu0
  %v4670 = vpop.f32.mrb[0].mxu0
  %4671 = vdwg.mxu0
  %v4672 = vpack.i.b16 %v2377, %v2377
  %v4673 = vlaneseq
  %v4674 = vshrl.u32 %v4673, 7
  %v4675 = vsub.s32 0, %v4674
  %v4676 = vrot.slane %v4672, %v4675
  %v4678 = vsel %vm2660, %v4676, 0
  %4680 = vmatprep.subr.bf16.mxu0 0
  %4681 = vmatpush1.bf16.msra.mxu0 %v2567
  %4682 = vmatprep.subr.bf16.mxu0 0
  %4683 = vmatpush1.bf16.msra.mxu0 %v2568
  %4684 = vmatprep.subr.bf16.mxu0 0
  %4685 = vmatpush1.bf16.msra.mxu0 %v2569
  %4686 = vmatprep.subr.bf16.mxu0 0
  %4687 = vmatpush1.bf16.msra.mxu0 %v2570
  %4688 = vmatprep.subr.bf16.mxu0 0
  %4689 = vmatpush1.bf16.msra.mxu0 0
  %4690 = vmatprep.subr.bf16.mxu0 0
  %4691 = vmatpush1.bf16.msra.mxu0 0
  %4692 = vmatprep.subr.bf16.mxu0 0
  %4693 = vmatpush1.bf16.msra.mxu0 0
  %4694 = vmatprep.subr.bf16.mxu0 0
  %4695 = vmatpush1.bf16.msra.mxu0 0
  %4696 = vmatprep.subr.bf16.mxu0 0
  %4697 = vmatpush1.bf16.msra.mxu0 0
  %4698 = vmatprep.subr.bf16.mxu0 0
  %4699 = vmatpush1.bf16.msra.mxu0 0
  %4700 = vmatprep.subr.bf16.mxu0 0
  %4701 = vmatpush1.bf16.msra.mxu0 0
  %4702 = vmatprep.subr.bf16.mxu0 0
  %4703 = vmatpush1.bf16.msra.mxu0 0
  %4704 = vmatprep.subr.bf16.mxu0 0
  %4705 = vmatpush1.bf16.msra.mxu0 0
  %4706 = vmatprep.subr.bf16.mxu0 0
  %4707 = vmatpush1.bf16.msra.mxu0 0
  %4708 = vmatprep.subr.bf16.mxu0 0
  %4709 = vmatpush1.bf16.msra.mxu0 0
  %4710 = vmatprep.subr.bf16.mxu0 0
  %4711 = vmatpush1.bf16.msra.mxu0 0
  %4712 = vmatprep.mubr.bf16.mxu0 0
  %4713 = vmatmul.mubr.bf16.gmra.mrb[0].mxu0 %v4678
  %v4714 = vpop.f32.mrb[0].mxu0
  %v4715 = vadd.f32 0.0, %v4714
  %v4716 = vpop.f32.mrb[0].mxu0
  %v4717 = vpop.f32.mrb[0].mxu0
  %v4718 = vpop.f32.mrb[0].mxu0
  %4719 = vdwg.mxu0
  %v4720 = vpack.i.b16 %v2378, %v2378
  %v4721 = vlaneseq
  %v4722 = vshrl.u32 %v4721, 7
  %v4723 = vsub.s32 0, %v4722
  %v4724 = vrot.slane %v4720, %v4723
  %v4726 = vsel %vm2660, %v4724, 0
  %4728 = vmatprep.subr.bf16.mxu0 0
  %4729 = vmatpush1.bf16.msra.mxu0 %v2571
  %4730 = vmatprep.subr.bf16.mxu0 0
  %4731 = vmatpush1.bf16.msra.mxu0 %v2572
  %4732 = vmatprep.subr.bf16.mxu0 0
  %4733 = vmatpush1.bf16.msra.mxu0 %v2573
  %4734 = vmatprep.subr.bf16.mxu0 0
  %4735 = vmatpush1.bf16.msra.mxu0 %v2574
  %4736 = vmatprep.subr.bf16.mxu0 0
  %4737 = vmatpush1.bf16.msra.mxu0 0
  %4738 = vmatprep.subr.bf16.mxu0 0
  %4739 = vmatpush1.bf16.msra.mxu0 0
  %4740 = vmatprep.subr.bf16.mxu0 0
  %4741 = vmatpush1.bf16.msra.mxu0 0
  %4742 = vmatprep.subr.bf16.mxu0 0
  %4743 = vmatpush1.bf16.msra.mxu0 0
  %4744 = vmatprep.subr.bf16.mxu0 0
  %4745 = vmatpush1.bf16.msra.mxu0 0
  %4746 = vmatprep.subr.bf16.mxu0 0
  %4747 = vmatpush1.bf16.msra.mxu0 0
  %4748 = vmatprep.subr.bf16.mxu0 0
  %4749 = vmatpush1.bf16.msra.mxu0 0
  %4750 = vmatprep.subr.bf16.mxu0 0
  %4751 = vmatpush1.bf16.msra.mxu0 0
  %4752 = vmatprep.subr.bf16.mxu0 0
  %4753 = vmatpush1.bf16.msra.mxu0 0
  %4754 = vmatprep.subr.bf16.mxu0 0
  %4755 = vmatpush1.bf16.msra.mxu0 0
  %4756 = vmatprep.subr.bf16.mxu0 0
  %4757 = vmatpush1.bf16.msra.mxu0 0
  %4758 = vmatprep.subr.bf16.mxu0 0
  %4759 = vmatpush1.bf16.msra.mxu0 0
  %4760 = vmatprep.mubr.bf16.mxu0 0
  %4761 = vmatmul.mubr.bf16.gmra.mrb[0].mxu0 %v4726
  %v4762 = vpop.f32.mrb[0].mxu0
  %v4763 = vadd.f32 0.0, %v4762
  %v4764 = vpop.f32.mrb[0].mxu0
  %v4765 = vpop.f32.mrb[0].mxu0
  %v4766 = vpop.f32.mrb[0].mxu0
  %4767 = vdwg.mxu0
  %v4768 = vpack.i.b16 %v2379, %v2379
  %v4769 = vlaneseq
  %v4770 = vshrl.u32 %v4769, 7
  %v4771 = vsub.s32 0, %v4770
  %v4772 = vrot.slane %v4768, %v4771
  %v4774 = vsel %vm2660, %v4772, 0
  %4776 = vmatprep.subr.bf16.mxu0 0
  %4777 = vmatpush1.bf16.msra.mxu0 %v2575
  %4778 = vmatprep.subr.bf16.mxu0 0
  %4779 = vmatpush1.bf16.msra.mxu0 %v2576
  %4780 = vmatprep.subr.bf16.mxu0 0
  %4781 = vmatpush1.bf16.msra.mxu0 %v2577
  %4782 = vmatprep.subr.bf16.mxu0 0
  %4783 = vmatpush1.bf16.msra.mxu0 %v2578
  %4784 = vmatprep.subr.bf16.mxu0 0
  %4785 = vmatpush1.bf16.msra.mxu0 0
  %4786 = vmatprep.subr.bf16.mxu0 0
  %4787 = vmatpush1.bf16.msra.mxu0 0
  %4788 = vmatprep.subr.bf16.mxu0 0
  %4789 = vmatpush1.bf16.msra.mxu0 0
  %4790 = vmatprep.subr.bf16.mxu0 0
  %4791 = vmatpush1.bf16.msra.mxu0 0
  %4792 = vmatprep.subr.bf16.mxu0 0
  %4793 = vmatpush1.bf16.msra.mxu0 0
  %4794 = vmatprep.subr.bf16.mxu0 0
  %4795 = vmatpush1.bf16.msra.mxu0 0
  %4796 = vmatprep.subr.bf16.mxu0 0
  %4797 = vmatpush1.bf16.msra.mxu0 0
  %4798 = vmatprep.subr.bf16.mxu0 0
  %4799 = vmatpush1.bf16.msra.mxu0 0
  %4800 = vmatprep.subr.bf16.mxu0 0
  %4801 = vmatpush1.bf16.msra.mxu0 0
  %4802 = vmatprep.subr.bf16.mxu0 0
  %4803 = vmatpush1.bf16.msra.mxu0 0
  %4804 = vmatprep.subr.bf16.mxu0 0
  %4805 = vmatpush1.bf16.msra.mxu0 0
  %4806 = vmatprep.subr.bf16.mxu0 0
  %4807 = vmatpush1.bf16.msra.mxu0 0
  %4808 = vmatprep.mubr.bf16.mxu0 0
  %4809 = vmatmul.mubr.bf16.gmra.mrb[0].mxu0 %v4774
  %v4810 = vpop.f32.mrb[0].mxu0
  %v4811 = vadd.f32 0.0, %v4810
  %v4812 = vpop.f32.mrb[0].mxu0
  %v4813 = vpop.f32.mrb[0].mxu0
  %v4814 = vpop.f32.mrb[0].mxu0
  %4815 = vdwg.mxu0
  %v4816 = vpack.i.b16 %v2380, %v2380
  %v4817 = vlaneseq
  %v4818 = vshrl.u32 %v4817, 7
  %v4819 = vsub.s32 0, %v4818
  %v4820 = vrot.slane %v4816, %v4819
  %v4822 = vsel %vm2660, %v4820, 0
  %4824 = vmatprep.subr.bf16.mxu0 0
  %4825 = vmatpush1.bf16.msra.mxu0 %v2579
  %4826 = vmatprep.subr.bf16.mxu0 0
  %4827 = vmatpush1.bf16.msra.mxu0 %v2580
  %4828 = vmatprep.subr.bf16.mxu0 0
  %4829 = vmatpush1.bf16.msra.mxu0 %v2581
  %4830 = vmatprep.subr.bf16.mxu0 0
  %4831 = vmatpush1.bf16.msra.mxu0 %v2582
  %4832 = vmatprep.subr.bf16.mxu0 0
  %4833 = vmatpush1.bf16.msra.mxu0 0
  %4834 = vmatprep.subr.bf16.mxu0 0
  %4835 = vmatpush1.bf16.msra.mxu0 0
  %4836 = vmatprep.subr.bf16.mxu0 0
  %4837 = vmatpush1.bf16.msra.mxu0 0
  %4838 = vmatprep.subr.bf16.mxu0 0
  %4839 = vmatpush1.bf16.msra.mxu0 0
  %4840 = vmatprep.subr.bf16.mxu0 0
  %4841 = vmatpush1.bf16.msra.mxu0 0
  %4842 = vmatprep.subr.bf16.mxu0 0
  %4843 = vmatpush1.bf16.msra.mxu0 0
  %4844 = vmatprep.subr.bf16.mxu0 0
  %4845 = vmatpush1.bf16.msra.mxu0 0
  %4846 = vmatprep.subr.bf16.mxu0 0
  %4847 = vmatpush1.bf16.msra.mxu0 0
  %4848 = vmatprep.subr.bf16.mxu0 0
  %4849 = vmatpush1.bf16.msra.mxu0 0
  %4850 = vmatprep.subr.bf16.mxu0 0
  %4851 = vmatpush1.bf16.msra.mxu0 0
  %4852 = vmatprep.subr.bf16.mxu0 0
  %4853 = vmatpush1.bf16.msra.mxu0 0
  %4854 = vmatprep.subr.bf16.mxu0 0
  %4855 = vmatpush1.bf16.msra.mxu0 0
  %4856 = vmatprep.mubr.bf16.mxu0 0
  %4857 = vmatmul.mubr.bf16.gmra.mrb[0].mxu0 %v4822
  %v4858 = vpop.f32.mrb[0].mxu0
  %v4859 = vadd.f32 0.0, %v4858
  %v4860 = vpop.f32.mrb[0].mxu0
  %v4861 = vpop.f32.mrb[0].mxu0
  %v4862 = vpop.f32.mrb[0].mxu0
  %4863 = vdwg.mxu0
  %v4864 = vpack.i.b16 %v2381, %v2381
  %v4865 = vlaneseq
  %v4866 = vshrl.u32 %v4865, 7
  %v4867 = vsub.s32 0, %v4866
  %v4868 = vrot.slane %v4864, %v4867
  %v4870 = vsel %vm2660, %v4868, 0
  %4872 = vmatprep.subr.bf16.mxu0 0
  %4873 = vmatpush1.bf16.msra.mxu0 %v2583
  %4874 = vmatprep.subr.bf16.mxu0 0
  %4875 = vmatpush1.bf16.msra.mxu0 %v2584
  %4876 = vmatprep.subr.bf16.mxu0 0
  %4877 = vmatpush1.bf16.msra.mxu0 %v2585
  %4878 = vmatprep.subr.bf16.mxu0 0
  %4879 = vmatpush1.bf16.msra.mxu0 %v2586
  %4880 = vmatprep.subr.bf16.mxu0 0
  %4881 = vmatpush1.bf16.msra.mxu0 0
  %4882 = vmatprep.subr.bf16.mxu0 0
  %4883 = vmatpush1.bf16.msra.mxu0 0
  %4884 = vmatprep.subr.bf16.mxu0 0
  %4885 = vmatpush1.bf16.msra.mxu0 0
  %4886 = vmatprep.subr.bf16.mxu0 0
  %4887 = vmatpush1.bf16.msra.mxu0 0
  %4888 = vmatprep.subr.bf16.mxu0 0
  %4889 = vmatpush1.bf16.msra.mxu0 0
  %4890 = vmatprep.subr.bf16.mxu0 0
  %4891 = vmatpush1.bf16.msra.mxu0 0
  %4892 = vmatprep.subr.bf16.mxu0 0
  %4893 = vmatpush1.bf16.msra.mxu0 0
  %4894 = vmatprep.subr.bf16.mxu0 0
  %4895 = vmatpush1.bf16.msra.mxu0 0
  %4896 = vmatprep.subr.bf16.mxu0 0
  %4897 = vmatpush1.bf16.msra.mxu0 0
  %4898 = vmatprep.subr.bf16.mxu0 0
  %4899 = vmatpush1.bf16.msra.mxu0 0
  %4900 = vmatprep.subr.bf16.mxu0 0
  %4901 = vmatpush1.bf16.msra.mxu0 0
  %4902 = vmatprep.subr.bf16.mxu0 0
  %4903 = vmatpush1.bf16.msra.mxu0 0
  %4904 = vmatprep.mubr.bf16.mxu0 0
  %4905 = vmatmul.mubr.bf16.gmra.mrb[0].mxu0 %v4870
  %v4906 = vpop.f32.mrb[0].mxu0
  %v4907 = vadd.f32 0.0, %v4906
  %v4908 = vpop.f32.mrb[0].mxu0
  %v4909 = vpop.f32.mrb[0].mxu0
  %v4910 = vpop.f32.mrb[0].mxu0
  %4911 = vdwg.mxu0
  %v4912 = vpack.i.b16 %v2382, %v2382
  %v4913 = vlaneseq
  %v4914 = vshrl.u32 %v4913, 7
  %v4915 = vsub.s32 0, %v4914
  %v4916 = vrot.slane %v4912, %v4915
  %v4918 = vsel %vm2660, %v4916, 0
  %4920 = vmatprep.subr.bf16.mxu0 0
  %4921 = vmatpush1.bf16.msra.mxu0 %v2587
  %4922 = vmatprep.subr.bf16.mxu0 0
  %4923 = vmatpush1.bf16.msra.mxu0 %v2588
  %4924 = vmatprep.subr.bf16.mxu0 0
  %4925 = vmatpush1.bf16.msra.mxu0 %v2589
  %4926 = vmatprep.subr.bf16.mxu0 0
  %4927 = vmatpush1.bf16.msra.mxu0 %v2590
  %4928 = vmatprep.subr.bf16.mxu0 0
  %4929 = vmatpush1.bf16.msra.mxu0 0
  %4930 = vmatprep.subr.bf16.mxu0 0
  %4931 = vmatpush1.bf16.msra.mxu0 0
  %4932 = vmatprep.subr.bf16.mxu0 0
  %4933 = vmatpush1.bf16.msra.mxu0 0
  %4934 = vmatprep.subr.bf16.mxu0 0
  %4935 = vmatpush1.bf16.msra.mxu0 0
  %4936 = vmatprep.subr.bf16.mxu0 0
  %4937 = vmatpush1.bf16.msra.mxu0 0
  %4938 = vmatprep.subr.bf16.mxu0 0
  %4939 = vmatpush1.bf16.msra.mxu0 0
  %4940 = vmatprep.subr.bf16.mxu0 0
  %4941 = vmatpush1.bf16.msra.mxu0 0
  %4942 = vmatprep.subr.bf16.mxu0 0
  %4943 = vmatpush1.bf16.msra.mxu0 0
  %4944 = vmatprep.subr.bf16.mxu0 0
  %4945 = vmatpush1.bf16.msra.mxu0 0
  %4946 = vmatprep.subr.bf16.mxu0 0
  %4947 = vmatpush1.bf16.msra.mxu0 0
  %4948 = vmatprep.subr.bf16.mxu0 0
  %4949 = vmatpush1.bf16.msra.mxu0 0
  %4950 = vmatprep.subr.bf16.mxu0 0
  %4951 = vmatpush1.bf16.msra.mxu0 0
  %4952 = vmatprep.mubr.bf16.mxu0 0
  %4953 = vmatmul.mubr.bf16.gmra.mrb[0].mxu0 %v4918
  %v4954 = vpop.f32.mrb[0].mxu0
  %v4955 = vadd.f32 0.0, %v4954
  %v4956 = vpop.f32.mrb[0].mxu0
  %v4957 = vpop.f32.mrb[0].mxu0
  %v4958 = vpop.f32.mrb[0].mxu0
  %4959 = vdwg.mxu0
  %v4960 = vpack.i.b16 %v2383, %v2383
  %v4961 = vlaneseq
  %v4962 = vshrl.u32 %v4961, 7
  %v4963 = vsub.s32 0, %v4962
  %v4964 = vrot.slane %v4960, %v4963
  %v4966 = vsel %vm2660, %v4964, 0
  %4968 = vmatprep.subr.bf16.mxu0 0
  %4969 = vmatpush1.bf16.msra.mxu0 %v2591
  %4970 = vmatprep.subr.bf16.mxu0 0
  %4971 = vmatpush1.bf16.msra.mxu0 %v2592
  %4972 = vmatprep.subr.bf16.mxu0 0
  %4973 = vmatpush1.bf16.msra.mxu0 %v2593
  %4974 = vmatprep.subr.bf16.mxu0 0
  %4975 = vmatpush1.bf16.msra.mxu0 %v2594
  %4976 = vmatprep.subr.bf16.mxu0 0
  %4977 = vmatpush1.bf16.msra.mxu0 0
  %4978 = vmatprep.subr.bf16.mxu0 0
  %4979 = vmatpush1.bf16.msra.mxu0 0
  %4980 = vmatprep.subr.bf16.mxu0 0
  %4981 = vmatpush1.bf16.msra.mxu0 0
  %4982 = vmatprep.subr.bf16.mxu0 0
  %4983 = vmatpush1.bf16.msra.mxu0 0
  %4984 = vmatprep.subr.bf16.mxu0 0
  %4985 = vmatpush1.bf16.msra.mxu0 0
  %4986 = vmatprep.subr.bf16.mxu0 0
  %4987 = vmatpush1.bf16.msra.mxu0 0
  %4988 = vmatprep.subr.bf16.mxu0 0
  %4989 = vmatpush1.bf16.msra.mxu0 0
  %4990 = vmatprep.subr.bf16.mxu0 0
  %4991 = vmatpush1.bf16.msra.mxu0 0
  %4992 = vmatprep.subr.bf16.mxu0 0
  %4993 = vmatpush1.bf16.msra.mxu0 0
  %4994 = vmatprep.subr.bf16.mxu0 0
  %4995 = vmatpush1.bf16.msra.mxu0 0
  %4996 = vmatprep.subr.bf16.mxu0 0
  %4997 = vmatpush1.bf16.msra.mxu0 0
  %4998 = vmatprep.subr.bf16.mxu0 0
  %4999 = vmatpush1.bf16.msra.mxu0 0
  %5000 = vmatprep.mubr.bf16.mxu0 0
  %5001 = vmatmul.mubr.bf16.gmra.mrb[0].mxu0 %v4966
  %v5002 = vpop.f32.mrb[0].mxu0
  %v5003 = vadd.f32 0.0, %v5002
  %v5004 = vpop.f32.mrb[0].mxu0
  %v5005 = vpop.f32.mrb[0].mxu0
  %v5006 = vpop.f32.mrb[0].mxu0
  %5007 = vdwg.mxu0
  %v5008 = vpack.i.b16 %v2384, %v2384
  %v5009 = vlaneseq
  %v5010 = vshrl.u32 %v5009, 7
  %v5011 = vsub.s32 0, %v5010
  %v5012 = vrot.slane %v5008, %v5011
  %v5014 = vsel %vm2660, %v5012, 0
  %5016 = vmatprep.subr.bf16.mxu0 0
  %5017 = vmatpush1.bf16.msra.mxu0 %v2595
  %5018 = vmatprep.subr.bf16.mxu0 0
  %5019 = vmatpush1.bf16.msra.mxu0 %v2596
  %5020 = vmatprep.subr.bf16.mxu0 0
  %5021 = vmatpush1.bf16.msra.mxu0 %v2597
  %5022 = vmatprep.subr.bf16.mxu0 0
  %5023 = vmatpush1.bf16.msra.mxu0 %v2598
  %5024 = vmatprep.subr.bf16.mxu0 0
  %5025 = vmatpush1.bf16.msra.mxu0 0
  %5026 = vmatprep.subr.bf16.mxu0 0
  %5027 = vmatpush1.bf16.msra.mxu0 0
  %5028 = vmatprep.subr.bf16.mxu0 0
  %5029 = vmatpush1.bf16.msra.mxu0 0
  %5030 = vmatprep.subr.bf16.mxu0 0
  %5031 = vmatpush1.bf16.msra.mxu0 0
  %5032 = vmatprep.subr.bf16.mxu0 0
  %5033 = vmatpush1.bf16.msra.mxu0 0
  %5034 = vmatprep.subr.bf16.mxu0 0
  %5035 = vmatpush1.bf16.msra.mxu0 0
  %5036 = vmatprep.subr.bf16.mxu0 0
  %5037 = vmatpush1.bf16.msra.mxu0 0
  %5038 = vmatprep.subr.bf16.mxu0 0
  %5039 = vmatpush1.bf16.msra.mxu0 0
  %5040 = vmatprep.subr.bf16.mxu0 0
  %5041 = vmatpush1.bf16.msra.mxu0 0
  %5042 = vmatprep.subr.bf16.mxu0 0
  %5043 = vmatpush1.bf16.msra.mxu0 0
  %5044 = vmatprep.subr.bf16.mxu0 0
  %5045 = vmatpush1.bf16.msra.mxu0 0
  %5046 = vmatprep.subr.bf16.mxu0 0
  %5047 = vmatpush1.bf16.msra.mxu0 0
  %5048 = vmatprep.mubr.bf16.mxu0 0
  %5049 = vmatmul.mubr.bf16.gmra.mrb[0].mxu0 %v5014
  %v5050 = vpop.f32.mrb[0].mxu0
  %v5051 = vadd.f32 0.0, %v5050
  %v5052 = vpop.f32.mrb[0].mxu0
  %v5053 = vpop.f32.mrb[0].mxu0
  %v5054 = vpop.f32.mrb[0].mxu0
  %5055 = vdwg.mxu0
  %v5056 = vpack.i.b16 %v2385, %v2385
  %v5057 = vlaneseq
  %v5058 = vshrl.u32 %v5057, 7
  %v5059 = vsub.s32 0, %v5058
  %v5060 = vrot.slane %v5056, %v5059
  %v5062 = vsel %vm2660, %v5060, 0
  %5064 = vmatprep.subr.bf16.mxu0 0
  %5065 = vmatpush1.bf16.msra.mxu0 %v2599
  %5066 = vmatprep.subr.bf16.mxu0 0
  %5067 = vmatpush1.bf16.msra.mxu0 %v2600
  %5068 = vmatprep.subr.bf16.mxu0 0
  %5069 = vmatpush1.bf16.msra.mxu0 %v2601
  %5070 = vmatprep.subr.bf16.mxu0 0
  %5071 = vmatpush1.bf16.msra.mxu0 %v2602
  %5072 = vmatprep.subr.bf16.mxu0 0
  %5073 = vmatpush1.bf16.msra.mxu0 0
  %5074 = vmatprep.subr.bf16.mxu0 0
  %5075 = vmatpush1.bf16.msra.mxu0 0
  %5076 = vmatprep.subr.bf16.mxu0 0
  %5077 = vmatpush1.bf16.msra.mxu0 0
  %5078 = vmatprep.subr.bf16.mxu0 0
  %5079 = vmatpush1.bf16.msra.mxu0 0
  %5080 = vmatprep.subr.bf16.mxu0 0
  %5081 = vmatpush1.bf16.msra.mxu0 0
  %5082 = vmatprep.subr.bf16.mxu0 0
  %5083 = vmatpush1.bf16.msra.mxu0 0
  %5084 = vmatprep.subr.bf16.mxu0 0
  %5085 = vmatpush1.bf16.msra.mxu0 0
  %5086 = vmatprep.subr.bf16.mxu0 0
  %5087 = vmatpush1.bf16.msra.mxu0 0
  %5088 = vmatprep.subr.bf16.mxu0 0
  %5089 = vmatpush1.bf16.msra.mxu0 0
  %5090 = vmatprep.subr.bf16.mxu0 0
  %5091 = vmatpush1.bf16.msra.mxu0 0
  %5092 = vmatprep.subr.bf16.mxu0 0
  %5093 = vmatpush1.bf16.msra.mxu0 0
  %5094 = vmatprep.subr.bf16.mxu0 0
  %5095 = vmatpush1.bf16.msra.mxu0 0
  %5096 = vmatprep.mubr.bf16.mxu0 0
  %5097 = vmatmul.mubr.bf16.gmra.mrb[0].mxu0 %v5062
  %v5098 = vpop.f32.mrb[0].mxu0
  %v5099 = vadd.f32 0.0, %v5098
  %v5100 = vpop.f32.mrb[0].mxu0
  %v5101 = vpop.f32.mrb[0].mxu0
  %v5102 = vpop.f32.mrb[0].mxu0
  %5103 = vdwg.mxu0
  %v5104 = vpack.i.b16 %v2386, %v2386
  %v5105 = vlaneseq
  %v5106 = vshrl.u32 %v5105, 7
  %v5107 = vsub.s32 0, %v5106
  %v5108 = vrot.slane %v5104, %v5107
  %v5110 = vsel %vm2660, %v5108, 0
  %5112 = vmatprep.subr.bf16.mxu0 0
  %5113 = vmatpush1.bf16.msra.mxu0 %v2603
  %5114 = vmatprep.subr.bf16.mxu0 0
  %5115 = vmatpush1.bf16.msra.mxu0 %v2604
  %5116 = vmatprep.subr.bf16.mxu0 0
  %5117 = vmatpush1.bf16.msra.mxu0 %v2605
  %5118 = vmatprep.subr.bf16.mxu0 0
  %5119 = vmatpush1.bf16.msra.mxu0 %v2606
  %5120 = vmatprep.subr.bf16.mxu0 0
  %5121 = vmatpush1.bf16.msra.mxu0 0
  %5122 = vmatprep.subr.bf16.mxu0 0
  %5123 = vmatpush1.bf16.msra.mxu0 0
  %5124 = vmatprep.subr.bf16.mxu0 0
  %5125 = vmatpush1.bf16.msra.mxu0 0
  %5126 = vmatprep.subr.bf16.mxu0 0
  %5127 = vmatpush1.bf16.msra.mxu0 0
  %5128 = vmatprep.subr.bf16.mxu0 0
  %5129 = vmatpush1.bf16.msra.mxu0 0
  %5130 = vmatprep.subr.bf16.mxu0 0
  %5131 = vmatpush1.bf16.msra.mxu0 0
  %5132 = vmatprep.subr.bf16.mxu0 0
  %5133 = vmatpush1.bf16.msra.mxu0 0
  %5134 = vmatprep.subr.bf16.mxu0 0
  %5135 = vmatpush1.bf16.msra.mxu0 0
  %5136 = vmatprep.subr.bf16.mxu0 0
  %5137 = vmatpush1.bf16.msra.mxu0 0
  %5138 = vmatprep.subr.bf16.mxu0 0
  %5139 = vmatpush1.bf16.msra.mxu0 0
  %5140 = vmatprep.subr.bf16.mxu0 0
  %5141 = vmatpush1.bf16.msra.mxu0 0
  %5142 = vmatprep.subr.bf16.mxu0 0
  %5143 = vmatpush1.bf16.msra.mxu0 0
  %5144 = vmatprep.mubr.bf16.mxu0 0
  %5145 = vmatmul.mubr.bf16.gmra.mrb[0].mxu0 %v5110
  %v5146 = vpop.f32.mrb[0].mxu0
  %v5147 = vadd.f32 0.0, %v5146
  %v5148 = vpop.f32.mrb[0].mxu0
  %v5149 = vpop.f32.mrb[0].mxu0
  %v5150 = vpop.f32.mrb[0].mxu0
  %5151 = vdwg.mxu0
  %v5152 = vpack.i.b16 %v2387, %v2387
  %v5153 = vlaneseq
  %v5154 = vshrl.u32 %v5153, 7
  %v5155 = vsub.s32 0, %v5154
  %v5156 = vrot.slane %v5152, %v5155
  %v5158 = vsel %vm2660, %v5156, 0
  %5160 = vmatprep.subr.bf16.mxu0 0
  %5161 = vmatpush1.bf16.msra.mxu0 %v2607
  %5162 = vmatprep.subr.bf16.mxu0 0
  %5163 = vmatpush1.bf16.msra.mxu0 %v2608
  %5164 = vmatprep.subr.bf16.mxu0 0
  %5165 = vmatpush1.bf16.msra.mxu0 %v2609
  %5166 = vmatprep.subr.bf16.mxu0 0
  %5167 = vmatpush1.bf16.msra.mxu0 %v2610
  %5168 = vmatprep.subr.bf16.mxu0 0
  %5169 = vmatpush1.bf16.msra.mxu0 0
  %5170 = vmatprep.subr.bf16.mxu0 0
  %5171 = vmatpush1.bf16.msra.mxu0 0
  %5172 = vmatprep.subr.bf16.mxu0 0
  %5173 = vmatpush1.bf16.msra.mxu0 0
  %5174 = vmatprep.subr.bf16.mxu0 0
  %5175 = vmatpush1.bf16.msra.mxu0 0
  %5176 = vmatprep.subr.bf16.mxu0 0
  %5177 = vmatpush1.bf16.msra.mxu0 0
  %5178 = vmatprep.subr.bf16.mxu0 0
  %5179 = vmatpush1.bf16.msra.mxu0 0
  %5180 = vmatprep.subr.bf16.mxu0 0
  %5181 = vmatpush1.bf16.msra.mxu0 0
  %5182 = vmatprep.subr.bf16.mxu0 0
  %5183 = vmatpush1.bf16.msra.mxu0 0
  %5184 = vmatprep.subr.bf16.mxu0 0
  %5185 = vmatpush1.bf16.msra.mxu0 0
  %5186 = vmatprep.subr.bf16.mxu0 0
  %5187 = vmatpush1.bf16.msra.mxu0 0
  %5188 = vmatprep.subr.bf16.mxu0 0
  %5189 = vmatpush1.bf16.msra.mxu0 0
  %5190 = vmatprep.subr.bf16.mxu0 0
  %5191 = vmatpush1.bf16.msra.mxu0 0
  %5192 = vmatprep.mubr.bf16.mxu0 0
  %5193 = vmatmul.mubr.bf16.gmra.mrb[0].mxu0 %v5158
  %v5194 = vpop.f32.mrb[0].mxu0
  %v5195 = vadd.f32 0.0, %v5194
  %v5196 = vpop.f32.mrb[0].mxu0
  %v5197 = vpop.f32.mrb[0].mxu0
  %v5198 = vpop.f32.mrb[0].mxu0
  %5199 = vdwg.mxu0
  %v5200 = vpack.i.b16 %v2388, %v2388
  %v5201 = vlaneseq
  %v5202 = vshrl.u32 %v5201, 7
  %v5203 = vsub.s32 0, %v5202
  %v5204 = vrot.slane %v5200, %v5203
  %v5206 = vsel %vm2660, %v5204, 0
  %5208 = vmatprep.subr.bf16.mxu0 0
  %5209 = vmatpush1.bf16.msra.mxu0 %v2611
  %5210 = vmatprep.subr.bf16.mxu0 0
  %5211 = vmatpush1.bf16.msra.mxu0 %v2612
  %5212 = vmatprep.subr.bf16.mxu0 0
  %5213 = vmatpush1.bf16.msra.mxu0 %v2613
  %5214 = vmatprep.subr.bf16.mxu0 0
  %5215 = vmatpush1.bf16.msra.mxu0 %v2614
  %5216 = vmatprep.subr.bf16.mxu0 0
  %5217 = vmatpush1.bf16.msra.mxu0 0
  %5218 = vmatprep.subr.bf16.mxu0 0
  %5219 = vmatpush1.bf16.msra.mxu0 0
  %5220 = vmatprep.subr.bf16.mxu0 0
  %5221 = vmatpush1.bf16.msra.mxu0 0
  %5222 = vmatprep.subr.bf16.mxu0 0
  %5223 = vmatpush1.bf16.msra.mxu0 0
  %5224 = vmatprep.subr.bf16.mxu0 0
  %5225 = vmatpush1.bf16.msra.mxu0 0
  %5226 = vmatprep.subr.bf16.mxu0 0
  %5227 = vmatpush1.bf16.msra.mxu0 0
  %5228 = vmatprep.subr.bf16.mxu0 0
  %5229 = vmatpush1.bf16.msra.mxu0 0
  %5230 = vmatprep.subr.bf16.mxu0 0
  %5231 = vmatpush1.bf16.msra.mxu0 0
  %5232 = vmatprep.subr.bf16.mxu0 0
  %5233 = vmatpush1.bf16.msra.mxu0 0
  %5234 = vmatprep.subr.bf16.mxu0 0
  %5235 = vmatpush1.bf16.msra.mxu0 0
  %5236 = vmatprep.subr.bf16.mxu0 0
  %5237 = vmatpush1.bf16.msra.mxu0 0
  %5238 = vmatprep.subr.bf16.mxu0 0
  %5239 = vmatpush1.bf16.msra.mxu0 0
  %5240 = vmatprep.mubr.bf16.mxu0 0
  %5241 = vmatmul.mubr.bf16.gmra.mrb[0].mxu0 %v5206
  %v5242 = vpop.f32.mrb[0].mxu0
  %v5243 = vadd.f32 0.0, %v5242
  %v5244 = vpop.f32.mrb[0].mxu0
  %v5245 = vpop.f32.mrb[0].mxu0
  %v5246 = vpop.f32.mrb[0].mxu0
  %5247 = vdwg.mxu0
  %v5248 = vpack.i.b16 %v2389, %v2389
  %v5249 = vlaneseq
  %v5250 = vshrl.u32 %v5249, 7
  %v5251 = vsub.s32 0, %v5250
  %v5252 = vrot.slane %v5248, %v5251
  %v5254 = vsel %vm2660, %v5252, 0
  %5256 = vmatprep.subr.bf16.mxu0 0
  %5257 = vmatpush1.bf16.msra.mxu0 %v2615
  %5258 = vmatprep.subr.bf16.mxu0 0
  %5259 = vmatpush1.bf16.msra.mxu0 %v2616
  %5260 = vmatprep.subr.bf16.mxu0 0
  %5261 = vmatpush1.bf16.msra.mxu0 %v2617
  %5262 = vmatprep.subr.bf16.mxu0 0
  %5263 = vmatpush1.bf16.msra.mxu0 %v2618
  %5264 = vmatprep.subr.bf16.mxu0 0
  %5265 = vmatpush1.bf16.msra.mxu0 0
  %5266 = vmatprep.subr.bf16.mxu0 0
  %5267 = vmatpush1.bf16.msra.mxu0 0
  %5268 = vmatprep.subr.bf16.mxu0 0
  %5269 = vmatpush1.bf16.msra.mxu0 0
  %5270 = vmatprep.subr.bf16.mxu0 0
  %5271 = vmatpush1.bf16.msra.mxu0 0
  %5272 = vmatprep.subr.bf16.mxu0 0
  %5273 = vmatpush1.bf16.msra.mxu0 0
  %5274 = vmatprep.subr.bf16.mxu0 0
  %5275 = vmatpush1.bf16.msra.mxu0 0
  %5276 = vmatprep.subr.bf16.mxu0 0
  %5277 = vmatpush1.bf16.msra.mxu0 0
  %5278 = vmatprep.subr.bf16.mxu0 0
  %5279 = vmatpush1.bf16.msra.mxu0 0
  %5280 = vmatprep.subr.bf16.mxu0 0
  %5281 = vmatpush1.bf16.msra.mxu0 0
  %5282 = vmatprep.subr.bf16.mxu0 0
  %5283 = vmatpush1.bf16.msra.mxu0 0
  %5284 = vmatprep.subr.bf16.mxu0 0
  %5285 = vmatpush1.bf16.msra.mxu0 0
  %5286 = vmatprep.subr.bf16.mxu0 0
  %5287 = vmatpush1.bf16.msra.mxu0 0
  %5288 = vmatprep.mubr.bf16.mxu0 0
  %5289 = vmatmul.mubr.bf16.gmra.mrb[0].mxu0 %v5254
  %v5290 = vpop.f32.mrb[0].mxu0
  %v5291 = vadd.f32 0.0, %v5290
  %v5292 = vpop.f32.mrb[0].mxu0
  %v5293 = vpop.f32.mrb[0].mxu0
  %v5294 = vpop.f32.mrb[0].mxu0
  %5295 = vdwg.mxu0
  %v5296 = vpack.i.b16 %v2390, %v2390
  %v5297 = vlaneseq
  %v5298 = vshrl.u32 %v5297, 7
  %v5299 = vsub.s32 0, %v5298
  %v5300 = vrot.slane %v5296, %v5299
  %v5302 = vsel %vm2660, %v5300, 0
  %5304 = vmatprep.subr.bf16.mxu0 0
  %5305 = vmatpush1.bf16.msra.mxu0 %v2619
  %5306 = vmatprep.subr.bf16.mxu0 0
  %5307 = vmatpush1.bf16.msra.mxu0 %v2620
  %5308 = vmatprep.subr.bf16.mxu0 0
  %5309 = vmatpush1.bf16.msra.mxu0 %v2621
  %5310 = vmatprep.subr.bf16.mxu0 0
  %5311 = vmatpush1.bf16.msra.mxu0 %v2622
  %5312 = vmatprep.subr.bf16.mxu0 0
  %5313 = vmatpush1.bf16.msra.mxu0 0
  %5314 = vmatprep.subr.bf16.mxu0 0
  %5315 = vmatpush1.bf16.msra.mxu0 0
  %5316 = vmatprep.subr.bf16.mxu0 0
  %5317 = vmatpush1.bf16.msra.mxu0 0
  %5318 = vmatprep.subr.bf16.mxu0 0
  %5319 = vmatpush1.bf16.msra.mxu0 0
  %5320 = vmatprep.subr.bf16.mxu0 0
  %5321 = vmatpush1.bf16.msra.mxu0 0
  %5322 = vmatprep.subr.bf16.mxu0 0
  %5323 = vmatpush1.bf16.msra.mxu0 0
  %5324 = vmatprep.subr.bf16.mxu0 0
  %5325 = vmatpush1.bf16.msra.mxu0 0
  %5326 = vmatprep.subr.bf16.mxu0 0
  %5327 = vmatpush1.bf16.msra.mxu0 0
  %5328 = vmatprep.subr.bf16.mxu0 0
  %5329 = vmatpush1.bf16.msra.mxu0 0
  %5330 = vmatprep.subr.bf16.mxu0 0
  %5331 = vmatpush1.bf16.msra.mxu0 0
  %5332 = vmatprep.subr.bf16.mxu0 0
  %5333 = vmatpush1.bf16.msra.mxu0 0
  %5334 = vmatprep.subr.bf16.mxu0 0
  %5335 = vmatpush1.bf16.msra.mxu0 0
  %5336 = vmatprep.mubr.bf16.mxu0 0
  %5337 = vmatmul.mubr.bf16.gmra.mrb[0].mxu0 %v5302
  %v5338 = vpop.f32.mrb[0].mxu0
  %v5339 = vadd.f32 0.0, %v5338
  %v5340 = vpop.f32.mrb[0].mxu0
  %v5341 = vpop.f32.mrb[0].mxu0
  %v5342 = vpop.f32.mrb[0].mxu0
  %5343 = vdwg.mxu0
  %v5344 = vpack.i.b16 %v2391, %v2391
  %v5345 = vlaneseq
  %v5346 = vshrl.u32 %v5345, 7
  %v5347 = vsub.s32 0, %v5346
  %v5348 = vrot.slane %v5344, %v5347
  %v5350 = vsel %vm2660, %v5348, 0
  %5352 = vmatprep.subr.bf16.mxu0 0
  %5353 = vmatpush1.bf16.msra.mxu0 %v2623
  %5354 = vmatprep.subr.bf16.mxu0 0
  %5355 = vmatpush1.bf16.msra.mxu0 %v2624
  %5356 = vmatprep.subr.bf16.mxu0 0
  %5357 = vmatpush1.bf16.msra.mxu0 %v2625
  %5358 = vmatprep.subr.bf16.mxu0 0
  %5359 = vmatpush1.bf16.msra.mxu0 %v2626
  %5360 = vmatprep.subr.bf16.mxu0 0
  %5361 = vmatpush1.bf16.msra.mxu0 0
  %5362 = vmatprep.subr.bf16.mxu0 0
  %5363 = vmatpush1.bf16.msra.mxu0 0
  %5364 = vmatprep.subr.bf16.mxu0 0
  %5365 = vmatpush1.bf16.msra.mxu0 0
  %5366 = vmatprep.subr.bf16.mxu0 0
  %5367 = vmatpush1.bf16.msra.mxu0 0
  %5368 = vmatprep.subr.bf16.mxu0 0
  %5369 = vmatpush1.bf16.msra.mxu0 0
  %5370 = vmatprep.subr.bf16.mxu0 0
  %5371 = vmatpush1.bf16.msra.mxu0 0
  %5372 = vmatprep.subr.bf16.mxu0 0
  %5373 = vmatpush1.bf16.msra.mxu0 0
  %5374 = vmatprep.subr.bf16.mxu0 0
  %5375 = vmatpush1.bf16.msra.mxu0 0
  %5376 = vmatprep.subr.bf16.mxu0 0
  %5377 = vmatpush1.bf16.msra.mxu0 0
  %5378 = vmatprep.subr.bf16.mxu0 0
  %5379 = vmatpush1.bf16.msra.mxu0 0
  %5380 = vmatprep.subr.bf16.mxu0 0
  %5381 = vmatpush1.bf16.msra.mxu0 0
  %5382 = vmatprep.subr.bf16.mxu0 0
  %5383 = vmatpush1.bf16.msra.mxu0 0
  %5384 = vmatprep.mubr.bf16.mxu0 0
  %5385 = vmatmul.mubr.bf16.gmra.mrb[0].mxu0 %v5350
  %v5386 = vpop.f32.mrb[0].mxu0
  %v5387 = vadd.f32 0.0, %v5386
  %v5388 = vpop.f32.mrb[0].mxu0
  %v5389 = vpop.f32.mrb[0].mxu0
  %v5390 = vpop.f32.mrb[0].mxu0
  %5391 = vdwg.mxu0
  %v5392 = vpack.i.b16 %v2392, %v2392
  %v5393 = vlaneseq
  %v5394 = vshrl.u32 %v5393, 7
  %v5395 = vsub.s32 0, %v5394
  %v5396 = vrot.slane %v5392, %v5395
  %v5398 = vsel %vm2660, %v5396, 0
  %5400 = vmatprep.subr.bf16.mxu0 0
  %5401 = vmatpush1.bf16.msra.mxu0 %v2627
  %5402 = vmatprep.subr.bf16.mxu0 0
  %5403 = vmatpush1.bf16.msra.mxu0 %v2628
  %5404 = vmatprep.subr.bf16.mxu0 0
  %5405 = vmatpush1.bf16.msra.mxu0 %v2629
  %5406 = vmatprep.subr.bf16.mxu0 0
  %5407 = vmatpush1.bf16.msra.mxu0 %v2630
  %5408 = vmatprep.subr.bf16.mxu0 0
  %5409 = vmatpush1.bf16.msra.mxu0 0
  %5410 = vmatprep.subr.bf16.mxu0 0
  %5411 = vmatpush1.bf16.msra.mxu0 0
  %5412 = vmatprep.subr.bf16.mxu0 0
  %5413 = vmatpush1.bf16.msra.mxu0 0
  %5414 = vmatprep.subr.bf16.mxu0 0
  %5415 = vmatpush1.bf16.msra.mxu0 0
  %5416 = vmatprep.subr.bf16.mxu0 0
  %5417 = vmatpush1.bf16.msra.mxu0 0
  %5418 = vmatprep.subr.bf16.mxu0 0
  %5419 = vmatpush1.bf16.msra.mxu0 0
  %5420 = vmatprep.subr.bf16.mxu0 0
  %5421 = vmatpush1.bf16.msra.mxu0 0
  %5422 = vmatprep.subr.bf16.mxu0 0
  %5423 = vmatpush1.bf16.msra.mxu0 0
  %5424 = vmatprep.subr.bf16.mxu0 0
  %5425 = vmatpush1.bf16.msra.mxu0 0
  %5426 = vmatprep.subr.bf16.mxu0 0
  %5427 = vmatpush1.bf16.msra.mxu0 0
  %5428 = vmatprep.subr.bf16.mxu0 0
  %5429 = vmatpush1.bf16.msra.mxu0 0
  %5430 = vmatprep.subr.bf16.mxu0 0
  %5431 = vmatpush1.bf16.msra.mxu0 0
  %5432 = vmatprep.mubr.bf16.mxu0 0
  %5433 = vmatmul.mubr.bf16.gmra.mrb[0].mxu0 %v5398
  %v5434 = vpop.f32.mrb[0].mxu0
  %v5435 = vadd.f32 0.0, %v5434
  %v5436 = vpop.f32.mrb[0].mxu0
  %v5437 = vpop.f32.mrb[0].mxu0
  %v5438 = vpop.f32.mrb[0].mxu0
  %5439 = vdwg.mxu0
  %v5440 = vpack.i.b16 %v2393, %v2393
  %v5441 = vlaneseq
  %v5442 = vshrl.u32 %v5441, 7
  %v5443 = vsub.s32 0, %v5442
  %v5444 = vrot.slane %v5440, %v5443
  %v5446 = vsel %vm2660, %v5444, 0
  %5448 = vmatprep.subr.bf16.mxu0 0
  %5449 = vmatpush1.bf16.msra.mxu0 %v2631
  %5450 = vmatprep.subr.bf16.mxu0 0
  %5451 = vmatpush1.bf16.msra.mxu0 %v2632
  %5452 = vmatprep.subr.bf16.mxu0 0
  %5453 = vmatpush1.bf16.msra.mxu0 %v2633
  %5454 = vmatprep.subr.bf16.mxu0 0
  %5455 = vmatpush1.bf16.msra.mxu0 %v2634
  %5456 = vmatprep.subr.bf16.mxu0 0
  %5457 = vmatpush1.bf16.msra.mxu0 0
  %5458 = vmatprep.subr.bf16.mxu0 0
  %5459 = vmatpush1.bf16.msra.mxu0 0
  %5460 = vmatprep.subr.bf16.mxu0 0
  %5461 = vmatpush1.bf16.msra.mxu0 0
  %5462 = vmatprep.subr.bf16.mxu0 0
  %5463 = vmatpush1.bf16.msra.mxu0 0
  %5464 = vmatprep.subr.bf16.mxu0 0
  %5465 = vmatpush1.bf16.msra.mxu0 0
  %5466 = vmatprep.subr.bf16.mxu0 0
  %5467 = vmatpush1.bf16.msra.mxu0 0
  %5468 = vmatprep.subr.bf16.mxu0 0
  %5469 = vmatpush1.bf16.msra.mxu0 0
  %5470 = vmatprep.subr.bf16.mxu0 0
  %5471 = vmatpush1.bf16.msra.mxu0 0
  %5472 = vmatprep.subr.bf16.mxu0 0
  %5473 = vmatpush1.bf16.msra.mxu0 0
  %5474 = vmatprep.subr.bf16.mxu0 0
  %5475 = vmatpush1.bf16.msra.mxu0 0
  %5476 = vmatprep.subr.bf16.mxu0 0
  %5477 = vmatpush1.bf16.msra.mxu0 0
  %5478 = vmatprep.subr.bf16.mxu0 0
  %5479 = vmatpush1.bf16.msra.mxu0 0
  %5480 = vmatprep.mubr.bf16.mxu0 0
  %5481 = vmatmul.mubr.bf16.gmra.mrb[0].mxu0 %v5446
  %v5482 = vpop.f32.mrb[0].mxu0
  %v5483 = vadd.f32 0.0, %v5482
  %v5484 = vpop.f32.mrb[0].mxu0
  %v5485 = vpop.f32.mrb[0].mxu0
  %v5486 = vpop.f32.mrb[0].mxu0
  %5487 = vdwg.mxu0
  %v5488 = vpack.i.b16 %v2394, %v2394
  %v5489 = vlaneseq
  %v5490 = vshrl.u32 %v5489, 7
  %v5491 = vsub.s32 0, %v5490
  %v5492 = vrot.slane %v5488, %v5491
  %v5494 = vsel %vm2660, %v5492, 0
  %5496 = vmatprep.subr.bf16.mxu0 0
  %5497 = vmatpush1.bf16.msra.mxu0 %v2635
  %5498 = vmatprep.subr.bf16.mxu0 0
  %5499 = vmatpush1.bf16.msra.mxu0 %v2636
  %5500 = vmatprep.subr.bf16.mxu0 0
  %5501 = vmatpush1.bf16.msra.mxu0 %v2637
  %5502 = vmatprep.subr.bf16.mxu0 0
  %5503 = vmatpush1.bf16.msra.mxu0 %v2638
  %5504 = vmatprep.subr.bf16.mxu0 0
  %5505 = vmatpush1.bf16.msra.mxu0 0
  %5506 = vmatprep.subr.bf16.mxu0 0
  %5507 = vmatpush1.bf16.msra.mxu0 0
  %5508 = vmatprep.subr.bf16.mxu0 0
  %5509 = vmatpush1.bf16.msra.mxu0 0
  %5510 = vmatprep.subr.bf16.mxu0 0
  %5511 = vmatpush1.bf16.msra.mxu0 0
  %5512 = vmatprep.subr.bf16.mxu0 0
  %5513 = vmatpush1.bf16.msra.mxu0 0
  %5514 = vmatprep.subr.bf16.mxu0 0
  %5515 = vmatpush1.bf16.msra.mxu0 0
  %5516 = vmatprep.subr.bf16.mxu0 0
  %5517 = vmatpush1.bf16.msra.mxu0 0
  %5518 = vmatprep.subr.bf16.mxu0 0
  %5519 = vmatpush1.bf16.msra.mxu0 0
  %5520 = vmatprep.subr.bf16.mxu0 0
  %5521 = vmatpush1.bf16.msra.mxu0 0
  %5522 = vmatprep.subr.bf16.mxu0 0
  %5523 = vmatpush1.bf16.msra.mxu0 0
  %5524 = vmatprep.subr.bf16.mxu0 0
  %5525 = vmatpush1.bf16.msra.mxu0 0
  %5526 = vmatprep.subr.bf16.mxu0 0
  %5527 = vmatpush1.bf16.msra.mxu0 0
  %5528 = vmatprep.mubr.bf16.mxu0 0
  %5529 = vmatmul.mubr.bf16.gmra.mrb[0].mxu0 %v5494
  %v5530 = vpop.f32.mrb[0].mxu0
  %v5531 = vadd.f32 0.0, %v5530
  %v5532 = vpop.f32.mrb[0].mxu0
  %v5533 = vpop.f32.mrb[0].mxu0
  %v5534 = vpop.f32.mrb[0].mxu0
  %5535 = vdwg.mxu0
  %v5536 = vpack.i.b16 %v2395, %v2395
  %v5537 = vlaneseq
  %v5538 = vshrl.u32 %v5537, 7
  %v5539 = vsub.s32 0, %v5538
  %v5540 = vrot.slane %v5536, %v5539
  %v5542 = vsel %vm2660, %v5540, 0
  %5544 = vmatprep.subr.bf16.mxu0 0
  %5545 = vmatpush1.bf16.msra.mxu0 %v2639
  %5546 = vmatprep.subr.bf16.mxu0 0
  %5547 = vmatpush1.bf16.msra.mxu0 %v2640
  %5548 = vmatprep.subr.bf16.mxu0 0
  %5549 = vmatpush1.bf16.msra.mxu0 %v2641
  %5550 = vmatprep.subr.bf16.mxu0 0
  %5551 = vmatpush1.bf16.msra.mxu0 %v2642
  %5552 = vmatprep.subr.bf16.mxu0 0
  %5553 = vmatpush1.bf16.msra.mxu0 0
  %5554 = vmatprep.subr.bf16.mxu0 0
  %5555 = vmatpush1.bf16.msra.mxu0 0
  %5556 = vmatprep.subr.bf16.mxu0 0
  %5557 = vmatpush1.bf16.msra.mxu0 0
  %5558 = vmatprep.subr.bf16.mxu0 0
  %5559 = vmatpush1.bf16.msra.mxu0 0
  %5560 = vmatprep.subr.bf16.mxu0 0
  %5561 = vmatpush1.bf16.msra.mxu0 0
  %5562 = vmatprep.subr.bf16.mxu0 0
  %5563 = vmatpush1.bf16.msra.mxu0 0
  %5564 = vmatprep.subr.bf16.mxu0 0
  %5565 = vmatpush1.bf16.msra.mxu0 0
  %5566 = vmatprep.subr.bf16.mxu0 0
  %5567 = vmatpush1.bf16.msra.mxu0 0
  %5568 = vmatprep.subr.bf16.mxu0 0
  %5569 = vmatpush1.bf16.msra.mxu0 0
  %5570 = vmatprep.subr.bf16.mxu0 0
  %5571 = vmatpush1.bf16.msra.mxu0 0
  %5572 = vmatprep.subr.bf16.mxu0 0
  %5573 = vmatpush1.bf16.msra.mxu0 0
  %5574 = vmatprep.subr.bf16.mxu0 0
  %5575 = vmatpush1.bf16.msra.mxu0 0
  %5576 = vmatprep.mubr.bf16.mxu0 0
  %5577 = vmatmul.mubr.bf16.gmra.mrb[0].mxu0 %v5542
  %v5578 = vpop.f32.mrb[0].mxu0
  %v5579 = vadd.f32 0.0, %v5578
  %v5580 = vpop.f32.mrb[0].mxu0
  %v5581 = vpop.f32.mrb[0].mxu0
  %v5582 = vpop.f32.mrb[0].mxu0
  %5583 = vdwg.mxu0
  %v5584 = vpack.i.b16 %v2396, %v2396
  %v5585 = vlaneseq
  %v5586 = vshrl.u32 %v5585, 7
  %v5587 = vsub.s32 0, %v5586
  %v5588 = vrot.slane %v5584, %v5587
  %v5590 = vsel %vm2660, %v5588, 0
  %5592 = vmatprep.subr.bf16.mxu0 0
  %5593 = vmatpush1.bf16.msra.mxu0 %v2643
  %5594 = vmatprep.subr.bf16.mxu0 0
  %5595 = vmatpush1.bf16.msra.mxu0 %v2644
  %5596 = vmatprep.subr.bf16.mxu0 0
  %5597 = vmatpush1.bf16.msra.mxu0 %v2645
  %5598 = vmatprep.subr.bf16.mxu0 0
  %5599 = vmatpush1.bf16.msra.mxu0 %v2646
  %5600 = vmatprep.subr.bf16.mxu0 0
  %5601 = vmatpush1.bf16.msra.mxu0 0
  %5602 = vmatprep.subr.bf16.mxu0 0
  %5603 = vmatpush1.bf16.msra.mxu0 0
  %5604 = vmatprep.subr.bf16.mxu0 0
  %5605 = vmatpush1.bf16.msra.mxu0 0
  %5606 = vmatprep.subr.bf16.mxu0 0
  %5607 = vmatpush1.bf16.msra.mxu0 0
  %5608 = vmatprep.subr.bf16.mxu0 0
  %5609 = vmatpush1.bf16.msra.mxu0 0
  %5610 = vmatprep.subr.bf16.mxu0 0
  %5611 = vmatpush1.bf16.msra.mxu0 0
  %5612 = vmatprep.subr.bf16.mxu0 0
  %5613 = vmatpush1.bf16.msra.mxu0 0
  %5614 = vmatprep.subr.bf16.mxu0 0
  %5615 = vmatpush1.bf16.msra.mxu0 0
  %5616 = vmatprep.subr.bf16.mxu0 0
  %5617 = vmatpush1.bf16.msra.mxu0 0
  %5618 = vmatprep.subr.bf16.mxu0 0
  %5619 = vmatpush1.bf16.msra.mxu0 0
  %5620 = vmatprep.subr.bf16.mxu0 0
  %5621 = vmatpush1.bf16.msra.mxu0 0
  %5622 = vmatprep.subr.bf16.mxu0 0
  %5623 = vmatpush1.bf16.msra.mxu0 0
  %5624 = vmatprep.mubr.bf16.mxu0 0
  %5625 = vmatmul.mubr.bf16.gmra.mrb[0].mxu0 %v5590
  %v5626 = vpop.f32.mrb[0].mxu0
  %v5627 = vadd.f32 0.0, %v5626
  %v5628 = vpop.f32.mrb[0].mxu0
  %v5629 = vpop.f32.mrb[0].mxu0
  %v5630 = vpop.f32.mrb[0].mxu0
  %5631 = vdwg.mxu0
  %v5632 = vpack.i.b16 %v2397, %v2397
  %v5633 = vlaneseq
  %v5634 = vshrl.u32 %v5633, 7
  %v5635 = vsub.s32 0, %v5634
  %v5636 = vrot.slane %v5632, %v5635
  %v5638 = vsel %vm2660, %v5636, 0
  %5640 = vmatprep.subr.bf16.mxu0 0
  %5641 = vmatpush1.bf16.msra.mxu0 %v2647
  %5642 = vmatprep.subr.bf16.mxu0 0
  %5643 = vmatpush1.bf16.msra.mxu0 %v2648
  %5644 = vmatprep.subr.bf16.mxu0 0
  %5645 = vmatpush1.bf16.msra.mxu0 %v2649
  %5646 = vmatprep.subr.bf16.mxu0 0
  %5647 = vmatpush1.bf16.msra.mxu0 %v2650
  %5648 = vmatprep.subr.bf16.mxu0 0
  %5649 = vmatpush1.bf16.msra.mxu0 0
  %5650 = vmatprep.subr.bf16.mxu0 0
  %5651 = vmatpush1.bf16.msra.mxu0 0
  %5652 = vmatprep.subr.bf16.mxu0 0
  %5653 = vmatpush1.bf16.msra.mxu0 0
  %5654 = vmatprep.subr.bf16.mxu0 0
  %5655 = vmatpush1.bf16.msra.mxu0 0
  %5656 = vmatprep.subr.bf16.mxu0 0
  %5657 = vmatpush1.bf16.msra.mxu0 0
  %5658 = vmatprep.subr.bf16.mxu0 0
  %5659 = vmatpush1.bf16.msra.mxu0 0
  %5660 = vmatprep.subr.bf16.mxu0 0
  %5661 = vmatpush1.bf16.msra.mxu0 0
  %5662 = vmatprep.subr.bf16.mxu0 0
  %5663 = vmatpush1.bf16.msra.mxu0 0
  %5664 = vmatprep.subr.bf16.mxu0 0
  %5665 = vmatpush1.bf16.msra.mxu0 0
  %5666 = vmatprep.subr.bf16.mxu0 0
  %5667 = vmatpush1.bf16.msra.mxu0 0
  %5668 = vmatprep.subr.bf16.mxu0 0
  %5669 = vmatpush1.bf16.msra.mxu0 0
  %5670 = vmatprep.subr.bf16.mxu0 0
  %5671 = vmatpush1.bf16.msra.mxu0 0
  %5672 = vmatprep.mubr.bf16.mxu0 0
  %5673 = vmatmul.mubr.bf16.gmra.mrb[0].mxu0 %v5638
  %v5674 = vpop.f32.mrb[0].mxu0
  %v5675 = vadd.f32 0.0, %v5674
  %v5676 = vpop.f32.mrb[0].mxu0
  %v5677 = vpop.f32.mrb[0].mxu0
  %v5678 = vpop.f32.mrb[0].mxu0
  %5679 = vdwg.mxu0
  %v5680 = vpack.i.b16 %v2398, %v2398
  %v5681 = vlaneseq
  %v5682 = vshrl.u32 %v5681, 7
  %v5683 = vsub.s32 0, %v5682
  %v5684 = vrot.slane %v5680, %v5683
  %v5686 = vsel %vm2660, %v5684, 0
  %5688 = vmatprep.subr.bf16.mxu0 0
  %5689 = vmatpush1.bf16.msra.mxu0 %v2651
  %5690 = vmatprep.subr.bf16.mxu0 0
  %5691 = vmatpush1.bf16.msra.mxu0 %v2652
  %5692 = vmatprep.subr.bf16.mxu0 0
  %5693 = vmatpush1.bf16.msra.mxu0 %v2653
  %5694 = vmatprep.subr.bf16.mxu0 0
  %5695 = vmatpush1.bf16.msra.mxu0 %v2654
  %5696 = vmatprep.subr.bf16.mxu0 0
  %5697 = vmatpush1.bf16.msra.mxu0 0
  %5698 = vmatprep.subr.bf16.mxu0 0
  %5699 = vmatpush1.bf16.msra.mxu0 0
  %5700 = vmatprep.subr.bf16.mxu0 0
  %5701 = vmatpush1.bf16.msra.mxu0 0
  %5702 = vmatprep.subr.bf16.mxu0 0
  %5703 = vmatpush1.bf16.msra.mxu0 0
  %5704 = vmatprep.subr.bf16.mxu0 0
  %5705 = vmatpush1.bf16.msra.mxu0 0
  %5706 = vmatprep.subr.bf16.mxu0 0
  %5707 = vmatpush1.bf16.msra.mxu0 0
  %5708 = vmatprep.subr.bf16.mxu0 0
  %5709 = vmatpush1.bf16.msra.mxu0 0
  %5710 = vmatprep.subr.bf16.mxu0 0
  %5711 = vmatpush1.bf16.msra.mxu0 0
  %5712 = vmatprep.subr.bf16.mxu0 0
  %5713 = vmatpush1.bf16.msra.mxu0 0
  %5714 = vmatprep.subr.bf16.mxu0 0
  %5715 = vmatpush1.bf16.msra.mxu0 0
  %5716 = vmatprep.subr.bf16.mxu0 0
  %5717 = vmatpush1.bf16.msra.mxu0 0
  %5718 = vmatprep.subr.bf16.mxu0 0
  %5719 = vmatpush1.bf16.msra.mxu0 0
  %5720 = vmatprep.mubr.bf16.mxu0 0
  %5721 = vmatmul.mubr.bf16.gmra.mrb[0].mxu0 %v5686
  %v5722 = vpop.f32.mrb[0].mxu0
  %v5723 = vadd.f32 0.0, %v5722
  %v5724 = vpop.f32.mrb[0].mxu0
  %v5725 = vpop.f32.mrb[0].mxu0
  %v5726 = vpop.f32.mrb[0].mxu0
  %5727 = vdwg.mxu0
  %v5728 = vadd.f32 %v2699, 0.0
  %v5729 = vadd.f32 %v2747, 0.0
  %v5730 = vadd.f32 %v2795, 0.0
  %v5731 = vadd.f32 %v2843, 0.0
  %v5732 = vadd.f32 %v2891, 0.0
  %v5733 = vadd.f32 %v2939, 0.0
  %v5734 = vadd.f32 %v2987, 0.0
  %v5735 = vadd.f32 %v3035, 0.0
  %v5736 = vadd.f32 %v3083, 0.0
  %v5737 = vadd.f32 %v3131, 0.0
  %v5738 = vadd.f32 %v3179, 0.0
  %v5739 = vadd.f32 %v3227, 0.0
  %v5740 = vadd.f32 %v3275, 0.0
  %v5741 = vadd.f32 %v3323, 0.0
  %v5742 = vadd.f32 %v3371, 0.0
  %v5743 = vadd.f32 %v3419, 0.0
  %v5744 = vadd.f32 %v3467, 0.0
  %v5745 = vadd.f32 %v3515, 0.0
  %v5746 = vadd.f32 %v3563, 0.0
  %v5747 = vadd.f32 %v3611, 0.0
  %v5748 = vadd.f32 %v3659, 0.0
  %v5749 = vadd.f32 %v3707, 0.0
  %v5750 = vadd.f32 %v3755, 0.0
  %v5751 = vadd.f32 %v3803, 0.0
  %v5752 = vadd.f32 %v3851, 0.0
  %v5753 = vadd.f32 %v3899, 0.0
  %v5754 = vadd.f32 %v3947, 0.0
  %v5755 = vadd.f32 %v3995, 0.0
  %v5756 = vadd.f32 %v4043, 0.0
  %v5757 = vadd.f32 %v4091, 0.0
  %v5758 = vadd.f32 %v4139, 0.0
  %v5759 = vadd.f32 %v4187, 0.0
  %v5760 = vadd.f32 %v4235, 0.0
  %v5761 = vadd.f32 %v4283, 0.0
  %v5762 = vadd.f32 %v4331, 0.0
  %v5763 = vadd.f32 %v4379, 0.0
  %v5764 = vadd.f32 %v4427, 0.0
  %v5765 = vadd.f32 %v4475, 0.0
  %v5766 = vadd.f32 %v4523, 0.0
  %v5767 = vadd.f32 %v4571, 0.0
  %v5768 = vadd.f32 %v4619, 0.0
  %v5769 = vadd.f32 %v4667, 0.0
  %v5770 = vadd.f32 %v4715, 0.0
  %v5771 = vadd.f32 %v4763, 0.0
  %v5772 = vadd.f32 %v4811, 0.0
  %v5773 = vadd.f32 %v4859, 0.0
  %v5774 = vadd.f32 %v4907, 0.0
  %v5775 = vadd.f32 %v4955, 0.0
  %v5776 = vadd.f32 %v5003, 0.0
  %v5777 = vadd.f32 %v5051, 0.0
  %v5778 = vadd.f32 %v5099, 0.0
  %v5779 = vadd.f32 %v5147, 0.0
  %v5780 = vadd.f32 %v5195, 0.0
  %v5781 = vadd.f32 %v5243, 0.0
  %v5782 = vadd.f32 %v5291, 0.0
  %v5783 = vadd.f32 %v5339, 0.0
  %v5784 = vadd.f32 %v5387, 0.0
  %v5785 = vadd.f32 %v5435, 0.0
  %v5786 = vadd.f32 %v5483, 0.0
  %v5787 = vadd.f32 %v5531, 0.0
  %v5788 = vadd.f32 %v5579, 0.0
  %v5789 = vadd.f32 %v5627, 0.0
  %v5790 = vadd.f32 %v5675, 0.0
  %v5791 = vadd.f32 %v5723, 0.0
  %v5792 = vunpack.c.l.bf16 %v57
  %v5793 = vunpack.c.l.bf16 %v58
  %v5794 = vunpack.c.l.bf16 %v59
  %v5795 = vunpack.c.l.bf16 %v60
  %v5796 = vunpack.c.l.bf16 %v61
  %v5797 = vunpack.c.l.bf16 %v62
  %v5798 = vunpack.c.l.bf16 %v63
  %v5799 = vunpack.c.l.bf16 %v64
  %v5800 = vsel %vm2660, %v5792, 0.0
  %5801 = vadd.xlane.f32.xlu0 %v5800
  %v5802 = vpop.xlane.xlu0 %5801
  %v5803 = vsel %vm2660, %v5793, 0.0
  %5804 = vadd.xlane.f32.xlu0 %v5803
  %v5805 = vpop.xlane.xlu0 %5804
  %v5806 = vsel %vm2660, %v5794, 0.0
  %5807 = vadd.xlane.f32.xlu0 %v5806
  %v5808 = vpop.xlane.xlu0 %5807
  %v5809 = vsel %vm2660, %v5795, 0.0
  %5810 = vadd.xlane.f32.xlu0 %v5809
  %v5811 = vpop.xlane.xlu0 %5810
  %v5812 = vsel %vm2660, %v5796, 0.0
  %5813 = vadd.xlane.f32.xlu0 %v5812
  %v5814 = vpop.xlane.xlu0 %5813
  %v5815 = vsel %vm2660, %v5797, 0.0
  %5816 = vadd.xlane.f32.xlu0 %v5815
  %v5817 = vpop.xlane.xlu0 %5816
  %v5818 = vsel %vm2660, %v5798, 0.0
  %5819 = vadd.xlane.f32.xlu0 %v5818
  %v5820 = vpop.xlane.xlu0 %5819
  %v5821 = vsel %vm2660, %v5799, 0.0
  %5822 = vadd.xlane.f32.xlu0 %v5821
  %v5823 = vpop.xlane.xlu0 %5822
  %v5824 = vpack.c.bf16 %v5728, %v5728
  %v5825 = vpack.c.bf16 %v5729, %v5729
  %v5826 = vpack.c.bf16 %v5730, %v5730
  %v5827 = vpack.c.bf16 %v5731, %v5731
  %v5828 = vpack.c.bf16 %v5732, %v5732
  %v5829 = vpack.c.bf16 %v5733, %v5733
  %v5830 = vpack.c.bf16 %v5734, %v5734
  %v5831 = vpack.c.bf16 %v5735, %v5735
  %v5832 = vpack.c.bf16 %v5736, %v5736
  %v5833 = vpack.c.bf16 %v5737, %v5737
  %v5834 = vpack.c.bf16 %v5738, %v5738
  %v5835 = vpack.c.bf16 %v5739, %v5739
  %v5836 = vpack.c.bf16 %v5740, %v5740
  %v5837 = vpack.c.bf16 %v5741, %v5741
  %v5838 = vpack.c.bf16 %v5742, %v5742
  %v5839 = vpack.c.bf16 %v5743, %v5743
  %v5840 = vpack.c.bf16 %v5744, %v5744
  %v5841 = vpack.c.bf16 %v5745, %v5745
  %v5842 = vpack.c.bf16 %v5746, %v5746
  %v5843 = vpack.c.bf16 %v5747, %v5747
  %v5844 = vpack.c.bf16 %v5748, %v5748
  %v5845 = vpack.c.bf16 %v5749, %v5749
  %v5846 = vpack.c.bf16 %v5750, %v5750
  %v5847 = vpack.c.bf16 %v5751, %v5751
  %v5848 = vpack.c.bf16 %v5752, %v5752
  %v5849 = vpack.c.bf16 %v5753, %v5753
  %v5850 = vpack.c.bf16 %v5754, %v5754
  %v5851 = vpack.c.bf16 %v5755, %v5755
  %v5852 = vpack.c.bf16 %v5756, %v5756
  %v5853 = vpack.c.bf16 %v5757, %v5757
  %v5854 = vpack.c.bf16 %v5758, %v5758
  %v5855 = vpack.c.bf16 %v5759, %v5759
  %v5856 = vpack.c.bf16 %v5760, %v5760
  %v5857 = vpack.c.bf16 %v5761, %v5761
  %v5858 = vpack.c.bf16 %v5762, %v5762
  %v5859 = vpack.c.bf16 %v5763, %v5763
  %v5860 = vpack.c.bf16 %v5764, %v5764
  %v5861 = vpack.c.bf16 %v5765, %v5765
  %v5862 = vpack.c.bf16 %v5766, %v5766
  %v5863 = vpack.c.bf16 %v5767, %v5767
  %v5864 = vpack.c.bf16 %v5768, %v5768
  %v5865 = vpack.c.bf16 %v5769, %v5769
  %v5866 = vpack.c.bf16 %v5770, %v5770
  %v5867 = vpack.c.bf16 %v5771, %v5771
  %v5868 = vpack.c.bf16 %v5772, %v5772
  %v5869 = vpack.c.bf16 %v5773, %v5773
  %v5870 = vpack.c.bf16 %v5774, %v5774
  %v5871 = vpack.c.bf16 %v5775, %v5775
  %v5872 = vpack.c.bf16 %v5776, %v5776
  %v5873 = vpack.c.bf16 %v5777, %v5777
  %v5874 = vpack.c.bf16 %v5778, %v5778
  %v5875 = vpack.c.bf16 %v5779, %v5779
  %v5876 = vpack.c.bf16 %v5780, %v5780
  %v5877 = vpack.c.bf16 %v5781, %v5781
  %v5878 = vpack.c.bf16 %v5782, %v5782
  %v5879 = vpack.c.bf16 %v5783, %v5783
  %v5880 = vpack.c.bf16 %v5784, %v5784
  %v5881 = vpack.c.bf16 %v5785, %v5785
  %v5882 = vpack.c.bf16 %v5786, %v5786
  %v5883 = vpack.c.bf16 %v5787, %v5787
  %v5884 = vpack.c.bf16 %v5788, %v5788
  %v5885 = vpack.c.bf16 %v5789, %v5789
  %v5886 = vpack.c.bf16 %v5790, %v5790
  %v5887 = vpack.c.bf16 %v5791, %v5791
  %v5889 = vlaneseq
  %v5890 = vshrl.u32 %v5889, 7
  %v5891 = vsub.s32 0, %v5890
  %v5892 = vrot.slane %v73, %v5891
  %v5894 = vmul.f32 %v5802, %v5892
  %v5895 = vmul.f32 %v5805, %v5892
  %v5896 = vmul.f32 %v5808, %v5892
  %v5897 = vmul.f32 %v5811, %v5892
  %v5898 = vmul.f32 %v5814, %v5892
  %v5899 = vmul.f32 %v5817, %v5892
  %v5900 = vmul.f32 %v5820, %v5892
  %v5901 = vmul.f32 %v5823, %v5892
  %v5966 = vunpack.c.l.b16 %v5824
  %v5967 = vunpack.c.l.b16 %v5825
  %v5968 = vunpack.c.l.b16 %v5826
  %v5969 = vunpack.c.l.b16 %v5827
  %v5970 = vunpack.c.l.b16 %v5828
  %v5971 = vunpack.c.l.b16 %v5829
  %v5972 = vunpack.c.l.b16 %v5830
  %v5973 = vunpack.c.l.b16 %v5831
  %v5974 = vunpack.c.l.b16 %v5832
  %v5975 = vunpack.c.l.b16 %v5833
  %v5976 = vunpack.c.l.b16 %v5834
  %v5977 = vunpack.c.l.b16 %v5835
  %v5978 = vunpack.c.l.b16 %v5836
  %v5979 = vunpack.c.l.b16 %v5837
  %v5980 = vunpack.c.l.b16 %v5838
  %v5981 = vunpack.c.l.b16 %v5839
  %v5982 = vunpack.c.l.b16 %v5840
  %v5983 = vunpack.c.l.b16 %v5841
  %v5984 = vunpack.c.l.b16 %v5842
  %v5985 = vunpack.c.l.b16 %v5843
  %v5986 = vunpack.c.l.b16 %v5844
  %v5987 = vunpack.c.l.b16 %v5845
  %v5988 = vunpack.c.l.b16 %v5846
  %v5989 = vunpack.c.l.b16 %v5847
  %v5990 = vunpack.c.l.b16 %v5848
  %v5991 = vunpack.c.l.b16 %v5849
  %v5992 = vunpack.c.l.b16 %v5850
  %v5993 = vunpack.c.l.b16 %v5851
  %v5994 = vunpack.c.l.b16 %v5852
  %v5995 = vunpack.c.l.b16 %v5853
  %v5996 = vunpack.c.l.b16 %v5854
  %v5997 = vunpack.c.l.b16 %v5855
  %v5998 = vunpack.c.l.b16 %v5856
  %v5999 = vunpack.c.l.b16 %v5857
  %v6000 = vunpack.c.l.b16 %v5858
  %v6001 = vunpack.c.l.b16 %v5859
  %v6002 = vunpack.c.l.b16 %v5860
  %v6003 = vunpack.c.l.b16 %v5861
  %v6004 = vunpack.c.l.b16 %v5862
  %v6005 = vunpack.c.l.b16 %v5863
  %v6006 = vunpack.c.l.b16 %v5864
  %v6007 = vunpack.c.l.b16 %v5865
  %v6008 = vunpack.c.l.b16 %v5866
  %v6009 = vunpack.c.l.b16 %v5867
  %v6010 = vunpack.c.l.b16 %v5868
  %v6011 = vunpack.c.l.b16 %v5869
  %v6012 = vunpack.c.l.b16 %v5870
  %v6013 = vunpack.c.l.b16 %v5871
  %v6014 = vunpack.c.l.b16 %v5872
  %v6015 = vunpack.c.l.b16 %v5873
  %v6016 = vunpack.c.l.b16 %v5874
  %v6017 = vunpack.c.l.b16 %v5875
  %v6018 = vunpack.c.l.b16 %v5876
  %v6019 = vunpack.c.l.b16 %v5877
  %v6020 = vunpack.c.l.b16 %v5878
  %v6021 = vunpack.c.l.b16 %v5879
  %v6022 = vunpack.c.l.b16 %v5880
  %v6023 = vunpack.c.l.b16 %v5881
  %v6024 = vunpack.c.l.b16 %v5882
  %v6025 = vunpack.c.l.b16 %v5883
  %v6026 = vunpack.c.l.b16 %v5884
  %v6027 = vunpack.c.l.b16 %v5885
  %v6028 = vunpack.c.l.b16 %v5886
  %v6029 = vunpack.c.l.b16 %v5887
  %v6030 = vrot.slane %v5967, 7
  %vm6031 = vcmask 1041409
  %v6032 = vsel %vm6031, %v6030, %v5966
  %v6033 = vrot.slane %v5968, 6
  %vm6034 = vcmask 1042434
  %v6035 = vsel %vm6034, %v6033, %v6032
  %v6036 = vrot.slane %v5969, 5
  %vm6037 = vcmask 1043459
  %v6038 = vsel %vm6037, %v6036, %v6035
  %v6039 = vrot.slane %v5970, 4
  %vm6040 = vcmask 1044484
  %v6041 = vsel %vm6040, %v6039, %v6038
  %v6042 = vrot.slane %v5971, 3
  %vm6043 = vcmask 1045509
  %v6044 = vsel %vm6043, %v6042, %v6041
  %v6045 = vrot.slane %v5972, 2
  %vm6046 = vcmask 1046534
  %v6047 = vsel %vm6046, %v6045, %v6044
  %v6048 = vrot.slane %v5973, 1
  %vm6049 = vcmask 1047559
  %v6050 = vsel %vm6049, %v6048, %v6047
  %v6051 = vrot.slane %v5975, 7
  %v6052 = vsel %vm6031, %v6051, %v5974
  %v6053 = vrot.slane %v5976, 6
  %v6054 = vsel %vm6034, %v6053, %v6052
  %v6055 = vrot.slane %v5977, 5
  %v6056 = vsel %vm6037, %v6055, %v6054
  %v6057 = vrot.slane %v5978, 4
  %v6058 = vsel %vm6040, %v6057, %v6056
  %v6059 = vrot.slane %v5979, 3
  %v6060 = vsel %vm6043, %v6059, %v6058
  %v6061 = vrot.slane %v5980, 2
  %v6062 = vsel %vm6046, %v6061, %v6060
  %v6063 = vrot.slane %v5981, 1
  %v6064 = vsel %vm6049, %v6063, %v6062
  %v6065 = vrot.slane %v5983, 7
  %v6066 = vsel %vm6031, %v6065, %v5982
  %v6067 = vrot.slane %v5984, 6
  %v6068 = vsel %vm6034, %v6067, %v6066
  %v6069 = vrot.slane %v5985, 5
  %v6070 = vsel %vm6037, %v6069, %v6068
  %v6071 = vrot.slane %v5986, 4
  %v6072 = vsel %vm6040, %v6071, %v6070
  %v6073 = vrot.slane %v5987, 3
  %v6074 = vsel %vm6043, %v6073, %v6072
  %v6075 = vrot.slane %v5988, 2
  %v6076 = vsel %vm6046, %v6075, %v6074
  %v6077 = vrot.slane %v5989, 1
  %v6078 = vsel %vm6049, %v6077, %v6076
  %v6079 = vrot.slane %v5991, 7
  %v6080 = vsel %vm6031, %v6079, %v5990
  %v6081 = vrot.slane %v5992, 6
  %v6082 = vsel %vm6034, %v6081, %v6080
  %v6083 = vrot.slane %v5993, 5
  %v6084 = vsel %vm6037, %v6083, %v6082
  %v6085 = vrot.slane %v5994, 4
  %v6086 = vsel %vm6040, %v6085, %v6084
  %v6087 = vrot.slane %v5995, 3
  %v6088 = vsel %vm6043, %v6087, %v6086
  %v6089 = vrot.slane %v5996, 2
  %v6090 = vsel %vm6046, %v6089, %v6088
  %v6091 = vrot.slane %v5997, 1
  %v6092 = vsel %vm6049, %v6091, %v6090
  %v6093 = vrot.slane %v5999, 7
  %v6094 = vsel %vm6031, %v6093, %v5998
  %v6095 = vrot.slane %v6000, 6
  %v6096 = vsel %vm6034, %v6095, %v6094
  %v6097 = vrot.slane %v6001, 5
  %v6098 = vsel %vm6037, %v6097, %v6096
  %v6099 = vrot.slane %v6002, 4
  %v6100 = vsel %vm6040, %v6099, %v6098
  %v6101 = vrot.slane %v6003, 3
  %v6102 = vsel %vm6043, %v6101, %v6100
  %v6103 = vrot.slane %v6004, 2
  %v6104 = vsel %vm6046, %v6103, %v6102
  %v6105 = vrot.slane %v6005, 1
  %v6106 = vsel %vm6049, %v6105, %v6104
  %v6107 = vrot.slane %v6007, 7
  %v6108 = vsel %vm6031, %v6107, %v6006
  %v6109 = vrot.slane %v6008, 6
  %v6110 = vsel %vm6034, %v6109, %v6108
  %v6111 = vrot.slane %v6009, 5
  %v6112 = vsel %vm6037, %v6111, %v6110
  %v6113 = vrot.slane %v6010, 4
  %v6114 = vsel %vm6040, %v6113, %v6112
  %v6115 = vrot.slane %v6011, 3
  %v6116 = vsel %vm6043, %v6115, %v6114
  %v6117 = vrot.slane %v6012, 2
  %v6118 = vsel %vm6046, %v6117, %v6116
  %v6119 = vrot.slane %v6013, 1
  %v6120 = vsel %vm6049, %v6119, %v6118
  %v6121 = vrot.slane %v6015, 7
  %v6122 = vsel %vm6031, %v6121, %v6014
  %v6123 = vrot.slane %v6016, 6
  %v6124 = vsel %vm6034, %v6123, %v6122
  %v6125 = vrot.slane %v6017, 5
  %v6126 = vsel %vm6037, %v6125, %v6124
  %v6127 = vrot.slane %v6018, 4
  %v6128 = vsel %vm6040, %v6127, %v6126
  %v6129 = vrot.slane %v6019, 3
  %v6130 = vsel %vm6043, %v6129, %v6128
  %v6131 = vrot.slane %v6020, 2
  %v6132 = vsel %vm6046, %v6131, %v6130
  %v6133 = vrot.slane %v6021, 1
  %v6134 = vsel %vm6049, %v6133, %v6132
  %v6135 = vrot.slane %v6023, 7
  %v6136 = vsel %vm6031, %v6135, %v6022
  %v6137 = vrot.slane %v6024, 6
  %v6138 = vsel %vm6034, %v6137, %v6136
  %v6139 = vrot.slane %v6025, 5
  %v6140 = vsel %vm6037, %v6139, %v6138
  %v6141 = vrot.slane %v6026, 4
  %v6142 = vsel %vm6040, %v6141, %v6140
  %v6143 = vrot.slane %v6027, 3
  %v6144 = vsel %vm6043, %v6143, %v6142
  %v6145 = vrot.slane %v6028, 2
  %v6146 = vsel %vm6046, %v6145, %v6144
  %v6147 = vrot.slane %v6029, 1
  %v6148 = vsel %vm6049, %v6147, %v6146
  %v6149 = vpack.c.b16 %v6064, %v6050
  %v6150 = vpack.c.b16 %v6092, %v6078
  %v6151 = vpack.c.b16 %v6120, %v6106
  %v6152 = vpack.c.b16 %v6148, %v6134
  %v6157 = vunpack.c.l.b16 %v69
  %v6158 = vunpack.c.l.b16 %v70
  %v6159 = vunpack.c.l.b16 %v71
  %v6160 = vunpack.c.l.b16 %v72
  %v6161 = vpack.c.b16 %v6158, %v6157
  %v6162 = vpack.c.b16 %v6160, %v6159
  %vm6165 = vcmask 261120
  %v6167 = vsel %vm6165, %v6149, 0
  %v6170 = vsel %vm6165, %v6150, 0
  %v6173 = vsel %vm6165, %v6151, 0
  %v6176 = vsel %vm6165, %v6152, 0
  %6178 = vmatprep.subr.bf16.mxu0 0
  %6179 = vmatpush1.bf16.msra.mxu0 %v6161
  %6180 = vmatprep.subr.bf16.mxu0 0
  %6181 = vmatpush1.bf16.msra.mxu0 %v6162
  %6182 = vmatprep.subr.bf16.mxu0 0
  %6183 = vmatpush1.bf16.msra.mxu0 0
  %6184 = vmatprep.subr.bf16.mxu0 0
  %6185 = vmatpush1.bf16.msra.mxu0 0
  %6186 = vmatprep.subr.bf16.mxu0 0
  %6187 = vmatpush1.bf16.msra.mxu0 0
  %6188 = vmatprep.subr.bf16.mxu0 0
  %6189 = vmatpush1.bf16.msra.mxu0 0
  %6190 = vmatprep.subr.bf16.mxu0 0
  %6191 = vmatpush1.bf16.msra.mxu0 0
  %6192 = vmatprep.subr.bf16.mxu0 0
  %6193 = vmatpush1.bf16.msra.mxu0 0
  %6194 = vmatprep.subr.bf16.mxu0 0
  %6195 = vmatpush1.bf16.msra.mxu0 0
  %6196 = vmatprep.subr.bf16.mxu0 0
  %6197 = vmatpush1.bf16.msra.mxu0 0
  %6198 = vmatprep.subr.bf16.mxu0 0
  %6199 = vmatpush1.bf16.msra.mxu0 0
  %6200 = vmatprep.subr.bf16.mxu0 0
  %6201 = vmatpush1.bf16.msra.mxu0 0
  %6202 = vmatprep.subr.bf16.mxu0 0
  %6203 = vmatpush1.bf16.msra.mxu0 0
  %6204 = vmatprep.subr.bf16.mxu0 0
  %6205 = vmatpush1.bf16.msra.mxu0 0
  %6206 = vmatprep.subr.bf16.mxu0 0
  %6207 = vmatpush1.bf16.msra.mxu0 0
  %6208 = vmatprep.subr.bf16.mxu0 0
  %6209 = vmatpush1.bf16.msra.mxu0 0
  %6210 = vmatprep.mubr.bf16.mxu0 0
  %6211 = vmatmul.mubr.bf16.gmra.mrb[0].mxu0 %v6167
  %v6212 = vpop.f32.mrb[0].mxu0
  %v6213 = vadd.f32 %v5894, %v6212
  %v6214 = vpop.f32.mrb[0].mxu0
  %v6215 = vpop.f32.mrb[0].mxu0
  %v6216 = vadd.f32 %v5895, %v6215
  %v6217 = vpop.f32.mrb[0].mxu0
  %6218 = vmatprep.mubr.bf16.mxu0 0
  %6219 = vmatmul.mubr.bf16.gmra.mrb[0].mxu0 %v6170
  %v6220 = vpop.f32.mrb[0].mxu0
  %v6221 = vadd.f32 %v5896, %v6220
  %v6222 = vpop.f32.mrb[0].mxu0
  %v6223 = vpop.f32.mrb[0].mxu0
  %v6224 = vadd.f32 %v5897, %v6223
  %v6225 = vpop.f32.mrb[0].mxu0
  %6226 = vmatprep.mubr.bf16.mxu0 0
  %6227 = vmatmul.mubr.bf16.gmra.mrb[0].mxu0 %v6173
  %v6228 = vpop.f32.mrb[0].mxu0
  %v6229 = vadd.f32 %v5898, %v6228
  %v6230 = vpop.f32.mrb[0].mxu0
  %v6231 = vpop.f32.mrb[0].mxu0
  %v6232 = vadd.f32 %v5899, %v6231
  %v6233 = vpop.f32.mrb[0].mxu0
  %6234 = vmatprep.mubr.bf16.mxu0 0
  %6235 = vmatmul.mubr.bf16.gmra.mrb[0].mxu0 %v6176
  %v6236 = vpop.f32.mrb[0].mxu0
  %v6237 = vadd.f32 %v5900, %v6236
  %v6238 = vpop.f32.mrb[0].mxu0
  %v6239 = vpop.f32.mrb[0].mxu0
  %v6240 = vadd.f32 %v5901, %v6239
  %v6241 = vpop.f32.mrb[0].mxu0
  %6242 = vdwg.mxu0
  %v6243 = vmax.f32 %v6213, 0.0
  %v6244 = vmax.f32 %v6216, 0.0
  %v6245 = vmax.f32 %v6221, 0.0
  %v6246 = vmax.f32 %v6224, 0.0
  %v6247 = vmax.f32 %v6229, 0.0
  %v6248 = vmax.f32 %v6232, 0.0
  %v6249 = vmax.f32 %v6237, 0.0
  %v6250 = vmax.f32 %v6240, 0.0
  %v6251 = vpack.c.bf16 %v6244, %v6243
  %v6252 = vpack.c.bf16 %v6246, %v6245
  %v6253 = vpack.c.bf16 %v6248, %v6247
  %v6254 = vpack.c.bf16 %v6250, %v6249
  %v6259 = vunpack.c.l.b16 %v6251
  %v6260 = vunpack.c.h.b16 %v6251
  %v6261 = vunpack.c.l.b16 %v6252
  %v6262 = vunpack.c.h.b16 %v6252
  %v6263 = vunpack.c.l.b16 %v6253
  %v6264 = vunpack.c.h.b16 %v6253
  %v6265 = vunpack.c.l.b16 %v6254
  %v6266 = vunpack.c.h.b16 %v6254
  %v6267 = vpack.c.b16 %v6259, %v6259
  %v6268 = vpack.c.b16 %v6260, %v6260
  %v6269 = vpack.c.b16 %v6261, %v6261
  %v6270 = vpack.c.b16 %v6262, %v6262
  %v6271 = vpack.c.b16 %v6263, %v6263
  %v6272 = vpack.c.b16 %v6264, %v6264
  %v6273 = vpack.c.b16 %v6265, %v6265
  %v6274 = vpack.c.b16 %v6266, %v6266
  %vm6283 = vcmask 257024
  %6284 = vst.msk [vmem:[%s9] sm:$0xf] %vm6283, %v6267
  %6285 = vst.msk [vmem:[%s9 + $0x4] sm:$0xf] %vm6283, %v6268
  %6286 = vst.msk [vmem:[%s9 + $0x8] sm:$0xf] %vm6283, %v6269
  %6287 = vst.msk [vmem:[%s9 + $0xc] sm:$0xf] %vm6283, %v6270
  %6288 = vst.msk [vmem:[%s9 + $0x10] sm:$0xf] %vm6283, %v6271
  %6289 = vst.msk [vmem:[%s9 + $0x14] sm:$0xf] %vm6283, %v6272
  %6290 = vst.msk [vmem:[%s9 + $0x18] sm:$0xf] %vm6283, %v6273
  %6291 = vst.msk [vmem:[%s9 + $0x1c] sm:$0xf] %vm6283, %v6274
  // Predicated region
  $region38: #{face_classifier_forward.4} parent=0 // pred_check
    _
  $region39: #{face_classifier_forward.4} parent=0 // pred_check_branch
    %6293 = sbr.rel (0) target = $region41
  $region40: #{face_classifier_forward.4} parent=0 // pred_region
    _
  $region41: #{face_classifier_forward.4} parent=0 // pred_fallthru
    _
  // Predicated region
  $region42: #{face_classifier_forward.4} parent=0 // pred_check
    _
  $region43: #{face_classifier_forward.4} parent=0 // pred_check_branch
    %6295 = sbr.rel (0) target = $region45
  $region44: #{face_classifier_forward.4} parent=0 // pred_region
    _
  $region45: #{face_classifier_forward.4} parent=0 // pred_fallthru
    _

// kernel: face_classifier_forward.5
$region0: #{face_classifier_forward.5}
  #allocation0 [shape = 'u32[]', space=smem, size = 0x4, offset = 0x4, fixed_abs, tag = 'smem constant byte address 0x4 - core index']
  #allocation1 [shape = 'u32[144,128]{1,0:T(1,128)}', space=vmem, size = 0x12000, scoped, tag = 'internal scratch']
  #allocation2 [shape = 'f32[1]{0:T(128)S(6)}', space=smem, size = 0x200, scoped, tag = 'scoped memory for face_classifier_forward.5']
  %s0 = inlined_call_operand.vmem [shape: bf16[64,32], index: 0, kind: input, shape index: {}]
  %s1 = inlined_call_operand.vmem [shape: bf16[64,8], index: 1, kind: input, shape index: {}]
  %s2 = inlined_call_operand.vmem [shape: bf16[64,64], index: 2, kind: input, shape index: {}]
  %s3 = inlined_call_operand.vmem [shape: bf16[32,32], index: 3, kind: input, shape index: {}]
  %s4 = inlined_call_operand.vmem [shape: bf16[8,32], index: 4, kind: input, shape index: {}]
  %s5 = inlined_call_operand.vmem [shape: f32[1,32], index: 5, kind: input, shape index: {}]
  %s6 = inlined_call_operand.vmem [shape: bf16[32,32], index: 6, kind: input, shape index: {}]
  %s7 = inlined_call_operand.vmem [shape: f32[1,32], index: 7, kind: input, shape index: {}]
  %s8 = inlined_call_operand.vmem [shape: bf16[1,32], index: 8, kind: input, shape index: {}]
  %s9 = inlined_call_operand.<no memory space> [shape: f32[1], index: 9, kind: input, shape index: {}]
  %s10 = inlined_call_operand.hbm [shape: f32[1,64], index: 10, kind: output, shape index: {}]
  %s11 = sld [smem:[#allocation0]]
  $region50: #{face_classifier_forward.5} parent=0
    _
  %s13 = ssub.s32 1, %s11
  %s14 = scalar_select 0, %s13, %s11
  %15 = sst [smem:[#allocation2]] %s9
  $region1: #{face_classifier_forward.5} parent=0
    #allocation3 [shape = 'u8[512]{0}', space=vmem, size = 0x400, scoped, tag = 'output window, operand 0, single buffered']
    #allocation4 [shape = 's32[1]{0}', space=sflag, size = 0x4, scoped, tag = 'scoped memory for face_classifier_forward.5']
    %16 = vsyncpa [#allocation4], 0
    // Predicated region
    $region2: #{face_classifier_forward.5} parent=1 // pred_check
      _
    $region3: #{face_classifier_forward.5} parent=1 // pred_check_branch
      %18 = sbr.rel (0) target = $region5
    $region4: #{face_classifier_forward.5} parent=1 // pred_region
      _
    $region5: #{face_classifier_forward.5} parent=1 // pred_fallthru
      _
    // Predicated region
    $region6: #{face_classifier_forward.5} parent=1 // pred_check
      _
    $region7: #{face_classifier_forward.5} parent=1 // pred_check_branch
      %20 = sbr.rel (0) target = $region9
    $region8: #{face_classifier_forward.5} parent=1 // pred_region
      _
    $region9: #{face_classifier_forward.5} parent=1 // pred_fallthru
      _
    // Predicated region
    $region10: #{face_classifier_forward.5} parent=1 // pred_check
      _
    $region11: #{face_classifier_forward.5} parent=1 // pred_check_branch
      %22 = sbr.rel (0) target = $region13
    $region12: #{face_classifier_forward.5} parent=1 // pred_region
      _
    $region13: #{face_classifier_forward.5} parent=1 // pred_fallthru
      _
    // Predicated region
    $region14: #{face_classifier_forward.5} parent=1 // pred_check
      _
    $region15: #{face_classifier_forward.5} parent=1 // pred_check_branch
      %24 = sbr.rel (0) target = $region17
    $region16: #{face_classifier_forward.5} parent=1 // pred_region
      _
    $region17: #{face_classifier_forward.5} parent=1 // pred_fallthru
      _
    // Predicated region
    $region18: #{face_classifier_forward.5} parent=1 // pred_check
      _
    $region19: #{face_classifier_forward.5} parent=1 // pred_check_branch
      %26 = sbr.rel (0) target = $region21
    $region20: #{face_classifier_forward.5} parent=1 // pred_region
      _
    $region21: #{face_classifier_forward.5} parent=1 // pred_fallthru
      _
    // Predicated region
    $region22: #{face_classifier_forward.5} parent=1 // pred_check
      _
    $region23: #{face_classifier_forward.5} parent=1 // pred_check_branch
      %28 = sbr.rel (0) target = $region25
    $region24: #{face_classifier_forward.5} parent=1 // pred_region
      _
    $region25: #{face_classifier_forward.5} parent=1 // pred_fallthru
      _
    // Predicated region
    $region26: #{face_classifier_forward.5} parent=1 // pred_check
      _
    $region27: #{face_classifier_forward.5} parent=1 // pred_check_branch
      %30 = sbr.rel (0) target = $region29
    $region28: #{face_classifier_forward.5} parent=1 // pred_region
      _
    $region29: #{face_classifier_forward.5} parent=1 // pred_fallthru
      _
    // Predicated region
    $region30: #{face_classifier_forward.5} parent=1 // pred_check
      _
    $region31: #{face_classifier_forward.5} parent=1 // pred_check_branch
      %32 = sbr.rel (0) target = $region33
    $region32: #{face_classifier_forward.5} parent=1 // pred_region
      _
    $region33: #{face_classifier_forward.5} parent=1 // pred_fallthru
      _
    // Predicated region
    $region34: #{face_classifier_forward.5} parent=1 // pred_check
      _
    $region35: #{face_classifier_forward.5} parent=1 // pred_check_branch
      %34 = sbr.rel (0) target = $region37
    $region36: #{face_classifier_forward.5} parent=1 // pred_region
      _
    $region37: #{face_classifier_forward.5} parent=1 // pred_fallthru
      _
    // Predicated region
    $region38: #{face_classifier_forward.5} parent=1 // pred_check
      _
    $region39: #{face_classifier_forward.5} parent=1 // pred_check_branch
      %36 = sbr.rel (0) target = $region41
    $region40: #{face_classifier_forward.5} parent=1 // pred_region
      _
    $region41: #{face_classifier_forward.5} parent=1 // pred_fallthru
      _
    %v38 = vld [vmem:[%s0] sm:$0xf]
    %v39 = vld [vmem:[%s0 + $0x4] sm:$0xf]
    %v40 = vld [vmem:[%s0 + $0x8] sm:$0xf]
    %v41 = vld [vmem:[%s0 + $0xc] sm:$0xf]
    %v42 = vld [vmem:[%s0 + $0x10] sm:$0xf]
    %v43 = vld [vmem:[%s0 + $0x14] sm:$0xf]
    %v44 = vld [vmem:[%s0 + $0x18] sm:$0xf]
    %v45 = vld [vmem:[%s0 + $0x1c] sm:$0xf]
    %v46 = vld [vmem:[%s1] sm:$0xf]
    %v47 = vld [vmem:[%s1 + $0x4] sm:$0xf]
    %v48 = vld [vmem:[%s1 + $0x8] sm:$0xf]
    %v49 = vld [vmem:[%s1 + $0xc] sm:$0xf]
    %v50 = vld [vmem:[%s1 + $0x10] sm:$0xf]
    %v51 = vld [vmem:[%s1 + $0x14] sm:$0xf]
    %v52 = vld [vmem:[%s1 + $0x18] sm:$0xf]
    %v53 = vld [vmem:[%s1 + $0x1c] sm:$0xf]
    %v54 = vld [vmem:[%s2] sm:$0xf]
    %v55 = vld [vmem:[%s2 + $0x4] sm:$0xf]
    %v56 = vld [vmem:[%s2 + $0x8] sm:$0xf]
    %v57 = vld [vmem:[%s2 + $0xc] sm:$0xf]
    %v58 = vld [vmem:[%s2 + $0x10] sm:$0xf]
    %v59 = vld [vmem:[%s2 + $0x14] sm:$0xf]
    %v60 = vld [vmem:[%s2 + $0x18] sm:$0xf]
    %v61 = vld [vmem:[%s2 + $0x1c] sm:$0xf]
    %v62 = vld [vmem:[%s3] sm:$0xf]
    %v63 = vld [vmem:[%s3 + $0x4] sm:$0xf]
    %v64 = vld [vmem:[%s3 + $0x8] sm:$0xf]
    %v65 = vld [vmem:[%s3 + $0xc] sm:$0xf]
    %v66 = vld [vmem:[%s4] sm:$0xf]
    %v67 = vld [vmem:[%s5] sm:$0x1]
    %v68 = vld [vmem:[%s6] sm:$0xf]
    %v69 = vld [vmem:[%s6 + $0x4] sm:$0xf]
    %v70 = vld [vmem:[%s6 + $0x8] sm:$0xf]
    %v71 = vld [vmem:[%s6 + $0xc] sm:$0xf]
    %v72 = vld [vmem:[%s7] sm:$0x1]
    %v81 = vunpack.c.l.b16 %v46
    %v82 = vunpack.c.l.b16 %v47
    %v83 = vunpack.c.l.b16 %v48
    %v84 = vunpack.c.l.b16 %v49
    %v85 = vunpack.c.l.b16 %v50
    %v86 = vunpack.c.l.b16 %v51
    %v87 = vunpack.c.l.b16 %v52
    %v88 = vunpack.c.l.b16 %v53
    %v89 = vpack.c.b16 %v82, %v81
    %v90 = vpack.c.b16 %v84, %v83
    %v91 = vpack.c.b16 %v86, %v85
    %v92 = vpack.c.b16 %v88, %v87
    %vm93 = vcmask 64512
    %v95 = vsel %vm93, %v89, 0
    %v98 = vsel %vm93, %v90, 0
    %v101 = vsel %vm93, %v91, 0
    %v104 = vsel %vm93, %v92, 0
    %vm106 = vcmask 1043456
    %v108 = vsel %vm106, %v66, 0
    %110 = vmatprep.subr.bf16.mxu0 0
    %111 = vmatpush1.bf16.msra.mxu0 %v108
    %112 = vmatprep.subr.bf16.mxu0 0
    %113 = vmatpush1.bf16.msra.mxu0 0
    %114 = vmatprep.subr.bf16.mxu0 0
    %115 = vmatpush1.bf16.msra.mxu0 0
    %116 = vmatprep.subr.bf16.mxu0 0
    %117 = vmatpush1.bf16.msra.mxu0 0
    %118 = vmatprep.subr.bf16.mxu0 0
    %119 = vmatpush1.bf16.msra.mxu0 0
    %120 = vmatprep.subr.bf16.mxu0 0
    %121 = vmatpush1.bf16.msra.mxu0 0
    %122 = vmatprep.subr.bf16.mxu0 0
    %123 = vmatpush1.bf16.msra.mxu0 0
    %124 = vmatprep.subr.bf16.mxu0 0
    %125 = vmatpush1.bf16.msra.mxu0 0
    %126 = vmatprep.subr.bf16.mxu0 0
    %127 = vmatpush1.bf16.msra.mxu0 0
    %128 = vmatprep.subr.bf16.mxu0 0
    %129 = vmatpush1.bf16.msra.mxu0 0
    %130 = vmatprep.subr.bf16.mxu0 0
    %131 = vmatpush1.bf16.msra.mxu0 0
    %132 = vmatprep.subr.bf16.mxu0 0
    %133 = vmatpush1.bf16.msra.mxu0 0
    %134 = vmatprep.subr.bf16.mxu0 0
    %135 = vmatpush1.bf16.msra.mxu0 0
    %136 = vmatprep.subr.bf16.mxu0 0
    %137 = vmatpush1.bf16.msra.mxu0 0
    %138 = vmatprep.subr.bf16.mxu0 0
    %139 = vmatpush1.bf16.msra.mxu0 0
    %140 = vmatprep.subr.bf16.mxu0 0
    %141 = vmatpush1.bf16.msra.mxu0 0
    %142 = vmatprep.mubr.bf16.mxu0 0
    %143 = vmatmul.mubr.bf16.gmra.mrb[0].mxu0 %v95
    %v144 = vpop.f32.mrb[0].mxu0
    %v145 = vadd.f32 0.0, %v144
    %v146 = vpop.f32.mrb[0].mxu0
    %v147 = vpop.f32.mrb[0].mxu0
    %v148 = vadd.f32 0.0, %v147
    %v149 = vpop.f32.mrb[0].mxu0
    %150 = vmatprep.mubr.bf16.mxu0 0
    %151 = vmatmul.mubr.bf16.gmra.mrb[0].mxu0 %v98
    %v152 = vpop.f32.mrb[0].mxu0
    %v153 = vadd.f32 0.0, %v152
    %v154 = vpop.f32.mrb[0].mxu0
    %v155 = vpop.f32.mrb[0].mxu0
    %v156 = vadd.f32 0.0, %v155
    %v157 = vpop.f32.mrb[0].mxu0
    %158 = vmatprep.mubr.bf16.mxu0 0
    %159 = vmatmul.mubr.bf16.gmra.mrb[0].mxu0 %v101
    %v160 = vpop.f32.mrb[0].mxu0
    %v161 = vadd.f32 0.0, %v160
    %v162 = vpop.f32.mrb[0].mxu0
    %v163 = vpop.f32.mrb[0].mxu0
    %v164 = vadd.f32 0.0, %v163
    %v165 = vpop.f32.mrb[0].mxu0
    %166 = vmatprep.mubr.bf16.mxu0 0
    %167 = vmatmul.mubr.bf16.gmra.mrb[0].mxu0 %v104
    %v168 = vpop.f32.mrb[0].mxu0
    %v169 = vadd.f32 0.0, %v168
    %v170 = vpop.f32.mrb[0].mxu0
    %v171 = vpop.f32.mrb[0].mxu0
    %v172 = vadd.f32 0.0, %v171
    %v173 = vpop.f32.mrb[0].mxu0
    %174 = vdwg.mxu0
    %v183 = vunpack.c.l.b16 %v38
    %v184 = vunpack.c.l.b16 %v39
    %v185 = vunpack.c.l.b16 %v40
    %v186 = vunpack.c.l.b16 %v41
    %v187 = vunpack.c.l.b16 %v42
    %v188 = vunpack.c.l.b16 %v43
    %v189 = vunpack.c.l.b16 %v44
    %v190 = vunpack.c.l.b16 %v45
    %v191 = vpack.c.b16 %v184, %v183
    %v192 = vpack.c.b16 %v186, %v185
    %v193 = vpack.c.b16 %v188, %v187
    %v194 = vpack.c.b16 %v190, %v189
    %v199 = vunpack.c.l.b16 %v62
    %v200 = vunpack.c.l.b16 %v63
    %v201 = vunpack.c.l.b16 %v64
    %v202 = vunpack.c.l.b16 %v65
    %v203 = vpack.c.b16 %v200, %v199
    %v204 = vpack.c.b16 %v202, %v201
    %vm207 = vcmask 261120
    %v209 = vsel %vm207, %v191, 0
    %v212 = vsel %vm207, %v192, 0
    %v215 = vsel %vm207, %v193, 0
    %v218 = vsel %vm207, %v194, 0
    %220 = vmatprep.subr.bf16.mxu0 0
    %221 = vmatpush1.bf16.msra.mxu0 %v203
    %222 = vmatprep.subr.bf16.mxu0 0
    %223 = vmatpush1.bf16.msra.mxu0 %v204
    %224 = vmatprep.subr.bf16.mxu0 0
    %225 = vmatpush1.bf16.msra.mxu0 0
    %226 = vmatprep.subr.bf16.mxu0 0
    %227 = vmatpush1.bf16.msra.mxu0 0
    %228 = vmatprep.subr.bf16.mxu0 0
    %229 = vmatpush1.bf16.msra.mxu0 0
    %230 = vmatprep.subr.bf16.mxu0 0
    %231 = vmatpush1.bf16.msra.mxu0 0
    %232 = vmatprep.subr.bf16.mxu0 0
    %233 = vmatpush1.bf16.msra.mxu0 0
    %234 = vmatprep.subr.bf16.mxu0 0
    %235 = vmatpush1.bf16.msra.mxu0 0
    %236 = vmatprep.subr.bf16.mxu0 0
    %237 = vmatpush1.bf16.msra.mxu0 0
    %238 = vmatprep.subr.bf16.mxu0 0
    %239 = vmatpush1.bf16.msra.mxu0 0
    %240 = vmatprep.subr.bf16.mxu0 0
    %241 = vmatpush1.bf16.msra.mxu0 0
    %242 = vmatprep.subr.bf16.mxu0 0
    %243 = vmatpush1.bf16.msra.mxu0 0
    %244 = vmatprep.subr.bf16.mxu0 0
    %245 = vmatpush1.bf16.msra.mxu0 0
    %246 = vmatprep.subr.bf16.mxu0 0
    %247 = vmatpush1.bf16.msra.mxu0 0
    %248 = vmatprep.subr.bf16.mxu0 0
    %249 = vmatpush1.bf16.msra.mxu0 0
    %250 = vmatprep.subr.bf16.mxu0 0
    %251 = vmatpush1.bf16.msra.mxu0 0
    %252 = vmatprep.mubr.bf16.mxu0 0
    %253 = vmatmul.mubr.bf16.gmra.mrb[0].mxu0 %v209
    %v254 = vpop.f32.mrb[0].mxu0
    %v255 = vadd.f32 %v145, %v254
    %v256 = vpop.f32.mrb[0].mxu0
    %v257 = vpop.f32.mrb[0].mxu0
    %v258 = vadd.f32 %v148, %v257
    %v259 = vpop.f32.mrb[0].mxu0
    %260 = vmatprep.mubr.bf16.mxu0 0
    %261 = vmatmul.mubr.bf16.gmra.mrb[0].mxu0 %v212
    %v262 = vpop.f32.mrb[0].mxu0
    %v263 = vadd.f32 %v153, %v262
    %v264 = vpop.f32.mrb[0].mxu0
    %v265 = vpop.f32.mrb[0].mxu0
    %v266 = vadd.f32 %v156, %v265
    %v267 = vpop.f32.mrb[0].mxu0
    %268 = vmatprep.mubr.bf16.mxu0 0
    %269 = vmatmul.mubr.bf16.gmra.mrb[0].mxu0 %v215
    %v270 = vpop.f32.mrb[0].mxu0
    %v271 = vadd.f32 %v161, %v270
    %v272 = vpop.f32.mrb[0].mxu0
    %v273 = vpop.f32.mrb[0].mxu0
    %v274 = vadd.f32 %v164, %v273
    %v275 = vpop.f32.mrb[0].mxu0
    %276 = vmatprep.mubr.bf16.mxu0 0
    %277 = vmatmul.mubr.bf16.gmra.mrb[0].mxu0 %v218
    %v278 = vpop.f32.mrb[0].mxu0
    %v279 = vadd.f32 %v169, %v278
    %v280 = vpop.f32.mrb[0].mxu0
    %v281 = vpop.f32.mrb[0].mxu0
    %v282 = vadd.f32 %v172, %v281
    %v283 = vpop.f32.mrb[0].mxu0
    %284 = vdwg.mxu0
    %v286 = vlaneseq
    %v287 = vshrl.u32 %v286, 7
    %v288 = vsub.s32 0, %v287
    %v289 = vrot.slane %v67, %v288
    %v291 = vsub.f32 %v289, %v145
    %v292 = vsub.f32 %v289, %v148
    %v293 = vsub.f32 %v289, %v153
    %v294 = vsub.f32 %v289, %v156
    %v295 = vsub.f32 %v289, %v161
    %v296 = vsub.f32 %v289, %v164
    %v297 = vsub.f32 %v289, %v169
    %v298 = vsub.f32 %v289, %v172
    %v307 = vcombine.high %v291, %v291
    %v309 = vunpack.c.l.s4 1966171168
    %v310 = vunpack.c.0.s8 %v309
    %v311 = vlaneseq
    %v312 = vshrl.u32 %v311, 7
    %v313 = vsub.s32 %v310, %v312
    %v314 = vrot.slane %v291, %v313
    %v316 = vunpack.c.l.s4 1966171168
    %v317 = vunpack.c.0.s8 %v316
    %v318 = vlaneseq
    %v319 = vshrl.u32 %v318, 7
    %v320 = vsub.s32 %v317, %v319
    %v321 = vrot.slane %v307, %v320
    %v322 = vcombine.high %v314, %v314
    %v323 = vcombine.high %v321, %v321
    %v325 = vunpack.c.l.s4 1966171168
    %v326 = vunpack.c.0.s8 %v325
    %v327 = vlaneseq
    %v328 = vshrl.u32 %v327, 7
    %v329 = vsub.s32 %v326, %v328
    %v330 = vrot.slane %v314, %v329
    %v332 = vunpack.c.l.s4 1966171168
    %v333 = vunpack.c.0.s8 %v332
    %v334 = vlaneseq
    %v335 = vshrl.u32 %v334, 7
    %v336 = vsub.s32 %v333, %v335
    %v337 = vrot.slane %v321, %v336
    %v339 = vunpack.c.l.s4 1966171168
    %v340 = vunpack.c.0.s8 %v339
    %v341 = vlaneseq
    %v342 = vshrl.u32 %v341, 7
    %v343 = vsub.s32 %v340, %v342
    %v344 = vrot.slane %v322, %v343
    %v346 = vunpack.c.l.s4 1966171168
    %v347 = vunpack.c.0.s8 %v346
    %v348 = vlaneseq
    %v349 = vshrl.u32 %v348, 7
    %v350 = vsub.s32 %v347, %v349
    %v351 = vrot.slane %v323, %v350
    %v352 = vcombine.high %v330, %v330
    %v353 = vcombine.high %v337, %v337
    %v354 = vcombine.high %v344, %v344
    %v355 = vcombine.high %v351, %v351
    %v356 = vcombine.high %v292, %v292
    %v358 = vunpack.c.l.s4 1966171168
    %v359 = vunpack.c.0.s8 %v358
    %v360 = vlaneseq
    %v361 = vshrl.u32 %v360, 7
    %v362 = vsub.s32 %v359, %v361
    %v363 = vrot.slane %v292, %v362
    %v365 = vunpack.c.l.s4 1966171168
    %v366 = vunpack.c.0.s8 %v365
    %v367 = vlaneseq
    %v368 = vshrl.u32 %v367, 7
    %v369 = vsub.s32 %v366, %v368
    %v370 = vrot.slane %v356, %v369
    %v371 = vcombine.high %v363, %v363
    %v372 = vcombine.high %v370, %v370
    %v374 = vunpack.c.l.s4 1966171168
    %v375 = vunpack.c.0.s8 %v374
    %v376 = vlaneseq
    %v377 = vshrl.u32 %v376, 7
    %v378 = vsub.s32 %v375, %v377
    %v379 = vrot.slane %v363, %v378
    %v381 = vunpack.c.l.s4 1966171168
    %v382 = vunpack.c.0.s8 %v381
    %v383 = vlaneseq
    %v384 = vshrl.u32 %v383, 7
    %v385 = vsub.s32 %v382, %v384
    %v386 = vrot.slane %v370, %v385
    %v388 = vunpack.c.l.s4 1966171168
    %v389 = vunpack.c.0.s8 %v388
    %v390 = vlaneseq
    %v391 = vshrl.u32 %v390, 7
    %v392 = vsub.s32 %v389, %v391
    %v393 = vrot.slane %v371, %v392
    %v395 = vunpack.c.l.s4 1966171168
    %v396 = vunpack.c.0.s8 %v395
    %v397 = vlaneseq
    %v398 = vshrl.u32 %v397, 7
    %v399 = vsub.s32 %v396, %v398
    %v400 = vrot.slane %v372, %v399
    %v401 = vcombine.high %v379, %v379
    %v402 = vcombine.high %v386, %v386
    %v403 = vcombine.high %v393, %v393
    %v404 = vcombine.high %v400, %v400
    %v405 = vcombine.high %v293, %v293
    %v407 = vunpack.c.l.s4 1966171168
    %v408 = vunpack.c.0.s8 %v407
    %v409 = vlaneseq
    %v410 = vshrl.u32 %v409, 7
    %v411 = vsub.s32 %v408, %v410
    %v412 = vrot.slane %v293, %v411
    %v414 = vunpack.c.l.s4 1966171168
    %v415 = vunpack.c.0.s8 %v414
    %v416 = vlaneseq
    %v417 = vshrl.u32 %v416, 7
    %v418 = vsub.s32 %v415, %v417
    %v419 = vrot.slane %v405, %v418
    %v420 = vcombine.high %v412, %v412
    %v421 = vcombine.high %v419, %v419
    %v423 = vunpack.c.l.s4 1966171168
    %v424 = vunpack.c.0.s8 %v423
    %v425 = vlaneseq
    %v426 = vshrl.u32 %v425, 7
    %v427 = vsub.s32 %v424, %v426
    %v428 = vrot.slane %v412, %v427
    %v430 = vunpack.c.l.s4 1966171168
    %v431 = vunpack.c.0.s8 %v430
    %v432 = vlaneseq
    %v433 = vshrl.u32 %v432, 7
    %v434 = vsub.s32 %v431, %v433
    %v435 = vrot.slane %v419, %v434
    %v437 = vunpack.c.l.s4 1966171168
    %v438 = vunpack.c.0.s8 %v437
    %v439 = vlaneseq
    %v440 = vshrl.u32 %v439, 7
    %v441 = vsub.s32 %v438, %v440
    %v442 = vrot.slane %v420, %v441
    %v444 = vunpack.c.l.s4 1966171168
    %v445 = vunpack.c.0.s8 %v444
    %v446 = vlaneseq
    %v447 = vshrl.u32 %v446, 7
    %v448 = vsub.s32 %v445, %v447
    %v449 = vrot.slane %v421, %v448
    %v450 = vcombine.high %v428, %v428
    %v451 = vcombine.high %v435, %v435
    %v452 = vcombine.high %v442, %v442
    %v453 = vcombine.high %v449, %v449
    %v454 = vcombine.high %v294, %v294
    %v456 = vunpack.c.l.s4 1966171168
    %v457 = vunpack.c.0.s8 %v456
    %v458 = vlaneseq
    %v459 = vshrl.u32 %v458, 7
    %v460 = vsub.s32 %v457, %v459
    %v461 = vrot.slane %v294, %v460
    %v463 = vunpack.c.l.s4 1966171168
    %v464 = vunpack.c.0.s8 %v463
    %v465 = vlaneseq
    %v466 = vshrl.u32 %v465, 7
    %v467 = vsub.s32 %v464, %v466
    %v468 = vrot.slane %v454, %v467
    %v469 = vcombine.high %v461, %v461
    %v470 = vcombine.high %v468, %v468
    %v472 = vunpack.c.l.s4 1966171168
    %v473 = vunpack.c.0.s8 %v472
    %v474 = vlaneseq
    %v475 = vshrl.u32 %v474, 7
    %v476 = vsub.s32 %v473, %v475
    %v477 = vrot.slane %v461, %v476
    %v479 = vunpack.c.l.s4 1966171168
    %v480 = vunpack.c.0.s8 %v479
    %v481 = vlaneseq
    %v482 = vshrl.u32 %v481, 7
    %v483 = vsub.s32 %v480, %v482
    %v484 = vrot.slane %v468, %v483
    %v486 = vunpack.c.l.s4 1966171168
    %v487 = vunpack.c.0.s8 %v486
    %v488 = vlaneseq
    %v489 = vshrl.u32 %v488, 7
    %v490 = vsub.s32 %v487, %v489
    %v491 = vrot.slane %v469, %v490
    %v493 = vunpack.c.l.s4 1966171168
    %v494 = vunpack.c.0.s8 %v493
    %v495 = vlaneseq
    %v496 = vshrl.u32 %v495, 7
    %v497 = vsub.s32 %v494, %v496
    %v498 = vrot.slane %v470, %v497
    %v499 = vcombine.high %v477, %v477
    %v500 = vcombine.high %v484, %v484
    %v501 = vcombine.high %v491, %v491
    %v502 = vcombine.high %v498, %v498
    %v503 = vcombine.high %v295, %v295
    %v505 = vunpack.c.l.s4 1966171168
    %v506 = vunpack.c.0.s8 %v505
    %v507 = vlaneseq
    %v508 = vshrl.u32 %v507, 7
    %v509 = vsub.s32 %v506, %v508
    %v510 = vrot.slane %v295, %v509
    %v512 = vunpack.c.l.s4 1966171168
    %v513 = vunpack.c.0.s8 %v512
    %v514 = vlaneseq
    %v515 = vshrl.u32 %v514, 7
    %v516 = vsub.s32 %v513, %v515
    %v517 = vrot.slane %v503, %v516
    %v518 = vcombine.high %v510, %v510
    %v519 = vcombine.high %v517, %v517
    %v521 = vunpack.c.l.s4 1966171168
    %v522 = vunpack.c.0.s8 %v521
    %v523 = vlaneseq
    %v524 = vshrl.u32 %v523, 7
    %v525 = vsub.s32 %v522, %v524
    %v526 = vrot.slane %v510, %v525
    %v528 = vunpack.c.l.s4 1966171168
    %v529 = vunpack.c.0.s8 %v528
    %v530 = vlaneseq
    %v531 = vshrl.u32 %v530, 7
    %v532 = vsub.s32 %v529, %v531
    %v533 = vrot.slane %v517, %v532
    %v535 = vunpack.c.l.s4 1966171168
    %v536 = vunpack.c.0.s8 %v535
    %v537 = vlaneseq
    %v538 = vshrl.u32 %v537, 7
    %v539 = vsub.s32 %v536, %v538
    %v540 = vrot.slane %v518, %v539
    %v542 = vunpack.c.l.s4 1966171168
    %v543 = vunpack.c.0.s8 %v542
    %v544 = vlaneseq
    %v545 = vshrl.u32 %v544, 7
    %v546 = vsub.s32 %v543, %v545
    %v547 = vrot.slane %v519, %v546
    %v548 = vcombine.high %v526, %v526
    %v549 = vcombine.high %v533, %v533
    %v550 = vcombine.high %v540, %v540
    %v551 = vcombine.high %v547, %v547
    %v552 = vcombine.high %v296, %v296
    %v554 = vunpack.c.l.s4 1966171168
    %v555 = vunpack.c.0.s8 %v554
    %v556 = vlaneseq
    %v557 = vshrl.u32 %v556, 7
    %v558 = vsub.s32 %v555, %v557
    %v559 = vrot.slane %v296, %v558
    %v561 = vunpack.c.l.s4 1966171168
    %v562 = vunpack.c.0.s8 %v561
    %v563 = vlaneseq
    %v564 = vshrl.u32 %v563, 7
    %v565 = vsub.s32 %v562, %v564
    %v566 = vrot.slane %v552, %v565
    %v567 = vcombine.high %v559, %v559
    %v568 = vcombine.high %v566, %v566
    %v570 = vunpack.c.l.s4 1966171168
    %v571 = vunpack.c.0.s8 %v570
    %v572 = vlaneseq
    %v573 = vshrl.u32 %v572, 7
    %v574 = vsub.s32 %v571, %v573
    %v575 = vrot.slane %v559, %v574
    %v577 = vunpack.c.l.s4 1966171168
    %v578 = vunpack.c.0.s8 %v577
    %v579 = vlaneseq
    %v580 = vshrl.u32 %v579, 7
    %v581 = vsub.s32 %v578, %v580
    %v582 = vrot.slane %v566, %v581
    %v584 = vunpack.c.l.s4 1966171168
    %v585 = vunpack.c.0.s8 %v584
    %v586 = vlaneseq
    %v587 = vshrl.u32 %v586, 7
    %v588 = vsub.s32 %v585, %v587
    %v589 = vrot.slane %v567, %v588
    %v591 = vunpack.c.l.s4 1966171168
    %v592 = vunpack.c.0.s8 %v591
    %v593 = vlaneseq
    %v594 = vshrl.u32 %v593, 7
    %v595 = vsub.s32 %v592, %v594
    %v596 = vrot.slane %v568, %v595
    %v597 = vcombine.high %v575, %v575
    %v598 = vcombine.high %v582, %v582
    %v599 = vcombine.high %v589, %v589
    %v600 = vcombine.high %v596, %v596
    %v601 = vcombine.high %v297, %v297
    %v603 = vunpack.c.l.s4 1966171168
    %v604 = vunpack.c.0.s8 %v603
    %v605 = vlaneseq
    %v606 = vshrl.u32 %v605, 7
    %v607 = vsub.s32 %v604, %v606
    %v608 = vrot.slane %v297, %v607
    %v610 = vunpack.c.l.s4 1966171168
    %v611 = vunpack.c.0.s8 %v610
    %v612 = vlaneseq
    %v613 = vshrl.u32 %v612, 7
    %v614 = vsub.s32 %v611, %v613
    %v615 = vrot.slane %v601, %v614
    %v616 = vcombine.high %v608, %v608
    %v617 = vcombine.high %v615, %v615
    %v619 = vunpack.c.l.s4 1966171168
    %v620 = vunpack.c.0.s8 %v619
    %v621 = vlaneseq
    %v622 = vshrl.u32 %v621, 7
    %v623 = vsub.s32 %v620, %v622
    %v624 = vrot.slane %v608, %v623
    %v626 = vunpack.c.l.s4 1966171168
    %v627 = vunpack.c.0.s8 %v626
    %v628 = vlaneseq
    %v629 = vshrl.u32 %v628, 7
    %v630 = vsub.s32 %v627, %v629
    %v631 = vrot.slane %v615, %v630
    %v633 = vunpack.c.l.s4 1966171168
    %v634 = vunpack.c.0.s8 %v633
    %v635 = vlaneseq
    %v636 = vshrl.u32 %v635, 7
    %v637 = vsub.s32 %v634, %v636
    %v638 = vrot.slane %v616, %v637
    %v640 = vunpack.c.l.s4 1966171168
    %v641 = vunpack.c.0.s8 %v640
    %v642 = vlaneseq
    %v643 = vshrl.u32 %v642, 7
    %v644 = vsub.s32 %v641, %v643
    %v645 = vrot.slane %v617, %v644
    %v646 = vcombine.high %v624, %v624
    %v647 = vcombine.high %v631, %v631
    %v648 = vcombine.high %v638, %v638
    %v649 = vcombine.high %v645, %v645
    %v650 = vcombine.high %v298, %v298
    %v652 = vunpack.c.l.s4 1966171168
    %v653 = vunpack.c.0.s8 %v652
    %v654 = vlaneseq
    %v655 = vshrl.u32 %v654, 7
    %v656 = vsub.s32 %v653, %v655
    %v657 = vrot.slane %v298, %v656
    %v659 = vunpack.c.l.s4 1966171168
    %v660 = vunpack.c.0.s8 %v659
    %v661 = vlaneseq
    %v662 = vshrl.u32 %v661, 7
    %v663 = vsub.s32 %v660, %v662
    %v664 = vrot.slane %v650, %v663
    %v665 = vcombine.high %v657, %v657
    %v666 = vcombine.high %v664, %v664
    %v668 = vunpack.c.l.s4 1966171168
    %v669 = vunpack.c.0.s8 %v668
    %v670 = vlaneseq
    %v671 = vshrl.u32 %v670, 7
    %v672 = vsub.s32 %v669, %v671
    %v673 = vrot.slane %v657, %v672
    %v675 = vunpack.c.l.s4 1966171168
    %v676 = vunpack.c.0.s8 %v675
    %v677 = vlaneseq
    %v678 = vshrl.u32 %v677, 7
    %v679 = vsub.s32 %v676, %v678
    %v680 = vrot.slane %v664, %v679
    %v682 = vunpack.c.l.s4 1966171168
    %v683 = vunpack.c.0.s8 %v682
    %v684 = vlaneseq
    %v685 = vshrl.u32 %v684, 7
    %v686 = vsub.s32 %v683, %v685
    %v687 = vrot.slane %v665, %v686
    %v689 = vunpack.c.l.s4 1966171168
    %v690 = vunpack.c.0.s8 %v689
    %v691 = vlaneseq
    %v692 = vshrl.u32 %v691, 7
    %v693 = vsub.s32 %v690, %v692
    %v694 = vrot.slane %v666, %v693
    %v695 = vcombine.high %v673, %v673
    %v696 = vcombine.high %v680, %v680
    %v697 = vcombine.high %v687, %v687
    %v698 = vcombine.high %v694, %v694
    %v699 = vlaneseq
    %v700 = vshrl.u32 %v699, 7
    %v701 = vsub.s32 0, %v700
    %v702 = vrot.slane %v330, %v701
    %v703 = vlaneseq
    %v704 = vshrl.u32 %v703, 7
    %v705 = vsub.s32 0, %v704
    %v706 = vrot.slane %v344, %v705
    %v707 = vlaneseq
    %v708 = vshrl.u32 %v707, 7
    %v709 = vsub.s32 0, %v708
    %v710 = vrot.slane %v352, %v709
    %v711 = vlaneseq
    %v712 = vshrl.u32 %v711, 7
    %v713 = vsub.s32 0, %v712
    %v714 = vrot.slane %v354, %v713
    %v715 = vlaneseq
    %v716 = vshrl.u32 %v715, 7
    %v717 = vsub.s32 0, %v716
    %v718 = vrot.slane %v337, %v717
    %v719 = vlaneseq
    %v720 = vshrl.u32 %v719, 7
    %v721 = vsub.s32 0, %v720
    %v722 = vrot.slane %v351, %v721
    %v723 = vlaneseq
    %v724 = vshrl.u32 %v723, 7
    %v725 = vsub.s32 0, %v724
    %v726 = vrot.slane %v353, %v725
    %v727 = vlaneseq
    %v728 = vshrl.u32 %v727, 7
    %v729 = vsub.s32 0, %v728
    %v730 = vrot.slane %v355, %v729
    %v731 = vlaneseq
    %v732 = vshrl.u32 %v731, 7
    %v733 = vsub.s32 0, %v732
    %v734 = vrot.slane %v379, %v733
    %v735 = vlaneseq
    %v736 = vshrl.u32 %v735, 7
    %v737 = vsub.s32 0, %v736
    %v738 = vrot.slane %v393, %v737
    %v739 = vlaneseq
    %v740 = vshrl.u32 %v739, 7
    %v741 = vsub.s32 0, %v740
    %v742 = vrot.slane %v401, %v741
    %v743 = vlaneseq
    %v744 = vshrl.u32 %v743, 7
    %v745 = vsub.s32 0, %v744
    %v746 = vrot.slane %v403, %v745
    %v747 = vlaneseq
    %v748 = vshrl.u32 %v747, 7
    %v749 = vsub.s32 0, %v748
    %v750 = vrot.slane %v386, %v749
    %v751 = vlaneseq
    %v752 = vshrl.u32 %v751, 7
    %v753 = vsub.s32 0, %v752
    %v754 = vrot.slane %v400, %v753
    %v755 = vlaneseq
    %v756 = vshrl.u32 %v755, 7
    %v757 = vsub.s32 0, %v756
    %v758 = vrot.slane %v402, %v757
    %v759 = vlaneseq
    %v760 = vshrl.u32 %v759, 7
    %v761 = vsub.s32 0, %v760
    %v762 = vrot.slane %v404, %v761
    %v763 = vlaneseq
    %v764 = vshrl.u32 %v763, 7
    %v765 = vsub.s32 0, %v764
    %v766 = vrot.slane %v428, %v765
    %v767 = vlaneseq
    %v768 = vshrl.u32 %v767, 7
    %v769 = vsub.s32 0, %v768
    %v770 = vrot.slane %v442, %v769
    %v771 = vlaneseq
    %v772 = vshrl.u32 %v771, 7
    %v773 = vsub.s32 0, %v772
    %v774 = vrot.slane %v450, %v773
    %v775 = vlaneseq
    %v776 = vshrl.u32 %v775, 7
    %v777 = vsub.s32 0, %v776
    %v778 = vrot.slane %v452, %v777
    %v779 = vlaneseq
    %v780 = vshrl.u32 %v779, 7
    %v781 = vsub.s32 0, %v780
    %v782 = vrot.slane %v435, %v781
    %v783 = vlaneseq
    %v784 = vshrl.u32 %v783, 7
    %v785 = vsub.s32 0, %v784
    %v786 = vrot.slane %v449, %v785
    %v787 = vlaneseq
    %v788 = vshrl.u32 %v787, 7
    %v789 = vsub.s32 0, %v788
    %v790 = vrot.slane %v451, %v789
    %v791 = vlaneseq
    %v792 = vshrl.u32 %v791, 7
    %v793 = vsub.s32 0, %v792
    %v794 = vrot.slane %v453, %v793
    %v795 = vlaneseq
    %v796 = vshrl.u32 %v795, 7
    %v797 = vsub.s32 0, %v796
    %v798 = vrot.slane %v477, %v797
    %v799 = vlaneseq
    %v800 = vshrl.u32 %v799, 7
    %v801 = vsub.s32 0, %v800
    %v802 = vrot.slane %v491, %v801
    %v803 = vlaneseq
    %v804 = vshrl.u32 %v803, 7
    %v805 = vsub.s32 0, %v804
    %v806 = vrot.slane %v499, %v805
    %v807 = vlaneseq
    %v808 = vshrl.u32 %v807, 7
    %v809 = vsub.s32 0, %v808
    %v810 = vrot.slane %v501, %v809
    %v811 = vlaneseq
    %v812 = vshrl.u32 %v811, 7
    %v813 = vsub.s32 0, %v812
    %v814 = vrot.slane %v484, %v813
    %v815 = vlaneseq
    %v816 = vshrl.u32 %v815, 7
    %v817 = vsub.s32 0, %v816
    %v818 = vrot.slane %v498, %v817
    %v819 = vlaneseq
    %v820 = vshrl.u32 %v819, 7
    %v821 = vsub.s32 0, %v820
    %v822 = vrot.slane %v500, %v821
    %v823 = vlaneseq
    %v824 = vshrl.u32 %v823, 7
    %v825 = vsub.s32 0, %v824
    %v826 = vrot.slane %v502, %v825
    %v827 = vlaneseq
    %v828 = vshrl.u32 %v827, 7
    %v829 = vsub.s32 0, %v828
    %v830 = vrot.slane %v526, %v829
    %v831 = vlaneseq
    %v832 = vshrl.u32 %v831, 7
    %v833 = vsub.s32 0, %v832
    %v834 = vrot.slane %v540, %v833
    %v835 = vlaneseq
    %v836 = vshrl.u32 %v835, 7
    %v837 = vsub.s32 0, %v836
    %v838 = vrot.slane %v548, %v837
    %v839 = vlaneseq
    %v840 = vshrl.u32 %v839, 7
    %v841 = vsub.s32 0, %v840
    %v842 = vrot.slane %v550, %v841
    %v843 = vlaneseq
    %v844 = vshrl.u32 %v843, 7
    %v845 = vsub.s32 0, %v844
    %v846 = vrot.slane %v533, %v845
    %v847 = vlaneseq
    %v848 = vshrl.u32 %v847, 7
    %v849 = vsub.s32 0, %v848
    %v850 = vrot.slane %v547, %v849
    %v851 = vlaneseq
    %v852 = vshrl.u32 %v851, 7
    %v853 = vsub.s32 0, %v852
    %v854 = vrot.slane %v549, %v853
    %v855 = vlaneseq
    %v856 = vshrl.u32 %v855, 7
    %v857 = vsub.s32 0, %v856
    %v858 = vrot.slane %v551, %v857
    %v859 = vlaneseq
    %v860 = vshrl.u32 %v859, 7
    %v861 = vsub.s32 0, %v860
    %v862 = vrot.slane %v575, %v861
    %v863 = vlaneseq
    %v864 = vshrl.u32 %v863, 7
    %v865 = vsub.s32 0, %v864
    %v866 = vrot.slane %v589, %v865
    %v867 = vlaneseq
    %v868 = vshrl.u32 %v867, 7
    %v869 = vsub.s32 0, %v868
    %v870 = vrot.slane %v597, %v869
    %v871 = vlaneseq
    %v872 = vshrl.u32 %v871, 7
    %v873 = vsub.s32 0, %v872
    %v874 = vrot.slane %v599, %v873
    %v875 = vlaneseq
    %v876 = vshrl.u32 %v875, 7
    %v877 = vsub.s32 0, %v876
    %v878 = vrot.slane %v582, %v877
    %v879 = vlaneseq
    %v880 = vshrl.u32 %v879, 7
    %v881 = vsub.s32 0, %v880
    %v882 = vrot.slane %v596, %v881
    %v883 = vlaneseq
    %v884 = vshrl.u32 %v883, 7
    %v885 = vsub.s32 0, %v884
    %v886 = vrot.slane %v598, %v885
    %v887 = vlaneseq
    %v888 = vshrl.u32 %v887, 7
    %v889 = vsub.s32 0, %v888
    %v890 = vrot.slane %v600, %v889
    %v891 = vlaneseq
    %v892 = vshrl.u32 %v891, 7
    %v893 = vsub.s32 0, %v892
    %v894 = vrot.slane %v624, %v893
    %v895 = vlaneseq
    %v896 = vshrl.u32 %v895, 7
    %v897 = vsub.s32 0, %v896
    %v898 = vrot.slane %v638, %v897
    %v899 = vlaneseq
    %v900 = vshrl.u32 %v899, 7
    %v901 = vsub.s32 0, %v900
    %v902 = vrot.slane %v646, %v901
    %v903 = vlaneseq
    %v904 = vshrl.u32 %v903, 7
    %v905 = vsub.s32 0, %v904
    %v906 = vrot.slane %v648, %v905
    %v907 = vlaneseq
    %v908 = vshrl.u32 %v907, 7
    %v909 = vsub.s32 0, %v908
    %v910 = vrot.slane %v631, %v909
    %v911 = vlaneseq
    %v912 = vshrl.u32 %v911, 7
    %v913 = vsub.s32 0, %v912
    %v914 = vrot.slane %v645, %v913
    %v915 = vlaneseq
    %v916 = vshrl.u32 %v915, 7
    %v917 = vsub.s32 0, %v916
    %v918 = vrot.slane %v647, %v917
    %v919 = vlaneseq
    %v920 = vshrl.u32 %v919, 7
    %v921 = vsub.s32 0, %v920
    %v922 = vrot.slane %v649, %v921
    %v923 = vlaneseq
    %v924 = vshrl.u32 %v923, 7
    %v925 = vsub.s32 0, %v924
    %v926 = vrot.slane %v673, %v925
    %v927 = vlaneseq
    %v928 = vshrl.u32 %v927, 7
    %v929 = vsub.s32 0, %v928
    %v930 = vrot.slane %v687, %v929
    %v931 = vlaneseq
    %v932 = vshrl.u32 %v931, 7
    %v933 = vsub.s32 0, %v932
    %v934 = vrot.slane %v695, %v933
    %v935 = vlaneseq
    %v936 = vshrl.u32 %v935, 7
    %v937 = vsub.s32 0, %v936
    %v938 = vrot.slane %v697, %v937
    %v939 = vlaneseq
    %v940 = vshrl.u32 %v939, 7
    %v941 = vsub.s32 0, %v940
    %v942 = vrot.slane %v680, %v941
    %v943 = vlaneseq
    %v944 = vshrl.u32 %v943, 7
    %v945 = vsub.s32 0, %v944
    %v946 = vrot.slane %v694, %v945
    %v947 = vlaneseq
    %v948 = vshrl.u32 %v947, 7
    %v949 = vsub.s32 0, %v948
    %v950 = vrot.slane %v696, %v949
    %v951 = vlaneseq
    %v952 = vshrl.u32 %v951, 7
    %v953 = vsub.s32 0, %v952
    %v954 = vrot.slane %v698, %v953
    %v1019 = vadd.f32 %v702, %v255
    %v1020 = vadd.f32 %v702, %v258
    %v1021 = vadd.f32 %v702, %v263
    %v1022 = vadd.f32 %v702, %v266
    %v1023 = vadd.f32 %v702, %v271
    %v1024 = vadd.f32 %v702, %v274
    %v1025 = vadd.f32 %v702, %v279
    %v1026 = vadd.f32 %v702, %v282
    %v1027 = vadd.f32 %v706, %v255
    %v1028 = vadd.f32 %v706, %v258
    %v1029 = vadd.f32 %v706, %v263
    %v1030 = vadd.f32 %v706, %v266
    %v1031 = vadd.f32 %v706, %v271
    %v1032 = vadd.f32 %v706, %v274
    %v1033 = vadd.f32 %v706, %v279
    %v1034 = vadd.f32 %v706, %v282
    %v1035 = vadd.f32 %v710, %v255
    %v1036 = vadd.f32 %v710, %v258
    %v1037 = vadd.f32 %v710, %v263
    %v1038 = vadd.f32 %v710, %v266
    %v1039 = vadd.f32 %v710, %v271
    %v1040 = vadd.f32 %v710, %v274
    %v1041 = vadd.f32 %v710, %v279
    %v1042 = vadd.f32 %v710, %v282
    %v1043 = vadd.f32 %v714, %v255
    %v1044 = vadd.f32 %v714, %v258
    %v1045 = vadd.f32 %v714, %v263
    %v1046 = vadd.f32 %v714, %v266
    %v1047 = vadd.f32 %v714, %v271
    %v1048 = vadd.f32 %v714, %v274
    %v1049 = vadd.f32 %v714, %v279
    %v1050 = vadd.f32 %v714, %v282
    %v1051 = vadd.f32 %v718, %v255
    %v1052 = vadd.f32 %v718, %v258
    %v1053 = vadd.f32 %v718, %v263
    %v1054 = vadd.f32 %v718, %v266
    %v1055 = vadd.f32 %v718, %v271
    %v1056 = vadd.f32 %v718, %v274
    %v1057 = vadd.f32 %v718, %v279
    %v1058 = vadd.f32 %v718, %v282
    %v1059 = vadd.f32 %v722, %v255
    %v1060 = vadd.f32 %v722, %v258
    %v1061 = vadd.f32 %v722, %v263
    %v1062 = vadd.f32 %v722, %v266
    %v1063 = vadd.f32 %v722, %v271
    %v1064 = vadd.f32 %v722, %v274
    %v1065 = vadd.f32 %v722, %v279
    %v1066 = vadd.f32 %v722, %v282
    %v1067 = vadd.f32 %v726, %v255
    %v1068 = vadd.f32 %v726, %v258
    %v1069 = vadd.f32 %v726, %v263
    %v1070 = vadd.f32 %v726, %v266
    %v1071 = vadd.f32 %v726, %v271
    %v1072 = vadd.f32 %v726, %v274
    %v1073 = vadd.f32 %v726, %v279
    %v1074 = vadd.f32 %v726, %v282
    %v1075 = vadd.f32 %v730, %v255
    %v1076 = vadd.f32 %v730, %v258
    %v1077 = vadd.f32 %v730, %v263
    %v1078 = vadd.f32 %v730, %v266
    %v1079 = vadd.f32 %v730, %v271
    %v1080 = vadd.f32 %v730, %v274
    %v1081 = vadd.f32 %v730, %v279
    %v1082 = vadd.f32 %v730, %v282
    %v1083 = vadd.f32 %v734, %v255
    %v1084 = vadd.f32 %v734, %v258
    %v1085 = vadd.f32 %v734, %v263
    %v1086 = vadd.f32 %v734, %v266
    %v1087 = vadd.f32 %v734, %v271
    %v1088 = vadd.f32 %v734, %v274
    %v1089 = vadd.f32 %v734, %v279
    %v1090 = vadd.f32 %v734, %v282
    %v1091 = vadd.f32 %v738, %v255
    %v1092 = vadd.f32 %v738, %v258
    %v1093 = vadd.f32 %v738, %v263
    %v1094 = vadd.f32 %v738, %v266
    %v1095 = vadd.f32 %v738, %v271
    %v1096 = vadd.f32 %v738, %v274
    %v1097 = vadd.f32 %v738, %v279
    %v1098 = vadd.f32 %v738, %v282
    %v1099 = vadd.f32 %v742, %v255
    %v1100 = vadd.f32 %v742, %v258
    %v1101 = vadd.f32 %v742, %v263
    %v1102 = vadd.f32 %v742, %v266
    %v1103 = vadd.f32 %v742, %v271
    %v1104 = vadd.f32 %v742, %v274
    %v1105 = vadd.f32 %v742, %v279
    %v1106 = vadd.f32 %v742, %v282
    %v1107 = vadd.f32 %v746, %v255
    %v1108 = vadd.f32 %v746, %v258
    %v1109 = vadd.f32 %v746, %v263
    %v1110 = vadd.f32 %v746, %v266
    %v1111 = vadd.f32 %v746, %v271
    %v1112 = vadd.f32 %v746, %v274
    %v1113 = vadd.f32 %v746, %v279
    %v1114 = vadd.f32 %v746, %v282
    %v1115 = vadd.f32 %v750, %v255
    %v1116 = vadd.f32 %v750, %v258
    %v1117 = vadd.f32 %v750, %v263
    %v1118 = vadd.f32 %v750, %v266
    %v1119 = vadd.f32 %v750, %v271
    %v1120 = vadd.f32 %v750, %v274
    %v1121 = vadd.f32 %v750, %v279
    %v1122 = vadd.f32 %v750, %v282
    %v1123 = vadd.f32 %v754, %v255
    %v1124 = vadd.f32 %v754, %v258
    %v1125 = vadd.f32 %v754, %v263
    %v1126 = vadd.f32 %v754, %v266
    %v1127 = vadd.f32 %v754, %v271
    %v1128 = vadd.f32 %v754, %v274
    %v1129 = vadd.f32 %v754, %v279
    %v1130 = vadd.f32 %v754, %v282
    %v1131 = vadd.f32 %v758, %v255
    %v1132 = vadd.f32 %v758, %v258
    %v1133 = vadd.f32 %v758, %v263
    %v1134 = vadd.f32 %v758, %v266
    %v1135 = vadd.f32 %v758, %v271
    %v1136 = vadd.f32 %v758, %v274
    %v1137 = vadd.f32 %v758, %v279
    %v1138 = vadd.f32 %v758, %v282
    %v1139 = vadd.f32 %v762, %v255
    %v1140 = vadd.f32 %v762, %v258
    %v1141 = vadd.f32 %v762, %v263
    %v1142 = vadd.f32 %v762, %v266
    %v1143 = vadd.f32 %v762, %v271
    %v1144 = vadd.f32 %v762, %v274
    %v1145 = vadd.f32 %v762, %v279
    %v1146 = vadd.f32 %v762, %v282
    %v1147 = vadd.f32 %v766, %v255
    %v1148 = vadd.f32 %v766, %v258
    %v1149 = vadd.f32 %v766, %v263
    %v1150 = vadd.f32 %v766, %v266
    %v1151 = vadd.f32 %v766, %v271
    %v1152 = vadd.f32 %v766, %v274
    %v1153 = vadd.f32 %v766, %v279
    %v1154 = vadd.f32 %v766, %v282
    %v1155 = vadd.f32 %v770, %v255
    %v1156 = vadd.f32 %v770, %v258
    %v1157 = vadd.f32 %v770, %v263
    %v1158 = vadd.f32 %v770, %v266
    %v1159 = vadd.f32 %v770, %v271
    %v1160 = vadd.f32 %v770, %v274
    %v1161 = vadd.f32 %v770, %v279
    %v1162 = vadd.f32 %v770, %v282
    %v1163 = vadd.f32 %v774, %v255
    %v1164 = vadd.f32 %v774, %v258
    %v1165 = vadd.f32 %v774, %v263
    %v1166 = vadd.f32 %v774, %v266
    %v1167 = vadd.f32 %v774, %v271
    %v1168 = vadd.f32 %v774, %v274
    %v1169 = vadd.f32 %v774, %v279
    %v1170 = vadd.f32 %v774, %v282
    %v1171 = vadd.f32 %v778, %v255
    %v1172 = vadd.f32 %v778, %v258
    %v1173 = vadd.f32 %v778, %v263
    %v1174 = vadd.f32 %v778, %v266
    %v1175 = vadd.f32 %v778, %v271
    %v1176 = vadd.f32 %v778, %v274
    %v1177 = vadd.f32 %v778, %v279
    %v1178 = vadd.f32 %v778, %v282
    %v1179 = vadd.f32 %v782, %v255
    %v1180 = vadd.f32 %v782, %v258
    %v1181 = vadd.f32 %v782, %v263
    %v1182 = vadd.f32 %v782, %v266
    %v1183 = vadd.f32 %v782, %v271
    %v1184 = vadd.f32 %v782, %v274
    %v1185 = vadd.f32 %v782, %v279
    %v1186 = vadd.f32 %v782, %v282
    %v1187 = vadd.f32 %v786, %v255
    %v1188 = vadd.f32 %v786, %v258
    %v1189 = vadd.f32 %v786, %v263
    %v1190 = vadd.f32 %v786, %v266
    %v1191 = vadd.f32 %v786, %v271
    %v1192 = vadd.f32 %v786, %v274
    %v1193 = vadd.f32 %v786, %v279
    %v1194 = vadd.f32 %v786, %v282
    %v1195 = vadd.f32 %v790, %v255
    %v1196 = vadd.f32 %v790, %v258
    %v1197 = vadd.f32 %v790, %v263
    %v1198 = vadd.f32 %v790, %v266
    %v1199 = vadd.f32 %v790, %v271
    %v1200 = vadd.f32 %v790, %v274
    %v1201 = vadd.f32 %v790, %v279
    %v1202 = vadd.f32 %v790, %v282
    %v1203 = vadd.f32 %v794, %v255
    %v1204 = vadd.f32 %v794, %v258
    %v1205 = vadd.f32 %v794, %v263
    %v1206 = vadd.f32 %v794, %v266
    %v1207 = vadd.f32 %v794, %v271
    %v1208 = vadd.f32 %v794, %v274
    %v1209 = vadd.f32 %v794, %v279
    %v1210 = vadd.f32 %v794, %v282
    %v1211 = vadd.f32 %v798, %v255
    %v1212 = vadd.f32 %v798, %v258
    %v1213 = vadd.f32 %v798, %v263
    %v1214 = vadd.f32 %v798, %v266
    %v1215 = vadd.f32 %v798, %v271
    %v1216 = vadd.f32 %v798, %v274
    %v1217 = vadd.f32 %v798, %v279
    %v1218 = vadd.f32 %v798, %v282
    %v1219 = vadd.f32 %v802, %v255
    %v1220 = vadd.f32 %v802, %v258
    %v1221 = vadd.f32 %v802, %v263
    %v1222 = vadd.f32 %v802, %v266
    %v1223 = vadd.f32 %v802, %v271
    %v1224 = vadd.f32 %v802, %v274
    %v1225 = vadd.f32 %v802, %v279
    %v1226 = vadd.f32 %v802, %v282
    %v1227 = vadd.f32 %v806, %v255
    %v1228 = vadd.f32 %v806, %v258
    %v1229 = vadd.f32 %v806, %v263
    %v1230 = vadd.f32 %v806, %v266
    %v1231 = vadd.f32 %v806, %v271
    %v1232 = vadd.f32 %v806, %v274
    %v1233 = vadd.f32 %v806, %v279
    %v1234 = vadd.f32 %v806, %v282
    %v1235 = vadd.f32 %v810, %v255
    %v1236 = vadd.f32 %v810, %v258
    %v1237 = vadd.f32 %v810, %v263
    %v1238 = vadd.f32 %v810, %v266
    %v1239 = vadd.f32 %v810, %v271
    %v1240 = vadd.f32 %v810, %v274
    %v1241 = vadd.f32 %v810, %v279
    %v1242 = vadd.f32 %v810, %v282
    %v1243 = vadd.f32 %v814, %v255
    %v1244 = vadd.f32 %v814, %v258
    %v1245 = vadd.f32 %v814, %v263
    %v1246 = vadd.f32 %v814, %v266
    %v1247 = vadd.f32 %v814, %v271
    %v1248 = vadd.f32 %v814, %v274
    %v1249 = vadd.f32 %v814, %v279
    %v1250 = vadd.f32 %v814, %v282
    %v1251 = vadd.f32 %v818, %v255
    %v1252 = vadd.f32 %v818, %v258
    %v1253 = vadd.f32 %v818, %v263
    %v1254 = vadd.f32 %v818, %v266
    %v1255 = vadd.f32 %v818, %v271
    %v1256 = vadd.f32 %v818, %v274
    %v1257 = vadd.f32 %v818, %v279
    %v1258 = vadd.f32 %v818, %v282
    %v1259 = vadd.f32 %v822, %v255
    %v1260 = vadd.f32 %v822, %v258
    %v1261 = vadd.f32 %v822, %v263
    %v1262 = vadd.f32 %v822, %v266
    %v1263 = vadd.f32 %v822, %v271
    %v1264 = vadd.f32 %v822, %v274
    %v1265 = vadd.f32 %v822, %v279
    %v1266 = vadd.f32 %v822, %v282
    %v1267 = vadd.f32 %v826, %v255
    %v1268 = vadd.f32 %v826, %v258
    %v1269 = vadd.f32 %v826, %v263
    %v1270 = vadd.f32 %v826, %v266
    %v1271 = vadd.f32 %v826, %v271
    %v1272 = vadd.f32 %v826, %v274
    %v1273 = vadd.f32 %v826, %v279
    %v1274 = vadd.f32 %v826, %v282
    %v1275 = vadd.f32 %v830, %v255
    %v1276 = vadd.f32 %v830, %v258
    %v1277 = vadd.f32 %v830, %v263
    %v1278 = vadd.f32 %v830, %v266
    %v1279 = vadd.f32 %v830, %v271
    %v1280 = vadd.f32 %v830, %v274
    %v1281 = vadd.f32 %v830, %v279
    %v1282 = vadd.f32 %v830, %v282
    %v1283 = vadd.f32 %v834, %v255
    %v1284 = vadd.f32 %v834, %v258
    %v1285 = vadd.f32 %v834, %v263
    %v1286 = vadd.f32 %v834, %v266
    %v1287 = vadd.f32 %v834, %v271
    %v1288 = vadd.f32 %v834, %v274
    %v1289 = vadd.f32 %v834, %v279
    %v1290 = vadd.f32 %v834, %v282
    %v1291 = vadd.f32 %v838, %v255
    %v1292 = vadd.f32 %v838, %v258
    %v1293 = vadd.f32 %v838, %v263
    %v1294 = vadd.f32 %v838, %v266
    %v1295 = vadd.f32 %v838, %v271
    %v1296 = vadd.f32 %v838, %v274
    %v1297 = vadd.f32 %v838, %v279
    %v1298 = vadd.f32 %v838, %v282
    %v1299 = vadd.f32 %v842, %v255
    %v1300 = vadd.f32 %v842, %v258
    %v1301 = vadd.f32 %v842, %v263
    %v1302 = vadd.f32 %v842, %v266
    %v1303 = vadd.f32 %v842, %v271
    %v1304 = vadd.f32 %v842, %v274
    %v1305 = vadd.f32 %v842, %v279
    %v1306 = vadd.f32 %v842, %v282
    %v1307 = vadd.f32 %v846, %v255
    %v1308 = vadd.f32 %v846, %v258
    %v1309 = vadd.f32 %v846, %v263
    %v1310 = vadd.f32 %v846, %v266
    %v1311 = vadd.f32 %v846, %v271
    %v1312 = vadd.f32 %v846, %v274
    %v1313 = vadd.f32 %v846, %v279
    %v1314 = vadd.f32 %v846, %v282
    %v1315 = vadd.f32 %v850, %v255
    %v1316 = vadd.f32 %v850, %v258
    %v1317 = vadd.f32 %v850, %v263
    %v1318 = vadd.f32 %v850, %v266
    %v1319 = vadd.f32 %v850, %v271
    %v1320 = vadd.f32 %v850, %v274
    %v1321 = vadd.f32 %v850, %v279
    %v1322 = vadd.f32 %v850, %v282
    %v1323 = vadd.f32 %v854, %v255
    %v1324 = vadd.f32 %v854, %v258
    %v1325 = vadd.f32 %v854, %v263
    %v1326 = vadd.f32 %v854, %v266
    %v1327 = vadd.f32 %v854, %v271
    %v1328 = vadd.f32 %v854, %v274
    %v1329 = vadd.f32 %v854, %v279
    %v1330 = vadd.f32 %v854, %v282
    %v1331 = vadd.f32 %v858, %v255
    %v1332 = vadd.f32 %v858, %v258
    %v1333 = vadd.f32 %v858, %v263
    %v1334 = vadd.f32 %v858, %v266
    %v1335 = vadd.f32 %v858, %v271
    %v1336 = vadd.f32 %v858, %v274
    %v1337 = vadd.f32 %v858, %v279
    %v1338 = vadd.f32 %v858, %v282
    %v1339 = vadd.f32 %v862, %v255
    %v1340 = vadd.f32 %v862, %v258
    %v1341 = vadd.f32 %v862, %v263
    %v1342 = vadd.f32 %v862, %v266
    %v1343 = vadd.f32 %v862, %v271
    %v1344 = vadd.f32 %v862, %v274
    %v1345 = vadd.f32 %v862, %v279
    %v1346 = vadd.f32 %v862, %v282
    %v1347 = vadd.f32 %v866, %v255
    %v1348 = vadd.f32 %v866, %v258
    %v1349 = vadd.f32 %v866, %v263
    %v1350 = vadd.f32 %v866, %v266
    %v1351 = vadd.f32 %v866, %v271
    %v1352 = vadd.f32 %v866, %v274
    %v1353 = vadd.f32 %v866, %v279
    %v1354 = vadd.f32 %v866, %v282
    %v1355 = vadd.f32 %v870, %v255
    %v1356 = vadd.f32 %v870, %v258
    %v1357 = vadd.f32 %v870, %v263
    %v1358 = vadd.f32 %v870, %v266
    %v1359 = vadd.f32 %v870, %v271
    %v1360 = vadd.f32 %v870, %v274
    %v1361 = vadd.f32 %v870, %v279
    %v1362 = vadd.f32 %v870, %v282
    %v1363 = vadd.f32 %v874, %v255
    %v1364 = vadd.f32 %v874, %v258
    %v1365 = vadd.f32 %v874, %v263
    %v1366 = vadd.f32 %v874, %v266
    %v1367 = vadd.f32 %v874, %v271
    %v1368 = vadd.f32 %v874, %v274
    %v1369 = vadd.f32 %v874, %v279
    %v1370 = vadd.f32 %v874, %v282
    %v1371 = vadd.f32 %v878, %v255
    %v1372 = vadd.f32 %v878, %v258
    %v1373 = vadd.f32 %v878, %v263
    %v1374 = vadd.f32 %v878, %v266
    %v1375 = vadd.f32 %v878, %v271
    %v1376 = vadd.f32 %v878, %v274
    %v1377 = vadd.f32 %v878, %v279
    %v1378 = vadd.f32 %v878, %v282
    %v1379 = vadd.f32 %v882, %v255
    %v1380 = vadd.f32 %v882, %v258
    %v1381 = vadd.f32 %v882, %v263
    %v1382 = vadd.f32 %v882, %v266
    %v1383 = vadd.f32 %v882, %v271
    %v1384 = vadd.f32 %v882, %v274
    %v1385 = vadd.f32 %v882, %v279
    %v1386 = vadd.f32 %v882, %v282
    %v1387 = vadd.f32 %v886, %v255
    %v1388 = vadd.f32 %v886, %v258
    %v1389 = vadd.f32 %v886, %v263
    %v1390 = vadd.f32 %v886, %v266
    %v1391 = vadd.f32 %v886, %v271
    %v1392 = vadd.f32 %v886, %v274
    %v1393 = vadd.f32 %v886, %v279
    %v1394 = vadd.f32 %v886, %v282
    %v1395 = vadd.f32 %v890, %v255
    %v1396 = vadd.f32 %v890, %v258
    %v1397 = vadd.f32 %v890, %v263
    %v1398 = vadd.f32 %v890, %v266
    %v1399 = vadd.f32 %v890, %v271
    %v1400 = vadd.f32 %v890, %v274
    %v1401 = vadd.f32 %v890, %v279
    %v1402 = vadd.f32 %v890, %v282
    %v1403 = vadd.f32 %v894, %v255
    %v1404 = vadd.f32 %v894, %v258
    %v1405 = vadd.f32 %v894, %v263
    %v1406 = vadd.f32 %v894, %v266
    %v1407 = vadd.f32 %v894, %v271
    %v1408 = vadd.f32 %v894, %v274
    %v1409 = vadd.f32 %v894, %v279
    %v1410 = vadd.f32 %v894, %v282
    %v1411 = vadd.f32 %v898, %v255
    %v1412 = vadd.f32 %v898, %v258
    %v1413 = vadd.f32 %v898, %v263
    %v1414 = vadd.f32 %v898, %v266
    %v1415 = vadd.f32 %v898, %v271
    %v1416 = vadd.f32 %v898, %v274
    %v1417 = vadd.f32 %v898, %v279
    %v1418 = vadd.f32 %v898, %v282
    %v1419 = vadd.f32 %v902, %v255
    %v1420 = vadd.f32 %v902, %v258
    %v1421 = vadd.f32 %v902, %v263
    %v1422 = vadd.f32 %v902, %v266
    %v1423 = vadd.f32 %v902, %v271
    %v1424 = vadd.f32 %v902, %v274
    %v1425 = vadd.f32 %v902, %v279
    %v1426 = vadd.f32 %v902, %v282
    %v1427 = vadd.f32 %v906, %v255
    %v1428 = vadd.f32 %v906, %v258
    %v1429 = vadd.f32 %v906, %v263
    %v1430 = vadd.f32 %v906, %v266
    %v1431 = vadd.f32 %v906, %v271
    %v1432 = vadd.f32 %v906, %v274
    %v1433 = vadd.f32 %v906, %v279
    %v1434 = vadd.f32 %v906, %v282
    %v1435 = vadd.f32 %v910, %v255
    %v1436 = vadd.f32 %v910, %v258
    %v1437 = vadd.f32 %v910, %v263
    %v1438 = vadd.f32 %v910, %v266
    %v1439 = vadd.f32 %v910, %v271
    %v1440 = vadd.f32 %v910, %v274
    %v1441 = vadd.f32 %v910, %v279
    %v1442 = vadd.f32 %v910, %v282
    %v1443 = vadd.f32 %v914, %v255
    %v1444 = vadd.f32 %v914, %v258
    %v1445 = vadd.f32 %v914, %v263
    %v1446 = vadd.f32 %v914, %v266
    %v1447 = vadd.f32 %v914, %v271
    %v1448 = vadd.f32 %v914, %v274
    %v1449 = vadd.f32 %v914, %v279
    %v1450 = vadd.f32 %v914, %v282
    %v1451 = vadd.f32 %v918, %v255
    %v1452 = vadd.f32 %v918, %v258
    %v1453 = vadd.f32 %v918, %v263
    %v1454 = vadd.f32 %v918, %v266
    %v1455 = vadd.f32 %v918, %v271
    %v1456 = vadd.f32 %v918, %v274
    %v1457 = vadd.f32 %v918, %v279
    %v1458 = vadd.f32 %v918, %v282
    %v1459 = vadd.f32 %v922, %v255
    %v1460 = vadd.f32 %v922, %v258
    %v1461 = vadd.f32 %v922, %v263
    %v1462 = vadd.f32 %v922, %v266
    %v1463 = vadd.f32 %v922, %v271
    %v1464 = vadd.f32 %v922, %v274
    %v1465 = vadd.f32 %v922, %v279
    %v1466 = vadd.f32 %v922, %v282
    %v1467 = vadd.f32 %v926, %v255
    %v1468 = vadd.f32 %v926, %v258
    %v1469 = vadd.f32 %v926, %v263
    %v1470 = vadd.f32 %v926, %v266
    %v1471 = vadd.f32 %v926, %v271
    %v1472 = vadd.f32 %v926, %v274
    %v1473 = vadd.f32 %v926, %v279
    %v1474 = vadd.f32 %v926, %v282
    %v1475 = vadd.f32 %v930, %v255
    %v1476 = vadd.f32 %v930, %v258
    %v1477 = vadd.f32 %v930, %v263
    %v1478 = vadd.f32 %v930, %v266
    %v1479 = vadd.f32 %v930, %v271
    %v1480 = vadd.f32 %v930, %v274
    %v1481 = vadd.f32 %v930, %v279
    %v1482 = vadd.f32 %v930, %v282
    %v1483 = vadd.f32 %v934, %v255
    %v1484 = vadd.f32 %v934, %v258
    %v1485 = vadd.f32 %v934, %v263
    %v1486 = vadd.f32 %v934, %v266
    %v1487 = vadd.f32 %v934, %v271
    %v1488 = vadd.f32 %v934, %v274
    %v1489 = vadd.f32 %v934, %v279
    %v1490 = vadd.f32 %v934, %v282
    %v1491 = vadd.f32 %v938, %v255
    %v1492 = vadd.f32 %v938, %v258
    %v1493 = vadd.f32 %v938, %v263
    %v1494 = vadd.f32 %v938, %v266
    %v1495 = vadd.f32 %v938, %v271
    %v1496 = vadd.f32 %v938, %v274
    %v1497 = vadd.f32 %v938, %v279
    %v1498 = vadd.f32 %v938, %v282
    %v1499 = vadd.f32 %v942, %v255
    %v1500 = vadd.f32 %v942, %v258
    %v1501 = vadd.f32 %v942, %v263
    %v1502 = vadd.f32 %v942, %v266
    %v1503 = vadd.f32 %v942, %v271
    %v1504 = vadd.f32 %v942, %v274
    %v1505 = vadd.f32 %v942, %v279
    %v1506 = vadd.f32 %v942, %v282
    %v1507 = vadd.f32 %v946, %v255
    %v1508 = vadd.f32 %v946, %v258
    %v1509 = vadd.f32 %v946, %v263
    %v1510 = vadd.f32 %v946, %v266
    %v1511 = vadd.f32 %v946, %v271
    %v1512 = vadd.f32 %v946, %v274
    %v1513 = vadd.f32 %v946, %v279
    %v1514 = vadd.f32 %v946, %v282
    %v1515 = vadd.f32 %v950, %v255
    %v1516 = vadd.f32 %v950, %v258
    %v1517 = vadd.f32 %v950, %v263
    %v1518 = vadd.f32 %v950, %v266
    %v1519 = vadd.f32 %v950, %v271
    %v1520 = vadd.f32 %v950, %v274
    %v1521 = vadd.f32 %v950, %v279
    %v1522 = vadd.f32 %v950, %v282
    %v1523 = vadd.f32 %v954, %v255
    %v1524 = vadd.f32 %v954, %v258
    %v1525 = vadd.f32 %v954, %v263
    %v1526 = vadd.f32 %v954, %v266
    %v1527 = vadd.f32 %v954, %v271
    %v1528 = vadd.f32 %v954, %v274
    %v1529 = vadd.f32 %v954, %v279
    %v1530 = vadd.f32 %v954, %v282
    %v1531 = vmax.f32 %v1019, 0.0
    %v1532 = vmax.f32 %v1020, 0.0
    %v1533 = vmax.f32 %v1021, 0.0
    %v1534 = vmax.f32 %v1022, 0.0
    %v1535 = vmax.f32 %v1023, 0.0
    %v1536 = vmax.f32 %v1024, 0.0
    %v1537 = vmax.f32 %v1025, 0.0
    %v1538 = vmax.f32 %v1026, 0.0
    %v1539 = vmax.f32 %v1027, 0.0
    %v1540 = vmax.f32 %v1028, 0.0
    %v1541 = vmax.f32 %v1029, 0.0
    %v1542 = vmax.f32 %v1030, 0.0
    %v1543 = vmax.f32 %v1031, 0.0
    %v1544 = vmax.f32 %v1032, 0.0
    %v1545 = vmax.f32 %v1033, 0.0
    %v1546 = vmax.f32 %v1034, 0.0
    %v1547 = vmax.f32 %v1035, 0.0
    %v1548 = vmax.f32 %v1036, 0.0
    %v1549 = vmax.f32 %v1037, 0.0
    %v1550 = vmax.f32 %v1038, 0.0
    %v1551 = vmax.f32 %v1039, 0.0
    %v1552 = vmax.f32 %v1040, 0.0
    %v1553 = vmax.f32 %v1041, 0.0
    %v1554 = vmax.f32 %v1042, 0.0
    %v1555 = vmax.f32 %v1043, 0.0
    %v1556 = vmax.f32 %v1044, 0.0
    %v1557 = vmax.f32 %v1045, 0.0
    %v1558 = vmax.f32 %v1046, 0.0
    %v1559 = vmax.f32 %v1047, 0.0
    %v1560 = vmax.f32 %v1048, 0.0
    %v1561 = vmax.f32 %v1049, 0.0
    %v1562 = vmax.f32 %v1050, 0.0
    %v1563 = vmax.f32 %v1051, 0.0
    %v1564 = vmax.f32 %v1052, 0.0
    %v1565 = vmax.f32 %v1053, 0.0
    %v1566 = vmax.f32 %v1054, 0.0
    %v1567 = vmax.f32 %v1055, 0.0
    %v1568 = vmax.f32 %v1056, 0.0
    %v1569 = vmax.f32 %v1057, 0.0
    %v1570 = vmax.f32 %v1058, 0.0
    %v1571 = vmax.f32 %v1059, 0.0
    %v1572 = vmax.f32 %v1060, 0.0
    %v1573 = vmax.f32 %v1061, 0.0
    %v1574 = vmax.f32 %v1062, 0.0
    %v1575 = vmax.f32 %v1063, 0.0
    %v1576 = vmax.f32 %v1064, 0.0
    %v1577 = vmax.f32 %v1065, 0.0
    %v1578 = vmax.f32 %v1066, 0.0
    %v1579 = vmax.f32 %v1067, 0.0
    %v1580 = vmax.f32 %v1068, 0.0
    %v1581 = vmax.f32 %v1069, 0.0
    %v1582 = vmax.f32 %v1070, 0.0
    %v1583 = vmax.f32 %v1071, 0.0
    %v1584 = vmax.f32 %v1072, 0.0
    %v1585 = vmax.f32 %v1073, 0.0
    %v1586 = vmax.f32 %v1074, 0.0
    %v1587 = vmax.f32 %v1075, 0.0
    %v1588 = vmax.f32 %v1076, 0.0
    %v1589 = vmax.f32 %v1077, 0.0
    %v1590 = vmax.f32 %v1078, 0.0
    %v1591 = vmax.f32 %v1079, 0.0
    %v1592 = vmax.f32 %v1080, 0.0
    %v1593 = vmax.f32 %v1081, 0.0
    %v1594 = vmax.f32 %v1082, 0.0
    %v1595 = vmax.f32 %v1083, 0.0
    %v1596 = vmax.f32 %v1084, 0.0
    %v1597 = vmax.f32 %v1085, 0.0
    %v1598 = vmax.f32 %v1086, 0.0
    %v1599 = vmax.f32 %v1087, 0.0
    %v1600 = vmax.f32 %v1088, 0.0
    %v1601 = vmax.f32 %v1089, 0.0
    %v1602 = vmax.f32 %v1090, 0.0
    %v1603 = vmax.f32 %v1091, 0.0
    %v1604 = vmax.f32 %v1092, 0.0
    %v1605 = vmax.f32 %v1093, 0.0
    %v1606 = vmax.f32 %v1094, 0.0
    %v1607 = vmax.f32 %v1095, 0.0
    %v1608 = vmax.f32 %v1096, 0.0
    %v1609 = vmax.f32 %v1097, 0.0
    %v1610 = vmax.f32 %v1098, 0.0
    %v1611 = vmax.f32 %v1099, 0.0
    %v1612 = vmax.f32 %v1100, 0.0
    %v1613 = vmax.f32 %v1101, 0.0
    %v1614 = vmax.f32 %v1102, 0.0
    %v1615 = vmax.f32 %v1103, 0.0
    %v1616 = vmax.f32 %v1104, 0.0
    %v1617 = vmax.f32 %v1105, 0.0
    %v1618 = vmax.f32 %v1106, 0.0
    %v1619 = vmax.f32 %v1107, 0.0
    %v1620 = vmax.f32 %v1108, 0.0
    %v1621 = vmax.f32 %v1109, 0.0
    %v1622 = vmax.f32 %v1110, 0.0
    %v1623 = vmax.f32 %v1111, 0.0
    %v1624 = vmax.f32 %v1112, 0.0
    %v1625 = vmax.f32 %v1113, 0.0
    %v1626 = vmax.f32 %v1114, 0.0
    %v1627 = vmax.f32 %v1115, 0.0
    %v1628 = vmax.f32 %v1116, 0.0
    %v1629 = vmax.f32 %v1117, 0.0
    %v1630 = vmax.f32 %v1118, 0.0
    %v1631 = vmax.f32 %v1119, 0.0
    %v1632 = vmax.f32 %v1120, 0.0
    %v1633 = vmax.f32 %v1121, 0.0
    %v1634 = vmax.f32 %v1122, 0.0
    %v1635 = vmax.f32 %v1123, 0.0
    %v1636 = vmax.f32 %v1124, 0.0
    %v1637 = vmax.f32 %v1125, 0.0
    %v1638 = vmax.f32 %v1126, 0.0
    %v1639 = vmax.f32 %v1127, 0.0
    %v1640 = vmax.f32 %v1128, 0.0
    %v1641 = vmax.f32 %v1129, 0.0
    %v1642 = vmax.f32 %v1130, 0.0
    %v1643 = vmax.f32 %v1131, 0.0
    %v1644 = vmax.f32 %v1132, 0.0
    %v1645 = vmax.f32 %v1133, 0.0
    %v1646 = vmax.f32 %v1134, 0.0
    %v1647 = vmax.f32 %v1135, 0.0
    %v1648 = vmax.f32 %v1136, 0.0
    %v1649 = vmax.f32 %v1137, 0.0
    %v1650 = vmax.f32 %v1138, 0.0
    %v1651 = vmax.f32 %v1139, 0.0
    %v1652 = vmax.f32 %v1140, 0.0
    %v1653 = vmax.f32 %v1141, 0.0
    %v1654 = vmax.f32 %v1142, 0.0
    %v1655 = vmax.f32 %v1143, 0.0
    %v1656 = vmax.f32 %v1144, 0.0
    %v1657 = vmax.f32 %v1145, 0.0
    %v1658 = vmax.f32 %v1146, 0.0
    %v1659 = vmax.f32 %v1147, 0.0
    %v1660 = vmax.f32 %v1148, 0.0
    %v1661 = vmax.f32 %v1149, 0.0
    %v1662 = vmax.f32 %v1150, 0.0
    %v1663 = vmax.f32 %v1151, 0.0
    %v1664 = vmax.f32 %v1152, 0.0
    %v1665 = vmax.f32 %v1153, 0.0
    %v1666 = vmax.f32 %v1154, 0.0
    %v1667 = vmax.f32 %v1155, 0.0
    %v1668 = vmax.f32 %v1156, 0.0
    %v1669 = vmax.f32 %v1157, 0.0
    %v1670 = vmax.f32 %v1158, 0.0
    %v1671 = vmax.f32 %v1159, 0.0
    %v1672 = vmax.f32 %v1160, 0.0
    %v1673 = vmax.f32 %v1161, 0.0
    %v1674 = vmax.f32 %v1162, 0.0
    %v1675 = vmax.f32 %v1163, 0.0
    %v1676 = vmax.f32 %v1164, 0.0
    %v1677 = vmax.f32 %v1165, 0.0
    %v1678 = vmax.f32 %v1166, 0.0
    %v1679 = vmax.f32 %v1167, 0.0
    %v1680 = vmax.f32 %v1168, 0.0
    %v1681 = vmax.f32 %v1169, 0.0
    %v1682 = vmax.f32 %v1170, 0.0
    %v1683 = vmax.f32 %v1171, 0.0
    %v1684 = vmax.f32 %v1172, 0.0
    %v1685 = vmax.f32 %v1173, 0.0
    %v1686 = vmax.f32 %v1174, 0.0
    %v1687 = vmax.f32 %v1175, 0.0
    %v1688 = vmax.f32 %v1176, 0.0
    %v1689 = vmax.f32 %v1177, 0.0
    %v1690 = vmax.f32 %v1178, 0.0
    %v1691 = vmax.f32 %v1179, 0.0
    %v1692 = vmax.f32 %v1180, 0.0
    %v1693 = vmax.f32 %v1181, 0.0
    %v1694 = vmax.f32 %v1182, 0.0
    %v1695 = vmax.f32 %v1183, 0.0
    %v1696 = vmax.f32 %v1184, 0.0
    %v1697 = vmax.f32 %v1185, 0.0
    %v1698 = vmax.f32 %v1186, 0.0
    %v1699 = vmax.f32 %v1187, 0.0
    %v1700 = vmax.f32 %v1188, 0.0
    %v1701 = vmax.f32 %v1189, 0.0
    %v1702 = vmax.f32 %v1190, 0.0
    %v1703 = vmax.f32 %v1191, 0.0
    %v1704 = vmax.f32 %v1192, 0.0
    %v1705 = vmax.f32 %v1193, 0.0
    %v1706 = vmax.f32 %v1194, 0.0
    %v1707 = vmax.f32 %v1195, 0.0
    %v1708 = vmax.f32 %v1196, 0.0
    %v1709 = vmax.f32 %v1197, 0.0
    %v1710 = vmax.f32 %v1198, 0.0
    %v1711 = vmax.f32 %v1199, 0.0
    %v1712 = vmax.f32 %v1200, 0.0
    %v1713 = vmax.f32 %v1201, 0.0
    %v1714 = vmax.f32 %v1202, 0.0
    %v1715 = vmax.f32 %v1203, 0.0
    %v1716 = vmax.f32 %v1204, 0.0
    %v1717 = vmax.f32 %v1205, 0.0
    %v1718 = vmax.f32 %v1206, 0.0
    %v1719 = vmax.f32 %v1207, 0.0
    %v1720 = vmax.f32 %v1208, 0.0
    %v1721 = vmax.f32 %v1209, 0.0
    %v1722 = vmax.f32 %v1210, 0.0
    %v1723 = vmax.f32 %v1211, 0.0
    %v1724 = vmax.f32 %v1212, 0.0
    %v1725 = vmax.f32 %v1213, 0.0
    %v1726 = vmax.f32 %v1214, 0.0
    %v1727 = vmax.f32 %v1215, 0.0
    %v1728 = vmax.f32 %v1216, 0.0
    %v1729 = vmax.f32 %v1217, 0.0
    %v1730 = vmax.f32 %v1218, 0.0
    %v1731 = vmax.f32 %v1219, 0.0
    %v1732 = vmax.f32 %v1220, 0.0
    %v1733 = vmax.f32 %v1221, 0.0
    %v1734 = vmax.f32 %v1222, 0.0
    %v1735 = vmax.f32 %v1223, 0.0
    %v1736 = vmax.f32 %v1224, 0.0
    %v1737 = vmax.f32 %v1225, 0.0
    %v1738 = vmax.f32 %v1226, 0.0
    %v1739 = vmax.f32 %v1227, 0.0
    %v1740 = vmax.f32 %v1228, 0.0
    %v1741 = vmax.f32 %v1229, 0.0
    %v1742 = vmax.f32 %v1230, 0.0
    %v1743 = vmax.f32 %v1231, 0.0
    %v1744 = vmax.f32 %v1232, 0.0
    %v1745 = vmax.f32 %v1233, 0.0
    %v1746 = vmax.f32 %v1234, 0.0
    %v1747 = vmax.f32 %v1235, 0.0
    %v1748 = vmax.f32 %v1236, 0.0
    %v1749 = vmax.f32 %v1237, 0.0
    %v1750 = vmax.f32 %v1238, 0.0
    %v1751 = vmax.f32 %v1239, 0.0
    %v1752 = vmax.f32 %v1240, 0.0
    %v1753 = vmax.f32 %v1241, 0.0
    %v1754 = vmax.f32 %v1242, 0.0
    %v1755 = vmax.f32 %v1243, 0.0
    %v1756 = vmax.f32 %v1244, 0.0
    %v1757 = vmax.f32 %v1245, 0.0
    %v1758 = vmax.f32 %v1246, 0.0
    %v1759 = vmax.f32 %v1247, 0.0
    %v1760 = vmax.f32 %v1248, 0.0
    %v1761 = vmax.f32 %v1249, 0.0
    %v1762 = vmax.f32 %v1250, 0.0
    %v1763 = vmax.f32 %v1251, 0.0
    %v1764 = vmax.f32 %v1252, 0.0
    %v1765 = vmax.f32 %v1253, 0.0
    %v1766 = vmax.f32 %v1254, 0.0
    %v1767 = vmax.f32 %v1255, 0.0
    %v1768 = vmax.f32 %v1256, 0.0
    %v1769 = vmax.f32 %v1257, 0.0
    %v1770 = vmax.f32 %v1258, 0.0
    %v1771 = vmax.f32 %v1259, 0.0
    %v1772 = vmax.f32 %v1260, 0.0
    %v1773 = vmax.f32 %v1261, 0.0
    %v1774 = vmax.f32 %v1262, 0.0
    %v1775 = vmax.f32 %v1263, 0.0
    %v1776 = vmax.f32 %v1264, 0.0
    %v1777 = vmax.f32 %v1265, 0.0
    %v1778 = vmax.f32 %v1266, 0.0
    %v1779 = vmax.f32 %v1267, 0.0
    %v1780 = vmax.f32 %v1268, 0.0
    %v1781 = vmax.f32 %v1269, 0.0
    %v1782 = vmax.f32 %v1270, 0.0
    %v1783 = vmax.f32 %v1271, 0.0
    %v1784 = vmax.f32 %v1272, 0.0
    %v1785 = vmax.f32 %v1273, 0.0
    %v1786 = vmax.f32 %v1274, 0.0
    %v1787 = vmax.f32 %v1275, 0.0
    %v1788 = vmax.f32 %v1276, 0.0
    %v1789 = vmax.f32 %v1277, 0.0
    %v1790 = vmax.f32 %v1278, 0.0
    %v1791 = vmax.f32 %v1279, 0.0
    %v1792 = vmax.f32 %v1280, 0.0
    %v1793 = vmax.f32 %v1281, 0.0
    %v1794 = vmax.f32 %v1282, 0.0
    %v1795 = vmax.f32 %v1283, 0.0
    %v1796 = vmax.f32 %v1284, 0.0
    %v1797 = vmax.f32 %v1285, 0.0
    %v1798 = vmax.f32 %v1286, 0.0
    %v1799 = vmax.f32 %v1287, 0.0
    %v1800 = vmax.f32 %v1288, 0.0
    %v1801 = vmax.f32 %v1289, 0.0
    %v1802 = vmax.f32 %v1290, 0.0
    %v1803 = vmax.f32 %v1291, 0.0
    %v1804 = vmax.f32 %v1292, 0.0
    %v1805 = vmax.f32 %v1293, 0.0
    %v1806 = vmax.f32 %v1294, 0.0
    %v1807 = vmax.f32 %v1295, 0.0
    %v1808 = vmax.f32 %v1296, 0.0
    %v1809 = vmax.f32 %v1297, 0.0
    %v1810 = vmax.f32 %v1298, 0.0
    %v1811 = vmax.f32 %v1299, 0.0
    %v1812 = vmax.f32 %v1300, 0.0
    %v1813 = vmax.f32 %v1301, 0.0
    %v1814 = vmax.f32 %v1302, 0.0
    %v1815 = vmax.f32 %v1303, 0.0
    %v1816 = vmax.f32 %v1304, 0.0
    %v1817 = vmax.f32 %v1305, 0.0
    %v1818 = vmax.f32 %v1306, 0.0
    %v1819 = vmax.f32 %v1307, 0.0
    %v1820 = vmax.f32 %v1308, 0.0
    %v1821 = vmax.f32 %v1309, 0.0
    %v1822 = vmax.f32 %v1310, 0.0
    %v1823 = vmax.f32 %v1311, 0.0
    %v1824 = vmax.f32 %v1312, 0.0
    %v1825 = vmax.f32 %v1313, 0.0
    %v1826 = vmax.f32 %v1314, 0.0
    %v1827 = vmax.f32 %v1315, 0.0
    %v1828 = vmax.f32 %v1316, 0.0
    %v1829 = vmax.f32 %v1317, 0.0
    %v1830 = vmax.f32 %v1318, 0.0
    %v1831 = vmax.f32 %v1319, 0.0
    %v1832 = vmax.f32 %v1320, 0.0
    %v1833 = vmax.f32 %v1321, 0.0
    %v1834 = vmax.f32 %v1322, 0.0
    %v1835 = vmax.f32 %v1323, 0.0
    %v1836 = vmax.f32 %v1324, 0.0
    %v1837 = vmax.f32 %v1325, 0.0
    %v1838 = vmax.f32 %v1326, 0.0
    %v1839 = vmax.f32 %v1327, 0.0
    %v1840 = vmax.f32 %v1328, 0.0
    %v1841 = vmax.f32 %v1329, 0.0
    %v1842 = vmax.f32 %v1330, 0.0
    %v1843 = vmax.f32 %v1331, 0.0
    %v1844 = vmax.f32 %v1332, 0.0
    %v1845 = vmax.f32 %v1333, 0.0
    %v1846 = vmax.f32 %v1334, 0.0
    %v1847 = vmax.f32 %v1335, 0.0
    %v1848 = vmax.f32 %v1336, 0.0
    %v1849 = vmax.f32 %v1337, 0.0
    %v1850 = vmax.f32 %v1338, 0.0
    %v1851 = vmax.f32 %v1339, 0.0
    %v1852 = vmax.f32 %v1340, 0.0
    %v1853 = vmax.f32 %v1341, 0.0
    %v1854 = vmax.f32 %v1342, 0.0
    %v1855 = vmax.f32 %v1343, 0.0
    %v1856 = vmax.f32 %v1344, 0.0
    %v1857 = vmax.f32 %v1345, 0.0
    %v1858 = vmax.f32 %v1346, 0.0
    %v1859 = vmax.f32 %v1347, 0.0
    %v1860 = vmax.f32 %v1348, 0.0
    %v1861 = vmax.f32 %v1349, 0.0
    %v1862 = vmax.f32 %v1350, 0.0
    %v1863 = vmax.f32 %v1351, 0.0
    %v1864 = vmax.f32 %v1352, 0.0
    %v1865 = vmax.f32 %v1353, 0.0
    %v1866 = vmax.f32 %v1354, 0.0
    %v1867 = vmax.f32 %v1355, 0.0
    %v1868 = vmax.f32 %v1356, 0.0
    %v1869 = vmax.f32 %v1357, 0.0
    %v1870 = vmax.f32 %v1358, 0.0
    %v1871 = vmax.f32 %v1359, 0.0
    %v1872 = vmax.f32 %v1360, 0.0
    %v1873 = vmax.f32 %v1361, 0.0
    %v1874 = vmax.f32 %v1362, 0.0
    %v1875 = vmax.f32 %v1363, 0.0
    %v1876 = vmax.f32 %v1364, 0.0
    %v1877 = vmax.f32 %v1365, 0.0
    %v1878 = vmax.f32 %v1366, 0.0
    %v1879 = vmax.f32 %v1367, 0.0
    %v1880 = vmax.f32 %v1368, 0.0
    %v1881 = vmax.f32 %v1369, 0.0
    %v1882 = vmax.f32 %v1370, 0.0
    %v1883 = vmax.f32 %v1371, 0.0
    %v1884 = vmax.f32 %v1372, 0.0
    %v1885 = vmax.f32 %v1373, 0.0
    %v1886 = vmax.f32 %v1374, 0.0
    %v1887 = vmax.f32 %v1375, 0.0
    %v1888 = vmax.f32 %v1376, 0.0
    %v1889 = vmax.f32 %v1377, 0.0
    %v1890 = vmax.f32 %v1378, 0.0
    %v1891 = vmax.f32 %v1379, 0.0
    %v1892 = vmax.f32 %v1380, 0.0
    %v1893 = vmax.f32 %v1381, 0.0
    %v1894 = vmax.f32 %v1382, 0.0
    %v1895 = vmax.f32 %v1383, 0.0
    %v1896 = vmax.f32 %v1384, 0.0
    %v1897 = vmax.f32 %v1385, 0.0
    %v1898 = vmax.f32 %v1386, 0.0
    %v1899 = vmax.f32 %v1387, 0.0
    %v1900 = vmax.f32 %v1388, 0.0
    %v1901 = vmax.f32 %v1389, 0.0
    %v1902 = vmax.f32 %v1390, 0.0
    %v1903 = vmax.f32 %v1391, 0.0
    %v1904 = vmax.f32 %v1392, 0.0
    %v1905 = vmax.f32 %v1393, 0.0
    %v1906 = vmax.f32 %v1394, 0.0
    %v1907 = vmax.f32 %v1395, 0.0
    %v1908 = vmax.f32 %v1396, 0.0
    %v1909 = vmax.f32 %v1397, 0.0
    %v1910 = vmax.f32 %v1398, 0.0
    %v1911 = vmax.f32 %v1399, 0.0
    %v1912 = vmax.f32 %v1400, 0.0
    %v1913 = vmax.f32 %v1401, 0.0
    %v1914 = vmax.f32 %v1402, 0.0
    %v1915 = vmax.f32 %v1403, 0.0
    %v1916 = vmax.f32 %v1404, 0.0
    %v1917 = vmax.f32 %v1405, 0.0
    %v1918 = vmax.f32 %v1406, 0.0
    %v1919 = vmax.f32 %v1407, 0.0
    %v1920 = vmax.f32 %v1408, 0.0
    %v1921 = vmax.f32 %v1409, 0.0
    %v1922 = vmax.f32 %v1410, 0.0
    %v1923 = vmax.f32 %v1411, 0.0
    %v1924 = vmax.f32 %v1412, 0.0
    %v1925 = vmax.f32 %v1413, 0.0
    %v1926 = vmax.f32 %v1414, 0.0
    %v1927 = vmax.f32 %v1415, 0.0
    %v1928 = vmax.f32 %v1416, 0.0
    %v1929 = vmax.f32 %v1417, 0.0
    %v1930 = vmax.f32 %v1418, 0.0
    %v1931 = vmax.f32 %v1419, 0.0
    %v1932 = vmax.f32 %v1420, 0.0
    %v1933 = vmax.f32 %v1421, 0.0
    %v1934 = vmax.f32 %v1422, 0.0
    %v1935 = vmax.f32 %v1423, 0.0
    %v1936 = vmax.f32 %v1424, 0.0
    %v1937 = vmax.f32 %v1425, 0.0
    %v1938 = vmax.f32 %v1426, 0.0
    %v1939 = vmax.f32 %v1427, 0.0
    %v1940 = vmax.f32 %v1428, 0.0
    %v1941 = vmax.f32 %v1429, 0.0
    %v1942 = vmax.f32 %v1430, 0.0
    %v1943 = vmax.f32 %v1431, 0.0
    %v1944 = vmax.f32 %v1432, 0.0
    %v1945 = vmax.f32 %v1433, 0.0
    %v1946 = vmax.f32 %v1434, 0.0
    %v1947 = vmax.f32 %v1435, 0.0
    %v1948 = vmax.f32 %v1436, 0.0
    %v1949 = vmax.f32 %v1437, 0.0
    %v1950 = vmax.f32 %v1438, 0.0
    %v1951 = vmax.f32 %v1439, 0.0
    %v1952 = vmax.f32 %v1440, 0.0
    %v1953 = vmax.f32 %v1441, 0.0
    %v1954 = vmax.f32 %v1442, 0.0
    %v1955 = vmax.f32 %v1443, 0.0
    %v1956 = vmax.f32 %v1444, 0.0
    %v1957 = vmax.f32 %v1445, 0.0
    %v1958 = vmax.f32 %v1446, 0.0
    %v1959 = vmax.f32 %v1447, 0.0
    %v1960 = vmax.f32 %v1448, 0.0
    %v1961 = vmax.f32 %v1449, 0.0
    %v1962 = vmax.f32 %v1450, 0.0
    %v1963 = vmax.f32 %v1451, 0.0
    %v1964 = vmax.f32 %v1452, 0.0
    %v1965 = vmax.f32 %v1453, 0.0
    %v1966 = vmax.f32 %v1454, 0.0
    %v1967 = vmax.f32 %v1455, 0.0
    %v1968 = vmax.f32 %v1456, 0.0
    %v1969 = vmax.f32 %v1457, 0.0
    %v1970 = vmax.f32 %v1458, 0.0
    %v1971 = vmax.f32 %v1459, 0.0
    %v1972 = vmax.f32 %v1460, 0.0
    %v1973 = vmax.f32 %v1461, 0.0
    %v1974 = vmax.f32 %v1462, 0.0
    %v1975 = vmax.f32 %v1463, 0.0
    %v1976 = vmax.f32 %v1464, 0.0
    %v1977 = vmax.f32 %v1465, 0.0
    %v1978 = vmax.f32 %v1466, 0.0
    %v1979 = vmax.f32 %v1467, 0.0
    %v1980 = vmax.f32 %v1468, 0.0
    %v1981 = vmax.f32 %v1469, 0.0
    %v1982 = vmax.f32 %v1470, 0.0
    %v1983 = vmax.f32 %v1471, 0.0
    %v1984 = vmax.f32 %v1472, 0.0
    %v1985 = vmax.f32 %v1473, 0.0
    %v1986 = vmax.f32 %v1474, 0.0
    %v1987 = vmax.f32 %v1475, 0.0
    %v1988 = vmax.f32 %v1476, 0.0
    %v1989 = vmax.f32 %v1477, 0.0
    %v1990 = vmax.f32 %v1478, 0.0
    %v1991 = vmax.f32 %v1479, 0.0
    %v1992 = vmax.f32 %v1480, 0.0
    %v1993 = vmax.f32 %v1481, 0.0
    %v1994 = vmax.f32 %v1482, 0.0
    %v1995 = vmax.f32 %v1483, 0.0
    %v1996 = vmax.f32 %v1484, 0.0
    %v1997 = vmax.f32 %v1485, 0.0
    %v1998 = vmax.f32 %v1486, 0.0
    %v1999 = vmax.f32 %v1487, 0.0
    %v2000 = vmax.f32 %v1488, 0.0
    %v2001 = vmax.f32 %v1489, 0.0
    %v2002 = vmax.f32 %v1490, 0.0
    %v2003 = vmax.f32 %v1491, 0.0
    %v2004 = vmax.f32 %v1492, 0.0
    %v2005 = vmax.f32 %v1493, 0.0
    %v2006 = vmax.f32 %v1494, 0.0
    %v2007 = vmax.f32 %v1495, 0.0
    %v2008 = vmax.f32 %v1496, 0.0
    %v2009 = vmax.f32 %v1497, 0.0
    %v2010 = vmax.f32 %v1498, 0.0
    %v2011 = vmax.f32 %v1499, 0.0
    %v2012 = vmax.f32 %v1500, 0.0
    %v2013 = vmax.f32 %v1501, 0.0
    %v2014 = vmax.f32 %v1502, 0.0
    %v2015 = vmax.f32 %v1503, 0.0
    %v2016 = vmax.f32 %v1504, 0.0
    %v2017 = vmax.f32 %v1505, 0.0
    %v2018 = vmax.f32 %v1506, 0.0
    %v2019 = vmax.f32 %v1507, 0.0
    %v2020 = vmax.f32 %v1508, 0.0
    %v2021 = vmax.f32 %v1509, 0.0
    %v2022 = vmax.f32 %v1510, 0.0
    %v2023 = vmax.f32 %v1511, 0.0
    %v2024 = vmax.f32 %v1512, 0.0
    %v2025 = vmax.f32 %v1513, 0.0
    %v2026 = vmax.f32 %v1514, 0.0
    %v2027 = vmax.f32 %v1515, 0.0
    %v2028 = vmax.f32 %v1516, 0.0
    %v2029 = vmax.f32 %v1517, 0.0
    %v2030 = vmax.f32 %v1518, 0.0
    %v2031 = vmax.f32 %v1519, 0.0
    %v2032 = vmax.f32 %v1520, 0.0
    %v2033 = vmax.f32 %v1521, 0.0
    %v2034 = vmax.f32 %v1522, 0.0
    %v2035 = vmax.f32 %v1523, 0.0
    %v2036 = vmax.f32 %v1524, 0.0
    %v2037 = vmax.f32 %v1525, 0.0
    %v2038 = vmax.f32 %v1526, 0.0
    %v2039 = vmax.f32 %v1527, 0.0
    %v2040 = vmax.f32 %v1528, 0.0
    %v2041 = vmax.f32 %v1529, 0.0
    %v2042 = vmax.f32 %v1530, 0.0
    %v2052 = vunpack.c.l.s4 1966171168
    %v2053 = vunpack.c.0.s8 %v2052
    %v2054 = vlaneseq
    %v2055 = vshrl.u32 %v2054, 7
    %v2056 = vsub.s32 %v2053, %v2055
    %v2057 = vrot.slane %v54, %v2056
    %v2058 = vcombine.high %v2057, %v2057
    %v2060 = vunpack.c.l.s4 1966171168
    %v2061 = vunpack.c.0.s8 %v2060
    %v2062 = vlaneseq
    %v2063 = vshrl.u32 %v2062, 7
    %v2064 = vsub.s32 %v2061, %v2063
    %v2065 = vrot.slane %v2057, %v2064
    %v2067 = vunpack.c.l.s4 1966171168
    %v2068 = vunpack.c.0.s8 %v2067
    %v2069 = vlaneseq
    %v2070 = vshrl.u32 %v2069, 7
    %v2071 = vsub.s32 %v2068, %v2070
    %v2072 = vrot.slane %v2058, %v2071
    %v2073 = vcombine.high %v2065, %v2065
    %v2074 = vcombine.high %v2072, %v2072
    %v2076 = vunpack.c.l.s4 1966171168
    %v2077 = vunpack.c.0.s8 %v2076
    %v2078 = vlaneseq
    %v2079 = vshrl.u32 %v2078, 7
    %v2080 = vsub.s32 %v2077, %v2079
    %v2081 = vrot.slane %v55, %v2080
    %v2082 = vcombine.high %v2081, %v2081
    %v2084 = vunpack.c.l.s4 1966171168
    %v2085 = vunpack.c.0.s8 %v2084
    %v2086 = vlaneseq
    %v2087 = vshrl.u32 %v2086, 7
    %v2088 = vsub.s32 %v2085, %v2087
    %v2089 = vrot.slane %v2081, %v2088
    %v2091 = vunpack.c.l.s4 1966171168
    %v2092 = vunpack.c.0.s8 %v2091
    %v2093 = vlaneseq
    %v2094 = vshrl.u32 %v2093, 7
    %v2095 = vsub.s32 %v2092, %v2094
    %v2096 = vrot.slane %v2082, %v2095
    %v2097 = vcombine.high %v2089, %v2089
    %v2098 = vcombine.high %v2096, %v2096
    %v2100 = vunpack.c.l.s4 1966171168
    %v2101 = vunpack.c.0.s8 %v2100
    %v2102 = vlaneseq
    %v2103 = vshrl.u32 %v2102, 7
    %v2104 = vsub.s32 %v2101, %v2103
    %v2105 = vrot.slane %v56, %v2104
    %v2106 = vcombine.high %v2105, %v2105
    %v2108 = vunpack.c.l.s4 1966171168
    %v2109 = vunpack.c.0.s8 %v2108
    %v2110 = vlaneseq
    %v2111 = vshrl.u32 %v2110, 7
    %v2112 = vsub.s32 %v2109, %v2111
    %v2113 = vrot.slane %v2105, %v2112
    %v2115 = vunpack.c.l.s4 1966171168
    %v2116 = vunpack.c.0.s8 %v2115
    %v2117 = vlaneseq
    %v2118 = vshrl.u32 %v2117, 7
    %v2119 = vsub.s32 %v2116, %v2118
    %v2120 = vrot.slane %v2106, %v2119
    %v2121 = vcombine.high %v2113, %v2113
    %v2122 = vcombine.high %v2120, %v2120
    %v2124 = vunpack.c.l.s4 1966171168
    %v2125 = vunpack.c.0.s8 %v2124
    %v2126 = vlaneseq
    %v2127 = vshrl.u32 %v2126, 7
    %v2128 = vsub.s32 %v2125, %v2127
    %v2129 = vrot.slane %v57, %v2128
    %v2130 = vcombine.high %v2129, %v2129
    %v2132 = vunpack.c.l.s4 1966171168
    %v2133 = vunpack.c.0.s8 %v2132
    %v2134 = vlaneseq
    %v2135 = vshrl.u32 %v2134, 7
    %v2136 = vsub.s32 %v2133, %v2135
    %v2137 = vrot.slane %v2129, %v2136
    %v2139 = vunpack.c.l.s4 1966171168
    %v2140 = vunpack.c.0.s8 %v2139
    %v2141 = vlaneseq
    %v2142 = vshrl.u32 %v2141, 7
    %v2143 = vsub.s32 %v2140, %v2142
    %v2144 = vrot.slane %v2130, %v2143
    %v2145 = vcombine.high %v2137, %v2137
    %v2146 = vcombine.high %v2144, %v2144
    %v2148 = vunpack.c.l.s4 1966171168
    %v2149 = vunpack.c.0.s8 %v2148
    %v2150 = vlaneseq
    %v2151 = vshrl.u32 %v2150, 7
    %v2152 = vsub.s32 %v2149, %v2151
    %v2153 = vrot.slane %v58, %v2152
    %v2154 = vcombine.high %v2153, %v2153
    %v2156 = vunpack.c.l.s4 1966171168
    %v2157 = vunpack.c.0.s8 %v2156
    %v2158 = vlaneseq
    %v2159 = vshrl.u32 %v2158, 7
    %v2160 = vsub.s32 %v2157, %v2159
    %v2161 = vrot.slane %v2153, %v2160
    %v2163 = vunpack.c.l.s4 1966171168
    %v2164 = vunpack.c.0.s8 %v2163
    %v2165 = vlaneseq
    %v2166 = vshrl.u32 %v2165, 7
    %v2167 = vsub.s32 %v2164, %v2166
    %v2168 = vrot.slane %v2154, %v2167
    %v2169 = vcombine.high %v2161, %v2161
    %v2170 = vcombine.high %v2168, %v2168
    %v2172 = vunpack.c.l.s4 1966171168
    %v2173 = vunpack.c.0.s8 %v2172
    %v2174 = vlaneseq
    %v2175 = vshrl.u32 %v2174, 7
    %v2176 = vsub.s32 %v2173, %v2175
    %v2177 = vrot.slane %v59, %v2176
    %v2178 = vcombine.high %v2177, %v2177
    %v2180 = vunpack.c.l.s4 1966171168
    %v2181 = vunpack.c.0.s8 %v2180
    %v2182 = vlaneseq
    %v2183 = vshrl.u32 %v2182, 7
    %v2184 = vsub.s32 %v2181, %v2183
    %v2185 = vrot.slane %v2177, %v2184
    %v2187 = vunpack.c.l.s4 1966171168
    %v2188 = vunpack.c.0.s8 %v2187
    %v2189 = vlaneseq
    %v2190 = vshrl.u32 %v2189, 7
    %v2191 = vsub.s32 %v2188, %v2190
    %v2192 = vrot.slane %v2178, %v2191
    %v2193 = vcombine.high %v2185, %v2185
    %v2194 = vcombine.high %v2192, %v2192
    %v2196 = vunpack.c.l.s4 1966171168
    %v2197 = vunpack.c.0.s8 %v2196
    %v2198 = vlaneseq
    %v2199 = vshrl.u32 %v2198, 7
    %v2200 = vsub.s32 %v2197, %v2199
    %v2201 = vrot.slane %v60, %v2200
    %v2202 = vcombine.high %v2201, %v2201
    %v2204 = vunpack.c.l.s4 1966171168
    %v2205 = vunpack.c.0.s8 %v2204
    %v2206 = vlaneseq
    %v2207 = vshrl.u32 %v2206, 7
    %v2208 = vsub.s32 %v2205, %v2207
    %v2209 = vrot.slane %v2201, %v2208
    %v2211 = vunpack.c.l.s4 1966171168
    %v2212 = vunpack.c.0.s8 %v2211
    %v2213 = vlaneseq
    %v2214 = vshrl.u32 %v2213, 7
    %v2215 = vsub.s32 %v2212, %v2214
    %v2216 = vrot.slane %v2202, %v2215
    %v2217 = vcombine.high %v2209, %v2209
    %v2218 = vcombine.high %v2216, %v2216
    %v2220 = vunpack.c.l.s4 1966171168
    %v2221 = vunpack.c.0.s8 %v2220
    %v2222 = vlaneseq
    %v2223 = vshrl.u32 %v2222, 7
    %v2224 = vsub.s32 %v2221, %v2223
    %v2225 = vrot.slane %v61, %v2224
    %v2226 = vcombine.high %v2225, %v2225
    %v2228 = vunpack.c.l.s4 1966171168
    %v2229 = vunpack.c.0.s8 %v2228
    %v2230 = vlaneseq
    %v2231 = vshrl.u32 %v2230, 7
    %v2232 = vsub.s32 %v2229, %v2231
    %v2233 = vrot.slane %v2225, %v2232
    %v2235 = vunpack.c.l.s4 1966171168
    %v2236 = vunpack.c.0.s8 %v2235
    %v2237 = vlaneseq
    %v2238 = vshrl.u32 %v2237, 7
    %v2239 = vsub.s32 %v2236, %v2238
    %v2240 = vrot.slane %v2226, %v2239
    %v2241 = vcombine.high %v2233, %v2233
    %v2242 = vcombine.high %v2240, %v2240
    %v2243 = vunpack.i.l.s16 %v2065
    %v2244 = vunpack.i.h.s16 %v2065
    %v2245 = vunpack.i.l.s16 %v2072
    %v2246 = vunpack.i.h.s16 %v2072
    %v2247 = vunpack.i.l.s16 %v2073
    %v2248 = vunpack.i.h.s16 %v2073
    %v2249 = vunpack.i.l.s16 %v2074
    %v2250 = vunpack.i.h.s16 %v2074
    %v2251 = vunpack.i.l.s16 %v2089
    %v2252 = vunpack.i.h.s16 %v2089
    %v2253 = vunpack.i.l.s16 %v2096
    %v2254 = vunpack.i.h.s16 %v2096
    %v2255 = vunpack.i.l.s16 %v2097
    %v2256 = vunpack.i.h.s16 %v2097
    %v2257 = vunpack.i.l.s16 %v2098
    %v2258 = vunpack.i.h.s16 %v2098
    %v2259 = vunpack.i.l.s16 %v2113
    %v2260 = vunpack.i.h.s16 %v2113
    %v2261 = vunpack.i.l.s16 %v2120
    %v2262 = vunpack.i.h.s16 %v2120
    %v2263 = vunpack.i.l.s16 %v2121
    %v2264 = vunpack.i.h.s16 %v2121
    %v2265 = vunpack.i.l.s16 %v2122
    %v2266 = vunpack.i.h.s16 %v2122
    %v2267 = vunpack.i.l.s16 %v2137
    %v2268 = vunpack.i.h.s16 %v2137
    %v2269 = vunpack.i.l.s16 %v2144
    %v2270 = vunpack.i.h.s16 %v2144
    %v2271 = vunpack.i.l.s16 %v2145
    %v2272 = vunpack.i.h.s16 %v2145
    %v2273 = vunpack.i.l.s16 %v2146
    %v2274 = vunpack.i.h.s16 %v2146
    %v2275 = vunpack.i.l.s16 %v2161
    %v2276 = vunpack.i.h.s16 %v2161
    %v2277 = vunpack.i.l.s16 %v2168
    %v2278 = vunpack.i.h.s16 %v2168
    %v2279 = vunpack.i.l.s16 %v2169
    %v2280 = vunpack.i.h.s16 %v2169
    %v2281 = vunpack.i.l.s16 %v2170
    %v2282 = vunpack.i.h.s16 %v2170
    %v2283 = vunpack.i.l.s16 %v2185
    %v2284 = vunpack.i.h.s16 %v2185
    %v2285 = vunpack.i.l.s16 %v2192
    %v2286 = vunpack.i.h.s16 %v2192
    %v2287 = vunpack.i.l.s16 %v2193
    %v2288 = vunpack.i.h.s16 %v2193
    %v2289 = vunpack.i.l.s16 %v2194
    %v2290 = vunpack.i.h.s16 %v2194
    %v2291 = vunpack.i.l.s16 %v2209
    %v2292 = vunpack.i.h.s16 %v2209
    %v2293 = vunpack.i.l.s16 %v2216
    %v2294 = vunpack.i.h.s16 %v2216
    %v2295 = vunpack.i.l.s16 %v2217
    %v2296 = vunpack.i.h.s16 %v2217
    %v2297 = vunpack.i.l.s16 %v2218
    %v2298 = vunpack.i.h.s16 %v2218
    %v2299 = vunpack.i.l.s16 %v2233
    %v2300 = vunpack.i.h.s16 %v2233
    %v2301 = vunpack.i.l.s16 %v2240
    %v2302 = vunpack.i.h.s16 %v2240
    %v2303 = vunpack.i.l.s16 %v2241
    %v2304 = vunpack.i.h.s16 %v2241
    %v2305 = vunpack.i.l.s16 %v2242
    %v2306 = vunpack.i.h.s16 %v2242
    %v2307 = vpack.c.bf16 %v1532, %v1531
    %v2308 = vpack.c.bf16 %v1534, %v1533
    %v2309 = vpack.c.bf16 %v1536, %v1535
    %v2310 = vpack.c.bf16 %v1538, %v1537
    %v2311 = vpack.c.bf16 %v1540, %v1539
    %v2312 = vpack.c.bf16 %v1542, %v1541
    %v2313 = vpack.c.bf16 %v1544, %v1543
    %v2314 = vpack.c.bf16 %v1546, %v1545
    %v2315 = vpack.c.bf16 %v1548, %v1547
    %v2316 = vpack.c.bf16 %v1550, %v1549
    %v2317 = vpack.c.bf16 %v1552, %v1551
    %v2318 = vpack.c.bf16 %v1554, %v1553
    %v2319 = vpack.c.bf16 %v1556, %v1555
    %v2320 = vpack.c.bf16 %v1558, %v1557
    %v2321 = vpack.c.bf16 %v1560, %v1559
    %v2322 = vpack.c.bf16 %v1562, %v1561
    %v2323 = vpack.c.bf16 %v1564, %v1563
    %v2324 = vpack.c.bf16 %v1566, %v1565
    %v2325 = vpack.c.bf16 %v1568, %v1567
    %v2326 = vpack.c.bf16 %v1570, %v1569
    %v2327 = vpack.c.bf16 %v1572, %v1571
    %v2328 = vpack.c.bf16 %v1574, %v1573
    %v2329 = vpack.c.bf16 %v1576, %v1575
    %v2330 = vpack.c.bf16 %v1578, %v1577
    %v2331 = vpack.c.bf16 %v1580, %v1579
    %v2332 = vpack.c.bf16 %v1582, %v1581
    %v2333 = vpack.c.bf16 %v1584, %v1583
    %v2334 = vpack.c.bf16 %v1586, %v1585
    %v2335 = vpack.c.bf16 %v1588, %v1587
    %v2336 = vpack.c.bf16 %v1590, %v1589
    %v2337 = vpack.c.bf16 %v1592, %v1591
    %v2338 = vpack.c.bf16 %v1594, %v1593
    %v2339 = vpack.c.bf16 %v1596, %v1595
    %v2340 = vpack.c.bf16 %v1598, %v1597
    %v2341 = vpack.c.bf16 %v1600, %v1599
    %v2342 = vpack.c.bf16 %v1602, %v1601
    %v2343 = vpack.c.bf16 %v1604, %v1603
    %v2344 = vpack.c.bf16 %v1606, %v1605
    %v2345 = vpack.c.bf16 %v1608, %v1607
    %v2346 = vpack.c.bf16 %v1610, %v1609
    %v2347 = vpack.c.bf16 %v1612, %v1611
    %v2348 = vpack.c.bf16 %v1614, %v1613
    %v2349 = vpack.c.bf16 %v1616, %v1615
    %v2350 = vpack.c.bf16 %v1618, %v1617
    %v2351 = vpack.c.bf16 %v1620, %v1619
    %v2352 = vpack.c.bf16 %v1622, %v1621
    %v2353 = vpack.c.bf16 %v1624, %v1623
    %v2354 = vpack.c.bf16 %v1626, %v1625
    %v2355 = vpack.c.bf16 %v1628, %v1627
    %v2356 = vpack.c.bf16 %v1630, %v1629
    %v2357 = vpack.c.bf16 %v1632, %v1631
    %v2358 = vpack.c.bf16 %v1634, %v1633
    %v2359 = vpack.c.bf16 %v1636, %v1635
    %v2360 = vpack.c.bf16 %v1638, %v1637
    %v2361 = vpack.c.bf16 %v1640, %v1639
    %v2362 = vpack.c.bf16 %v1642, %v1641
    %v2363 = vpack.c.bf16 %v1644, %v1643
    %v2364 = vpack.c.bf16 %v1646, %v1645
    %v2365 = vpack.c.bf16 %v1648, %v1647
    %v2366 = vpack.c.bf16 %v1650, %v1649
    %v2367 = vpack.c.bf16 %v1652, %v1651
    %v2368 = vpack.c.bf16 %v1654, %v1653
    %v2369 = vpack.c.bf16 %v1656, %v1655
    %v2370 = vpack.c.bf16 %v1658, %v1657
    %v2371 = vpack.c.bf16 %v1660, %v1659
    %v2372 = vpack.c.bf16 %v1662, %v1661
    %v2373 = vpack.c.bf16 %v1664, %v1663
    %v2374 = vpack.c.bf16 %v1666, %v1665
    %v2375 = vpack.c.bf16 %v1668, %v1667
    %v2376 = vpack.c.bf16 %v1670, %v1669
    %v2377 = vpack.c.bf16 %v1672, %v1671
    %v2378 = vpack.c.bf16 %v1674, %v1673
    %v2379 = vpack.c.bf16 %v1676, %v1675
    %v2380 = vpack.c.bf16 %v1678, %v1677
    %v2381 = vpack.c.bf16 %v1680, %v1679
    %v2382 = vpack.c.bf16 %v1682, %v1681
    %v2383 = vpack.c.bf16 %v1684, %v1683
    %v2384 = vpack.c.bf16 %v1686, %v1685
    %v2385 = vpack.c.bf16 %v1688, %v1687
    %v2386 = vpack.c.bf16 %v1690, %v1689
    %v2387 = vpack.c.bf16 %v1692, %v1691
    %v2388 = vpack.c.bf16 %v1694, %v1693
    %v2389 = vpack.c.bf16 %v1696, %v1695
    %v2390 = vpack.c.bf16 %v1698, %v1697
    %v2391 = vpack.c.bf16 %v1700, %v1699
    %v2392 = vpack.c.bf16 %v1702, %v1701
    %v2393 = vpack.c.bf16 %v1704, %v1703
    %v2394 = vpack.c.bf16 %v1706, %v1705
    %v2395 = vpack.c.bf16 %v1708, %v1707
    %v2396 = vpack.c.bf16 %v1710, %v1709
    %v2397 = vpack.c.bf16 %v1712, %v1711
    %v2398 = vpack.c.bf16 %v1714, %v1713
    %v2399 = vpack.c.bf16 %v1716, %v1715
    %v2400 = vpack.c.bf16 %v1718, %v1717
    %v2401 = vpack.c.bf16 %v1720, %v1719
    %v2402 = vpack.c.bf16 %v1722, %v1721
    %v2403 = vpack.c.bf16 %v1724, %v1723
    %v2404 = vpack.c.bf16 %v1726, %v1725
    %v2405 = vpack.c.bf16 %v1728, %v1727
    %v2406 = vpack.c.bf16 %v1730, %v1729
    %v2407 = vpack.c.bf16 %v1732, %v1731
    %v2408 = vpack.c.bf16 %v1734, %v1733
    %v2409 = vpack.c.bf16 %v1736, %v1735
    %v2410 = vpack.c.bf16 %v1738, %v1737
    %v2411 = vpack.c.bf16 %v1740, %v1739
    %v2412 = vpack.c.bf16 %v1742, %v1741
    %v2413 = vpack.c.bf16 %v1744, %v1743
    %v2414 = vpack.c.bf16 %v1746, %v1745
    %v2415 = vpack.c.bf16 %v1748, %v1747
    %v2416 = vpack.c.bf16 %v1750, %v1749
    %v2417 = vpack.c.bf16 %v1752, %v1751
    %v2418 = vpack.c.bf16 %v1754, %v1753
    %v2419 = vpack.c.bf16 %v1756, %v1755
    %v2420 = vpack.c.bf16 %v1758, %v1757
    %v2421 = vpack.c.bf16 %v1760, %v1759
    %v2422 = vpack.c.bf16 %v1762, %v1761
    %v2423 = vpack.c.bf16 %v1764, %v1763
    %v2424 = vpack.c.bf16 %v1766, %v1765
    %v2425 = vpack.c.bf16 %v1768, %v1767
    %v2426 = vpack.c.bf16 %v1770, %v1769
    %v2427 = vpack.c.bf16 %v1772, %v1771
    %v2428 = vpack.c.bf16 %v1774, %v1773
    %v2429 = vpack.c.bf16 %v1776, %v1775
    %v2430 = vpack.c.bf16 %v1778, %v1777
    %v2431 = vpack.c.bf16 %v1780, %v1779
    %v2432 = vpack.c.bf16 %v1782, %v1781
    %v2433 = vpack.c.bf16 %v1784, %v1783
    %v2434 = vpack.c.bf16 %v1786, %v1785
    %v2435 = vpack.c.bf16 %v1788, %v1787
    %v2436 = vpack.c.bf16 %v1790, %v1789
    %v2437 = vpack.c.bf16 %v1792, %v1791
    %v2438 = vpack.c.bf16 %v1794, %v1793
    %v2439 = vpack.c.bf16 %v1796, %v1795
    %v2440 = vpack.c.bf16 %v1798, %v1797
    %v2441 = vpack.c.bf16 %v1800, %v1799
    %v2442 = vpack.c.bf16 %v1802, %v1801
    %v2443 = vpack.c.bf16 %v1804, %v1803
    %v2444 = vpack.c.bf16 %v1806, %v1805
    %v2445 = vpack.c.bf16 %v1808, %v1807
    %v2446 = vpack.c.bf16 %v1810, %v1809
    %v2447 = vpack.c.bf16 %v1812, %v1811
    %v2448 = vpack.c.bf16 %v1814, %v1813
    %v2449 = vpack.c.bf16 %v1816, %v1815
    %v2450 = vpack.c.bf16 %v1818, %v1817
    %v2451 = vpack.c.bf16 %v1820, %v1819
    %v2452 = vpack.c.bf16 %v1822, %v1821
    %v2453 = vpack.c.bf16 %v1824, %v1823
    %v2454 = vpack.c.bf16 %v1826, %v1825
    %v2455 = vpack.c.bf16 %v1828, %v1827
    %v2456 = vpack.c.bf16 %v1830, %v1829
    %v2457 = vpack.c.bf16 %v1832, %v1831
    %v2458 = vpack.c.bf16 %v1834, %v1833
    %v2459 = vpack.c.bf16 %v1836, %v1835
    %v2460 = vpack.c.bf16 %v1838, %v1837
    %v2461 = vpack.c.bf16 %v1840, %v1839
    %v2462 = vpack.c.bf16 %v1842, %v1841
    %v2463 = vpack.c.bf16 %v1844, %v1843
    %v2464 = vpack.c.bf16 %v1846, %v1845
    %v2465 = vpack.c.bf16 %v1848, %v1847
    %v2466 = vpack.c.bf16 %v1850, %v1849
    %v2467 = vpack.c.bf16 %v1852, %v1851
    %v2468 = vpack.c.bf16 %v1854, %v1853
    %v2469 = vpack.c.bf16 %v1856, %v1855
    %v2470 = vpack.c.bf16 %v1858, %v1857
    %v2471 = vpack.c.bf16 %v1860, %v1859
    %v2472 = vpack.c.bf16 %v1862, %v1861
    %v2473 = vpack.c.bf16 %v1864, %v1863
    %v2474 = vpack.c.bf16 %v1866, %v1865
    %v2475 = vpack.c.bf16 %v1868, %v1867
    %v2476 = vpack.c.bf16 %v1870, %v1869
    %v2477 = vpack.c.bf16 %v1872, %v1871
    %v2478 = vpack.c.bf16 %v1874, %v1873
    %v2479 = vpack.c.bf16 %v1876, %v1875
    %v2480 = vpack.c.bf16 %v1878, %v1877
    %v2481 = vpack.c.bf16 %v1880, %v1879
    %v2482 = vpack.c.bf16 %v1882, %v1881
    %v2483 = vpack.c.bf16 %v1884, %v1883
    %v2484 = vpack.c.bf16 %v1886, %v1885
    %v2485 = vpack.c.bf16 %v1888, %v1887
    %v2486 = vpack.c.bf16 %v1890, %v1889
    %v2487 = vpack.c.bf16 %v1892, %v1891
    %v2488 = vpack.c.bf16 %v1894, %v1893
    %v2489 = vpack.c.bf16 %v1896, %v1895
    %v2490 = vpack.c.bf16 %v1898, %v1897
    %v2491 = vpack.c.bf16 %v1900, %v1899
    %v2492 = vpack.c.bf16 %v1902, %v1901
    %v2493 = vpack.c.bf16 %v1904, %v1903
    %v2494 = vpack.c.bf16 %v1906, %v1905
    %v2495 = vpack.c.bf16 %v1908, %v1907
    %v2496 = vpack.c.bf16 %v1910, %v1909
    %v2497 = vpack.c.bf16 %v1912, %v1911
    %v2498 = vpack.c.bf16 %v1914, %v1913
    %v2499 = vpack.c.bf16 %v1916, %v1915
    %v2500 = vpack.c.bf16 %v1918, %v1917
    %v2501 = vpack.c.bf16 %v1920, %v1919
    %v2502 = vpack.c.bf16 %v1922, %v1921
    %v2503 = vpack.c.bf16 %v1924, %v1923
    %v2504 = vpack.c.bf16 %v1926, %v1925
    %v2505 = vpack.c.bf16 %v1928, %v1927
    %v2506 = vpack.c.bf16 %v1930, %v1929
    %v2507 = vpack.c.bf16 %v1932, %v1931
    %v2508 = vpack.c.bf16 %v1934, %v1933
    %v2509 = vpack.c.bf16 %v1936, %v1935
    %v2510 = vpack.c.bf16 %v1938, %v1937
    %v2511 = vpack.c.bf16 %v1940, %v1939
    %v2512 = vpack.c.bf16 %v1942, %v1941
    %v2513 = vpack.c.bf16 %v1944, %v1943
    %v2514 = vpack.c.bf16 %v1946, %v1945
    %v2515 = vpack.c.bf16 %v1948, %v1947
    %v2516 = vpack.c.bf16 %v1950, %v1949
    %v2517 = vpack.c.bf16 %v1952, %v1951
    %v2518 = vpack.c.bf16 %v1954, %v1953
    %v2519 = vpack.c.bf16 %v1956, %v1955
    %v2520 = vpack.c.bf16 %v1958, %v1957
    %v2521 = vpack.c.bf16 %v1960, %v1959
    %v2522 = vpack.c.bf16 %v1962, %v1961
    %v2523 = vpack.c.bf16 %v1964, %v1963
    %v2524 = vpack.c.bf16 %v1966, %v1965
    %v2525 = vpack.c.bf16 %v1968, %v1967
    %v2526 = vpack.c.bf16 %v1970, %v1969
    %v2527 = vpack.c.bf16 %v1972, %v1971
    %v2528 = vpack.c.bf16 %v1974, %v1973
    %v2529 = vpack.c.bf16 %v1976, %v1975
    %v2530 = vpack.c.bf16 %v1978, %v1977
    %v2531 = vpack.c.bf16 %v1980, %v1979
    %v2532 = vpack.c.bf16 %v1982, %v1981
    %v2533 = vpack.c.bf16 %v1984, %v1983
    %v2534 = vpack.c.bf16 %v1986, %v1985
    %v2535 = vpack.c.bf16 %v1988, %v1987
    %v2536 = vpack.c.bf16 %v1990, %v1989
    %v2537 = vpack.c.bf16 %v1992, %v1991
    %v2538 = vpack.c.bf16 %v1994, %v1993
    %v2539 = vpack.c.bf16 %v1996, %v1995
    %v2540 = vpack.c.bf16 %v1998, %v1997
    %v2541 = vpack.c.bf16 %v2000, %v1999
    %v2542 = vpack.c.bf16 %v2002, %v2001
    %v2543 = vpack.c.bf16 %v2004, %v2003
    %v2544 = vpack.c.bf16 %v2006, %v2005
    %v2545 = vpack.c.bf16 %v2008, %v2007
    %v2546 = vpack.c.bf16 %v2010, %v2009
    %v2547 = vpack.c.bf16 %v2012, %v2011
    %v2548 = vpack.c.bf16 %v2014, %v2013
    %v2549 = vpack.c.bf16 %v2016, %v2015
    %v2550 = vpack.c.bf16 %v2018, %v2017
    %v2551 = vpack.c.bf16 %v2020, %v2019
    %v2552 = vpack.c.bf16 %v2022, %v2021
    %v2553 = vpack.c.bf16 %v2024, %v2023
    %v2554 = vpack.c.bf16 %v2026, %v2025
    %v2555 = vpack.c.bf16 %v2028, %v2027
    %v2556 = vpack.c.bf16 %v2030, %v2029
    %v2557 = vpack.c.bf16 %v2032, %v2031
    %v2558 = vpack.c.bf16 %v2034, %v2033
    %v2559 = vpack.c.bf16 %v2036, %v2035
    %v2560 = vpack.c.bf16 %v2038, %v2037
    %v2561 = vpack.c.bf16 %v2040, %v2039
    %v2562 = vpack.c.bf16 %v2042, %v2041
    %v2563 = vpack.i.b16 %v2243, %v2243
    %v2564 = vlaneseq
    %v2565 = vshrl.u32 %v2564, 7
    %v2566 = vsub.s32 0, %v2565
    %v2567 = vrot.slane %v2563, %v2566
    %vm2568 = vcmask 523264
    %v2570 = vsel %vm2568, %v2567, 0
    %2572 = vmatprep.subr.bf16.mxu0 0
    %2573 = vmatpush1.bf16.msra.mxu0 %v2307
    %2574 = vmatprep.subr.bf16.mxu0 0
    %2575 = vmatpush1.bf16.msra.mxu0 %v2308
    %2576 = vmatprep.subr.bf16.mxu0 0
    %2577 = vmatpush1.bf16.msra.mxu0 %v2309
    %2578 = vmatprep.subr.bf16.mxu0 0
    %2579 = vmatpush1.bf16.msra.mxu0 %v2310
    %2580 = vmatprep.subr.bf16.mxu0 0
    %2581 = vmatpush1.bf16.msra.mxu0 0
    %2582 = vmatprep.subr.bf16.mxu0 0
    %2583 = vmatpush1.bf16.msra.mxu0 0
    %2584 = vmatprep.subr.bf16.mxu0 0
    %2585 = vmatpush1.bf16.msra.mxu0 0
    %2586 = vmatprep.subr.bf16.mxu0 0
    %2587 = vmatpush1.bf16.msra.mxu0 0
    %2588 = vmatprep.subr.bf16.mxu0 0
    %2589 = vmatpush1.bf16.msra.mxu0 0
    %2590 = vmatprep.subr.bf16.mxu0 0
    %2591 = vmatpush1.bf16.msra.mxu0 0
    %2592 = vmatprep.subr.bf16.mxu0 0
    %2593 = vmatpush1.bf16.msra.mxu0 0
    %2594 = vmatprep.subr.bf16.mxu0 0
    %2595 = vmatpush1.bf16.msra.mxu0 0
    %2596 = vmatprep.subr.bf16.mxu0 0
    %2597 = vmatpush1.bf16.msra.mxu0 0
    %2598 = vmatprep.subr.bf16.mxu0 0
    %2599 = vmatpush1.bf16.msra.mxu0 0
    %2600 = vmatprep.subr.bf16.mxu0 0
    %2601 = vmatpush1.bf16.msra.mxu0 0
    %2602 = vmatprep.subr.bf16.mxu0 0
    %2603 = vmatpush1.bf16.msra.mxu0 0
    %2604 = vmatprep.mubr.bf16.mxu0 0
    %2605 = vmatmul.mubr.bf16.gmra.mrb[0].mxu0 %v2570
    %v2606 = vpop.f32.mrb[0].mxu0
    %v2607 = vadd.f32 0.0, %v2606
    %v2608 = vpop.f32.mrb[0].mxu0
    %v2609 = vpop.f32.mrb[0].mxu0
    %v2610 = vpop.f32.mrb[0].mxu0
    %2611 = vdwg.mxu0
    %v2612 = vpack.i.b16 %v2244, %v2244
    %v2613 = vlaneseq
    %v2614 = vshrl.u32 %v2613, 7
    %v2615 = vsub.s32 0, %v2614
    %v2616 = vrot.slane %v2612, %v2615
    %v2618 = vsel %vm2568, %v2616, 0
    %2620 = vmatprep.subr.bf16.mxu0 0
    %2621 = vmatpush1.bf16.msra.mxu0 %v2311
    %2622 = vmatprep.subr.bf16.mxu0 0
    %2623 = vmatpush1.bf16.msra.mxu0 %v2312
    %2624 = vmatprep.subr.bf16.mxu0 0
    %2625 = vmatpush1.bf16.msra.mxu0 %v2313
    %2626 = vmatprep.subr.bf16.mxu0 0
    %2627 = vmatpush1.bf16.msra.mxu0 %v2314
    %2628 = vmatprep.subr.bf16.mxu0 0
    %2629 = vmatpush1.bf16.msra.mxu0 0
    %2630 = vmatprep.subr.bf16.mxu0 0
    %2631 = vmatpush1.bf16.msra.mxu0 0
    %2632 = vmatprep.subr.bf16.mxu0 0
    %2633 = vmatpush1.bf16.msra.mxu0 0
    %2634 = vmatprep.subr.bf16.mxu0 0
    %2635 = vmatpush1.bf16.msra.mxu0 0
    %2636 = vmatprep.subr.bf16.mxu0 0
    %2637 = vmatpush1.bf16.msra.mxu0 0
    %2638 = vmatprep.subr.bf16.mxu0 0
    %2639 = vmatpush1.bf16.msra.mxu0 0
    %2640 = vmatprep.subr.bf16.mxu0 0
    %2641 = vmatpush1.bf16.msra.mxu0 0
    %2642 = vmatprep.subr.bf16.mxu0 0
    %2643 = vmatpush1.bf16.msra.mxu0 0
    %2644 = vmatprep.subr.bf16.mxu0 0
    %2645 = vmatpush1.bf16.msra.mxu0 0
    %2646 = vmatprep.subr.bf16.mxu0 0
    %2647 = vmatpush1.bf16.msra.mxu0 0
    %2648 = vmatprep.subr.bf16.mxu0 0
    %2649 = vmatpush1.bf16.msra.mxu0 0
    %2650 = vmatprep.subr.bf16.mxu0 0
    %2651 = vmatpush1.bf16.msra.mxu0 0
    %2652 = vmatprep.mubr.bf16.mxu0 0
    %2653 = vmatmul.mubr.bf16.gmra.mrb[0].mxu0 %v2618
    %v2654 = vpop.f32.mrb[0].mxu0
    %v2655 = vadd.f32 0.0, %v2654
    %v2656 = vpop.f32.mrb[0].mxu0
    %v2657 = vpop.f32.mrb[0].mxu0
    %v2658 = vpop.f32.mrb[0].mxu0
    %2659 = vdwg.mxu0
    %v2660 = vpack.i.b16 %v2245, %v2245
    %v2661 = vlaneseq
    %v2662 = vshrl.u32 %v2661, 7
    %v2663 = vsub.s32 0, %v2662
    %v2664 = vrot.slane %v2660, %v2663
    %v2666 = vsel %vm2568, %v2664, 0
    %2668 = vmatprep.subr.bf16.mxu0 0
    %2669 = vmatpush1.bf16.msra.mxu0 %v2315
    %2670 = vmatprep.subr.bf16.mxu0 0
    %2671 = vmatpush1.bf16.msra.mxu0 %v2316
    %2672 = vmatprep.subr.bf16.mxu0 0
    %2673 = vmatpush1.bf16.msra.mxu0 %v2317
    %2674 = vmatprep.subr.bf16.mxu0 0
    %2675 = vmatpush1.bf16.msra.mxu0 %v2318
    %2676 = vmatprep.subr.bf16.mxu0 0
    %2677 = vmatpush1.bf16.msra.mxu0 0
    %2678 = vmatprep.subr.bf16.mxu0 0
    %2679 = vmatpush1.bf16.msra.mxu0 0
    %2680 = vmatprep.subr.bf16.mxu0 0
    %2681 = vmatpush1.bf16.msra.mxu0 0
    %2682 = vmatprep.subr.bf16.mxu0 0
    %2683 = vmatpush1.bf16.msra.mxu0 0
    %2684 = vmatprep.subr.bf16.mxu0 0
    %2685 = vmatpush1.bf16.msra.mxu0 0
    %2686 = vmatprep.subr.bf16.mxu0 0
    %2687 = vmatpush1.bf16.msra.mxu0 0
    %2688 = vmatprep.subr.bf16.mxu0 0
    %2689 = vmatpush1.bf16.msra.mxu0 0
    %2690 = vmatprep.subr.bf16.mxu0 0
    %2691 = vmatpush1.bf16.msra.mxu0 0
    %2692 = vmatprep.subr.bf16.mxu0 0
    %2693 = vmatpush1.bf16.msra.mxu0 0
    %2694 = vmatprep.subr.bf16.mxu0 0
    %2695 = vmatpush1.bf16.msra.mxu0 0
    %2696 = vmatprep.subr.bf16.mxu0 0
    %2697 = vmatpush1.bf16.msra.mxu0 0
    %2698 = vmatprep.subr.bf16.mxu0 0
    %2699 = vmatpush1.bf16.msra.mxu0 0
    %2700 = vmatprep.mubr.bf16.mxu0 0
    %2701 = vmatmul.mubr.bf16.gmra.mrb[0].mxu0 %v2666
    %v2702 = vpop.f32.mrb[0].mxu0
    %v2703 = vadd.f32 0.0, %v2702
    %v2704 = vpop.f32.mrb[0].mxu0
    %v2705 = vpop.f32.mrb[0].mxu0
    %v2706 = vpop.f32.mrb[0].mxu0
    %2707 = vdwg.mxu0
    %v2708 = vpack.i.b16 %v2246, %v2246
    %v2709 = vlaneseq
    %v2710 = vshrl.u32 %v2709, 7
    %v2711 = vsub.s32 0, %v2710
    %v2712 = vrot.slane %v2708, %v2711
    %v2714 = vsel %vm2568, %v2712, 0
    %2716 = vmatprep.subr.bf16.mxu0 0
    %2717 = vmatpush1.bf16.msra.mxu0 %v2319
    %2718 = vmatprep.subr.bf16.mxu0 0
    %2719 = vmatpush1.bf16.msra.mxu0 %v2320
    %2720 = vmatprep.subr.bf16.mxu0 0
    %2721 = vmatpush1.bf16.msra.mxu0 %v2321
    %2722 = vmatprep.subr.bf16.mxu0 0
    %2723 = vmatpush1.bf16.msra.mxu0 %v2322
    %2724 = vmatprep.subr.bf16.mxu0 0
    %2725 = vmatpush1.bf16.msra.mxu0 0
    %2726 = vmatprep.subr.bf16.mxu0 0
    %2727 = vmatpush1.bf16.msra.mxu0 0
    %2728 = vmatprep.subr.bf16.mxu0 0
    %2729 = vmatpush1.bf16.msra.mxu0 0
    %2730 = vmatprep.subr.bf16.mxu0 0
    %2731 = vmatpush1.bf16.msra.mxu0 0
    %2732 = vmatprep.subr.bf16.mxu0 0
    %2733 = vmatpush1.bf16.msra.mxu0 0
    %2734 = vmatprep.subr.bf16.mxu0 0
    %2735 = vmatpush1.bf16.msra.mxu0 0
    %2736 = vmatprep.subr.bf16.mxu0 0
    %2737 = vmatpush1.bf16.msra.mxu0 0
    %2738 = vmatprep.subr.bf16.mxu0 0
    %2739 = vmatpush1.bf16.msra.mxu0 0
    %2740 = vmatprep.subr.bf16.mxu0 0
    %2741 = vmatpush1.bf16.msra.mxu0 0
    %2742 = vmatprep.subr.bf16.mxu0 0
    %2743 = vmatpush1.bf16.msra.mxu0 0
    %2744 = vmatprep.subr.bf16.mxu0 0
    %2745 = vmatpush1.bf16.msra.mxu0 0
    %2746 = vmatprep.subr.bf16.mxu0 0
    %2747 = vmatpush1.bf16.msra.mxu0 0
    %2748 = vmatprep.mubr.bf16.mxu0 0
    %2749 = vmatmul.mubr.bf16.gmra.mrb[0].mxu0 %v2714
    %v2750 = vpop.f32.mrb[0].mxu0
    %v2751 = vadd.f32 0.0, %v2750
    %v2752 = vpop.f32.mrb[0].mxu0
    %v2753 = vpop.f32.mrb[0].mxu0
    %v2754 = vpop.f32.mrb[0].mxu0
    %2755 = vdwg.mxu0
    %v2756 = vpack.i.b16 %v2247, %v2247
    %v2757 = vlaneseq
    %v2758 = vshrl.u32 %v2757, 7
    %v2759 = vsub.s32 0, %v2758
    %v2760 = vrot.slane %v2756, %v2759
    %v2762 = vsel %vm2568, %v2760, 0
    %2764 = vmatprep.subr.bf16.mxu0 0
    %2765 = vmatpush1.bf16.msra.mxu0 %v2323
    %2766 = vmatprep.subr.bf16.mxu0 0
    %2767 = vmatpush1.bf16.msra.mxu0 %v2324
    %2768 = vmatprep.subr.bf16.mxu0 0
    %2769 = vmatpush1.bf16.msra.mxu0 %v2325
    %2770 = vmatprep.subr.bf16.mxu0 0
    %2771 = vmatpush1.bf16.msra.mxu0 %v2326
    %2772 = vmatprep.subr.bf16.mxu0 0
    %2773 = vmatpush1.bf16.msra.mxu0 0
    %2774 = vmatprep.subr.bf16.mxu0 0
    %2775 = vmatpush1.bf16.msra.mxu0 0
    %2776 = vmatprep.subr.bf16.mxu0 0
    %2777 = vmatpush1.bf16.msra.mxu0 0
    %2778 = vmatprep.subr.bf16.mxu0 0
    %2779 = vmatpush1.bf16.msra.mxu0 0
    %2780 = vmatprep.subr.bf16.mxu0 0
    %2781 = vmatpush1.bf16.msra.mxu0 0
    %2782 = vmatprep.subr.bf16.mxu0 0
    %2783 = vmatpush1.bf16.msra.mxu0 0
    %2784 = vmatprep.subr.bf16.mxu0 0
    %2785 = vmatpush1.bf16.msra.mxu0 0
    %2786 = vmatprep.subr.bf16.mxu0 0
    %2787 = vmatpush1.bf16.msra.mxu0 0
    %2788 = vmatprep.subr.bf16.mxu0 0
    %2789 = vmatpush1.bf16.msra.mxu0 0
    %2790 = vmatprep.subr.bf16.mxu0 0
    %2791 = vmatpush1.bf16.msra.mxu0 0
    %2792 = vmatprep.subr.bf16.mxu0 0
    %2793 = vmatpush1.bf16.msra.mxu0 0
    %2794 = vmatprep.subr.bf16.mxu0 0
    %2795 = vmatpush1.bf16.msra.mxu0 0
    %2796 = vmatprep.mubr.bf16.mxu0 0
    %2797 = vmatmul.mubr.bf16.gmra.mrb[0].mxu0 %v2762
    %v2798 = vpop.f32.mrb[0].mxu0
    %v2799 = vadd.f32 0.0, %v2798
    %v2800 = vpop.f32.mrb[0].mxu0
    %v2801 = vpop.f32.mrb[0].mxu0
    %v2802 = vpop.f32.mrb[0].mxu0
    %2803 = vdwg.mxu0
    %v2804 = vpack.i.b16 %v2248, %v2248
    %v2805 = vlaneseq
    %v2806 = vshrl.u32 %v2805, 7
    %v2807 = vsub.s32 0, %v2806
    %v2808 = vrot.slane %v2804, %v2807
    %v2810 = vsel %vm2568, %v2808, 0
    %2812 = vmatprep.subr.bf16.mxu0 0
    %2813 = vmatpush1.bf16.msra.mxu0 %v2327
    %2814 = vmatprep.subr.bf16.mxu0 0
    %2815 = vmatpush1.bf16.msra.mxu0 %v2328
    %2816 = vmatprep.subr.bf16.mxu0 0
    %2817 = vmatpush1.bf16.msra.mxu0 %v2329
    %2818 = vmatprep.subr.bf16.mxu0 0
    %2819 = vmatpush1.bf16.msra.mxu0 %v2330
    %2820 = vmatprep.subr.bf16.mxu0 0
    %2821 = vmatpush1.bf16.msra.mxu0 0
    %2822 = vmatprep.subr.bf16.mxu0 0
    %2823 = vmatpush1.bf16.msra.mxu0 0
    %2824 = vmatprep.subr.bf16.mxu0 0
    %2825 = vmatpush1.bf16.msra.mxu0 0
    %2826 = vmatprep.subr.bf16.mxu0 0
    %2827 = vmatpush1.bf16.msra.mxu0 0
    %2828 = vmatprep.subr.bf16.mxu0 0
    %2829 = vmatpush1.bf16.msra.mxu0 0
    %2830 = vmatprep.subr.bf16.mxu0 0
    %2831 = vmatpush1.bf16.msra.mxu0 0
    %2832 = vmatprep.subr.bf16.mxu0 0
    %2833 = vmatpush1.bf16.msra.mxu0 0
    %2834 = vmatprep.subr.bf16.mxu0 0
    %2835 = vmatpush1.bf16.msra.mxu0 0
    %2836 = vmatprep.subr.bf16.mxu0 0
    %2837 = vmatpush1.bf16.msra.mxu0 0
    %2838 = vmatprep.subr.bf16.mxu0 0
    %2839 = vmatpush1.bf16.msra.mxu0 0
    %2840 = vmatprep.subr.bf16.mxu0 0
    %2841 = vmatpush1.bf16.msra.mxu0 0
    %2842 = vmatprep.subr.bf16.mxu0 0
    %2843 = vmatpush1.bf16.msra.mxu0 0
    %2844 = vmatprep.mubr.bf16.mxu0 0
    %2845 = vmatmul.mubr.bf16.gmra.mrb[0].mxu0 %v2810
    %v2846 = vpop.f32.mrb[0].mxu0
    %v2847 = vadd.f32 0.0, %v2846
    %v2848 = vpop.f32.mrb[0].mxu0
    %v2849 = vpop.f32.mrb[0].mxu0
    %v2850 = vpop.f32.mrb[0].mxu0
    %2851 = vdwg.mxu0
    %v2852 = vpack.i.b16 %v2249, %v2249
    %v2853 = vlaneseq
    %v2854 = vshrl.u32 %v2853, 7
    %v2855 = vsub.s32 0, %v2854
    %v2856 = vrot.slane %v2852, %v2855
    %v2858 = vsel %vm2568, %v2856, 0
    %2860 = vmatprep.subr.bf16.mxu0 0
    %2861 = vmatpush1.bf16.msra.mxu0 %v2331
    %2862 = vmatprep.subr.bf16.mxu0 0
    %2863 = vmatpush1.bf16.msra.mxu0 %v2332
    %2864 = vmatprep.subr.bf16.mxu0 0
    %2865 = vmatpush1.bf16.msra.mxu0 %v2333
    %2866 = vmatprep.subr.bf16.mxu0 0
    %2867 = vmatpush1.bf16.msra.mxu0 %v2334
    %2868 = vmatprep.subr.bf16.mxu0 0
    %2869 = vmatpush1.bf16.msra.mxu0 0
    %2870 = vmatprep.subr.bf16.mxu0 0
    %2871 = vmatpush1.bf16.msra.mxu0 0
    %2872 = vmatprep.subr.bf16.mxu0 0
    %2873 = vmatpush1.bf16.msra.mxu0 0
    %2874 = vmatprep.subr.bf16.mxu0 0
    %2875 = vmatpush1.bf16.msra.mxu0 0
    %2876 = vmatprep.subr.bf16.mxu0 0
    %2877 = vmatpush1.bf16.msra.mxu0 0
    %2878 = vmatprep.subr.bf16.mxu0 0
    %2879 = vmatpush1.bf16.msra.mxu0 0
    %2880 = vmatprep.subr.bf16.mxu0 0
    %2881 = vmatpush1.bf16.msra.mxu0 0
    %2882 = vmatprep.subr.bf16.mxu0 0
    %2883 = vmatpush1.bf16.msra.mxu0 0
    %2884 = vmatprep.subr.bf16.mxu0 0
    %2885 = vmatpush1.bf16.msra.mxu0 0
    %2886 = vmatprep.subr.bf16.mxu0 0
    %2887 = vmatpush1.bf16.msra.mxu0 0
    %2888 = vmatprep.subr.bf16.mxu0 0
    %2889 = vmatpush1.bf16.msra.mxu0 0
    %2890 = vmatprep.subr.bf16.mxu0 0
    %2891 = vmatpush1.bf16.msra.mxu0 0
    %2892 = vmatprep.mubr.bf16.mxu0 0
    %2893 = vmatmul.mubr.bf16.gmra.mrb[0].mxu0 %v2858
    %v2894 = vpop.f32.mrb[0].mxu0
    %v2895 = vadd.f32 0.0, %v2894
    %v2896 = vpop.f32.mrb[0].mxu0
    %v2897 = vpop.f32.mrb[0].mxu0
    %v2898 = vpop.f32.mrb[0].mxu0
    %2899 = vdwg.mxu0
    %v2900 = vpack.i.b16 %v2250, %v2250
    %v2901 = vlaneseq
    %v2902 = vshrl.u32 %v2901, 7
    %v2903 = vsub.s32 0, %v2902
    %v2904 = vrot.slane %v2900, %v2903
    %v2906 = vsel %vm2568, %v2904, 0
    %2908 = vmatprep.subr.bf16.mxu0 0
    %2909 = vmatpush1.bf16.msra.mxu0 %v2335
    %2910 = vmatprep.subr.bf16.mxu0 0
    %2911 = vmatpush1.bf16.msra.mxu0 %v2336
    %2912 = vmatprep.subr.bf16.mxu0 0
    %2913 = vmatpush1.bf16.msra.mxu0 %v2337
    %2914 = vmatprep.subr.bf16.mxu0 0
    %2915 = vmatpush1.bf16.msra.mxu0 %v2338
    %2916 = vmatprep.subr.bf16.mxu0 0
    %2917 = vmatpush1.bf16.msra.mxu0 0
    %2918 = vmatprep.subr.bf16.mxu0 0
    %2919 = vmatpush1.bf16.msra.mxu0 0
    %2920 = vmatprep.subr.bf16.mxu0 0
    %2921 = vmatpush1.bf16.msra.mxu0 0
    %2922 = vmatprep.subr.bf16.mxu0 0
    %2923 = vmatpush1.bf16.msra.mxu0 0
    %2924 = vmatprep.subr.bf16.mxu0 0
    %2925 = vmatpush1.bf16.msra.mxu0 0
    %2926 = vmatprep.subr.bf16.mxu0 0
    %2927 = vmatpush1.bf16.msra.mxu0 0
    %2928 = vmatprep.subr.bf16.mxu0 0
    %2929 = vmatpush1.bf16.msra.mxu0 0
    %2930 = vmatprep.subr.bf16.mxu0 0
    %2931 = vmatpush1.bf16.msra.mxu0 0
    %2932 = vmatprep.subr.bf16.mxu0 0
    %2933 = vmatpush1.bf16.msra.mxu0 0
    %2934 = vmatprep.subr.bf16.mxu0 0
    %2935 = vmatpush1.bf16.msra.mxu0 0
    %2936 = vmatprep.subr.bf16.mxu0 0
    %2937 = vmatpush1.bf16.msra.mxu0 0
    %2938 = vmatprep.subr.bf16.mxu0 0
    %2939 = vmatpush1.bf16.msra.mxu0 0
    %2940 = vmatprep.mubr.bf16.mxu0 0
    %2941 = vmatmul.mubr.bf16.gmra.mrb[0].mxu0 %v2906
    %v2942 = vpop.f32.mrb[0].mxu0
    %v2943 = vadd.f32 0.0, %v2942
    %v2944 = vpop.f32.mrb[0].mxu0
    %v2945 = vpop.f32.mrb[0].mxu0
    %v2946 = vpop.f32.mrb[0].mxu0
    %2947 = vdwg.mxu0
    %v2948 = vpack.i.b16 %v2251, %v2251
    %v2949 = vlaneseq
    %v2950 = vshrl.u32 %v2949, 7
    %v2951 = vsub.s32 0, %v2950
    %v2952 = vrot.slane %v2948, %v2951
    %v2954 = vsel %vm2568, %v2952, 0
    %2956 = vmatprep.subr.bf16.mxu0 0
    %2957 = vmatpush1.bf16.msra.mxu0 %v2339
    %2958 = vmatprep.subr.bf16.mxu0 0
    %2959 = vmatpush1.bf16.msra.mxu0 %v2340
    %2960 = vmatprep.subr.bf16.mxu0 0
    %2961 = vmatpush1.bf16.msra.mxu0 %v2341
    %2962 = vmatprep.subr.bf16.mxu0 0
    %2963 = vmatpush1.bf16.msra.mxu0 %v2342
    %2964 = vmatprep.subr.bf16.mxu0 0
    %2965 = vmatpush1.bf16.msra.mxu0 0
    %2966 = vmatprep.subr.bf16.mxu0 0
    %2967 = vmatpush1.bf16.msra.mxu0 0
    %2968 = vmatprep.subr.bf16.mxu0 0
    %2969 = vmatpush1.bf16.msra.mxu0 0
    %2970 = vmatprep.subr.bf16.mxu0 0
    %2971 = vmatpush1.bf16.msra.mxu0 0
    %2972 = vmatprep.subr.bf16.mxu0 0
    %2973 = vmatpush1.bf16.msra.mxu0 0
    %2974 = vmatprep.subr.bf16.mxu0 0
    %2975 = vmatpush1.bf16.msra.mxu0 0
    %2976 = vmatprep.subr.bf16.mxu0 0
    %2977 = vmatpush1.bf16.msra.mxu0 0
    %2978 = vmatprep.subr.bf16.mxu0 0
    %2979 = vmatpush1.bf16.msra.mxu0 0
    %2980 = vmatprep.subr.bf16.mxu0 0
    %2981 = vmatpush1.bf16.msra.mxu0 0
    %2982 = vmatprep.subr.bf16.mxu0 0
    %2983 = vmatpush1.bf16.msra.mxu0 0
    %2984 = vmatprep.subr.bf16.mxu0 0
    %2985 = vmatpush1.bf16.msra.mxu0 0
    %2986 = vmatprep.subr.bf16.mxu0 0
    %2987 = vmatpush1.bf16.msra.mxu0 0
    %2988 = vmatprep.mubr.bf16.mxu0 0
    %2989 = vmatmul.mubr.bf16.gmra.mrb[0].mxu0 %v2954
    %v2990 = vpop.f32.mrb[0].mxu0
    %v2991 = vadd.f32 0.0, %v2990
    %v2992 = vpop.f32.mrb[0].mxu0
    %v2993 = vpop.f32.mrb[0].mxu0
    %v2994 = vpop.f32.mrb[0].mxu0
    %2995 = vdwg.mxu0
    %v2996 = vpack.i.b16 %v2252, %v2252
    %v2997 = vlaneseq
    %v2998 = vshrl.u32 %v2997, 7
    %v2999 = vsub.s32 0, %v2998
    %v3000 = vrot.slane %v2996, %v2999
    %v3002 = vsel %vm2568, %v3000, 0
    %3004 = vmatprep.subr.bf16.mxu0 0
    %3005 = vmatpush1.bf16.msra.mxu0 %v2343
    %3006 = vmatprep.subr.bf16.mxu0 0
    %3007 = vmatpush1.bf16.msra.mxu0 %v2344
    %3008 = vmatprep.subr.bf16.mxu0 0
    %3009 = vmatpush1.bf16.msra.mxu0 %v2345
    %3010 = vmatprep.subr.bf16.mxu0 0
    %3011 = vmatpush1.bf16.msra.mxu0 %v2346
    %3012 = vmatprep.subr.bf16.mxu0 0
    %3013 = vmatpush1.bf16.msra.mxu0 0
    %3014 = vmatprep.subr.bf16.mxu0 0
    %3015 = vmatpush1.bf16.msra.mxu0 0
    %3016 = vmatprep.subr.bf16.mxu0 0
    %3017 = vmatpush1.bf16.msra.mxu0 0
    %3018 = vmatprep.subr.bf16.mxu0 0
    %3019 = vmatpush1.bf16.msra.mxu0 0
    %3020 = vmatprep.subr.bf16.mxu0 0
    %3021 = vmatpush1.bf16.msra.mxu0 0
    %3022 = vmatprep.subr.bf16.mxu0 0
    %3023 = vmatpush1.bf16.msra.mxu0 0
    %3024 = vmatprep.subr.bf16.mxu0 0
    %3025 = vmatpush1.bf16.msra.mxu0 0
    %3026 = vmatprep.subr.bf16.mxu0 0
    %3027 = vmatpush1.bf16.msra.mxu0 0
    %3028 = vmatprep.subr.bf16.mxu0 0
    %3029 = vmatpush1.bf16.msra.mxu0 0
    %3030 = vmatprep.subr.bf16.mxu0 0
    %3031 = vmatpush1.bf16.msra.mxu0 0
    %3032 = vmatprep.subr.bf16.mxu0 0
    %3033 = vmatpush1.bf16.msra.mxu0 0
    %3034 = vmatprep.subr.bf16.mxu0 0
    %3035 = vmatpush1.bf16.msra.mxu0 0
    %3036 = vmatprep.mubr.bf16.mxu0 0
    %3037 = vmatmul.mubr.bf16.gmra.mrb[0].mxu0 %v3002
    %v3038 = vpop.f32.mrb[0].mxu0
    %v3039 = vadd.f32 0.0, %v3038
    %v3040 = vpop.f32.mrb[0].mxu0
    %v3041 = vpop.f32.mrb[0].mxu0
    %v3042 = vpop.f32.mrb[0].mxu0
    %3043 = vdwg.mxu0
    %v3044 = vpack.i.b16 %v2253, %v2253
    %v3045 = vlaneseq
    %v3046 = vshrl.u32 %v3045, 7
    %v3047 = vsub.s32 0, %v3046
    %v3048 = vrot.slane %v3044, %v3047
    %v3050 = vsel %vm2568, %v3048, 0
    %3052 = vmatprep.subr.bf16.mxu0 0
    %3053 = vmatpush1.bf16.msra.mxu0 %v2347
    %3054 = vmatprep.subr.bf16.mxu0 0
    %3055 = vmatpush1.bf16.msra.mxu0 %v2348
    %3056 = vmatprep.subr.bf16.mxu0 0
    %3057 = vmatpush1.bf16.msra.mxu0 %v2349
    %3058 = vmatprep.subr.bf16.mxu0 0
    %3059 = vmatpush1.bf16.msra.mxu0 %v2350
    %3060 = vmatprep.subr.bf16.mxu0 0
    %3061 = vmatpush1.bf16.msra.mxu0 0
    %3062 = vmatprep.subr.bf16.mxu0 0
    %3063 = vmatpush1.bf16.msra.mxu0 0
    %3064 = vmatprep.subr.bf16.mxu0 0
    %3065 = vmatpush1.bf16.msra.mxu0 0
    %3066 = vmatprep.subr.bf16.mxu0 0
    %3067 = vmatpush1.bf16.msra.mxu0 0
    %3068 = vmatprep.subr.bf16.mxu0 0
    %3069 = vmatpush1.bf16.msra.mxu0 0
    %3070 = vmatprep.subr.bf16.mxu0 0
    %3071 = vmatpush1.bf16.msra.mxu0 0
    %3072 = vmatprep.subr.bf16.mxu0 0
    %3073 = vmatpush1.bf16.msra.mxu0 0
    %3074 = vmatprep.subr.bf16.mxu0 0
    %3075 = vmatpush1.bf16.msra.mxu0 0
    %3076 = vmatprep.subr.bf16.mxu0 0
    %3077 = vmatpush1.bf16.msra.mxu0 0
    %3078 = vmatprep.subr.bf16.mxu0 0
    %3079 = vmatpush1.bf16.msra.mxu0 0
    %3080 = vmatprep.subr.bf16.mxu0 0
    %3081 = vmatpush1.bf16.msra.mxu0 0
    %3082 = vmatprep.subr.bf16.mxu0 0
    %3083 = vmatpush1.bf16.msra.mxu0 0
    %3084 = vmatprep.mubr.bf16.mxu0 0
    %3085 = vmatmul.mubr.bf16.gmra.mrb[0].mxu0 %v3050
    %v3086 = vpop.f32.mrb[0].mxu0
    %v3087 = vadd.f32 0.0, %v3086
    %v3088 = vpop.f32.mrb[0].mxu0
    %v3089 = vpop.f32.mrb[0].mxu0
    %v3090 = vpop.f32.mrb[0].mxu0
    %3091 = vdwg.mxu0
    %v3092 = vpack.i.b16 %v2254, %v2254
    %v3093 = vlaneseq
    %v3094 = vshrl.u32 %v3093, 7
    %v3095 = vsub.s32 0, %v3094
    %v3096 = vrot.slane %v3092, %v3095
    %v3098 = vsel %vm2568, %v3096, 0
    %3100 = vmatprep.subr.bf16.mxu0 0
    %3101 = vmatpush1.bf16.msra.mxu0 %v2351
    %3102 = vmatprep.subr.bf16.mxu0 0
    %3103 = vmatpush1.bf16.msra.mxu0 %v2352
    %3104 = vmatprep.subr.bf16.mxu0 0
    %3105 = vmatpush1.bf16.msra.mxu0 %v2353
    %3106 = vmatprep.subr.bf16.mxu0 0
    %3107 = vmatpush1.bf16.msra.mxu0 %v2354
    %3108 = vmatprep.subr.bf16.mxu0 0
    %3109 = vmatpush1.bf16.msra.mxu0 0
    %3110 = vmatprep.subr.bf16.mxu0 0
    %3111 = vmatpush1.bf16.msra.mxu0 0
    %3112 = vmatprep.subr.bf16.mxu0 0
    %3113 = vmatpush1.bf16.msra.mxu0 0
    %3114 = vmatprep.subr.bf16.mxu0 0
    %3115 = vmatpush1.bf16.msra.mxu0 0
    %3116 = vmatprep.subr.bf16.mxu0 0
    %3117 = vmatpush1.bf16.msra.mxu0 0
    %3118 = vmatprep.subr.bf16.mxu0 0
    %3119 = vmatpush1.bf16.msra.mxu0 0
    %3120 = vmatprep.subr.bf16.mxu0 0
    %3121 = vmatpush1.bf16.msra.mxu0 0
    %3122 = vmatprep.subr.bf16.mxu0 0
    %3123 = vmatpush1.bf16.msra.mxu0 0
    %3124 = vmatprep.subr.bf16.mxu0 0
    %3125 = vmatpush1.bf16.msra.mxu0 0
    %3126 = vmatprep.subr.bf16.mxu0 0
    %3127 = vmatpush1.bf16.msra.mxu0 0
    %3128 = vmatprep.subr.bf16.mxu0 0
    %3129 = vmatpush1.bf16.msra.mxu0 0
    %3130 = vmatprep.subr.bf16.mxu0 0
    %3131 = vmatpush1.bf16.msra.mxu0 0
    %3132 = vmatprep.mubr.bf16.mxu0 0
    %3133 = vmatmul.mubr.bf16.gmra.mrb[0].mxu0 %v3098
    %v3134 = vpop.f32.mrb[0].mxu0
    %v3135 = vadd.f32 0.0, %v3134
    %v3136 = vpop.f32.mrb[0].mxu0
    %v3137 = vpop.f32.mrb[0].mxu0
    %v3138 = vpop.f32.mrb[0].mxu0
    %3139 = vdwg.mxu0
    %v3140 = vpack.i.b16 %v2255, %v2255
    %v3141 = vlaneseq
    %v3142 = vshrl.u32 %v3141, 7
    %v3143 = vsub.s32 0, %v3142
    %v3144 = vrot.slane %v3140, %v3143
    %v3146 = vsel %vm2568, %v3144, 0
    %3148 = vmatprep.subr.bf16.mxu0 0
    %3149 = vmatpush1.bf16.msra.mxu0 %v2355
    %3150 = vmatprep.subr.bf16.mxu0 0
    %3151 = vmatpush1.bf16.msra.mxu0 %v2356
    %3152 = vmatprep.subr.bf16.mxu0 0
    %3153 = vmatpush1.bf16.msra.mxu0 %v2357
    %3154 = vmatprep.subr.bf16.mxu0 0
    %3155 = vmatpush1.bf16.msra.mxu0 %v2358
    %3156 = vmatprep.subr.bf16.mxu0 0
    %3157 = vmatpush1.bf16.msra.mxu0 0
    %3158 = vmatprep.subr.bf16.mxu0 0
    %3159 = vmatpush1.bf16.msra.mxu0 0
    %3160 = vmatprep.subr.bf16.mxu0 0
    %3161 = vmatpush1.bf16.msra.mxu0 0
    %3162 = vmatprep.subr.bf16.mxu0 0
    %3163 = vmatpush1.bf16.msra.mxu0 0
    %3164 = vmatprep.subr.bf16.mxu0 0
    %3165 = vmatpush1.bf16.msra.mxu0 0
    %3166 = vmatprep.subr.bf16.mxu0 0
    %3167 = vmatpush1.bf16.msra.mxu0 0
    %3168 = vmatprep.subr.bf16.mxu0 0
    %3169 = vmatpush1.bf16.msra.mxu0 0
    %3170 = vmatprep.subr.bf16.mxu0 0
    %3171 = vmatpush1.bf16.msra.mxu0 0
    %3172 = vmatprep.subr.bf16.mxu0 0
    %3173 = vmatpush1.bf16.msra.mxu0 0
    %3174 = vmatprep.subr.bf16.mxu0 0
    %3175 = vmatpush1.bf16.msra.mxu0 0
    %3176 = vmatprep.subr.bf16.mxu0 0
    %3177 = vmatpush1.bf16.msra.mxu0 0
    %3178 = vmatprep.subr.bf16.mxu0 0
    %3179 = vmatpush1.bf16.msra.mxu0 0
    %3180 = vmatprep.mubr.bf16.mxu0 0
    %3181 = vmatmul.mubr.bf16.gmra.mrb[0].mxu0 %v3146
    %v3182 = vpop.f32.mrb[0].mxu0
    %v3183 = vadd.f32 0.0, %v3182
    %v3184 = vpop.f32.mrb[0].mxu0
    %v3185 = vpop.f32.mrb[0].mxu0
    %v3186 = vpop.f32.mrb[0].mxu0
    %3187 = vdwg.mxu0
    %v3188 = vpack.i.b16 %v2256, %v2256
    %v3189 = vlaneseq
    %v3190 = vshrl.u32 %v3189, 7
    %v3191 = vsub.s32 0, %v3190
    %v3192 = vrot.slane %v3188, %v3191
    %v3194 = vsel %vm2568, %v3192, 0
    %3196 = vmatprep.subr.bf16.mxu0 0
    %3197 = vmatpush1.bf16.msra.mxu0 %v2359
    %3198 = vmatprep.subr.bf16.mxu0 0
    %3199 = vmatpush1.bf16.msra.mxu0 %v2360
    %3200 = vmatprep.subr.bf16.mxu0 0
    %3201 = vmatpush1.bf16.msra.mxu0 %v2361
    %3202 = vmatprep.subr.bf16.mxu0 0
    %3203 = vmatpush1.bf16.msra.mxu0 %v2362
    %3204 = vmatprep.subr.bf16.mxu0 0
    %3205 = vmatpush1.bf16.msra.mxu0 0
    %3206 = vmatprep.subr.bf16.mxu0 0
    %3207 = vmatpush1.bf16.msra.mxu0 0
    %3208 = vmatprep.subr.bf16.mxu0 0
    %3209 = vmatpush1.bf16.msra.mxu0 0
    %3210 = vmatprep.subr.bf16.mxu0 0
    %3211 = vmatpush1.bf16.msra.mxu0 0
    %3212 = vmatprep.subr.bf16.mxu0 0
    %3213 = vmatpush1.bf16.msra.mxu0 0
    %3214 = vmatprep.subr.bf16.mxu0 0
    %3215 = vmatpush1.bf16.msra.mxu0 0
    %3216 = vmatprep.subr.bf16.mxu0 0
    %3217 = vmatpush1.bf16.msra.mxu0 0
    %3218 = vmatprep.subr.bf16.mxu0 0
    %3219 = vmatpush1.bf16.msra.mxu0 0
    %3220 = vmatprep.subr.bf16.mxu0 0
    %3221 = vmatpush1.bf16.msra.mxu0 0
    %3222 = vmatprep.subr.bf16.mxu0 0
    %3223 = vmatpush1.bf16.msra.mxu0 0
    %3224 = vmatprep.subr.bf16.mxu0 0
    %3225 = vmatpush1.bf16.msra.mxu0 0
    %3226 = vmatprep.subr.bf16.mxu0 0
    %3227 = vmatpush1.bf16.msra.mxu0 0
    %3228 = vmatprep.mubr.bf16.mxu0 0
    %3229 = vmatmul.mubr.bf16.gmra.mrb[0].mxu0 %v3194
    %v3230 = vpop.f32.mrb[0].mxu0
    %v3231 = vadd.f32 0.0, %v3230
    %v3232 = vpop.f32.mrb[0].mxu0
    %v3233 = vpop.f32.mrb[0].mxu0
    %v3234 = vpop.f32.mrb[0].mxu0
    %3235 = vdwg.mxu0
    %v3236 = vpack.i.b16 %v2257, %v2257
    %v3237 = vlaneseq
    %v3238 = vshrl.u32 %v3237, 7
    %v3239 = vsub.s32 0, %v3238
    %v3240 = vrot.slane %v3236, %v3239
    %v3242 = vsel %vm2568, %v3240, 0
    %3244 = vmatprep.subr.bf16.mxu0 0
    %3245 = vmatpush1.bf16.msra.mxu0 %v2363
    %3246 = vmatprep.subr.bf16.mxu0 0
    %3247 = vmatpush1.bf16.msra.mxu0 %v2364
    %3248 = vmatprep.subr.bf16.mxu0 0
    %3249 = vmatpush1.bf16.msra.mxu0 %v2365
    %3250 = vmatprep.subr.bf16.mxu0 0
    %3251 = vmatpush1.bf16.msra.mxu0 %v2366
    %3252 = vmatprep.subr.bf16.mxu0 0
    %3253 = vmatpush1.bf16.msra.mxu0 0
    %3254 = vmatprep.subr.bf16.mxu0 0
    %3255 = vmatpush1.bf16.msra.mxu0 0
    %3256 = vmatprep.subr.bf16.mxu0 0
    %3257 = vmatpush1.bf16.msra.mxu0 0
    %3258 = vmatprep.subr.bf16.mxu0 0
    %3259 = vmatpush1.bf16.msra.mxu0 0
    %3260 = vmatprep.subr.bf16.mxu0 0
    %3261 = vmatpush1.bf16.msra.mxu0 0
    %3262 = vmatprep.subr.bf16.mxu0 0
    %3263 = vmatpush1.bf16.msra.mxu0 0
    %3264 = vmatprep.subr.bf16.mxu0 0
    %3265 = vmatpush1.bf16.msra.mxu0 0
    %3266 = vmatprep.subr.bf16.mxu0 0
    %3267 = vmatpush1.bf16.msra.mxu0 0
    %3268 = vmatprep.subr.bf16.mxu0 0
    %3269 = vmatpush1.bf16.msra.mxu0 0
    %3270 = vmatprep.subr.bf16.mxu0 0
    %3271 = vmatpush1.bf16.msra.mxu0 0
    %3272 = vmatprep.subr.bf16.mxu0 0
    %3273 = vmatpush1.bf16.msra.mxu0 0
    %3274 = vmatprep.subr.bf16.mxu0 0
    %3275 = vmatpush1.bf16.msra.mxu0 0
    %3276 = vmatprep.mubr.bf16.mxu0 0
    %3277 = vmatmul.mubr.bf16.gmra.mrb[0].mxu0 %v3242
    %v3278 = vpop.f32.mrb[0].mxu0
    %v3279 = vadd.f32 0.0, %v3278
    %v3280 = vpop.f32.mrb[0].mxu0
    %v3281 = vpop.f32.mrb[0].mxu0
    %v3282 = vpop.f32.mrb[0].mxu0
    %3283 = vdwg.mxu0
    %v3284 = vpack.i.b16 %v2258, %v2258
    %v3285 = vlaneseq
    %v3286 = vshrl.u32 %v3285, 7
    %v3287 = vsub.s32 0, %v3286
    %v3288 = vrot.slane %v3284, %v3287
    %v3290 = vsel %vm2568, %v3288, 0
    %3292 = vmatprep.subr.bf16.mxu0 0
    %3293 = vmatpush1.bf16.msra.mxu0 %v2367
    %3294 = vmatprep.subr.bf16.mxu0 0
    %3295 = vmatpush1.bf16.msra.mxu0 %v2368
    %3296 = vmatprep.subr.bf16.mxu0 0
    %3297 = vmatpush1.bf16.msra.mxu0 %v2369
    %3298 = vmatprep.subr.bf16.mxu0 0
    %3299 = vmatpush1.bf16.msra.mxu0 %v2370
    %3300 = vmatprep.subr.bf16.mxu0 0
    %3301 = vmatpush1.bf16.msra.mxu0 0
    %3302 = vmatprep.subr.bf16.mxu0 0
    %3303 = vmatpush1.bf16.msra.mxu0 0
    %3304 = vmatprep.subr.bf16.mxu0 0
    %3305 = vmatpush1.bf16.msra.mxu0 0
    %3306 = vmatprep.subr.bf16.mxu0 0
    %3307 = vmatpush1.bf16.msra.mxu0 0
    %3308 = vmatprep.subr.bf16.mxu0 0
    %3309 = vmatpush1.bf16.msra.mxu0 0
    %3310 = vmatprep.subr.bf16.mxu0 0
    %3311 = vmatpush1.bf16.msra.mxu0 0
    %3312 = vmatprep.subr.bf16.mxu0 0
    %3313 = vmatpush1.bf16.msra.mxu0 0
    %3314 = vmatprep.subr.bf16.mxu0 0
    %3315 = vmatpush1.bf16.msra.mxu0 0
    %3316 = vmatprep.subr.bf16.mxu0 0
    %3317 = vmatpush1.bf16.msra.mxu0 0
    %3318 = vmatprep.subr.bf16.mxu0 0
    %3319 = vmatpush1.bf16.msra.mxu0 0
    %3320 = vmatprep.subr.bf16.mxu0 0
    %3321 = vmatpush1.bf16.msra.mxu0 0
    %3322 = vmatprep.subr.bf16.mxu0 0
    %3323 = vmatpush1.bf16.msra.mxu0 0
    %3324 = vmatprep.mubr.bf16.mxu0 0
    %3325 = vmatmul.mubr.bf16.gmra.mrb[0].mxu0 %v3290
    %v3326 = vpop.f32.mrb[0].mxu0
    %v3327 = vadd.f32 0.0, %v3326
    %v3328 = vpop.f32.mrb[0].mxu0
    %v3329 = vpop.f32.mrb[0].mxu0
    %v3330 = vpop.f32.mrb[0].mxu0
    %3331 = vdwg.mxu0
    %v3332 = vpack.i.b16 %v2259, %v2259
    %v3333 = vlaneseq
    %v3334 = vshrl.u32 %v3333, 7
    %v3335 = vsub.s32 0, %v3334
    %v3336 = vrot.slane %v3332, %v3335
    %v3338 = vsel %vm2568, %v3336, 0
    %3340 = vmatprep.subr.bf16.mxu0 0
    %3341 = vmatpush1.bf16.msra.mxu0 %v2371
    %3342 = vmatprep.subr.bf16.mxu0 0
    %3343 = vmatpush1.bf16.msra.mxu0 %v2372
    %3344 = vmatprep.subr.bf16.mxu0 0
    %3345 = vmatpush1.bf16.msra.mxu0 %v2373
    %3346 = vmatprep.subr.bf16.mxu0 0
    %3347 = vmatpush1.bf16.msra.mxu0 %v2374
    %3348 = vmatprep.subr.bf16.mxu0 0
    %3349 = vmatpush1.bf16.msra.mxu0 0
    %3350 = vmatprep.subr.bf16.mxu0 0
    %3351 = vmatpush1.bf16.msra.mxu0 0
    %3352 = vmatprep.subr.bf16.mxu0 0
    %3353 = vmatpush1.bf16.msra.mxu0 0
    %3354 = vmatprep.subr.bf16.mxu0 0
    %3355 = vmatpush1.bf16.msra.mxu0 0
    %3356 = vmatprep.subr.bf16.mxu0 0
    %3357 = vmatpush1.bf16.msra.mxu0 0
    %3358 = vmatprep.subr.bf16.mxu0 0
    %3359 = vmatpush1.bf16.msra.mxu0 0
    %3360 = vmatprep.subr.bf16.mxu0 0
    %3361 = vmatpush1.bf16.msra.mxu0 0
    %3362 = vmatprep.subr.bf16.mxu0 0
    %3363 = vmatpush1.bf16.msra.mxu0 0
    %3364 = vmatprep.subr.bf16.mxu0 0
    %3365 = vmatpush1.bf16.msra.mxu0 0
    %3366 = vmatprep.subr.bf16.mxu0 0
    %3367 = vmatpush1.bf16.msra.mxu0 0
    %3368 = vmatprep.subr.bf16.mxu0 0
    %3369 = vmatpush1.bf16.msra.mxu0 0
    %3370 = vmatprep.subr.bf16.mxu0 0
    %3371 = vmatpush1.bf16.msra.mxu0 0
    %3372 = vmatprep.mubr.bf16.mxu0 0
    %3373 = vmatmul.mubr.bf16.gmra.mrb[0].mxu0 %v3338
    %v3374 = vpop.f32.mrb[0].mxu0
    %v3375 = vadd.f32 0.0, %v3374
    %v3376 = vpop.f32.mrb[0].mxu0
    %v3377 = vpop.f32.mrb[0].mxu0
    %v3378 = vpop.f32.mrb[0].mxu0
    %3379 = vdwg.mxu0
    %v3380 = vpack.i.b16 %v2260, %v2260
    %v3381 = vlaneseq
    %v3382 = vshrl.u32 %v3381, 7
    %v3383 = vsub.s32 0, %v3382
    %v3384 = vrot.slane %v3380, %v3383
    %v3386 = vsel %vm2568, %v3384, 0
    %3388 = vmatprep.subr.bf16.mxu0 0
    %3389 = vmatpush1.bf16.msra.mxu0 %v2375
    %3390 = vmatprep.subr.bf16.mxu0 0
    %3391 = vmatpush1.bf16.msra.mxu0 %v2376
    %3392 = vmatprep.subr.bf16.mxu0 0
    %3393 = vmatpush1.bf16.msra.mxu0 %v2377
    %3394 = vmatprep.subr.bf16.mxu0 0
    %3395 = vmatpush1.bf16.msra.mxu0 %v2378
    %3396 = vmatprep.subr.bf16.mxu0 0
    %3397 = vmatpush1.bf16.msra.mxu0 0
    %3398 = vmatprep.subr.bf16.mxu0 0
    %3399 = vmatpush1.bf16.msra.mxu0 0
    %3400 = vmatprep.subr.bf16.mxu0 0
    %3401 = vmatpush1.bf16.msra.mxu0 0
    %3402 = vmatprep.subr.bf16.mxu0 0
    %3403 = vmatpush1.bf16.msra.mxu0 0
    %3404 = vmatprep.subr.bf16.mxu0 0
    %3405 = vmatpush1.bf16.msra.mxu0 0
    %3406 = vmatprep.subr.bf16.mxu0 0
    %3407 = vmatpush1.bf16.msra.mxu0 0
    %3408 = vmatprep.subr.bf16.mxu0 0
    %3409 = vmatpush1.bf16.msra.mxu0 0
    %3410 = vmatprep.subr.bf16.mxu0 0
    %3411 = vmatpush1.bf16.msra.mxu0 0
    %3412 = vmatprep.subr.bf16.mxu0 0
    %3413 = vmatpush1.bf16.msra.mxu0 0
    %3414 = vmatprep.subr.bf16.mxu0 0
    %3415 = vmatpush1.bf16.msra.mxu0 0
    %3416 = vmatprep.subr.bf16.mxu0 0
    %3417 = vmatpush1.bf16.msra.mxu0 0
    %3418 = vmatprep.subr.bf16.mxu0 0
    %3419 = vmatpush1.bf16.msra.mxu0 0
    %3420 = vmatprep.mubr.bf16.mxu0 0
    %3421 = vmatmul.mubr.bf16.gmra.mrb[0].mxu0 %v3386
    %v3422 = vpop.f32.mrb[0].mxu0
    %v3423 = vadd.f32 0.0, %v3422
    %v3424 = vpop.f32.mrb[0].mxu0
    %v3425 = vpop.f32.mrb[0].mxu0
    %v3426 = vpop.f32.mrb[0].mxu0
    %3427 = vdwg.mxu0
    %v3428 = vpack.i.b16 %v2261, %v2261
    %v3429 = vlaneseq
    %v3430 = vshrl.u32 %v3429, 7
    %v3431 = vsub.s32 0, %v3430
    %v3432 = vrot.slane %v3428, %v3431
    %v3434 = vsel %vm2568, %v3432, 0
    %3436 = vmatprep.subr.bf16.mxu0 0
    %3437 = vmatpush1.bf16.msra.mxu0 %v2379
    %3438 = vmatprep.subr.bf16.mxu0 0
    %3439 = vmatpush1.bf16.msra.mxu0 %v2380
    %3440 = vmatprep.subr.bf16.mxu0 0
    %3441 = vmatpush1.bf16.msra.mxu0 %v2381
    %3442 = vmatprep.subr.bf16.mxu0 0
    %3443 = vmatpush1.bf16.msra.mxu0 %v2382
    %3444 = vmatprep.subr.bf16.mxu0 0
    %3445 = vmatpush1.bf16.msra.mxu0 0
    %3446 = vmatprep.subr.bf16.mxu0 0
    %3447 = vmatpush1.bf16.msra.mxu0 0
    %3448 = vmatprep.subr.bf16.mxu0 0
    %3449 = vmatpush1.bf16.msra.mxu0 0
    %3450 = vmatprep.subr.bf16.mxu0 0
    %3451 = vmatpush1.bf16.msra.mxu0 0
    %3452 = vmatprep.subr.bf16.mxu0 0
    %3453 = vmatpush1.bf16.msra.mxu0 0
    %3454 = vmatprep.subr.bf16.mxu0 0
    %3455 = vmatpush1.bf16.msra.mxu0 0
    %3456 = vmatprep.subr.bf16.mxu0 0
    %3457 = vmatpush1.bf16.msra.mxu0 0
    %3458 = vmatprep.subr.bf16.mxu0 0
    %3459 = vmatpush1.bf16.msra.mxu0 0
    %3460 = vmatprep.subr.bf16.mxu0 0
    %3461 = vmatpush1.bf16.msra.mxu0 0
    %3462 = vmatprep.subr.bf16.mxu0 0
    %3463 = vmatpush1.bf16.msra.mxu0 0
    %3464 = vmatprep.subr.bf16.mxu0 0
    %3465 = vmatpush1.bf16.msra.mxu0 0
    %3466 = vmatprep.subr.bf16.mxu0 0
    %3467 = vmatpush1.bf16.msra.mxu0 0
    %3468 = vmatprep.mubr.bf16.mxu0 0
    %3469 = vmatmul.mubr.bf16.gmra.mrb[0].mxu0 %v3434
    %v3470 = vpop.f32.mrb[0].mxu0
    %v3471 = vadd.f32 0.0, %v3470
    %v3472 = vpop.f32.mrb[0].mxu0
    %v3473 = vpop.f32.mrb[0].mxu0
    %v3474 = vpop.f32.mrb[0].mxu0
    %3475 = vdwg.mxu0
    %v3476 = vpack.i.b16 %v2262, %v2262
    %v3477 = vlaneseq
    %v3478 = vshrl.u32 %v3477, 7
    %v3479 = vsub.s32 0, %v3478
    %v3480 = vrot.slane %v3476, %v3479
    %v3482 = vsel %vm2568, %v3480, 0
    %3484 = vmatprep.subr.bf16.mxu0 0
    %3485 = vmatpush1.bf16.msra.mxu0 %v2383
    %3486 = vmatprep.subr.bf16.mxu0 0
    %3487 = vmatpush1.bf16.msra.mxu0 %v2384
    %3488 = vmatprep.subr.bf16.mxu0 0
    %3489 = vmatpush1.bf16.msra.mxu0 %v2385
    %3490 = vmatprep.subr.bf16.mxu0 0
    %3491 = vmatpush1.bf16.msra.mxu0 %v2386
    %3492 = vmatprep.subr.bf16.mxu0 0
    %3493 = vmatpush1.bf16.msra.mxu0 0
    %3494 = vmatprep.subr.bf16.mxu0 0
    %3495 = vmatpush1.bf16.msra.mxu0 0
    %3496 = vmatprep.subr.bf16.mxu0 0
    %3497 = vmatpush1.bf16.msra.mxu0 0
    %3498 = vmatprep.subr.bf16.mxu0 0
    %3499 = vmatpush1.bf16.msra.mxu0 0
    %3500 = vmatprep.subr.bf16.mxu0 0
    %3501 = vmatpush1.bf16.msra.mxu0 0
    %3502 = vmatprep.subr.bf16.mxu0 0
    %3503 = vmatpush1.bf16.msra.mxu0 0
    %3504 = vmatprep.subr.bf16.mxu0 0
    %3505 = vmatpush1.bf16.msra.mxu0 0
    %3506 = vmatprep.subr.bf16.mxu0 0
    %3507 = vmatpush1.bf16.msra.mxu0 0
    %3508 = vmatprep.subr.bf16.mxu0 0
    %3509 = vmatpush1.bf16.msra.mxu0 0
    %3510 = vmatprep.subr.bf16.mxu0 0
    %3511 = vmatpush1.bf16.msra.mxu0 0
    %3512 = vmatprep.subr.bf16.mxu0 0
    %3513 = vmatpush1.bf16.msra.mxu0 0
    %3514 = vmatprep.subr.bf16.mxu0 0
    %3515 = vmatpush1.bf16.msra.mxu0 0
    %3516 = vmatprep.mubr.bf16.mxu0 0
    %3517 = vmatmul.mubr.bf16.gmra.mrb[0].mxu0 %v3482
    %v3518 = vpop.f32.mrb[0].mxu0
    %v3519 = vadd.f32 0.0, %v3518
    %v3520 = vpop.f32.mrb[0].mxu0
    %v3521 = vpop.f32.mrb[0].mxu0
    %v3522 = vpop.f32.mrb[0].mxu0
    %3523 = vdwg.mxu0
    %v3524 = vpack.i.b16 %v2263, %v2263
    %v3525 = vlaneseq
    %v3526 = vshrl.u32 %v3525, 7
    %v3527 = vsub.s32 0, %v3526
    %v3528 = vrot.slane %v3524, %v3527
    %v3530 = vsel %vm2568, %v3528, 0
    %3532 = vmatprep.subr.bf16.mxu0 0
    %3533 = vmatpush1.bf16.msra.mxu0 %v2387
    %3534 = vmatprep.subr.bf16.mxu0 0
    %3535 = vmatpush1.bf16.msra.mxu0 %v2388
    %3536 = vmatprep.subr.bf16.mxu0 0
    %3537 = vmatpush1.bf16.msra.mxu0 %v2389
    %3538 = vmatprep.subr.bf16.mxu0 0
    %3539 = vmatpush1.bf16.msra.mxu0 %v2390
    %3540 = vmatprep.subr.bf16.mxu0 0
    %3541 = vmatpush1.bf16.msra.mxu0 0
    %3542 = vmatprep.subr.bf16.mxu0 0
    %3543 = vmatpush1.bf16.msra.mxu0 0
    %3544 = vmatprep.subr.bf16.mxu0 0
    %3545 = vmatpush1.bf16.msra.mxu0 0
    %3546 = vmatprep.subr.bf16.mxu0 0
    %3547 = vmatpush1.bf16.msra.mxu0 0
    %3548 = vmatprep.subr.bf16.mxu0 0
    %3549 = vmatpush1.bf16.msra.mxu0 0
    %3550 = vmatprep.subr.bf16.mxu0 0
    %3551 = vmatpush1.bf16.msra.mxu0 0
    %3552 = vmatprep.subr.bf16.mxu0 0
    %3553 = vmatpush1.bf16.msra.mxu0 0
    %3554 = vmatprep.subr.bf16.mxu0 0
    %3555 = vmatpush1.bf16.msra.mxu0 0
    %3556 = vmatprep.subr.bf16.mxu0 0
    %3557 = vmatpush1.bf16.msra.mxu0 0
    %3558 = vmatprep.subr.bf16.mxu0 0
    %3559 = vmatpush1.bf16.msra.mxu0 0
    %3560 = vmatprep.subr.bf16.mxu0 0
    %3561 = vmatpush1.bf16.msra.mxu0 0
    %3562 = vmatprep.subr.bf16.mxu0 0
    %3563 = vmatpush1.bf16.msra.mxu0 0
    %3564 = vmatprep.mubr.bf16.mxu0 0
    %3565 = vmatmul.mubr.bf16.gmra.mrb[0].mxu0 %v3530
    %v3566 = vpop.f32.mrb[0].mxu0
    %v3567 = vadd.f32 0.0, %v3566
    %v3568 = vpop.f32.mrb[0].mxu0
    %v3569 = vpop.f32.mrb[0].mxu0
    %v3570 = vpop.f32.mrb[0].mxu0
    %3571 = vdwg.mxu0
    %v3572 = vpack.i.b16 %v2264, %v2264
    %v3573 = vlaneseq
    %v3574 = vshrl.u32 %v3573, 7
    %v3575 = vsub.s32 0, %v3574
    %v3576 = vrot.slane %v3572, %v3575
    %v3578 = vsel %vm2568, %v3576, 0
    %3580 = vmatprep.subr.bf16.mxu0 0
    %3581 = vmatpush1.bf16.msra.mxu0 %v2391
    %3582 = vmatprep.subr.bf16.mxu0 0
    %3583 = vmatpush1.bf16.msra.mxu0 %v2392
    %3584 = vmatprep.subr.bf16.mxu0 0
    %3585 = vmatpush1.bf16.msra.mxu0 %v2393
    %3586 = vmatprep.subr.bf16.mxu0 0
    %3587 = vmatpush1.bf16.msra.mxu0 %v2394
    %3588 = vmatprep.subr.bf16.mxu0 0
    %3589 = vmatpush1.bf16.msra.mxu0 0
    %3590 = vmatprep.subr.bf16.mxu0 0
    %3591 = vmatpush1.bf16.msra.mxu0 0
    %3592 = vmatprep.subr.bf16.mxu0 0
    %3593 = vmatpush1.bf16.msra.mxu0 0
    %3594 = vmatprep.subr.bf16.mxu0 0
    %3595 = vmatpush1.bf16.msra.mxu0 0
    %3596 = vmatprep.subr.bf16.mxu0 0
    %3597 = vmatpush1.bf16.msra.mxu0 0
    %3598 = vmatprep.subr.bf16.mxu0 0
    %3599 = vmatpush1.bf16.msra.mxu0 0
    %3600 = vmatprep.subr.bf16.mxu0 0
    %3601 = vmatpush1.bf16.msra.mxu0 0
    %3602 = vmatprep.subr.bf16.mxu0 0
    %3603 = vmatpush1.bf16.msra.mxu0 0
    %3604 = vmatprep.subr.bf16.mxu0 0
    %3605 = vmatpush1.bf16.msra.mxu0 0
    %3606 = vmatprep.subr.bf16.mxu0 0
    %3607 = vmatpush1.bf16.msra.mxu0 0
    %3608 = vmatprep.subr.bf16.mxu0 0
    %3609 = vmatpush1.bf16.msra.mxu0 0
    %3610 = vmatprep.subr.bf16.mxu0 0
    %3611 = vmatpush1.bf16.msra.mxu0 0
    %3612 = vmatprep.mubr.bf16.mxu0 0
    %3613 = vmatmul.mubr.bf16.gmra.mrb[0].mxu0 %v3578
    %v3614 = vpop.f32.mrb[0].mxu0
    %v3615 = vadd.f32 0.0, %v3614
    %v3616 = vpop.f32.mrb[0].mxu0
    %v3617 = vpop.f32.mrb[0].mxu0
    %v3618 = vpop.f32.mrb[0].mxu0
    %3619 = vdwg.mxu0
    %v3620 = vpack.i.b16 %v2265, %v2265
    %v3621 = vlaneseq
    %v3622 = vshrl.u32 %v3621, 7
    %v3623 = vsub.s32 0, %v3622
    %v3624 = vrot.slane %v3620, %v3623
    %v3626 = vsel %vm2568, %v3624, 0
    %3628 = vmatprep.subr.bf16.mxu0 0
    %3629 = vmatpush1.bf16.msra.mxu0 %v2395
    %3630 = vmatprep.subr.bf16.mxu0 0
    %3631 = vmatpush1.bf16.msra.mxu0 %v2396
    %3632 = vmatprep.subr.bf16.mxu0 0
    %3633 = vmatpush1.bf16.msra.mxu0 %v2397
    %3634 = vmatprep.subr.bf16.mxu0 0
    %3635 = vmatpush1.bf16.msra.mxu0 %v2398
    %3636 = vmatprep.subr.bf16.mxu0 0
    %3637 = vmatpush1.bf16.msra.mxu0 0
    %3638 = vmatprep.subr.bf16.mxu0 0
    %3639 = vmatpush1.bf16.msra.mxu0 0
    %3640 = vmatprep.subr.bf16.mxu0 0
    %3641 = vmatpush1.bf16.msra.mxu0 0
    %3642 = vmatprep.subr.bf16.mxu0 0
    %3643 = vmatpush1.bf16.msra.mxu0 0
    %3644 = vmatprep.subr.bf16.mxu0 0
    %3645 = vmatpush1.bf16.msra.mxu0 0
    %3646 = vmatprep.subr.bf16.mxu0 0
    %3647 = vmatpush1.bf16.msra.mxu0 0
    %3648 = vmatprep.subr.bf16.mxu0 0
    %3649 = vmatpush1.bf16.msra.mxu0 0
    %3650 = vmatprep.subr.bf16.mxu0 0
    %3651 = vmatpush1.bf16.msra.mxu0 0
    %3652 = vmatprep.subr.bf16.mxu0 0
    %3653 = vmatpush1.bf16.msra.mxu0 0
    %3654 = vmatprep.subr.bf16.mxu0 0
    %3655 = vmatpush1.bf16.msra.mxu0 0
    %3656 = vmatprep.subr.bf16.mxu0 0
    %3657 = vmatpush1.bf16.msra.mxu0 0
    %3658 = vmatprep.subr.bf16.mxu0 0
    %3659 = vmatpush1.bf16.msra.mxu0 0
    %3660 = vmatprep.mubr.bf16.mxu0 0
    %3661 = vmatmul.mubr.bf16.gmra.mrb[0].mxu0 %v3626
    %v3662 = vpop.f32.mrb[0].mxu0
    %v3663 = vadd.f32 0.0, %v3662
    %v3664 = vpop.f32.mrb[0].mxu0
    %v3665 = vpop.f32.mrb[0].mxu0
    %v3666 = vpop.f32.mrb[0].mxu0
    %3667 = vdwg.mxu0
    %v3668 = vpack.i.b16 %v2266, %v2266
    %v3669 = vlaneseq
    %v3670 = vshrl.u32 %v3669, 7
    %v3671 = vsub.s32 0, %v3670
    %v3672 = vrot.slane %v3668, %v3671
    %v3674 = vsel %vm2568, %v3672, 0
    %3676 = vmatprep.subr.bf16.mxu0 0
    %3677 = vmatpush1.bf16.msra.mxu0 %v2399
    %3678 = vmatprep.subr.bf16.mxu0 0
    %3679 = vmatpush1.bf16.msra.mxu0 %v2400
    %3680 = vmatprep.subr.bf16.mxu0 0
    %3681 = vmatpush1.bf16.msra.mxu0 %v2401
    %3682 = vmatprep.subr.bf16.mxu0 0
    %3683 = vmatpush1.bf16.msra.mxu0 %v2402
    %3684 = vmatprep.subr.bf16.mxu0 0
    %3685 = vmatpush1.bf16.msra.mxu0 0
    %3686 = vmatprep.subr.bf16.mxu0 0
    %3687 = vmatpush1.bf16.msra.mxu0 0
    %3688 = vmatprep.subr.bf16.mxu0 0
    %3689 = vmatpush1.bf16.msra.mxu0 0
    %3690 = vmatprep.subr.bf16.mxu0 0
    %3691 = vmatpush1.bf16.msra.mxu0 0
    %3692 = vmatprep.subr.bf16.mxu0 0
    %3693 = vmatpush1.bf16.msra.mxu0 0
    %3694 = vmatprep.subr.bf16.mxu0 0
    %3695 = vmatpush1.bf16.msra.mxu0 0
    %3696 = vmatprep.subr.bf16.mxu0 0
    %3697 = vmatpush1.bf16.msra.mxu0 0
    %3698 = vmatprep.subr.bf16.mxu0 0
    %3699 = vmatpush1.bf16.msra.mxu0 0
    %3700 = vmatprep.subr.bf16.mxu0 0
    %3701 = vmatpush1.bf16.msra.mxu0 0
    %3702 = vmatprep.subr.bf16.mxu0 0
    %3703 = vmatpush1.bf16.msra.mxu0 0
    %3704 = vmatprep.subr.bf16.mxu0 0
    %3705 = vmatpush1.bf16.msra.mxu0 0
    %3706 = vmatprep.subr.bf16.mxu0 0
    %3707 = vmatpush1.bf16.msra.mxu0 0
    %3708 = vmatprep.mubr.bf16.mxu0 0
    %3709 = vmatmul.mubr.bf16.gmra.mrb[0].mxu0 %v3674
    %v3710 = vpop.f32.mrb[0].mxu0
    %v3711 = vadd.f32 0.0, %v3710
    %v3712 = vpop.f32.mrb[0].mxu0
    %v3713 = vpop.f32.mrb[0].mxu0
    %v3714 = vpop.f32.mrb[0].mxu0
    %3715 = vdwg.mxu0
    %v3716 = vpack.i.b16 %v2267, %v2267
    %v3717 = vlaneseq
    %v3718 = vshrl.u32 %v3717, 7
    %v3719 = vsub.s32 0, %v3718
    %v3720 = vrot.slane %v3716, %v3719
    %v3722 = vsel %vm2568, %v3720, 0
    %3724 = vmatprep.subr.bf16.mxu0 0
    %3725 = vmatpush1.bf16.msra.mxu0 %v2403
    %3726 = vmatprep.subr.bf16.mxu0 0
    %3727 = vmatpush1.bf16.msra.mxu0 %v2404
    %3728 = vmatprep.subr.bf16.mxu0 0
    %3729 = vmatpush1.bf16.msra.mxu0 %v2405
    %3730 = vmatprep.subr.bf16.mxu0 0
    %3731 = vmatpush1.bf16.msra.mxu0 %v2406
    %3732 = vmatprep.subr.bf16.mxu0 0
    %3733 = vmatpush1.bf16.msra.mxu0 0
    %3734 = vmatprep.subr.bf16.mxu0 0
    %3735 = vmatpush1.bf16.msra.mxu0 0
    %3736 = vmatprep.subr.bf16.mxu0 0
    %3737 = vmatpush1.bf16.msra.mxu0 0
    %3738 = vmatprep.subr.bf16.mxu0 0
    %3739 = vmatpush1.bf16.msra.mxu0 0
    %3740 = vmatprep.subr.bf16.mxu0 0
    %3741 = vmatpush1.bf16.msra.mxu0 0
    %3742 = vmatprep.subr.bf16.mxu0 0
    %3743 = vmatpush1.bf16.msra.mxu0 0
    %3744 = vmatprep.subr.bf16.mxu0 0
    %3745 = vmatpush1.bf16.msra.mxu0 0
    %3746 = vmatprep.subr.bf16.mxu0 0
    %3747 = vmatpush1.bf16.msra.mxu0 0
    %3748 = vmatprep.subr.bf16.mxu0 0
    %3749 = vmatpush1.bf16.msra.mxu0 0
    %3750 = vmatprep.subr.bf16.mxu0 0
    %3751 = vmatpush1.bf16.msra.mxu0 0
    %3752 = vmatprep.subr.bf16.mxu0 0
    %3753 = vmatpush1.bf16.msra.mxu0 0
    %3754 = vmatprep.subr.bf16.mxu0 0
    %3755 = vmatpush1.bf16.msra.mxu0 0
    %3756 = vmatprep.mubr.bf16.mxu0 0
    %3757 = vmatmul.mubr.bf16.gmra.mrb[0].mxu0 %v3722
    %v3758 = vpop.f32.mrb[0].mxu0
    %v3759 = vadd.f32 0.0, %v3758
    %v3760 = vpop.f32.mrb[0].mxu0
    %v3761 = vpop.f32.mrb[0].mxu0
    %v3762 = vpop.f32.mrb[0].mxu0
    %3763 = vdwg.mxu0
    %v3764 = vpack.i.b16 %v2268, %v2268
    %v3765 = vlaneseq
    %v3766 = vshrl.u32 %v3765, 7
    %v3767 = vsub.s32 0, %v3766
    %v3768 = vrot.slane %v3764, %v3767
    %v3770 = vsel %vm2568, %v3768, 0
    %3772 = vmatprep.subr.bf16.mxu0 0
    %3773 = vmatpush1.bf16.msra.mxu0 %v2407
    %3774 = vmatprep.subr.bf16.mxu0 0
    %3775 = vmatpush1.bf16.msra.mxu0 %v2408
    %3776 = vmatprep.subr.bf16.mxu0 0
    %3777 = vmatpush1.bf16.msra.mxu0 %v2409
    %3778 = vmatprep.subr.bf16.mxu0 0
    %3779 = vmatpush1.bf16.msra.mxu0 %v2410
    %3780 = vmatprep.subr.bf16.mxu0 0
    %3781 = vmatpush1.bf16.msra.mxu0 0
    %3782 = vmatprep.subr.bf16.mxu0 0
    %3783 = vmatpush1.bf16.msra.mxu0 0
    %3784 = vmatprep.subr.bf16.mxu0 0
    %3785 = vmatpush1.bf16.msra.mxu0 0
    %3786 = vmatprep.subr.bf16.mxu0 0
    %3787 = vmatpush1.bf16.msra.mxu0 0
    %3788 = vmatprep.subr.bf16.mxu0 0
    %3789 = vmatpush1.bf16.msra.mxu0 0
    %3790 = vmatprep.subr.bf16.mxu0 0
    %3791 = vmatpush1.bf16.msra.mxu0 0
    %3792 = vmatprep.subr.bf16.mxu0 0
    %3793 = vmatpush1.bf16.msra.mxu0 0
    %3794 = vmatprep.subr.bf16.mxu0 0
    %3795 = vmatpush1.bf16.msra.mxu0 0
    %3796 = vmatprep.subr.bf16.mxu0 0
    %3797 = vmatpush1.bf16.msra.mxu0 0
    %3798 = vmatprep.subr.bf16.mxu0 0
    %3799 = vmatpush1.bf16.msra.mxu0 0
    %3800 = vmatprep.subr.bf16.mxu0 0
    %3801 = vmatpush1.bf16.msra.mxu0 0
    %3802 = vmatprep.subr.bf16.mxu0 0
    %3803 = vmatpush1.bf16.msra.mxu0 0
    %3804 = vmatprep.mubr.bf16.mxu0 0
    %3805 = vmatmul.mubr.bf16.gmra.mrb[0].mxu0 %v3770
    %v3806 = vpop.f32.mrb[0].mxu0
    %v3807 = vadd.f32 0.0, %v3806
    %v3808 = vpop.f32.mrb[0].mxu0
    %v3809 = vpop.f32.mrb[0].mxu0
    %v3810 = vpop.f32.mrb[0].mxu0
    %3811 = vdwg.mxu0
    %v3812 = vpack.i.b16 %v2269, %v2269
    %v3813 = vlaneseq
    %v3814 = vshrl.u32 %v3813, 7
    %v3815 = vsub.s32 0, %v3814
    %v3816 = vrot.slane %v3812, %v3815
    %v3818 = vsel %vm2568, %v3816, 0
    %3820 = vmatprep.subr.bf16.mxu0 0
    %3821 = vmatpush1.bf16.msra.mxu0 %v2411
    %3822 = vmatprep.subr.bf16.mxu0 0
    %3823 = vmatpush1.bf16.msra.mxu0 %v2412
    %3824 = vmatprep.subr.bf16.mxu0 0
    %3825 = vmatpush1.bf16.msra.mxu0 %v2413
    %3826 = vmatprep.subr.bf16.mxu0 0
    %3827 = vmatpush1.bf16.msra.mxu0 %v2414
    %3828 = vmatprep.subr.bf16.mxu0 0
    %3829 = vmatpush1.bf16.msra.mxu0 0
    %3830 = vmatprep.subr.bf16.mxu0 0
    %3831 = vmatpush1.bf16.msra.mxu0 0
    %3832 = vmatprep.subr.bf16.mxu0 0
    %3833 = vmatpush1.bf16.msra.mxu0 0
    %3834 = vmatprep.subr.bf16.mxu0 0
    %3835 = vmatpush1.bf16.msra.mxu0 0
    %3836 = vmatprep.subr.bf16.mxu0 0
    %3837 = vmatpush1.bf16.msra.mxu0 0
    %3838 = vmatprep.subr.bf16.mxu0 0
    %3839 = vmatpush1.bf16.msra.mxu0 0
    %3840 = vmatprep.subr.bf16.mxu0 0
    %3841 = vmatpush1.bf16.msra.mxu0 0
    %3842 = vmatprep.subr.bf16.mxu0 0
    %3843 = vmatpush1.bf16.msra.mxu0 0
    %3844 = vmatprep.subr.bf16.mxu0 0
    %3845 = vmatpush1.bf16.msra.mxu0 0
    %3846 = vmatprep.subr.bf16.mxu0 0
    %3847 = vmatpush1.bf16.msra.mxu0 0
    %3848 = vmatprep.subr.bf16.mxu0 0
    %3849 = vmatpush1.bf16.msra.mxu0 0
    %3850 = vmatprep.subr.bf16.mxu0 0
    %3851 = vmatpush1.bf16.msra.mxu0 0
    %3852 = vmatprep.mubr.bf16.mxu0 0
    %3853 = vmatmul.mubr.bf16.gmra.mrb[0].mxu0 %v3818
    %v3854 = vpop.f32.mrb[0].mxu0
    %v3855 = vadd.f32 0.0, %v3854
    %v3856 = vpop.f32.mrb[0].mxu0
    %v3857 = vpop.f32.mrb[0].mxu0
    %v3858 = vpop.f32.mrb[0].mxu0
    %3859 = vdwg.mxu0
    %v3860 = vpack.i.b16 %v2270, %v2270
    %v3861 = vlaneseq
    %v3862 = vshrl.u32 %v3861, 7
    %v3863 = vsub.s32 0, %v3862
    %v3864 = vrot.slane %v3860, %v3863
    %v3866 = vsel %vm2568, %v3864, 0
    %3868 = vmatprep.subr.bf16.mxu0 0
    %3869 = vmatpush1.bf16.msra.mxu0 %v2415
    %3870 = vmatprep.subr.bf16.mxu0 0
    %3871 = vmatpush1.bf16.msra.mxu0 %v2416
    %3872 = vmatprep.subr.bf16.mxu0 0
    %3873 = vmatpush1.bf16.msra.mxu0 %v2417
    %3874 = vmatprep.subr.bf16.mxu0 0
    %3875 = vmatpush1.bf16.msra.mxu0 %v2418
    %3876 = vmatprep.subr.bf16.mxu0 0
    %3877 = vmatpush1.bf16.msra.mxu0 0
    %3878 = vmatprep.subr.bf16.mxu0 0
    %3879 = vmatpush1.bf16.msra.mxu0 0
    %3880 = vmatprep.subr.bf16.mxu0 0
    %3881 = vmatpush1.bf16.msra.mxu0 0
    %3882 = vmatprep.subr.bf16.mxu0 0
    %3883 = vmatpush1.bf16.msra.mxu0 0
    %3884 = vmatprep.subr.bf16.mxu0 0
    %3885 = vmatpush1.bf16.msra.mxu0 0
    %3886 = vmatprep.subr.bf16.mxu0 0
    %3887 = vmatpush1.bf16.msra.mxu0 0
    %3888 = vmatprep.subr.bf16.mxu0 0
    %3889 = vmatpush1.bf16.msra.mxu0 0
    %3890 = vmatprep.subr.bf16.mxu0 0
    %3891 = vmatpush1.bf16.msra.mxu0 0
    %3892 = vmatprep.subr.bf16.mxu0 0
    %3893 = vmatpush1.bf16.msra.mxu0 0
    %3894 = vmatprep.subr.bf16.mxu0 0
    %3895 = vmatpush1.bf16.msra.mxu0 0
    %3896 = vmatprep.subr.bf16.mxu0 0
    %3897 = vmatpush1.bf16.msra.mxu0 0
    %3898 = vmatprep.subr.bf16.mxu0 0
    %3899 = vmatpush1.bf16.msra.mxu0 0
    %3900 = vmatprep.mubr.bf16.mxu0 0
    %3901 = vmatmul.mubr.bf16.gmra.mrb[0].mxu0 %v3866
    %v3902 = vpop.f32.mrb[0].mxu0
    %v3903 = vadd.f32 0.0, %v3902
    %v3904 = vpop.f32.mrb[0].mxu0
    %v3905 = vpop.f32.mrb[0].mxu0
    %v3906 = vpop.f32.mrb[0].mxu0
    %3907 = vdwg.mxu0
    %v3908 = vpack.i.b16 %v2271, %v2271
    %v3909 = vlaneseq
    %v3910 = vshrl.u32 %v3909, 7
    %v3911 = vsub.s32 0, %v3910
    %v3912 = vrot.slane %v3908, %v3911
    %v3914 = vsel %vm2568, %v3912, 0
    %3916 = vmatprep.subr.bf16.mxu0 0
    %3917 = vmatpush1.bf16.msra.mxu0 %v2419
    %3918 = vmatprep.subr.bf16.mxu0 0
    %3919 = vmatpush1.bf16.msra.mxu0 %v2420
    %3920 = vmatprep.subr.bf16.mxu0 0
    %3921 = vmatpush1.bf16.msra.mxu0 %v2421
    %3922 = vmatprep.subr.bf16.mxu0 0
    %3923 = vmatpush1.bf16.msra.mxu0 %v2422
    %3924 = vmatprep.subr.bf16.mxu0 0
    %3925 = vmatpush1.bf16.msra.mxu0 0
    %3926 = vmatprep.subr.bf16.mxu0 0
    %3927 = vmatpush1.bf16.msra.mxu0 0
    %3928 = vmatprep.subr.bf16.mxu0 0
    %3929 = vmatpush1.bf16.msra.mxu0 0
    %3930 = vmatprep.subr.bf16.mxu0 0
    %3931 = vmatpush1.bf16.msra.mxu0 0
    %3932 = vmatprep.subr.bf16.mxu0 0
    %3933 = vmatpush1.bf16.msra.mxu0 0
    %3934 = vmatprep.subr.bf16.mxu0 0
    %3935 = vmatpush1.bf16.msra.mxu0 0
    %3936 = vmatprep.subr.bf16.mxu0 0
    %3937 = vmatpush1.bf16.msra.mxu0 0
    %3938 = vmatprep.subr.bf16.mxu0 0
    %3939 = vmatpush1.bf16.msra.mxu0 0
    %3940 = vmatprep.subr.bf16.mxu0 0
    %3941 = vmatpush1.bf16.msra.mxu0 0
    %3942 = vmatprep.subr.bf16.mxu0 0
    %3943 = vmatpush1.bf16.msra.mxu0 0
    %3944 = vmatprep.subr.bf16.mxu0 0
    %3945 = vmatpush1.bf16.msra.mxu0 0
    %3946 = vmatprep.subr.bf16.mxu0 0
    %3947 = vmatpush1.bf16.msra.mxu0 0
    %3948 = vmatprep.mubr.bf16.mxu0 0
    %3949 = vmatmul.mubr.bf16.gmra.mrb[0].mxu0 %v3914
    %v3950 = vpop.f32.mrb[0].mxu0
    %v3951 = vadd.f32 0.0, %v3950
    %v3952 = vpop.f32.mrb[0].mxu0
    %v3953 = vpop.f32.mrb[0].mxu0
    %v3954 = vpop.f32.mrb[0].mxu0
    %3955 = vdwg.mxu0
    %v3956 = vpack.i.b16 %v2272, %v2272
    %v3957 = vlaneseq
    %v3958 = vshrl.u32 %v3957, 7
    %v3959 = vsub.s32 0, %v3958
    %v3960 = vrot.slane %v3956, %v3959
    %v3962 = vsel %vm2568, %v3960, 0
    %3964 = vmatprep.subr.bf16.mxu0 0
    %3965 = vmatpush1.bf16.msra.mxu0 %v2423
    %3966 = vmatprep.subr.bf16.mxu0 0
    %3967 = vmatpush1.bf16.msra.mxu0 %v2424
    %3968 = vmatprep.subr.bf16.mxu0 0
    %3969 = vmatpush1.bf16.msra.mxu0 %v2425
    %3970 = vmatprep.subr.bf16.mxu0 0
    %3971 = vmatpush1.bf16.msra.mxu0 %v2426
    %3972 = vmatprep.subr.bf16.mxu0 0
    %3973 = vmatpush1.bf16.msra.mxu0 0
    %3974 = vmatprep.subr.bf16.mxu0 0
    %3975 = vmatpush1.bf16.msra.mxu0 0
    %3976 = vmatprep.subr.bf16.mxu0 0
    %3977 = vmatpush1.bf16.msra.mxu0 0
    %3978 = vmatprep.subr.bf16.mxu0 0
    %3979 = vmatpush1.bf16.msra.mxu0 0
    %3980 = vmatprep.subr.bf16.mxu0 0
    %3981 = vmatpush1.bf16.msra.mxu0 0
    %3982 = vmatprep.subr.bf16.mxu0 0
    %3983 = vmatpush1.bf16.msra.mxu0 0
    %3984 = vmatprep.subr.bf16.mxu0 0
    %3985 = vmatpush1.bf16.msra.mxu0 0
    %3986 = vmatprep.subr.bf16.mxu0 0
    %3987 = vmatpush1.bf16.msra.mxu0 0
    %3988 = vmatprep.subr.bf16.mxu0 0
    %3989 = vmatpush1.bf16.msra.mxu0 0
    %3990 = vmatprep.subr.bf16.mxu0 0
    %3991 = vmatpush1.bf16.msra.mxu0 0
    %3992 = vmatprep.subr.bf16.mxu0 0
    %3993 = vmatpush1.bf16.msra.mxu0 0
    %3994 = vmatprep.subr.bf16.mxu0 0
    %3995 = vmatpush1.bf16.msra.mxu0 0
    %3996 = vmatprep.mubr.bf16.mxu0 0
    %3997 = vmatmul.mubr.bf16.gmra.mrb[0].mxu0 %v3962
    %v3998 = vpop.f32.mrb[0].mxu0
    %v3999 = vadd.f32 0.0, %v3998
    %v4000 = vpop.f32.mrb[0].mxu0
    %v4001 = vpop.f32.mrb[0].mxu0
    %v4002 = vpop.f32.mrb[0].mxu0
    %4003 = vdwg.mxu0
    %v4004 = vpack.i.b16 %v2273, %v2273
    %v4005 = vlaneseq
    %v4006 = vshrl.u32 %v4005, 7
    %v4007 = vsub.s32 0, %v4006
    %v4008 = vrot.slane %v4004, %v4007
    %v4010 = vsel %vm2568, %v4008, 0
    %4012 = vmatprep.subr.bf16.mxu0 0
    %4013 = vmatpush1.bf16.msra.mxu0 %v2427
    %4014 = vmatprep.subr.bf16.mxu0 0
    %4015 = vmatpush1.bf16.msra.mxu0 %v2428
    %4016 = vmatprep.subr.bf16.mxu0 0
    %4017 = vmatpush1.bf16.msra.mxu0 %v2429
    %4018 = vmatprep.subr.bf16.mxu0 0
    %4019 = vmatpush1.bf16.msra.mxu0 %v2430
    %4020 = vmatprep.subr.bf16.mxu0 0
    %4021 = vmatpush1.bf16.msra.mxu0 0
    %4022 = vmatprep.subr.bf16.mxu0 0
    %4023 = vmatpush1.bf16.msra.mxu0 0
    %4024 = vmatprep.subr.bf16.mxu0 0
    %4025 = vmatpush1.bf16.msra.mxu0 0
    %4026 = vmatprep.subr.bf16.mxu0 0
    %4027 = vmatpush1.bf16.msra.mxu0 0
    %4028 = vmatprep.subr.bf16.mxu0 0
    %4029 = vmatpush1.bf16.msra.mxu0 0
    %4030 = vmatprep.subr.bf16.mxu0 0
    %4031 = vmatpush1.bf16.msra.mxu0 0
    %4032 = vmatprep.subr.bf16.mxu0 0
    %4033 = vmatpush1.bf16.msra.mxu0 0
    %4034 = vmatprep.subr.bf16.mxu0 0
    %4035 = vmatpush1.bf16.msra.mxu0 0
    %4036 = vmatprep.subr.bf16.mxu0 0
    %4037 = vmatpush1.bf16.msra.mxu0 0
    %4038 = vmatprep.subr.bf16.mxu0 0
    %4039 = vmatpush1.bf16.msra.mxu0 0
    %4040 = vmatprep.subr.bf16.mxu0 0
    %4041 = vmatpush1.bf16.msra.mxu0 0
    %4042 = vmatprep.subr.bf16.mxu0 0
    %4043 = vmatpush1.bf16.msra.mxu0 0
    %4044 = vmatprep.mubr.bf16.mxu0 0
    %4045 = vmatmul.mubr.bf16.gmra.mrb[0].mxu0 %v4010
    %v4046 = vpop.f32.mrb[0].mxu0
    %v4047 = vadd.f32 0.0, %v4046
    %v4048 = vpop.f32.mrb[0].mxu0
    %v4049 = vpop.f32.mrb[0].mxu0
    %v4050 = vpop.f32.mrb[0].mxu0
    %4051 = vdwg.mxu0
    %v4052 = vpack.i.b16 %v2274, %v2274
    %v4053 = vlaneseq
    %v4054 = vshrl.u32 %v4053, 7
    %v4055 = vsub.s32 0, %v4054
    %v4056 = vrot.slane %v4052, %v4055
    %v4058 = vsel %vm2568, %v4056, 0
    %4060 = vmatprep.subr.bf16.mxu0 0
    %4061 = vmatpush1.bf16.msra.mxu0 %v2431
    %4062 = vmatprep.subr.bf16.mxu0 0
    %4063 = vmatpush1.bf16.msra.mxu0 %v2432
    %4064 = vmatprep.subr.bf16.mxu0 0
    %4065 = vmatpush1.bf16.msra.mxu0 %v2433
    %4066 = vmatprep.subr.bf16.mxu0 0
    %4067 = vmatpush1.bf16.msra.mxu0 %v2434
    %4068 = vmatprep.subr.bf16.mxu0 0
    %4069 = vmatpush1.bf16.msra.mxu0 0
    %4070 = vmatprep.subr.bf16.mxu0 0
    %4071 = vmatpush1.bf16.msra.mxu0 0
    %4072 = vmatprep.subr.bf16.mxu0 0
    %4073 = vmatpush1.bf16.msra.mxu0 0
    %4074 = vmatprep.subr.bf16.mxu0 0
    %4075 = vmatpush1.bf16.msra.mxu0 0
    %4076 = vmatprep.subr.bf16.mxu0 0
    %4077 = vmatpush1.bf16.msra.mxu0 0
    %4078 = vmatprep.subr.bf16.mxu0 0
    %4079 = vmatpush1.bf16.msra.mxu0 0
    %4080 = vmatprep.subr.bf16.mxu0 0
    %4081 = vmatpush1.bf16.msra.mxu0 0
    %4082 = vmatprep.subr.bf16.mxu0 0
    %4083 = vmatpush1.bf16.msra.mxu0 0
    %4084 = vmatprep.subr.bf16.mxu0 0
    %4085 = vmatpush1.bf16.msra.mxu0 0
    %4086 = vmatprep.subr.bf16.mxu0 0
    %4087 = vmatpush1.bf16.msra.mxu0 0
    %4088 = vmatprep.subr.bf16.mxu0 0
    %4089 = vmatpush1.bf16.msra.mxu0 0
    %4090 = vmatprep.subr.bf16.mxu0 0
    %4091 = vmatpush1.bf16.msra.mxu0 0
    %4092 = vmatprep.mubr.bf16.mxu0 0
    %4093 = vmatmul.mubr.bf16.gmra.mrb[0].mxu0 %v4058
    %v4094 = vpop.f32.mrb[0].mxu0
    %v4095 = vadd.f32 0.0, %v4094
    %v4096 = vpop.f32.mrb[0].mxu0
    %v4097 = vpop.f32.mrb[0].mxu0
    %v4098 = vpop.f32.mrb[0].mxu0
    %4099 = vdwg.mxu0
    %v4100 = vpack.i.b16 %v2275, %v2275
    %v4101 = vlaneseq
    %v4102 = vshrl.u32 %v4101, 7
    %v4103 = vsub.s32 0, %v4102
    %v4104 = vrot.slane %v4100, %v4103
    %v4106 = vsel %vm2568, %v4104, 0
    %4108 = vmatprep.subr.bf16.mxu0 0
    %4109 = vmatpush1.bf16.msra.mxu0 %v2435
    %4110 = vmatprep.subr.bf16.mxu0 0
    %4111 = vmatpush1.bf16.msra.mxu0 %v2436
    %4112 = vmatprep.subr.bf16.mxu0 0
    %4113 = vmatpush1.bf16.msra.mxu0 %v2437
    %4114 = vmatprep.subr.bf16.mxu0 0
    %4115 = vmatpush1.bf16.msra.mxu0 %v2438
    %4116 = vmatprep.subr.bf16.mxu0 0
    %4117 = vmatpush1.bf16.msra.mxu0 0
    %4118 = vmatprep.subr.bf16.mxu0 0
    %4119 = vmatpush1.bf16.msra.mxu0 0
    %4120 = vmatprep.subr.bf16.mxu0 0
    %4121 = vmatpush1.bf16.msra.mxu0 0
    %4122 = vmatprep.subr.bf16.mxu0 0
    %4123 = vmatpush1.bf16.msra.mxu0 0
    %4124 = vmatprep.subr.bf16.mxu0 0
    %4125 = vmatpush1.bf16.msra.mxu0 0
    %4126 = vmatprep.subr.bf16.mxu0 0
    %4127 = vmatpush1.bf16.msra.mxu0 0
    %4128 = vmatprep.subr.bf16.mxu0 0
    %4129 = vmatpush1.bf16.msra.mxu0 0
    %4130 = vmatprep.subr.bf16.mxu0 0
    %4131 = vmatpush1.bf16.msra.mxu0 0
    %4132 = vmatprep.subr.bf16.mxu0 0
    %4133 = vmatpush1.bf16.msra.mxu0 0
    %4134 = vmatprep.subr.bf16.mxu0 0
    %4135 = vmatpush1.bf16.msra.mxu0 0
    %4136 = vmatprep.subr.bf16.mxu0 0
    %4137 = vmatpush1.bf16.msra.mxu0 0
    %4138 = vmatprep.subr.bf16.mxu0 0
    %4139 = vmatpush1.bf16.msra.mxu0 0
    %4140 = vmatprep.mubr.bf16.mxu0 0
    %4141 = vmatmul.mubr.bf16.gmra.mrb[0].mxu0 %v4106
    %v4142 = vpop.f32.mrb[0].mxu0
    %v4143 = vadd.f32 0.0, %v4142
    %v4144 = vpop.f32.mrb[0].mxu0
    %v4145 = vpop.f32.mrb[0].mxu0
    %v4146 = vpop.f32.mrb[0].mxu0
    %4147 = vdwg.mxu0
    %v4148 = vpack.i.b16 %v2276, %v2276
    %v4149 = vlaneseq
    %v4150 = vshrl.u32 %v4149, 7
    %v4151 = vsub.s32 0, %v4150
    %v4152 = vrot.slane %v4148, %v4151
    %v4154 = vsel %vm2568, %v4152, 0
    %4156 = vmatprep.subr.bf16.mxu0 0
    %4157 = vmatpush1.bf16.msra.mxu0 %v2439
    %4158 = vmatprep.subr.bf16.mxu0 0
    %4159 = vmatpush1.bf16.msra.mxu0 %v2440
    %4160 = vmatprep.subr.bf16.mxu0 0
    %4161 = vmatpush1.bf16.msra.mxu0 %v2441
    %4162 = vmatprep.subr.bf16.mxu0 0
    %4163 = vmatpush1.bf16.msra.mxu0 %v2442
    %4164 = vmatprep.subr.bf16.mxu0 0
    %4165 = vmatpush1.bf16.msra.mxu0 0
    %4166 = vmatprep.subr.bf16.mxu0 0
    %4167 = vmatpush1.bf16.msra.mxu0 0
    %4168 = vmatprep.subr.bf16.mxu0 0
    %4169 = vmatpush1.bf16.msra.mxu0 0
    %4170 = vmatprep.subr.bf16.mxu0 0
    %4171 = vmatpush1.bf16.msra.mxu0 0
    %4172 = vmatprep.subr.bf16.mxu0 0
    %4173 = vmatpush1.bf16.msra.mxu0 0
    %4174 = vmatprep.subr.bf16.mxu0 0
    %4175 = vmatpush1.bf16.msra.mxu0 0
    %4176 = vmatprep.subr.bf16.mxu0 0
    %4177 = vmatpush1.bf16.msra.mxu0 0
    %4178 = vmatprep.subr.bf16.mxu0 0
    %4179 = vmatpush1.bf16.msra.mxu0 0
    %4180 = vmatprep.subr.bf16.mxu0 0
    %4181 = vmatpush1.bf16.msra.mxu0 0
    %4182 = vmatprep.subr.bf16.mxu0 0
    %4183 = vmatpush1.bf16.msra.mxu0 0
    %4184 = vmatprep.subr.bf16.mxu0 0
    %4185 = vmatpush1.bf16.msra.mxu0 0
    %4186 = vmatprep.subr.bf16.mxu0 0
    %4187 = vmatpush1.bf16.msra.mxu0 0
    %4188 = vmatprep.mubr.bf16.mxu0 0
    %4189 = vmatmul.mubr.bf16.gmra.mrb[0].mxu0 %v4154
    %v4190 = vpop.f32.mrb[0].mxu0
    %v4191 = vadd.f32 0.0, %v4190
    %v4192 = vpop.f32.mrb[0].mxu0
    %v4193 = vpop.f32.mrb[0].mxu0
    %v4194 = vpop.f32.mrb[0].mxu0
    %4195 = vdwg.mxu0
    %v4196 = vpack.i.b16 %v2277, %v2277
    %v4197 = vlaneseq
    %v4198 = vshrl.u32 %v4197, 7
    %v4199 = vsub.s32 0, %v4198
    %v4200 = vrot.slane %v4196, %v4199
    %v4202 = vsel %vm2568, %v4200, 0
    %4204 = vmatprep.subr.bf16.mxu0 0
    %4205 = vmatpush1.bf16.msra.mxu0 %v2443
    %4206 = vmatprep.subr.bf16.mxu0 0
    %4207 = vmatpush1.bf16.msra.mxu0 %v2444
    %4208 = vmatprep.subr.bf16.mxu0 0
    %4209 = vmatpush1.bf16.msra.mxu0 %v2445
    %4210 = vmatprep.subr.bf16.mxu0 0
    %4211 = vmatpush1.bf16.msra.mxu0 %v2446
    %4212 = vmatprep.subr.bf16.mxu0 0
    %4213 = vmatpush1.bf16.msra.mxu0 0
    %4214 = vmatprep.subr.bf16.mxu0 0
    %4215 = vmatpush1.bf16.msra.mxu0 0
    %4216 = vmatprep.subr.bf16.mxu0 0
    %4217 = vmatpush1.bf16.msra.mxu0 0
    %4218 = vmatprep.subr.bf16.mxu0 0
    %4219 = vmatpush1.bf16.msra.mxu0 0
    %4220 = vmatprep.subr.bf16.mxu0 0
    %4221 = vmatpush1.bf16.msra.mxu0 0
    %4222 = vmatprep.subr.bf16.mxu0 0
    %4223 = vmatpush1.bf16.msra.mxu0 0
    %4224 = vmatprep.subr.bf16.mxu0 0
    %4225 = vmatpush1.bf16.msra.mxu0 0
    %4226 = vmatprep.subr.bf16.mxu0 0
    %4227 = vmatpush1.bf16.msra.mxu0 0
    %4228 = vmatprep.subr.bf16.mxu0 0
    %4229 = vmatpush1.bf16.msra.mxu0 0
    %4230 = vmatprep.subr.bf16.mxu0 0
    %4231 = vmatpush1.bf16.msra.mxu0 0
    %4232 = vmatprep.subr.bf16.mxu0 0
    %4233 = vmatpush1.bf16.msra.mxu0 0
    %4234 = vmatprep.subr.bf16.mxu0 0
    %4235 = vmatpush1.bf16.msra.mxu0 0
    %4236 = vmatprep.mubr.bf16.mxu0 0
    %4237 = vmatmul.mubr.bf16.gmra.mrb[0].mxu0 %v4202
    %v4238 = vpop.f32.mrb[0].mxu0
    %v4239 = vadd.f32 0.0, %v4238
    %v4240 = vpop.f32.mrb[0].mxu0
    %v4241 = vpop.f32.mrb[0].mxu0
    %v4242 = vpop.f32.mrb[0].mxu0
    %4243 = vdwg.mxu0
    %v4244 = vpack.i.b16 %v2278, %v2278
    %v4245 = vlaneseq
    %v4246 = vshrl.u32 %v4245, 7
    %v4247 = vsub.s32 0, %v4246
    %v4248 = vrot.slane %v4244, %v4247
    %v4250 = vsel %vm2568, %v4248, 0
    %4252 = vmatprep.subr.bf16.mxu0 0
    %4253 = vmatpush1.bf16.msra.mxu0 %v2447
    %4254 = vmatprep.subr.bf16.mxu0 0
    %4255 = vmatpush1.bf16.msra.mxu0 %v2448
    %4256 = vmatprep.subr.bf16.mxu0 0
    %4257 = vmatpush1.bf16.msra.mxu0 %v2449
    %4258 = vmatprep.subr.bf16.mxu0 0
    %4259 = vmatpush1.bf16.msra.mxu0 %v2450
    %4260 = vmatprep.subr.bf16.mxu0 0
    %4261 = vmatpush1.bf16.msra.mxu0 0
    %4262 = vmatprep.subr.bf16.mxu0 0
    %4263 = vmatpush1.bf16.msra.mxu0 0
    %4264 = vmatprep.subr.bf16.mxu0 0
    %4265 = vmatpush1.bf16.msra.mxu0 0
    %4266 = vmatprep.subr.bf16.mxu0 0
    %4267 = vmatpush1.bf16.msra.mxu0 0
    %4268 = vmatprep.subr.bf16.mxu0 0
    %4269 = vmatpush1.bf16.msra.mxu0 0
    %4270 = vmatprep.subr.bf16.mxu0 0
    %4271 = vmatpush1.bf16.msra.mxu0 0
    %4272 = vmatprep.subr.bf16.mxu0 0
    %4273 = vmatpush1.bf16.msra.mxu0 0
    %4274 = vmatprep.subr.bf16.mxu0 0
    %4275 = vmatpush1.bf16.msra.mxu0 0
    %4276 = vmatprep.subr.bf16.mxu0 0
    %4277 = vmatpush1.bf16.msra.mxu0 0
    %4278 = vmatprep.subr.bf16.mxu0 0
    %4279 = vmatpush1.bf16.msra.mxu0 0
    %4280 = vmatprep.subr.bf16.mxu0 0
    %4281 = vmatpush1.bf16.msra.mxu0 0
    %4282 = vmatprep.subr.bf16.mxu0 0
    %4283 = vmatpush1.bf16.msra.mxu0 0
    %4284 = vmatprep.mubr.bf16.mxu0 0
    %4285 = vmatmul.mubr.bf16.gmra.mrb[0].mxu0 %v4250
    %v4286 = vpop.f32.mrb[0].mxu0
    %v4287 = vadd.f32 0.0, %v4286
    %v4288 = vpop.f32.mrb[0].mxu0
    %v4289 = vpop.f32.mrb[0].mxu0
    %v4290 = vpop.f32.mrb[0].mxu0
    %4291 = vdwg.mxu0
    %v4292 = vpack.i.b16 %v2279, %v2279
    %v4293 = vlaneseq
    %v4294 = vshrl.u32 %v4293, 7
    %v4295 = vsub.s32 0, %v4294
    %v4296 = vrot.slane %v4292, %v4295
    %v4298 = vsel %vm2568, %v4296, 0
    %4300 = vmatprep.subr.bf16.mxu0 0
    %4301 = vmatpush1.bf16.msra.mxu0 %v2451
    %4302 = vmatprep.subr.bf16.mxu0 0
    %4303 = vmatpush1.bf16.msra.mxu0 %v2452
    %4304 = vmatprep.subr.bf16.mxu0 0
    %4305 = vmatpush1.bf16.msra.mxu0 %v2453
    %4306 = vmatprep.subr.bf16.mxu0 0
    %4307 = vmatpush1.bf16.msra.mxu0 %v2454
    %4308 = vmatprep.subr.bf16.mxu0 0
    %4309 = vmatpush1.bf16.msra.mxu0 0
    %4310 = vmatprep.subr.bf16.mxu0 0
    %4311 = vmatpush1.bf16.msra.mxu0 0
    %4312 = vmatprep.subr.bf16.mxu0 0
    %4313 = vmatpush1.bf16.msra.mxu0 0
    %4314 = vmatprep.subr.bf16.mxu0 0
    %4315 = vmatpush1.bf16.msra.mxu0 0
    %4316 = vmatprep.subr.bf16.mxu0 0
    %4317 = vmatpush1.bf16.msra.mxu0 0
    %4318 = vmatprep.subr.bf16.mxu0 0
    %4319 = vmatpush1.bf16.msra.mxu0 0
    %4320 = vmatprep.subr.bf16.mxu0 0
    %4321 = vmatpush1.bf16.msra.mxu0 0
    %4322 = vmatprep.subr.bf16.mxu0 0
    %4323 = vmatpush1.bf16.msra.mxu0 0
    %4324 = vmatprep.subr.bf16.mxu0 0
    %4325 = vmatpush1.bf16.msra.mxu0 0
    %4326 = vmatprep.subr.bf16.mxu0 0
    %4327 = vmatpush1.bf16.msra.mxu0 0
    %4328 = vmatprep.subr.bf16.mxu0 0
    %4329 = vmatpush1.bf16.msra.mxu0 0
    %4330 = vmatprep.subr.bf16.mxu0 0
    %4331 = vmatpush1.bf16.msra.mxu0 0
    %4332 = vmatprep.mubr.bf16.mxu0 0
    %4333 = vmatmul.mubr.bf16.gmra.mrb[0].mxu0 %v4298
    %v4334 = vpop.f32.mrb[0].mxu0
    %v4335 = vadd.f32 0.0, %v4334
    %v4336 = vpop.f32.mrb[0].mxu0
    %v4337 = vpop.f32.mrb[0].mxu0
    %v4338 = vpop.f32.mrb[0].mxu0
    %4339 = vdwg.mxu0
    %v4340 = vpack.i.b16 %v2280, %v2280
    %v4341 = vlaneseq
    %v4342 = vshrl.u32 %v4341, 7
    %v4343 = vsub.s32 0, %v4342
    %v4344 = vrot.slane %v4340, %v4343
    %v4346 = vsel %vm2568, %v4344, 0
    %4348 = vmatprep.subr.bf16.mxu0 0
    %4349 = vmatpush1.bf16.msra.mxu0 %v2455
    %4350 = vmatprep.subr.bf16.mxu0 0
    %4351 = vmatpush1.bf16.msra.mxu0 %v2456
    %4352 = vmatprep.subr.bf16.mxu0 0
    %4353 = vmatpush1.bf16.msra.mxu0 %v2457
    %4354 = vmatprep.subr.bf16.mxu0 0
    %4355 = vmatpush1.bf16.msra.mxu0 %v2458
    %4356 = vmatprep.subr.bf16.mxu0 0
    %4357 = vmatpush1.bf16.msra.mxu0 0
    %4358 = vmatprep.subr.bf16.mxu0 0
    %4359 = vmatpush1.bf16.msra.mxu0 0
    %4360 = vmatprep.subr.bf16.mxu0 0
    %4361 = vmatpush1.bf16.msra.mxu0 0
    %4362 = vmatprep.subr.bf16.mxu0 0
    %4363 = vmatpush1.bf16.msra.mxu0 0
    %4364 = vmatprep.subr.bf16.mxu0 0
    %4365 = vmatpush1.bf16.msra.mxu0 0
    %4366 = vmatprep.subr.bf16.mxu0 0
    %4367 = vmatpush1.bf16.msra.mxu0 0
    %4368 = vmatprep.subr.bf16.mxu0 0
    %4369 = vmatpush1.bf16.msra.mxu0 0
    %4370 = vmatprep.subr.bf16.mxu0 0
    %4371 = vmatpush1.bf16.msra.mxu0 0
    %4372 = vmatprep.subr.bf16.mxu0 0
    %4373 = vmatpush1.bf16.msra.mxu0 0
    %4374 = vmatprep.subr.bf16.mxu0 0
    %4375 = vmatpush1.bf16.msra.mxu0 0
    %4376 = vmatprep.subr.bf16.mxu0 0
    %4377 = vmatpush1.bf16.msra.mxu0 0
    %4378 = vmatprep.subr.bf16.mxu0 0
    %4379 = vmatpush1.bf16.msra.mxu0 0
    %4380 = vmatprep.mubr.bf16.mxu0 0
    %4381 = vmatmul.mubr.bf16.gmra.mrb[0].mxu0 %v4346
    %v4382 = vpop.f32.mrb[0].mxu0
    %v4383 = vadd.f32 0.0, %v4382
    %v4384 = vpop.f32.mrb[0].mxu0
    %v4385 = vpop.f32.mrb[0].mxu0
    %v4386 = vpop.f32.mrb[0].mxu0
    %4387 = vdwg.mxu0
    %v4388 = vpack.i.b16 %v2281, %v2281
    %v4389 = vlaneseq
    %v4390 = vshrl.u32 %v4389, 7
    %v4391 = vsub.s32 0, %v4390
    %v4392 = vrot.slane %v4388, %v4391
    %v4394 = vsel %vm2568, %v4392, 0
    %4396 = vmatprep.subr.bf16.mxu0 0
    %4397 = vmatpush1.bf16.msra.mxu0 %v2459
    %4398 = vmatprep.subr.bf16.mxu0 0
    %4399 = vmatpush1.bf16.msra.mxu0 %v2460
    %4400 = vmatprep.subr.bf16.mxu0 0
    %4401 = vmatpush1.bf16.msra.mxu0 %v2461
    %4402 = vmatprep.subr.bf16.mxu0 0
    %4403 = vmatpush1.bf16.msra.mxu0 %v2462
    %4404 = vmatprep.subr.bf16.mxu0 0
    %4405 = vmatpush1.bf16.msra.mxu0 0
    %4406 = vmatprep.subr.bf16.mxu0 0
    %4407 = vmatpush1.bf16.msra.mxu0 0
    %4408 = vmatprep.subr.bf16.mxu0 0
    %4409 = vmatpush1.bf16.msra.mxu0 0
    %4410 = vmatprep.subr.bf16.mxu0 0
    %4411 = vmatpush1.bf16.msra.mxu0 0
    %4412 = vmatprep.subr.bf16.mxu0 0
    %4413 = vmatpush1.bf16.msra.mxu0 0
    %4414 = vmatprep.subr.bf16.mxu0 0
    %4415 = vmatpush1.bf16.msra.mxu0 0
    %4416 = vmatprep.subr.bf16.mxu0 0
    %4417 = vmatpush1.bf16.msra.mxu0 0
    %4418 = vmatprep.subr.bf16.mxu0 0
    %4419 = vmatpush1.bf16.msra.mxu0 0
    %4420 = vmatprep.subr.bf16.mxu0 0
    %4421 = vmatpush1.bf16.msra.mxu0 0
    %4422 = vmatprep.subr.bf16.mxu0 0
    %4423 = vmatpush1.bf16.msra.mxu0 0
    %4424 = vmatprep.subr.bf16.mxu0 0
    %4425 = vmatpush1.bf16.msra.mxu0 0
    %4426 = vmatprep.subr.bf16.mxu0 0
    %4427 = vmatpush1.bf16.msra.mxu0 0
    %4428 = vmatprep.mubr.bf16.mxu0 0
    %4429 = vmatmul.mubr.bf16.gmra.mrb[0].mxu0 %v4394
    %v4430 = vpop.f32.mrb[0].mxu0
    %v4431 = vadd.f32 0.0, %v4430
    %v4432 = vpop.f32.mrb[0].mxu0
    %v4433 = vpop.f32.mrb[0].mxu0
    %v4434 = vpop.f32.mrb[0].mxu0
    %4435 = vdwg.mxu0
    %v4436 = vpack.i.b16 %v2282, %v2282
    %v4437 = vlaneseq
    %v4438 = vshrl.u32 %v4437, 7
    %v4439 = vsub.s32 0, %v4438
    %v4440 = vrot.slane %v4436, %v4439
    %v4442 = vsel %vm2568, %v4440, 0
    %4444 = vmatprep.subr.bf16.mxu0 0
    %4445 = vmatpush1.bf16.msra.mxu0 %v2463
    %4446 = vmatprep.subr.bf16.mxu0 0
    %4447 = vmatpush1.bf16.msra.mxu0 %v2464
    %4448 = vmatprep.subr.bf16.mxu0 0
    %4449 = vmatpush1.bf16.msra.mxu0 %v2465
    %4450 = vmatprep.subr.bf16.mxu0 0
    %4451 = vmatpush1.bf16.msra.mxu0 %v2466
    %4452 = vmatprep.subr.bf16.mxu0 0
    %4453 = vmatpush1.bf16.msra.mxu0 0
    %4454 = vmatprep.subr.bf16.mxu0 0
    %4455 = vmatpush1.bf16.msra.mxu0 0
    %4456 = vmatprep.subr.bf16.mxu0 0
    %4457 = vmatpush1.bf16.msra.mxu0 0
    %4458 = vmatprep.subr.bf16.mxu0 0
    %4459 = vmatpush1.bf16.msra.mxu0 0
    %4460 = vmatprep.subr.bf16.mxu0 0
    %4461 = vmatpush1.bf16.msra.mxu0 0
    %4462 = vmatprep.subr.bf16.mxu0 0
    %4463 = vmatpush1.bf16.msra.mxu0 0
    %4464 = vmatprep.subr.bf16.mxu0 0
    %4465 = vmatpush1.bf16.msra.mxu0 0
    %4466 = vmatprep.subr.bf16.mxu0 0
    %4467 = vmatpush1.bf16.msra.mxu0 0
    %4468 = vmatprep.subr.bf16.mxu0 0
    %4469 = vmatpush1.bf16.msra.mxu0 0
    %4470 = vmatprep.subr.bf16.mxu0 0
    %4471 = vmatpush1.bf16.msra.mxu0 0
    %4472 = vmatprep.subr.bf16.mxu0 0
    %4473 = vmatpush1.bf16.msra.mxu0 0
    %4474 = vmatprep.subr.bf16.mxu0 0
    %4475 = vmatpush1.bf16.msra.mxu0 0
    %4476 = vmatprep.mubr.bf16.mxu0 0
    %4477 = vmatmul.mubr.bf16.gmra.mrb[0].mxu0 %v4442
    %v4478 = vpop.f32.mrb[0].mxu0
    %v4479 = vadd.f32 0.0, %v4478
    %v4480 = vpop.f32.mrb[0].mxu0
    %v4481 = vpop.f32.mrb[0].mxu0
    %v4482 = vpop.f32.mrb[0].mxu0
    %4483 = vdwg.mxu0
    %v4484 = vpack.i.b16 %v2283, %v2283
    %v4485 = vlaneseq
    %v4486 = vshrl.u32 %v4485, 7
    %v4487 = vsub.s32 0, %v4486
    %v4488 = vrot.slane %v4484, %v4487
    %v4490 = vsel %vm2568, %v4488, 0
    %4492 = vmatprep.subr.bf16.mxu0 0
    %4493 = vmatpush1.bf16.msra.mxu0 %v2467
    %4494 = vmatprep.subr.bf16.mxu0 0
    %4495 = vmatpush1.bf16.msra.mxu0 %v2468
    %4496 = vmatprep.subr.bf16.mxu0 0
    %4497 = vmatpush1.bf16.msra.mxu0 %v2469
    %4498 = vmatprep.subr.bf16.mxu0 0
    %4499 = vmatpush1.bf16.msra.mxu0 %v2470
    %4500 = vmatprep.subr.bf16.mxu0 0
    %4501 = vmatpush1.bf16.msra.mxu0 0
    %4502 = vmatprep.subr.bf16.mxu0 0
    %4503 = vmatpush1.bf16.msra.mxu0 0
    %4504 = vmatprep.subr.bf16.mxu0 0
    %4505 = vmatpush1.bf16.msra.mxu0 0
    %4506 = vmatprep.subr.bf16.mxu0 0
    %4507 = vmatpush1.bf16.msra.mxu0 0
    %4508 = vmatprep.subr.bf16.mxu0 0
    %4509 = vmatpush1.bf16.msra.mxu0 0
    %4510 = vmatprep.subr.bf16.mxu0 0
    %4511 = vmatpush1.bf16.msra.mxu0 0
    %4512 = vmatprep.subr.bf16.mxu0 0
    %4513 = vmatpush1.bf16.msra.mxu0 0
    %4514 = vmatprep.subr.bf16.mxu0 0
    %4515 = vmatpush1.bf16.msra.mxu0 0
    %4516 = vmatprep.subr.bf16.mxu0 0
    %4517 = vmatpush1.bf16.msra.mxu0 0
    %4518 = vmatprep.subr.bf16.mxu0 0
    %4519 = vmatpush1.bf16.msra.mxu0 0
    %4520 = vmatprep.subr.bf16.mxu0 0
    %4521 = vmatpush1.bf16.msra.mxu0 0
    %4522 = vmatprep.subr.bf16.mxu0 0
    %4523 = vmatpush1.bf16.msra.mxu0 0
    %4524 = vmatprep.mubr.bf16.mxu0 0
    %4525 = vmatmul.mubr.bf16.gmra.mrb[0].mxu0 %v4490
    %v4526 = vpop.f32.mrb[0].mxu0
    %v4527 = vadd.f32 0.0, %v4526
    %v4528 = vpop.f32.mrb[0].mxu0
    %v4529 = vpop.f32.mrb[0].mxu0
    %v4530 = vpop.f32.mrb[0].mxu0
    %4531 = vdwg.mxu0
    %v4532 = vpack.i.b16 %v2284, %v2284
    %v4533 = vlaneseq
    %v4534 = vshrl.u32 %v4533, 7
    %v4535 = vsub.s32 0, %v4534
    %v4536 = vrot.slane %v4532, %v4535
    %v4538 = vsel %vm2568, %v4536, 0
    %4540 = vmatprep.subr.bf16.mxu0 0
    %4541 = vmatpush1.bf16.msra.mxu0 %v2471
    %4542 = vmatprep.subr.bf16.mxu0 0
    %4543 = vmatpush1.bf16.msra.mxu0 %v2472
    %4544 = vmatprep.subr.bf16.mxu0 0
    %4545 = vmatpush1.bf16.msra.mxu0 %v2473
    %4546 = vmatprep.subr.bf16.mxu0 0
    %4547 = vmatpush1.bf16.msra.mxu0 %v2474
    %4548 = vmatprep.subr.bf16.mxu0 0
    %4549 = vmatpush1.bf16.msra.mxu0 0
    %4550 = vmatprep.subr.bf16.mxu0 0
    %4551 = vmatpush1.bf16.msra.mxu0 0
    %4552 = vmatprep.subr.bf16.mxu0 0
    %4553 = vmatpush1.bf16.msra.mxu0 0
    %4554 = vmatprep.subr.bf16.mxu0 0
    %4555 = vmatpush1.bf16.msra.mxu0 0
    %4556 = vmatprep.subr.bf16.mxu0 0
    %4557 = vmatpush1.bf16.msra.mxu0 0
    %4558 = vmatprep.subr.bf16.mxu0 0
    %4559 = vmatpush1.bf16.msra.mxu0 0
    %4560 = vmatprep.subr.bf16.mxu0 0
    %4561 = vmatpush1.bf16.msra.mxu0 0
    %4562 = vmatprep.subr.bf16.mxu0 0
    %4563 = vmatpush1.bf16.msra.mxu0 0
    %4564 = vmatprep.subr.bf16.mxu0 0
    %4565 = vmatpush1.bf16.msra.mxu0 0
    %4566 = vmatprep.subr.bf16.mxu0 0
    %4567 = vmatpush1.bf16.msra.mxu0 0
    %4568 = vmatprep.subr.bf16.mxu0 0
    %4569 = vmatpush1.bf16.msra.mxu0 0
    %4570 = vmatprep.subr.bf16.mxu0 0
    %4571 = vmatpush1.bf16.msra.mxu0 0
    %4572 = vmatprep.mubr.bf16.mxu0 0
    %4573 = vmatmul.mubr.bf16.gmra.mrb[0].mxu0 %v4538
    %v4574 = vpop.f32.mrb[0].mxu0
    %v4575 = vadd.f32 0.0, %v4574
    %v4576 = vpop.f32.mrb[0].mxu0
    %v4577 = vpop.f32.mrb[0].mxu0
    %v4578 = vpop.f32.mrb[0].mxu0
    %4579 = vdwg.mxu0
    %v4580 = vpack.i.b16 %v2285, %v2285
    %v4581 = vlaneseq
    %v4582 = vshrl.u32 %v4581, 7
    %v4583 = vsub.s32 0, %v4582
    %v4584 = vrot.slane %v4580, %v4583
    %v4586 = vsel %vm2568, %v4584, 0
    %4588 = vmatprep.subr.bf16.mxu0 0
    %4589 = vmatpush1.bf16.msra.mxu0 %v2475
    %4590 = vmatprep.subr.bf16.mxu0 0
    %4591 = vmatpush1.bf16.msra.mxu0 %v2476
    %4592 = vmatprep.subr.bf16.mxu0 0
    %4593 = vmatpush1.bf16.msra.mxu0 %v2477
    %4594 = vmatprep.subr.bf16.mxu0 0
    %4595 = vmatpush1.bf16.msra.mxu0 %v2478
    %4596 = vmatprep.subr.bf16.mxu0 0
    %4597 = vmatpush1.bf16.msra.mxu0 0
    %4598 = vmatprep.subr.bf16.mxu0 0
    %4599 = vmatpush1.bf16.msra.mxu0 0
    %4600 = vmatprep.subr.bf16.mxu0 0
    %4601 = vmatpush1.bf16.msra.mxu0 0
    %4602 = vmatprep.subr.bf16.mxu0 0
    %4603 = vmatpush1.bf16.msra.mxu0 0
    %4604 = vmatprep.subr.bf16.mxu0 0
    %4605 = vmatpush1.bf16.msra.mxu0 0
    %4606 = vmatprep.subr.bf16.mxu0 0
    %4607 = vmatpush1.bf16.msra.mxu0 0
    %4608 = vmatprep.subr.bf16.mxu0 0
    %4609 = vmatpush1.bf16.msra.mxu0 0
    %4610 = vmatprep.subr.bf16.mxu0 0
    %4611 = vmatpush1.bf16.msra.mxu0 0
    %4612 = vmatprep.subr.bf16.mxu0 0
    %4613 = vmatpush1.bf16.msra.mxu0 0
    %4614 = vmatprep.subr.bf16.mxu0 0
    %4615 = vmatpush1.bf16.msra.mxu0 0
    %4616 = vmatprep.subr.bf16.mxu0 0
    %4617 = vmatpush1.bf16.msra.mxu0 0
    %4618 = vmatprep.subr.bf16.mxu0 0
    %4619 = vmatpush1.bf16.msra.mxu0 0
    %4620 = vmatprep.mubr.bf16.mxu0 0
    %4621 = vmatmul.mubr.bf16.gmra.mrb[0].mxu0 %v4586
    %v4622 = vpop.f32.mrb[0].mxu0
    %v4623 = vadd.f32 0.0, %v4622
    %v4624 = vpop.f32.mrb[0].mxu0
    %v4625 = vpop.f32.mrb[0].mxu0
    %v4626 = vpop.f32.mrb[0].mxu0
    %4627 = vdwg.mxu0
    %v4628 = vpack.i.b16 %v2286, %v2286
    %v4629 = vlaneseq
    %v4630 = vshrl.u32 %v4629, 7
    %v4631 = vsub.s32 0, %v4630
    %v4632 = vrot.slane %v4628, %v4631
    %v4634 = vsel %vm2568, %v4632, 0
    %4636 = vmatprep.subr.bf16.mxu0 0
    %4637 = vmatpush1.bf16.msra.mxu0 %v2479
    %4638 = vmatprep.subr.bf16.mxu0 0
    %4639 = vmatpush1.bf16.msra.mxu0 %v2480
    %4640 = vmatprep.subr.bf16.mxu0 0
    %4641 = vmatpush1.bf16.msra.mxu0 %v2481
    %4642 = vmatprep.subr.bf16.mxu0 0
    %4643 = vmatpush1.bf16.msra.mxu0 %v2482
    %4644 = vmatprep.subr.bf16.mxu0 0
    %4645 = vmatpush1.bf16.msra.mxu0 0
    %4646 = vmatprep.subr.bf16.mxu0 0
    %4647 = vmatpush1.bf16.msra.mxu0 0
    %4648 = vmatprep.subr.bf16.mxu0 0
    %4649 = vmatpush1.bf16.msra.mxu0 0
    %4650 = vmatprep.subr.bf16.mxu0 0
    %4651 = vmatpush1.bf16.msra.mxu0 0
    %4652 = vmatprep.subr.bf16.mxu0 0
    %4653 = vmatpush1.bf16.msra.mxu0 0
    %4654 = vmatprep.subr.bf16.mxu0 0
    %4655 = vmatpush1.bf16.msra.mxu0 0
    %4656 = vmatprep.subr.bf16.mxu0 0
    %4657 = vmatpush1.bf16.msra.mxu0 0
    %4658 = vmatprep.subr.bf16.mxu0 0
    %4659 = vmatpush1.bf16.msra.mxu0 0
    %4660 = vmatprep.subr.bf16.mxu0 0
    %4661 = vmatpush1.bf16.msra.mxu0 0
    %4662 = vmatprep.subr.bf16.mxu0 0
    %4663 = vmatpush1.bf16.msra.mxu0 0
    %4664 = vmatprep.subr.bf16.mxu0 0
    %4665 = vmatpush1.bf16.msra.mxu0 0
    %4666 = vmatprep.subr.bf16.mxu0 0
    %4667 = vmatpush1.bf16.msra.mxu0 0
    %4668 = vmatprep.mubr.bf16.mxu0 0
    %4669 = vmatmul.mubr.bf16.gmra.mrb[0].mxu0 %v4634
    %v4670 = vpop.f32.mrb[0].mxu0
    %v4671 = vadd.f32 0.0, %v4670
    %v4672 = vpop.f32.mrb[0].mxu0
    %v4673 = vpop.f32.mrb[0].mxu0
    %v4674 = vpop.f32.mrb[0].mxu0
    %4675 = vdwg.mxu0
    %v4676 = vpack.i.b16 %v2287, %v2287
    %v4677 = vlaneseq
    %v4678 = vshrl.u32 %v4677, 7
    %v4679 = vsub.s32 0, %v4678
    %v4680 = vrot.slane %v4676, %v4679
    %v4682 = vsel %vm2568, %v4680, 0
    %4684 = vmatprep.subr.bf16.mxu0 0
    %4685 = vmatpush1.bf16.msra.mxu0 %v2483
    %4686 = vmatprep.subr.bf16.mxu0 0
    %4687 = vmatpush1.bf16.msra.mxu0 %v2484
    %4688 = vmatprep.subr.bf16.mxu0 0
    %4689 = vmatpush1.bf16.msra.mxu0 %v2485
    %4690 = vmatprep.subr.bf16.mxu0 0
    %4691 = vmatpush1.bf16.msra.mxu0 %v2486
    %4692 = vmatprep.subr.bf16.mxu0 0
    %4693 = vmatpush1.bf16.msra.mxu0 0
    %4694 = vmatprep.subr.bf16.mxu0 0
    %4695 = vmatpush1.bf16.msra.mxu0 0
    %4696 = vmatprep.subr.bf16.mxu0 0
    %4697 = vmatpush1.bf16.msra.mxu0 0
    %4698 = vmatprep.subr.bf16.mxu0 0
    %4699 = vmatpush1.bf16.msra.mxu0 0
    %4700 = vmatprep.subr.bf16.mxu0 0
    %4701 = vmatpush1.bf16.msra.mxu0 0
    %4702 = vmatprep.subr.bf16.mxu0 0
    %4703 = vmatpush1.bf16.msra.mxu0 0
    %4704 = vmatprep.subr.bf16.mxu0 0
    %4705 = vmatpush1.bf16.msra.mxu0 0
    %4706 = vmatprep.subr.bf16.mxu0 0
    %4707 = vmatpush1.bf16.msra.mxu0 0
    %4708 = vmatprep.subr.bf16.mxu0 0
    %4709 = vmatpush1.bf16.msra.mxu0 0
    %4710 = vmatprep.subr.bf16.mxu0 0
    %4711 = vmatpush1.bf16.msra.mxu0 0
    %4712 = vmatprep.subr.bf16.mxu0 0
    %4713 = vmatpush1.bf16.msra.mxu0 0
    %4714 = vmatprep.subr.bf16.mxu0 0
    %4715 = vmatpush1.bf16.msra.mxu0 0
    %4716 = vmatprep.mubr.bf16.mxu0 0
    %4717 = vmatmul.mubr.bf16.gmra.mrb[0].mxu0 %v4682
    %v4718 = vpop.f32.mrb[0].mxu0
    %v4719 = vadd.f32 0.0, %v4718
    %v4720 = vpop.f32.mrb[0].mxu0
    %v4721 = vpop.f32.mrb[0].mxu0
    %v4722 = vpop.f32.mrb[0].mxu0
    %4723 = vdwg.mxu0
    %v4724 = vpack.i.b16 %v2288, %v2288
    %v4725 = vlaneseq
    %v4726 = vshrl.u32 %v4725, 7
    %v4727 = vsub.s32 0, %v4726
    %v4728 = vrot.slane %v4724, %v4727
    %v4730 = vsel %vm2568, %v4728, 0
    %4732 = vmatprep.subr.bf16.mxu0 0
    %4733 = vmatpush1.bf16.msra.mxu0 %v2487
    %4734 = vmatprep.subr.bf16.mxu0 0
    %4735 = vmatpush1.bf16.msra.mxu0 %v2488
    %4736 = vmatprep.subr.bf16.mxu0 0
    %4737 = vmatpush1.bf16.msra.mxu0 %v2489
    %4738 = vmatprep.subr.bf16.mxu0 0
    %4739 = vmatpush1.bf16.msra.mxu0 %v2490
    %4740 = vmatprep.subr.bf16.mxu0 0
    %4741 = vmatpush1.bf16.msra.mxu0 0
    %4742 = vmatprep.subr.bf16.mxu0 0
    %4743 = vmatpush1.bf16.msra.mxu0 0
    %4744 = vmatprep.subr.bf16.mxu0 0
    %4745 = vmatpush1.bf16.msra.mxu0 0
    %4746 = vmatprep.subr.bf16.mxu0 0
    %4747 = vmatpush1.bf16.msra.mxu0 0
    %4748 = vmatprep.subr.bf16.mxu0 0
    %4749 = vmatpush1.bf16.msra.mxu0 0
    %4750 = vmatprep.subr.bf16.mxu0 0
    %4751 = vmatpush1.bf16.msra.mxu0 0
    %4752 = vmatprep.subr.bf16.mxu0 0
    %4753 = vmatpush1.bf16.msra.mxu0 0
    %4754 = vmatprep.subr.bf16.mxu0 0
    %4755 = vmatpush1.bf16.msra.mxu0 0
    %4756 = vmatprep.subr.bf16.mxu0 0
    %4757 = vmatpush1.bf16.msra.mxu0 0
    %4758 = vmatprep.subr.bf16.mxu0 0
    %4759 = vmatpush1.bf16.msra.mxu0 0
    %4760 = vmatprep.subr.bf16.mxu0 0
    %4761 = vmatpush1.bf16.msra.mxu0 0
    %4762 = vmatprep.subr.bf16.mxu0 0
    %4763 = vmatpush1.bf16.msra.mxu0 0
    %4764 = vmatprep.mubr.bf16.mxu0 0
    %4765 = vmatmul.mubr.bf16.gmra.mrb[0].mxu0 %v4730
    %v4766 = vpop.f32.mrb[0].mxu0
    %v4767 = vadd.f32 0.0, %v4766
    %v4768 = vpop.f32.mrb[0].mxu0
    %v4769 = vpop.f32.mrb[0].mxu0
    %v4770 = vpop.f32.mrb[0].mxu0
    %4771 = vdwg.mxu0
    %v4772 = vpack.i.b16 %v2289, %v2289
    %v4773 = vlaneseq
    %v4774 = vshrl.u32 %v4773, 7
    %v4775 = vsub.s32 0, %v4774
    %v4776 = vrot.slane %v4772, %v4775
    %v4778 = vsel %vm2568, %v4776, 0
    %4780 = vmatprep.subr.bf16.mxu0 0
    %4781 = vmatpush1.bf16.msra.mxu0 %v2491
    %4782 = vmatprep.subr.bf16.mxu0 0
    %4783 = vmatpush1.bf16.msra.mxu0 %v2492
    %4784 = vmatprep.subr.bf16.mxu0 0
    %4785 = vmatpush1.bf16.msra.mxu0 %v2493
    %4786 = vmatprep.subr.bf16.mxu0 0
    %4787 = vmatpush1.bf16.msra.mxu0 %v2494
    %4788 = vmatprep.subr.bf16.mxu0 0
    %4789 = vmatpush1.bf16.msra.mxu0 0
    %4790 = vmatprep.subr.bf16.mxu0 0
    %4791 = vmatpush1.bf16.msra.mxu0 0
    %4792 = vmatprep.subr.bf16.mxu0 0
    %4793 = vmatpush1.bf16.msra.mxu0 0
    %4794 = vmatprep.subr.bf16.mxu0 0
    %4795 = vmatpush1.bf16.msra.mxu0 0
    %4796 = vmatprep.subr.bf16.mxu0 0
    %4797 = vmatpush1.bf16.msra.mxu0 0
    %4798 = vmatprep.subr.bf16.mxu0 0
    %4799 = vmatpush1.bf16.msra.mxu0 0
    %4800 = vmatprep.subr.bf16.mxu0 0
    %4801 = vmatpush1.bf16.msra.mxu0 0
    %4802 = vmatprep.subr.bf16.mxu0 0
    %4803 = vmatpush1.bf16.msra.mxu0 0
    %4804 = vmatprep.subr.bf16.mxu0 0
    %4805 = vmatpush1.bf16.msra.mxu0 0
    %4806 = vmatprep.subr.bf16.mxu0 0
    %4807 = vmatpush1.bf16.msra.mxu0 0
    %4808 = vmatprep.subr.bf16.mxu0 0
    %4809 = vmatpush1.bf16.msra.mxu0 0
    %4810 = vmatprep.subr.bf16.mxu0 0
    %4811 = vmatpush1.bf16.msra.mxu0 0
    %4812 = vmatprep.mubr.bf16.mxu0 0
    %4813 = vmatmul.mubr.bf16.gmra.mrb[0].mxu0 %v4778
    %v4814 = vpop.f32.mrb[0].mxu0
    %v4815 = vadd.f32 0.0, %v4814
    %v4816 = vpop.f32.mrb[0].mxu0
    %v4817 = vpop.f32.mrb[0].mxu0
    %v4818 = vpop.f32.mrb[0].mxu0
    %4819 = vdwg.mxu0
    %v4820 = vpack.i.b16 %v2290, %v2290
    %v4821 = vlaneseq
    %v4822 = vshrl.u32 %v4821, 7
    %v4823 = vsub.s32 0, %v4822
    %v4824 = vrot.slane %v4820, %v4823
    %v4826 = vsel %vm2568, %v4824, 0
    %4828 = vmatprep.subr.bf16.mxu0 0
    %4829 = vmatpush1.bf16.msra.mxu0 %v2495
    %4830 = vmatprep.subr.bf16.mxu0 0
    %4831 = vmatpush1.bf16.msra.mxu0 %v2496
    %4832 = vmatprep.subr.bf16.mxu0 0
    %4833 = vmatpush1.bf16.msra.mxu0 %v2497
    %4834 = vmatprep.subr.bf16.mxu0 0
    %4835 = vmatpush1.bf16.msra.mxu0 %v2498
    %4836 = vmatprep.subr.bf16.mxu0 0
    %4837 = vmatpush1.bf16.msra.mxu0 0
    %4838 = vmatprep.subr.bf16.mxu0 0
    %4839 = vmatpush1.bf16.msra.mxu0 0
    %4840 = vmatprep.subr.bf16.mxu0 0
    %4841 = vmatpush1.bf16.msra.mxu0 0
    %4842 = vmatprep.subr.bf16.mxu0 0
    %4843 = vmatpush1.bf16.msra.mxu0 0
    %4844 = vmatprep.subr.bf16.mxu0 0
    %4845 = vmatpush1.bf16.msra.mxu0 0
    %4846 = vmatprep.subr.bf16.mxu0 0
    %4847 = vmatpush1.bf16.msra.mxu0 0
    %4848 = vmatprep.subr.bf16.mxu0 0
    %4849 = vmatpush1.bf16.msra.mxu0 0
    %4850 = vmatprep.subr.bf16.mxu0 0
    %4851 = vmatpush1.bf16.msra.mxu0 0
    %4852 = vmatprep.subr.bf16.mxu0 0
    %4853 = vmatpush1.bf16.msra.mxu0 0
    %4854 = vmatprep.subr.bf16.mxu0 0
    %4855 = vmatpush1.bf16.msra.mxu0 0
    %4856 = vmatprep.subr.bf16.mxu0 0
    %4857 = vmatpush1.bf16.msra.mxu0 0
    %4858 = vmatprep.subr.bf16.mxu0 0
    %4859 = vmatpush1.bf16.msra.mxu0 0
    %4860 = vmatprep.mubr.bf16.mxu0 0
    %4861 = vmatmul.mubr.bf16.gmra.mrb[0].mxu0 %v4826
    %v4862 = vpop.f32.mrb[0].mxu0
    %v4863 = vadd.f32 0.0, %v4862
    %v4864 = vpop.f32.mrb[0].mxu0
    %v4865 = vpop.f32.mrb[0].mxu0
    %v4866 = vpop.f32.mrb[0].mxu0
    %4867 = vdwg.mxu0
    %v4868 = vpack.i.b16 %v2291, %v2291
    %v4869 = vlaneseq
    %v4870 = vshrl.u32 %v4869, 7
    %v4871 = vsub.s32 0, %v4870
    %v4872 = vrot.slane %v4868, %v4871
    %v4874 = vsel %vm2568, %v4872, 0
    %4876 = vmatprep.subr.bf16.mxu0 0
    %4877 = vmatpush1.bf16.msra.mxu0 %v2499
    %4878 = vmatprep.subr.bf16.mxu0 0
    %4879 = vmatpush1.bf16.msra.mxu0 %v2500
    %4880 = vmatprep.subr.bf16.mxu0 0
    %4881 = vmatpush1.bf16.msra.mxu0 %v2501
    %4882 = vmatprep.subr.bf16.mxu0 0
    %4883 = vmatpush1.bf16.msra.mxu0 %v2502
    %4884 = vmatprep.subr.bf16.mxu0 0
    %4885 = vmatpush1.bf16.msra.mxu0 0
    %4886 = vmatprep.subr.bf16.mxu0 0
    %4887 = vmatpush1.bf16.msra.mxu0 0
    %4888 = vmatprep.subr.bf16.mxu0 0
    %4889 = vmatpush1.bf16.msra.mxu0 0
    %4890 = vmatprep.subr.bf16.mxu0 0
    %4891 = vmatpush1.bf16.msra.mxu0 0
    %4892 = vmatprep.subr.bf16.mxu0 0
    %4893 = vmatpush1.bf16.msra.mxu0 0
    %4894 = vmatprep.subr.bf16.mxu0 0
    %4895 = vmatpush1.bf16.msra.mxu0 0
    %4896 = vmatprep.subr.bf16.mxu0 0
    %4897 = vmatpush1.bf16.msra.mxu0 0
    %4898 = vmatprep.subr.bf16.mxu0 0
    %4899 = vmatpush1.bf16.msra.mxu0 0
    %4900 = vmatprep.subr.bf16.mxu0 0
    %4901 = vmatpush1.bf16.msra.mxu0 0
    %4902 = vmatprep.subr.bf16.mxu0 0
    %4903 = vmatpush1.bf16.msra.mxu0 0
    %4904 = vmatprep.subr.bf16.mxu0 0
    %4905 = vmatpush1.bf16.msra.mxu0 0
    %4906 = vmatprep.subr.bf16.mxu0 0
    %4907 = vmatpush1.bf16.msra.mxu0 0
    %4908 = vmatprep.mubr.bf16.mxu0 0
    %4909 = vmatmul.mubr.bf16.gmra.mrb[0].mxu0 %v4874
    %v4910 = vpop.f32.mrb[0].mxu0
    %v4911 = vadd.f32 0.0, %v4910
    %v4912 = vpop.f32.mrb[0].mxu0
    %v4913 = vpop.f32.mrb[0].mxu0
    %v4914 = vpop.f32.mrb[0].mxu0
    %4915 = vdwg.mxu0
    %v4916 = vpack.i.b16 %v2292, %v2292
    %v4917 = vlaneseq
    %v4918 = vshrl.u32 %v4917, 7
    %v4919 = vsub.s32 0, %v4918
    %v4920 = vrot.slane %v4916, %v4919
    %v4922 = vsel %vm2568, %v4920, 0
    %4924 = vmatprep.subr.bf16.mxu0 0
    %4925 = vmatpush1.bf16.msra.mxu0 %v2503
    %4926 = vmatprep.subr.bf16.mxu0 0
    %4927 = vmatpush1.bf16.msra.mxu0 %v2504
    %4928 = vmatprep.subr.bf16.mxu0 0
    %4929 = vmatpush1.bf16.msra.mxu0 %v2505
    %4930 = vmatprep.subr.bf16.mxu0 0
    %4931 = vmatpush1.bf16.msra.mxu0 %v2506
    %4932 = vmatprep.subr.bf16.mxu0 0
    %4933 = vmatpush1.bf16.msra.mxu0 0
    %4934 = vmatprep.subr.bf16.mxu0 0
    %4935 = vmatpush1.bf16.msra.mxu0 0
    %4936 = vmatprep.subr.bf16.mxu0 0
    %4937 = vmatpush1.bf16.msra.mxu0 0
    %4938 = vmatprep.subr.bf16.mxu0 0
    %4939 = vmatpush1.bf16.msra.mxu0 0
    %4940 = vmatprep.subr.bf16.mxu0 0
    %4941 = vmatpush1.bf16.msra.mxu0 0
    %4942 = vmatprep.subr.bf16.mxu0 0
    %4943 = vmatpush1.bf16.msra.mxu0 0
    %4944 = vmatprep.subr.bf16.mxu0 0
    %4945 = vmatpush1.bf16.msra.mxu0 0
    %4946 = vmatprep.subr.bf16.mxu0 0
    %4947 = vmatpush1.bf16.msra.mxu0 0
    %4948 = vmatprep.subr.bf16.mxu0 0
    %4949 = vmatpush1.bf16.msra.mxu0 0
    %4950 = vmatprep.subr.bf16.mxu0 0
    %4951 = vmatpush1.bf16.msra.mxu0 0
    %4952 = vmatprep.subr.bf16.mxu0 0
    %4953 = vmatpush1.bf16.msra.mxu0 0
    %4954 = vmatprep.subr.bf16.mxu0 0
    %4955 = vmatpush1.bf16.msra.mxu0 0
    %4956 = vmatprep.mubr.bf16.mxu0 0
    %4957 = vmatmul.mubr.bf16.gmra.mrb[0].mxu0 %v4922
    %v4958 = vpop.f32.mrb[0].mxu0
    %v4959 = vadd.f32 0.0, %v4958
    %v4960 = vpop.f32.mrb[0].mxu0
    %v4961 = vpop.f32.mrb[0].mxu0
    %v4962 = vpop.f32.mrb[0].mxu0
    %4963 = vdwg.mxu0
    %v4964 = vpack.i.b16 %v2293, %v2293
    %v4965 = vlaneseq
    %v4966 = vshrl.u32 %v4965, 7
    %v4967 = vsub.s32 0, %v4966
    %v4968 = vrot.slane %v4964, %v4967
    %v4970 = vsel %vm2568, %v4968, 0
    %4972 = vmatprep.subr.bf16.mxu0 0
    %4973 = vmatpush1.bf16.msra.mxu0 %v2507
    %4974 = vmatprep.subr.bf16.mxu0 0
    %4975 = vmatpush1.bf16.msra.mxu0 %v2508
    %4976 = vmatprep.subr.bf16.mxu0 0
    %4977 = vmatpush1.bf16.msra.mxu0 %v2509
    %4978 = vmatprep.subr.bf16.mxu0 0
    %4979 = vmatpush1.bf16.msra.mxu0 %v2510
    %4980 = vmatprep.subr.bf16.mxu0 0
    %4981 = vmatpush1.bf16.msra.mxu0 0
    %4982 = vmatprep.subr.bf16.mxu0 0
    %4983 = vmatpush1.bf16.msra.mxu0 0
    %4984 = vmatprep.subr.bf16.mxu0 0
    %4985 = vmatpush1.bf16.msra.mxu0 0
    %4986 = vmatprep.subr.bf16.mxu0 0
    %4987 = vmatpush1.bf16.msra.mxu0 0
    %4988 = vmatprep.subr.bf16.mxu0 0
    %4989 = vmatpush1.bf16.msra.mxu0 0
    %4990 = vmatprep.subr.bf16.mxu0 0
    %4991 = vmatpush1.bf16.msra.mxu0 0
    %4992 = vmatprep.subr.bf16.mxu0 0
    %4993 = vmatpush1.bf16.msra.mxu0 0
    %4994 = vmatprep.subr.bf16.mxu0 0
    %4995 = vmatpush1.bf16.msra.mxu0 0
    %4996 = vmatprep.subr.bf16.mxu0 0
    %4997 = vmatpush1.bf16.msra.mxu0 0
    %4998 = vmatprep.subr.bf16.mxu0 0
    %4999 = vmatpush1.bf16.msra.mxu0 0
    %5000 = vmatprep.subr.bf16.mxu0 0
    %5001 = vmatpush1.bf16.msra.mxu0 0
    %5002 = vmatprep.subr.bf16.mxu0 0
    %5003 = vmatpush1.bf16.msra.mxu0 0
    %5004 = vmatprep.mubr.bf16.mxu0 0
    %5005 = vmatmul.mubr.bf16.gmra.mrb[0].mxu0 %v4970
    %v5006 = vpop.f32.mrb[0].mxu0
    %v5007 = vadd.f32 0.0, %v5006
    %v5008 = vpop.f32.mrb[0].mxu0
    %v5009 = vpop.f32.mrb[0].mxu0
    %v5010 = vpop.f32.mrb[0].mxu0
    %5011 = vdwg.mxu0
    %v5012 = vpack.i.b16 %v2294, %v2294
    %v5013 = vlaneseq
    %v5014 = vshrl.u32 %v5013, 7
    %v5015 = vsub.s32 0, %v5014
    %v5016 = vrot.slane %v5012, %v5015
    %v5018 = vsel %vm2568, %v5016, 0
    %5020 = vmatprep.subr.bf16.mxu0 0
    %5021 = vmatpush1.bf16.msra.mxu0 %v2511
    %5022 = vmatprep.subr.bf16.mxu0 0
    %5023 = vmatpush1.bf16.msra.mxu0 %v2512
    %5024 = vmatprep.subr.bf16.mxu0 0
    %5025 = vmatpush1.bf16.msra.mxu0 %v2513
    %5026 = vmatprep.subr.bf16.mxu0 0
    %5027 = vmatpush1.bf16.msra.mxu0 %v2514
    %5028 = vmatprep.subr.bf16.mxu0 0
    %5029 = vmatpush1.bf16.msra.mxu0 0
    %5030 = vmatprep.subr.bf16.mxu0 0
    %5031 = vmatpush1.bf16.msra.mxu0 0
    %5032 = vmatprep.subr.bf16.mxu0 0
    %5033 = vmatpush1.bf16.msra.mxu0 0
    %5034 = vmatprep.subr.bf16.mxu0 0
    %5035 = vmatpush1.bf16.msra.mxu0 0
    %5036 = vmatprep.subr.bf16.mxu0 0
    %5037 = vmatpush1.bf16.msra.mxu0 0
    %5038 = vmatprep.subr.bf16.mxu0 0
    %5039 = vmatpush1.bf16.msra.mxu0 0
    %5040 = vmatprep.subr.bf16.mxu0 0
    %5041 = vmatpush1.bf16.msra.mxu0 0
    %5042 = vmatprep.subr.bf16.mxu0 0
    %5043 = vmatpush1.bf16.msra.mxu0 0
    %5044 = vmatprep.subr.bf16.mxu0 0
    %5045 = vmatpush1.bf16.msra.mxu0 0
    %5046 = vmatprep.subr.bf16.mxu0 0
    %5047 = vmatpush1.bf16.msra.mxu0 0
    %5048 = vmatprep.subr.bf16.mxu0 0
    %5049 = vmatpush1.bf16.msra.mxu0 0
    %5050 = vmatprep.subr.bf16.mxu0 0
    %5051 = vmatpush1.bf16.msra.mxu0 0
    %5052 = vmatprep.mubr.bf16.mxu0 0
    %5053 = vmatmul.mubr.bf16.gmra.mrb[0].mxu0 %v5018
    %v5054 = vpop.f32.mrb[0].mxu0
    %v5055 = vadd.f32 0.0, %v5054
    %v5056 = vpop.f32.mrb[0].mxu0
    %v5057 = vpop.f32.mrb[0].mxu0
    %v5058 = vpop.f32.mrb[0].mxu0
    %5059 = vdwg.mxu0
    %v5060 = vpack.i.b16 %v2295, %v2295
    %v5061 = vlaneseq
    %v5062 = vshrl.u32 %v5061, 7
    %v5063 = vsub.s32 0, %v5062
    %v5064 = vrot.slane %v5060, %v5063
    %v5066 = vsel %vm2568, %v5064, 0
    %5068 = vmatprep.subr.bf16.mxu0 0
    %5069 = vmatpush1.bf16.msra.mxu0 %v2515
    %5070 = vmatprep.subr.bf16.mxu0 0
    %5071 = vmatpush1.bf16.msra.mxu0 %v2516
    %5072 = vmatprep.subr.bf16.mxu0 0
    %5073 = vmatpush1.bf16.msra.mxu0 %v2517
    %5074 = vmatprep.subr.bf16.mxu0 0
    %5075 = vmatpush1.bf16.msra.mxu0 %v2518
    %5076 = vmatprep.subr.bf16.mxu0 0
    %5077 = vmatpush1.bf16.msra.mxu0 0
    %5078 = vmatprep.subr.bf16.mxu0 0
    %5079 = vmatpush1.bf16.msra.mxu0 0
    %5080 = vmatprep.subr.bf16.mxu0 0
    %5081 = vmatpush1.bf16.msra.mxu0 0
    %5082 = vmatprep.subr.bf16.mxu0 0
    %5083 = vmatpush1.bf16.msra.mxu0 0
    %5084 = vmatprep.subr.bf16.mxu0 0
    %5085 = vmatpush1.bf16.msra.mxu0 0
    %5086 = vmatprep.subr.bf16.mxu0 0
    %5087 = vmatpush1.bf16.msra.mxu0 0
    %5088 = vmatprep.subr.bf16.mxu0 0
    %5089 = vmatpush1.bf16.msra.mxu0 0
    %5090 = vmatprep.subr.bf16.mxu0 0
    %5091 = vmatpush1.bf16.msra.mxu0 0
    %5092 = vmatprep.subr.bf16.mxu0 0
    %5093 = vmatpush1.bf16.msra.mxu0 0
    %5094 = vmatprep.subr.bf16.mxu0 0
    %5095 = vmatpush1.bf16.msra.mxu0 0
    %5096 = vmatprep.subr.bf16.mxu0 0
    %5097 = vmatpush1.bf16.msra.mxu0 0
    %5098 = vmatprep.subr.bf16.mxu0 0
    %5099 = vmatpush1.bf16.msra.mxu0 0
    %5100 = vmatprep.mubr.bf16.mxu0 0
    %5101 = vmatmul.mubr.bf16.gmra.mrb[0].mxu0 %v5066
    %v5102 = vpop.f32.mrb[0].mxu0
    %v5103 = vadd.f32 0.0, %v5102
    %v5104 = vpop.f32.mrb[0].mxu0
    %v5105 = vpop.f32.mrb[0].mxu0
    %v5106 = vpop.f32.mrb[0].mxu0
    %5107 = vdwg.mxu0
    %v5108 = vpack.i.b16 %v2296, %v2296
    %v5109 = vlaneseq
    %v5110 = vshrl.u32 %v5109, 7
    %v5111 = vsub.s32 0, %v5110
    %v5112 = vrot.slane %v5108, %v5111
    %v5114 = vsel %vm2568, %v5112, 0
    %5116 = vmatprep.subr.bf16.mxu0 0
    %5117 = vmatpush1.bf16.msra.mxu0 %v2519
    %5118 = vmatprep.subr.bf16.mxu0 0
    %5119 = vmatpush1.bf16.msra.mxu0 %v2520
    %5120 = vmatprep.subr.bf16.mxu0 0
    %5121 = vmatpush1.bf16.msra.mxu0 %v2521
    %5122 = vmatprep.subr.bf16.mxu0 0
    %5123 = vmatpush1.bf16.msra.mxu0 %v2522
    %5124 = vmatprep.subr.bf16.mxu0 0
    %5125 = vmatpush1.bf16.msra.mxu0 0
    %5126 = vmatprep.subr.bf16.mxu0 0
    %5127 = vmatpush1.bf16.msra.mxu0 0
    %5128 = vmatprep.subr.bf16.mxu0 0
    %5129 = vmatpush1.bf16.msra.mxu0 0
    %5130 = vmatprep.subr.bf16.mxu0 0
    %5131 = vmatpush1.bf16.msra.mxu0 0
    %5132 = vmatprep.subr.bf16.mxu0 0
    %5133 = vmatpush1.bf16.msra.mxu0 0
    %5134 = vmatprep.subr.bf16.mxu0 0
    %5135 = vmatpush1.bf16.msra.mxu0 0
    %5136 = vmatprep.subr.bf16.mxu0 0
    %5137 = vmatpush1.bf16.msra.mxu0 0
    %5138 = vmatprep.subr.bf16.mxu0 0
    %5139 = vmatpush1.bf16.msra.mxu0 0
    %5140 = vmatprep.subr.bf16.mxu0 0
    %5141 = vmatpush1.bf16.msra.mxu0 0
    %5142 = vmatprep.subr.bf16.mxu0 0
    %5143 = vmatpush1.bf16.msra.mxu0 0
    %5144 = vmatprep.subr.bf16.mxu0 0
    %5145 = vmatpush1.bf16.msra.mxu0 0
    %5146 = vmatprep.subr.bf16.mxu0 0
    %5147 = vmatpush1.bf16.msra.mxu0 0
    %5148 = vmatprep.mubr.bf16.mxu0 0
    %5149 = vmatmul.mubr.bf16.gmra.mrb[0].mxu0 %v5114
    %v5150 = vpop.f32.mrb[0].mxu0
    %v5151 = vadd.f32 0.0, %v5150
    %v5152 = vpop.f32.mrb[0].mxu0
    %v5153 = vpop.f32.mrb[0].mxu0
    %v5154 = vpop.f32.mrb[0].mxu0
    %5155 = vdwg.mxu0
    %v5156 = vpack.i.b16 %v2297, %v2297
    %v5157 = vlaneseq
    %v5158 = vshrl.u32 %v5157, 7
    %v5159 = vsub.s32 0, %v5158
    %v5160 = vrot.slane %v5156, %v5159
    %v5162 = vsel %vm2568, %v5160, 0
    %5164 = vmatprep.subr.bf16.mxu0 0
    %5165 = vmatpush1.bf16.msra.mxu0 %v2523
    %5166 = vmatprep.subr.bf16.mxu0 0
    %5167 = vmatpush1.bf16.msra.mxu0 %v2524
    %5168 = vmatprep.subr.bf16.mxu0 0
    %5169 = vmatpush1.bf16.msra.mxu0 %v2525
    %5170 = vmatprep.subr.bf16.mxu0 0
    %5171 = vmatpush1.bf16.msra.mxu0 %v2526
    %5172 = vmatprep.subr.bf16.mxu0 0
    %5173 = vmatpush1.bf16.msra.mxu0 0
    %5174 = vmatprep.subr.bf16.mxu0 0
    %5175 = vmatpush1.bf16.msra.mxu0 0
    %5176 = vmatprep.subr.bf16.mxu0 0
    %5177 = vmatpush1.bf16.msra.mxu0 0
    %5178 = vmatprep.subr.bf16.mxu0 0
    %5179 = vmatpush1.bf16.msra.mxu0 0
    %5180 = vmatprep.subr.bf16.mxu0 0
    %5181 = vmatpush1.bf16.msra.mxu0 0
    %5182 = vmatprep.subr.bf16.mxu0 0
    %5183 = vmatpush1.bf16.msra.mxu0 0
    %5184 = vmatprep.subr.bf16.mxu0 0
    %5185 = vmatpush1.bf16.msra.mxu0 0
    %5186 = vmatprep.subr.bf16.mxu0 0
    %5187 = vmatpush1.bf16.msra.mxu0 0
    %5188 = vmatprep.subr.bf16.mxu0 0
    %5189 = vmatpush1.bf16.msra.mxu0 0
    %5190 = vmatprep.subr.bf16.mxu0 0
    %5191 = vmatpush1.bf16.msra.mxu0 0
    %5192 = vmatprep.subr.bf16.mxu0 0
    %5193 = vmatpush1.bf16.msra.mxu0 0
    %5194 = vmatprep.subr.bf16.mxu0 0
    %5195 = vmatpush1.bf16.msra.mxu0 0
    %5196 = vmatprep.mubr.bf16.mxu0 0
    %5197 = vmatmul.mubr.bf16.gmra.mrb[0].mxu0 %v5162
    %v5198 = vpop.f32.mrb[0].mxu0
    %v5199 = vadd.f32 0.0, %v5198
    %v5200 = vpop.f32.mrb[0].mxu0
    %v5201 = vpop.f32.mrb[0].mxu0
    %v5202 = vpop.f32.mrb[0].mxu0
    %5203 = vdwg.mxu0
    %v5204 = vpack.i.b16 %v2298, %v2298
    %v5205 = vlaneseq
    %v5206 = vshrl.u32 %v5205, 7
    %v5207 = vsub.s32 0, %v5206
    %v5208 = vrot.slane %v5204, %v5207
    %v5210 = vsel %vm2568, %v5208, 0
    %5212 = vmatprep.subr.bf16.mxu0 0
    %5213 = vmatpush1.bf16.msra.mxu0 %v2527
    %5214 = vmatprep.subr.bf16.mxu0 0
    %5215 = vmatpush1.bf16.msra.mxu0 %v2528
    %5216 = vmatprep.subr.bf16.mxu0 0
    %5217 = vmatpush1.bf16.msra.mxu0 %v2529
    %5218 = vmatprep.subr.bf16.mxu0 0
    %5219 = vmatpush1.bf16.msra.mxu0 %v2530
    %5220 = vmatprep.subr.bf16.mxu0 0
    %5221 = vmatpush1.bf16.msra.mxu0 0
    %5222 = vmatprep.subr.bf16.mxu0 0
    %5223 = vmatpush1.bf16.msra.mxu0 0
    %5224 = vmatprep.subr.bf16.mxu0 0
    %5225 = vmatpush1.bf16.msra.mxu0 0
    %5226 = vmatprep.subr.bf16.mxu0 0
    %5227 = vmatpush1.bf16.msra.mxu0 0
    %5228 = vmatprep.subr.bf16.mxu0 0
    %5229 = vmatpush1.bf16.msra.mxu0 0
    %5230 = vmatprep.subr.bf16.mxu0 0
    %5231 = vmatpush1.bf16.msra.mxu0 0
    %5232 = vmatprep.subr.bf16.mxu0 0
    %5233 = vmatpush1.bf16.msra.mxu0 0
    %5234 = vmatprep.subr.bf16.mxu0 0
    %5235 = vmatpush1.bf16.msra.mxu0 0
    %5236 = vmatprep.subr.bf16.mxu0 0
    %5237 = vmatpush1.bf16.msra.mxu0 0
    %5238 = vmatprep.subr.bf16.mxu0 0
    %5239 = vmatpush1.bf16.msra.mxu0 0
    %5240 = vmatprep.subr.bf16.mxu0 0
    %5241 = vmatpush1.bf16.msra.mxu0 0
    %5242 = vmatprep.subr.bf16.mxu0 0
    %5243 = vmatpush1.bf16.msra.mxu0 0
    %5244 = vmatprep.mubr.bf16.mxu0 0
    %5245 = vmatmul.mubr.bf16.gmra.mrb[0].mxu0 %v5210
    %v5246 = vpop.f32.mrb[0].mxu0
    %v5247 = vadd.f32 0.0, %v5246
    %v5248 = vpop.f32.mrb[0].mxu0
    %v5249 = vpop.f32.mrb[0].mxu0
    %v5250 = vpop.f32.mrb[0].mxu0
    %5251 = vdwg.mxu0
    %v5252 = vpack.i.b16 %v2299, %v2299
    %v5253 = vlaneseq
    %v5254 = vshrl.u32 %v5253, 7
    %v5255 = vsub.s32 0, %v5254
    %v5256 = vrot.slane %v5252, %v5255
    %v5258 = vsel %vm2568, %v5256, 0
    %5260 = vmatprep.subr.bf16.mxu0 0
    %5261 = vmatpush1.bf16.msra.mxu0 %v2531
    %5262 = vmatprep.subr.bf16.mxu0 0
    %5263 = vmatpush1.bf16.msra.mxu0 %v2532
    %5264 = vmatprep.subr.bf16.mxu0 0
    %5265 = vmatpush1.bf16.msra.mxu0 %v2533
    %5266 = vmatprep.subr.bf16.mxu0 0
    %5267 = vmatpush1.bf16.msra.mxu0 %v2534
    %5268 = vmatprep.subr.bf16.mxu0 0
    %5269 = vmatpush1.bf16.msra.mxu0 0
    %5270 = vmatprep.subr.bf16.mxu0 0
    %5271 = vmatpush1.bf16.msra.mxu0 0
    %5272 = vmatprep.subr.bf16.mxu0 0
    %5273 = vmatpush1.bf16.msra.mxu0 0
    %5274 = vmatprep.subr.bf16.mxu0 0
    %5275 = vmatpush1.bf16.msra.mxu0 0
    %5276 = vmatprep.subr.bf16.mxu0 0
    %5277 = vmatpush1.bf16.msra.mxu0 0
    %5278 = vmatprep.subr.bf16.mxu0 0
    %5279 = vmatpush1.bf16.msra.mxu0 0
    %5280 = vmatprep.subr.bf16.mxu0 0
    %5281 = vmatpush1.bf16.msra.mxu0 0
    %5282 = vmatprep.subr.bf16.mxu0 0
    %5283 = vmatpush1.bf16.msra.mxu0 0
    %5284 = vmatprep.subr.bf16.mxu0 0
    %5285 = vmatpush1.bf16.msra.mxu0 0
    %5286 = vmatprep.subr.bf16.mxu0 0
    %5287 = vmatpush1.bf16.msra.mxu0 0
    %5288 = vmatprep.subr.bf16.mxu0 0
    %5289 = vmatpush1.bf16.msra.mxu0 0
    %5290 = vmatprep.subr.bf16.mxu0 0
    %5291 = vmatpush1.bf16.msra.mxu0 0
    %5292 = vmatprep.mubr.bf16.mxu0 0
    %5293 = vmatmul.mubr.bf16.gmra.mrb[0].mxu0 %v5258
    %v5294 = vpop.f32.mrb[0].mxu0
    %v5295 = vadd.f32 0.0, %v5294
    %v5296 = vpop.f32.mrb[0].mxu0
    %v5297 = vpop.f32.mrb[0].mxu0
    %v5298 = vpop.f32.mrb[0].mxu0
    %5299 = vdwg.mxu0
    %v5300 = vpack.i.b16 %v2300, %v2300
    %v5301 = vlaneseq
    %v5302 = vshrl.u32 %v5301, 7
    %v5303 = vsub.s32 0, %v5302
    %v5304 = vrot.slane %v5300, %v5303
    %v5306 = vsel %vm2568, %v5304, 0
    %5308 = vmatprep.subr.bf16.mxu0 0
    %5309 = vmatpush1.bf16.msra.mxu0 %v2535
    %5310 = vmatprep.subr.bf16.mxu0 0
    %5311 = vmatpush1.bf16.msra.mxu0 %v2536
    %5312 = vmatprep.subr.bf16.mxu0 0
    %5313 = vmatpush1.bf16.msra.mxu0 %v2537
    %5314 = vmatprep.subr.bf16.mxu0 0
    %5315 = vmatpush1.bf16.msra.mxu0 %v2538
    %5316 = vmatprep.subr.bf16.mxu0 0
    %5317 = vmatpush1.bf16.msra.mxu0 0
    %5318 = vmatprep.subr.bf16.mxu0 0
    %5319 = vmatpush1.bf16.msra.mxu0 0
    %5320 = vmatprep.subr.bf16.mxu0 0
    %5321 = vmatpush1.bf16.msra.mxu0 0
    %5322 = vmatprep.subr.bf16.mxu0 0
    %5323 = vmatpush1.bf16.msra.mxu0 0
    %5324 = vmatprep.subr.bf16.mxu0 0
    %5325 = vmatpush1.bf16.msra.mxu0 0
    %5326 = vmatprep.subr.bf16.mxu0 0
    %5327 = vmatpush1.bf16.msra.mxu0 0
    %5328 = vmatprep.subr.bf16.mxu0 0
    %5329 = vmatpush1.bf16.msra.mxu0 0
    %5330 = vmatprep.subr.bf16.mxu0 0
    %5331 = vmatpush1.bf16.msra.mxu0 0
    %5332 = vmatprep.subr.bf16.mxu0 0
    %5333 = vmatpush1.bf16.msra.mxu0 0
    %5334 = vmatprep.subr.bf16.mxu0 0
    %5335 = vmatpush1.bf16.msra.mxu0 0
    %5336 = vmatprep.subr.bf16.mxu0 0
    %5337 = vmatpush1.bf16.msra.mxu0 0
    %5338 = vmatprep.subr.bf16.mxu0 0
    %5339 = vmatpush1.bf16.msra.mxu0 0
    %5340 = vmatprep.mubr.bf16.mxu0 0
    %5341 = vmatmul.mubr.bf16.gmra.mrb[0].mxu0 %v5306
    %v5342 = vpop.f32.mrb[0].mxu0
    %v5343 = vadd.f32 0.0, %v5342
    %v5344 = vpop.f32.mrb[0].mxu0
    %v5345 = vpop.f32.mrb[0].mxu0
    %v5346 = vpop.f32.mrb[0].mxu0
    %5347 = vdwg.mxu0
    %v5348 = vpack.i.b16 %v2301, %v2301
    %v5349 = vlaneseq
    %v5350 = vshrl.u32 %v5349, 7
    %v5351 = vsub.s32 0, %v5350
    %v5352 = vrot.slane %v5348, %v5351
    %v5354 = vsel %vm2568, %v5352, 0
    %5356 = vmatprep.subr.bf16.mxu0 0
    %5357 = vmatpush1.bf16.msra.mxu0 %v2539
    %5358 = vmatprep.subr.bf16.mxu0 0
    %5359 = vmatpush1.bf16.msra.mxu0 %v2540
    %5360 = vmatprep.subr.bf16.mxu0 0
    %5361 = vmatpush1.bf16.msra.mxu0 %v2541
    %5362 = vmatprep.subr.bf16.mxu0 0
    %5363 = vmatpush1.bf16.msra.mxu0 %v2542
    %5364 = vmatprep.subr.bf16.mxu0 0
    %5365 = vmatpush1.bf16.msra.mxu0 0
    %5366 = vmatprep.subr.bf16.mxu0 0
    %5367 = vmatpush1.bf16.msra.mxu0 0
    %5368 = vmatprep.subr.bf16.mxu0 0
    %5369 = vmatpush1.bf16.msra.mxu0 0
    %5370 = vmatprep.subr.bf16.mxu0 0
    %5371 = vmatpush1.bf16.msra.mxu0 0
    %5372 = vmatprep.subr.bf16.mxu0 0
    %5373 = vmatpush1.bf16.msra.mxu0 0
    %5374 = vmatprep.subr.bf16.mxu0 0
    %5375 = vmatpush1.bf16.msra.mxu0 0
    %5376 = vmatprep.subr.bf16.mxu0 0
    %5377 = vmatpush1.bf16.msra.mxu0 0
    %5378 = vmatprep.subr.bf16.mxu0 0
    %5379 = vmatpush1.bf16.msra.mxu0 0
    %5380 = vmatprep.subr.bf16.mxu0 0
    %5381 = vmatpush1.bf16.msra.mxu0 0
    %5382 = vmatprep.subr.bf16.mxu0 0
    %5383 = vmatpush1.bf16.msra.mxu0 0
    %5384 = vmatprep.subr.bf16.mxu0 0
    %5385 = vmatpush1.bf16.msra.mxu0 0
    %5386 = vmatprep.subr.bf16.mxu0 0
    %5387 = vmatpush1.bf16.msra.mxu0 0
    %5388 = vmatprep.mubr.bf16.mxu0 0
    %5389 = vmatmul.mubr.bf16.gmra.mrb[0].mxu0 %v5354
    %v5390 = vpop.f32.mrb[0].mxu0
    %v5391 = vadd.f32 0.0, %v5390
    %v5392 = vpop.f32.mrb[0].mxu0
    %v5393 = vpop.f32.mrb[0].mxu0
    %v5394 = vpop.f32.mrb[0].mxu0
    %5395 = vdwg.mxu0
    %v5396 = vpack.i.b16 %v2302, %v2302
    %v5397 = vlaneseq
    %v5398 = vshrl.u32 %v5397, 7
    %v5399 = vsub.s32 0, %v5398
    %v5400 = vrot.slane %v5396, %v5399
    %v5402 = vsel %vm2568, %v5400, 0
    %5404 = vmatprep.subr.bf16.mxu0 0
    %5405 = vmatpush1.bf16.msra.mxu0 %v2543
    %5406 = vmatprep.subr.bf16.mxu0 0
    %5407 = vmatpush1.bf16.msra.mxu0 %v2544
    %5408 = vmatprep.subr.bf16.mxu0 0
    %5409 = vmatpush1.bf16.msra.mxu0 %v2545
    %5410 = vmatprep.subr.bf16.mxu0 0
    %5411 = vmatpush1.bf16.msra.mxu0 %v2546
    %5412 = vmatprep.subr.bf16.mxu0 0
    %5413 = vmatpush1.bf16.msra.mxu0 0
    %5414 = vmatprep.subr.bf16.mxu0 0
    %5415 = vmatpush1.bf16.msra.mxu0 0
    %5416 = vmatprep.subr.bf16.mxu0 0
    %5417 = vmatpush1.bf16.msra.mxu0 0
    %5418 = vmatprep.subr.bf16.mxu0 0
    %5419 = vmatpush1.bf16.msra.mxu0 0
    %5420 = vmatprep.subr.bf16.mxu0 0
    %5421 = vmatpush1.bf16.msra.mxu0 0
    %5422 = vmatprep.subr.bf16.mxu0 0
    %5423 = vmatpush1.bf16.msra.mxu0 0
    %5424 = vmatprep.subr.bf16.mxu0 0
    %5425 = vmatpush1.bf16.msra.mxu0 0
    %5426 = vmatprep.subr.bf16.mxu0 0
    %5427 = vmatpush1.bf16.msra.mxu0 0
    %5428 = vmatprep.subr.bf16.mxu0 0
    %5429 = vmatpush1.bf16.msra.mxu0 0
    %5430 = vmatprep.subr.bf16.mxu0 0
    %5431 = vmatpush1.bf16.msra.mxu0 0
    %5432 = vmatprep.subr.bf16.mxu0 0
    %5433 = vmatpush1.bf16.msra.mxu0 0
    %5434 = vmatprep.subr.bf16.mxu0 0
    %5435 = vmatpush1.bf16.msra.mxu0 0
    %5436 = vmatprep.mubr.bf16.mxu0 0
    %5437 = vmatmul.mubr.bf16.gmra.mrb[0].mxu0 %v5402
    %v5438 = vpop.f32.mrb[0].mxu0
    %v5439 = vadd.f32 0.0, %v5438
    %v5440 = vpop.f32.mrb[0].mxu0
    %v5441 = vpop.f32.mrb[0].mxu0
    %v5442 = vpop.f32.mrb[0].mxu0
    %5443 = vdwg.mxu0
    %v5444 = vpack.i.b16 %v2303, %v2303
    %v5445 = vlaneseq
    %v5446 = vshrl.u32 %v5445, 7
    %v5447 = vsub.s32 0, %v5446
    %v5448 = vrot.slane %v5444, %v5447
    %v5450 = vsel %vm2568, %v5448, 0
    %5452 = vmatprep.subr.bf16.mxu0 0
    %5453 = vmatpush1.bf16.msra.mxu0 %v2547
    %5454 = vmatprep.subr.bf16.mxu0 0
    %5455 = vmatpush1.bf16.msra.mxu0 %v2548
    %5456 = vmatprep.subr.bf16.mxu0 0
    %5457 = vmatpush1.bf16.msra.mxu0 %v2549
    %5458 = vmatprep.subr.bf16.mxu0 0
    %5459 = vmatpush1.bf16.msra.mxu0 %v2550
    %5460 = vmatprep.subr.bf16.mxu0 0
    %5461 = vmatpush1.bf16.msra.mxu0 0
    %5462 = vmatprep.subr.bf16.mxu0 0
    %5463 = vmatpush1.bf16.msra.mxu0 0
    %5464 = vmatprep.subr.bf16.mxu0 0
    %5465 = vmatpush1.bf16.msra.mxu0 0
    %5466 = vmatprep.subr.bf16.mxu0 0
    %5467 = vmatpush1.bf16.msra.mxu0 0
    %5468 = vmatprep.subr.bf16.mxu0 0
    %5469 = vmatpush1.bf16.msra.mxu0 0
    %5470 = vmatprep.subr.bf16.mxu0 0
    %5471 = vmatpush1.bf16.msra.mxu0 0
    %5472 = vmatprep.subr.bf16.mxu0 0
    %5473 = vmatpush1.bf16.msra.mxu0 0
    %5474 = vmatprep.subr.bf16.mxu0 0
    %5475 = vmatpush1.bf16.msra.mxu0 0
    %5476 = vmatprep.subr.bf16.mxu0 0
    %5477 = vmatpush1.bf16.msra.mxu0 0
    %5478 = vmatprep.subr.bf16.mxu0 0
    %5479 = vmatpush1.bf16.msra.mxu0 0
    %5480 = vmatprep.subr.bf16.mxu0 0
    %5481 = vmatpush1.bf16.msra.mxu0 0
    %5482 = vmatprep.subr.bf16.mxu0 0
    %5483 = vmatpush1.bf16.msra.mxu0 0
    %5484 = vmatprep.mubr.bf16.mxu0 0
    %5485 = vmatmul.mubr.bf16.gmra.mrb[0].mxu0 %v5450
    %v5486 = vpop.f32.mrb[0].mxu0
    %v5487 = vadd.f32 0.0, %v5486
    %v5488 = vpop.f32.mrb[0].mxu0
    %v5489 = vpop.f32.mrb[0].mxu0
    %v5490 = vpop.f32.mrb[0].mxu0
    %5491 = vdwg.mxu0
    %v5492 = vpack.i.b16 %v2304, %v2304
    %v5493 = vlaneseq
    %v5494 = vshrl.u32 %v5493, 7
    %v5495 = vsub.s32 0, %v5494
    %v5496 = vrot.slane %v5492, %v5495
    %v5498 = vsel %vm2568, %v5496, 0
    %5500 = vmatprep.subr.bf16.mxu0 0
    %5501 = vmatpush1.bf16.msra.mxu0 %v2551
    %5502 = vmatprep.subr.bf16.mxu0 0
    %5503 = vmatpush1.bf16.msra.mxu0 %v2552
    %5504 = vmatprep.subr.bf16.mxu0 0
    %5505 = vmatpush1.bf16.msra.mxu0 %v2553
    %5506 = vmatprep.subr.bf16.mxu0 0
    %5507 = vmatpush1.bf16.msra.mxu0 %v2554
    %5508 = vmatprep.subr.bf16.mxu0 0
    %5509 = vmatpush1.bf16.msra.mxu0 0
    %5510 = vmatprep.subr.bf16.mxu0 0
    %5511 = vmatpush1.bf16.msra.mxu0 0
    %5512 = vmatprep.subr.bf16.mxu0 0
    %5513 = vmatpush1.bf16.msra.mxu0 0
    %5514 = vmatprep.subr.bf16.mxu0 0
    %5515 = vmatpush1.bf16.msra.mxu0 0
    %5516 = vmatprep.subr.bf16.mxu0 0
    %5517 = vmatpush1.bf16.msra.mxu0 0
    %5518 = vmatprep.subr.bf16.mxu0 0
    %5519 = vmatpush1.bf16.msra.mxu0 0
    %5520 = vmatprep.subr.bf16.mxu0 0
    %5521 = vmatpush1.bf16.msra.mxu0 0
    %5522 = vmatprep.subr.bf16.mxu0 0
    %5523 = vmatpush1.bf16.msra.mxu0 0
    %5524 = vmatprep.subr.bf16.mxu0 0
    %5525 = vmatpush1.bf16.msra.mxu0 0
    %5526 = vmatprep.subr.bf16.mxu0 0
    %5527 = vmatpush1.bf16.msra.mxu0 0
    %5528 = vmatprep.subr.bf16.mxu0 0
    %5529 = vmatpush1.bf16.msra.mxu0 0
    %5530 = vmatprep.subr.bf16.mxu0 0
    %5531 = vmatpush1.bf16.msra.mxu0 0
    %5532 = vmatprep.mubr.bf16.mxu0 0
    %5533 = vmatmul.mubr.bf16.gmra.mrb[0].mxu0 %v5498
    %v5534 = vpop.f32.mrb[0].mxu0
    %v5535 = vadd.f32 0.0, %v5534
    %v5536 = vpop.f32.mrb[0].mxu0
    %v5537 = vpop.f32.mrb[0].mxu0
    %v5538 = vpop.f32.mrb[0].mxu0
    %5539 = vdwg.mxu0
    %v5540 = vpack.i.b16 %v2305, %v2305
    %v5541 = vlaneseq
    %v5542 = vshrl.u32 %v5541, 7
    %v5543 = vsub.s32 0, %v5542
    %v5544 = vrot.slane %v5540, %v5543
    %v5546 = vsel %vm2568, %v5544, 0
    %5548 = vmatprep.subr.bf16.mxu0 0
    %5549 = vmatpush1.bf16.msra.mxu0 %v2555
    %5550 = vmatprep.subr.bf16.mxu0 0
    %5551 = vmatpush1.bf16.msra.mxu0 %v2556
    %5552 = vmatprep.subr.bf16.mxu0 0
    %5553 = vmatpush1.bf16.msra.mxu0 %v2557
    %5554 = vmatprep.subr.bf16.mxu0 0
    %5555 = vmatpush1.bf16.msra.mxu0 %v2558
    %5556 = vmatprep.subr.bf16.mxu0 0
    %5557 = vmatpush1.bf16.msra.mxu0 0
    %5558 = vmatprep.subr.bf16.mxu0 0
    %5559 = vmatpush1.bf16.msra.mxu0 0
    %5560 = vmatprep.subr.bf16.mxu0 0
    %5561 = vmatpush1.bf16.msra.mxu0 0
    %5562 = vmatprep.subr.bf16.mxu0 0
    %5563 = vmatpush1.bf16.msra.mxu0 0
    %5564 = vmatprep.subr.bf16.mxu0 0
    %5565 = vmatpush1.bf16.msra.mxu0 0
    %5566 = vmatprep.subr.bf16.mxu0 0
    %5567 = vmatpush1.bf16.msra.mxu0 0
    %5568 = vmatprep.subr.bf16.mxu0 0
    %5569 = vmatpush1.bf16.msra.mxu0 0
    %5570 = vmatprep.subr.bf16.mxu0 0
    %5571 = vmatpush1.bf16.msra.mxu0 0
    %5572 = vmatprep.subr.bf16.mxu0 0
    %5573 = vmatpush1.bf16.msra.mxu0 0
    %5574 = vmatprep.subr.bf16.mxu0 0
    %5575 = vmatpush1.bf16.msra.mxu0 0
    %5576 = vmatprep.subr.bf16.mxu0 0
    %5577 = vmatpush1.bf16.msra.mxu0 0
    %5578 = vmatprep.subr.bf16.mxu0 0
    %5579 = vmatpush1.bf16.msra.mxu0 0
    %5580 = vmatprep.mubr.bf16.mxu0 0
    %5581 = vmatmul.mubr.bf16.gmra.mrb[0].mxu0 %v5546
    %v5582 = vpop.f32.mrb[0].mxu0
    %v5583 = vadd.f32 0.0, %v5582
    %v5584 = vpop.f32.mrb[0].mxu0
    %v5585 = vpop.f32.mrb[0].mxu0
    %v5586 = vpop.f32.mrb[0].mxu0
    %5587 = vdwg.mxu0
    %v5588 = vpack.i.b16 %v2306, %v2306
    %v5589 = vlaneseq
    %v5590 = vshrl.u32 %v5589, 7
    %v5591 = vsub.s32 0, %v5590
    %v5592 = vrot.slane %v5588, %v5591
    %v5594 = vsel %vm2568, %v5592, 0
    %5596 = vmatprep.subr.bf16.mxu0 0
    %5597 = vmatpush1.bf16.msra.mxu0 %v2559
    %5598 = vmatprep.subr.bf16.mxu0 0
    %5599 = vmatpush1.bf16.msra.mxu0 %v2560
    %5600 = vmatprep.subr.bf16.mxu0 0
    %5601 = vmatpush1.bf16.msra.mxu0 %v2561
    %5602 = vmatprep.subr.bf16.mxu0 0
    %5603 = vmatpush1.bf16.msra.mxu0 %v2562
    %5604 = vmatprep.subr.bf16.mxu0 0
    %5605 = vmatpush1.bf16.msra.mxu0 0
    %5606 = vmatprep.subr.bf16.mxu0 0
    %5607 = vmatpush1.bf16.msra.mxu0 0
    %5608 = vmatprep.subr.bf16.mxu0 0
    %5609 = vmatpush1.bf16.msra.mxu0 0
    %5610 = vmatprep.subr.bf16.mxu0 0
    %5611 = vmatpush1.bf16.msra.mxu0 0
    %5612 = vmatprep.subr.bf16.mxu0 0
    %5613 = vmatpush1.bf16.msra.mxu0 0
    %5614 = vmatprep.subr.bf16.mxu0 0
    %5615 = vmatpush1.bf16.msra.mxu0 0
    %5616 = vmatprep.subr.bf16.mxu0 0
    %5617 = vmatpush1.bf16.msra.mxu0 0
    %5618 = vmatprep.subr.bf16.mxu0 0
    %5619 = vmatpush1.bf16.msra.mxu0 0
    %5620 = vmatprep.subr.bf16.mxu0 0
    %5621 = vmatpush1.bf16.msra.mxu0 0
    %5622 = vmatprep.subr.bf16.mxu0 0
    %5623 = vmatpush1.bf16.msra.mxu0 0
    %5624 = vmatprep.subr.bf16.mxu0 0
    %5625 = vmatpush1.bf16.msra.mxu0 0
    %5626 = vmatprep.subr.bf16.mxu0 0
    %5627 = vmatpush1.bf16.msra.mxu0 0
    %5628 = vmatprep.mubr.bf16.mxu0 0
    %5629 = vmatmul.mubr.bf16.gmra.mrb[0].mxu0 %v5594
    %v5630 = vpop.f32.mrb[0].mxu0
    %v5631 = vadd.f32 0.0, %v5630
    %v5632 = vpop.f32.mrb[0].mxu0
    %v5633 = vpop.f32.mrb[0].mxu0
    %v5634 = vpop.f32.mrb[0].mxu0
    %5635 = vdwg.mxu0
    %v5636 = vadd.f32 %v2607, 0.0
    %v5637 = vadd.f32 %v2655, 0.0
    %v5638 = vadd.f32 %v2703, 0.0
    %v5639 = vadd.f32 %v2751, 0.0
    %v5640 = vadd.f32 %v2799, 0.0
    %v5641 = vadd.f32 %v2847, 0.0
    %v5642 = vadd.f32 %v2895, 0.0
    %v5643 = vadd.f32 %v2943, 0.0
    %v5644 = vadd.f32 %v2991, 0.0
    %v5645 = vadd.f32 %v3039, 0.0
    %v5646 = vadd.f32 %v3087, 0.0
    %v5647 = vadd.f32 %v3135, 0.0
    %v5648 = vadd.f32 %v3183, 0.0
    %v5649 = vadd.f32 %v3231, 0.0
    %v5650 = vadd.f32 %v3279, 0.0
    %v5651 = vadd.f32 %v3327, 0.0
    %v5652 = vadd.f32 %v3375, 0.0
    %v5653 = vadd.f32 %v3423, 0.0
    %v5654 = vadd.f32 %v3471, 0.0
    %v5655 = vadd.f32 %v3519, 0.0
    %v5656 = vadd.f32 %v3567, 0.0
    %v5657 = vadd.f32 %v3615, 0.0
    %v5658 = vadd.f32 %v3663, 0.0
    %v5659 = vadd.f32 %v3711, 0.0
    %v5660 = vadd.f32 %v3759, 0.0
    %v5661 = vadd.f32 %v3807, 0.0
    %v5662 = vadd.f32 %v3855, 0.0
    %v5663 = vadd.f32 %v3903, 0.0
    %v5664 = vadd.f32 %v3951, 0.0
    %v5665 = vadd.f32 %v3999, 0.0
    %v5666 = vadd.f32 %v4047, 0.0
    %v5667 = vadd.f32 %v4095, 0.0
    %v5668 = vadd.f32 %v4143, 0.0
    %v5669 = vadd.f32 %v4191, 0.0
    %v5670 = vadd.f32 %v4239, 0.0
    %v5671 = vadd.f32 %v4287, 0.0
    %v5672 = vadd.f32 %v4335, 0.0
    %v5673 = vadd.f32 %v4383, 0.0
    %v5674 = vadd.f32 %v4431, 0.0
    %v5675 = vadd.f32 %v4479, 0.0
    %v5676 = vadd.f32 %v4527, 0.0
    %v5677 = vadd.f32 %v4575, 0.0
    %v5678 = vadd.f32 %v4623, 0.0
    %v5679 = vadd.f32 %v4671, 0.0
    %v5680 = vadd.f32 %v4719, 0.0
    %v5681 = vadd.f32 %v4767, 0.0
    %v5682 = vadd.f32 %v4815, 0.0
    %v5683 = vadd.f32 %v4863, 0.0
    %v5684 = vadd.f32 %v4911, 0.0
    %v5685 = vadd.f32 %v4959, 0.0
    %v5686 = vadd.f32 %v5007, 0.0
    %v5687 = vadd.f32 %v5055, 0.0
    %v5688 = vadd.f32 %v5103, 0.0
    %v5689 = vadd.f32 %v5151, 0.0
    %v5690 = vadd.f32 %v5199, 0.0
    %v5691 = vadd.f32 %v5247, 0.0
    %v5692 = vadd.f32 %v5295, 0.0
    %v5693 = vadd.f32 %v5343, 0.0
    %v5694 = vadd.f32 %v5391, 0.0
    %v5695 = vadd.f32 %v5439, 0.0
    %v5696 = vadd.f32 %v5487, 0.0
    %v5697 = vadd.f32 %v5535, 0.0
    %v5698 = vadd.f32 %v5583, 0.0
    %v5699 = vadd.f32 %v5631, 0.0
    %v5700 = vunpack.c.l.bf16 %v54
    %v5701 = vunpack.c.l.bf16 %v55
    %v5702 = vunpack.c.l.bf16 %v56
    %v5703 = vunpack.c.l.bf16 %v57
    %v5704 = vunpack.c.l.bf16 %v58
    %v5705 = vunpack.c.l.bf16 %v59
    %v5706 = vunpack.c.l.bf16 %v60
    %v5707 = vunpack.c.l.bf16 %v61
    %v5708 = vsel %vm2568, %v5700, 0.0
    %5709 = vadd.xlane.f32.xlu0 %v5708
    %v5710 = vpop.xlane.xlu0 %5709
    %v5711 = vsel %vm2568, %v5701, 0.0
    %5712 = vadd.xlane.f32.xlu0 %v5711
    %v5713 = vpop.xlane.xlu0 %5712
    %v5714 = vsel %vm2568, %v5702, 0.0
    %5715 = vadd.xlane.f32.xlu0 %v5714
    %v5716 = vpop.xlane.xlu0 %5715
    %v5717 = vsel %vm2568, %v5703, 0.0
    %5718 = vadd.xlane.f32.xlu0 %v5717
    %v5719 = vpop.xlane.xlu0 %5718
    %v5720 = vsel %vm2568, %v5704, 0.0
    %5721 = vadd.xlane.f32.xlu0 %v5720
    %v5722 = vpop.xlane.xlu0 %5721
    %v5723 = vsel %vm2568, %v5705, 0.0
    %5724 = vadd.xlane.f32.xlu0 %v5723
    %v5725 = vpop.xlane.xlu0 %5724
    %v5726 = vsel %vm2568, %v5706, 0.0
    %5727 = vadd.xlane.f32.xlu0 %v5726
    %v5728 = vpop.xlane.xlu0 %5727
    %v5729 = vsel %vm2568, %v5707, 0.0
    %5730 = vadd.xlane.f32.xlu0 %v5729
    %v5731 = vpop.xlane.xlu0 %5730
    %v5732 = vpack.c.bf16 %v5636, %v5636
    %v5733 = vpack.c.bf16 %v5637, %v5637
    %v5734 = vpack.c.bf16 %v5638, %v5638
    %v5735 = vpack.c.bf16 %v5639, %v5639
    %v5736 = vpack.c.bf16 %v5640, %v5640
    %v5737 = vpack.c.bf16 %v5641, %v5641
    %v5738 = vpack.c.bf16 %v5642, %v5642
    %v5739 = vpack.c.bf16 %v5643, %v5643
    %v5740 = vpack.c.bf16 %v5644, %v5644
    %v5741 = vpack.c.bf16 %v5645, %v5645
    %v5742 = vpack.c.bf16 %v5646, %v5646
    %v5743 = vpack.c.bf16 %v5647, %v5647
    %v5744 = vpack.c.bf16 %v5648, %v5648
    %v5745 = vpack.c.bf16 %v5649, %v5649
    %v5746 = vpack.c.bf16 %v5650, %v5650
    %v5747 = vpack.c.bf16 %v5651, %v5651
    %v5748 = vpack.c.bf16 %v5652, %v5652
    %v5749 = vpack.c.bf16 %v5653, %v5653
    %v5750 = vpack.c.bf16 %v5654, %v5654
    %v5751 = vpack.c.bf16 %v5655, %v5655
    %v5752 = vpack.c.bf16 %v5656, %v5656
    %v5753 = vpack.c.bf16 %v5657, %v5657
    %v5754 = vpack.c.bf16 %v5658, %v5658
    %v5755 = vpack.c.bf16 %v5659, %v5659
    %v5756 = vpack.c.bf16 %v5660, %v5660
    %v5757 = vpack.c.bf16 %v5661, %v5661
    %v5758 = vpack.c.bf16 %v5662, %v5662
    %v5759 = vpack.c.bf16 %v5663, %v5663
    %v5760 = vpack.c.bf16 %v5664, %v5664
    %v5761 = vpack.c.bf16 %v5665, %v5665
    %v5762 = vpack.c.bf16 %v5666, %v5666
    %v5763 = vpack.c.bf16 %v5667, %v5667
    %v5764 = vpack.c.bf16 %v5668, %v5668
    %v5765 = vpack.c.bf16 %v5669, %v5669
    %v5766 = vpack.c.bf16 %v5670, %v5670
    %v5767 = vpack.c.bf16 %v5671, %v5671
    %v5768 = vpack.c.bf16 %v5672, %v5672
    %v5769 = vpack.c.bf16 %v5673, %v5673
    %v5770 = vpack.c.bf16 %v5674, %v5674
    %v5771 = vpack.c.bf16 %v5675, %v5675
    %v5772 = vpack.c.bf16 %v5676, %v5676
    %v5773 = vpack.c.bf16 %v5677, %v5677
    %v5774 = vpack.c.bf16 %v5678, %v5678
    %v5775 = vpack.c.bf16 %v5679, %v5679
    %v5776 = vpack.c.bf16 %v5680, %v5680
    %v5777 = vpack.c.bf16 %v5681, %v5681
    %v5778 = vpack.c.bf16 %v5682, %v5682
    %v5779 = vpack.c.bf16 %v5683, %v5683
    %v5780 = vpack.c.bf16 %v5684, %v5684
    %v5781 = vpack.c.bf16 %v5685, %v5685
    %v5782 = vpack.c.bf16 %v5686, %v5686
    %v5783 = vpack.c.bf16 %v5687, %v5687
    %v5784 = vpack.c.bf16 %v5688, %v5688
    %v5785 = vpack.c.bf16 %v5689, %v5689
    %v5786 = vpack.c.bf16 %v5690, %v5690
    %v5787 = vpack.c.bf16 %v5691, %v5691
    %v5788 = vpack.c.bf16 %v5692, %v5692
    %v5789 = vpack.c.bf16 %v5693, %v5693
    %v5790 = vpack.c.bf16 %v5694, %v5694
    %v5791 = vpack.c.bf16 %v5695, %v5695
    %v5792 = vpack.c.bf16 %v5696, %v5696
    %v5793 = vpack.c.bf16 %v5697, %v5697
    %v5794 = vpack.c.bf16 %v5698, %v5698
    %v5795 = vpack.c.bf16 %v5699, %v5699
    %v5797 = vlaneseq
    %v5798 = vshrl.u32 %v5797, 7
    %v5799 = vsub.s32 0, %v5798
    %v5800 = vrot.slane %v72, %v5799
    %v5802 = vmul.f32 %v5710, %v5800
    %v5803 = vmul.f32 %v5713, %v5800
    %v5804 = vmul.f32 %v5716, %v5800
    %v5805 = vmul.f32 %v5719, %v5800
    %v5806 = vmul.f32 %v5722, %v5800
    %v5807 = vmul.f32 %v5725, %v5800
    %v5808 = vmul.f32 %v5728, %v5800
    %v5809 = vmul.f32 %v5731, %v5800
    %v5874 = vunpack.c.l.b16 %v5732
    %v5875 = vunpack.c.l.b16 %v5733
    %v5876 = vunpack.c.l.b16 %v5734
    %v5877 = vunpack.c.l.b16 %v5735
    %v5878 = vunpack.c.l.b16 %v5736
    %v5879 = vunpack.c.l.b16 %v5737
    %v5880 = vunpack.c.l.b16 %v5738
    %v5881 = vunpack.c.l.b16 %v5739
    %v5882 = vunpack.c.l.b16 %v5740
    %v5883 = vunpack.c.l.b16 %v5741
    %v5884 = vunpack.c.l.b16 %v5742
    %v5885 = vunpack.c.l.b16 %v5743
    %v5886 = vunpack.c.l.b16 %v5744
    %v5887 = vunpack.c.l.b16 %v5745
    %v5888 = vunpack.c.l.b16 %v5746
    %v5889 = vunpack.c.l.b16 %v5747
    %v5890 = vunpack.c.l.b16 %v5748
    %v5891 = vunpack.c.l.b16 %v5749
    %v5892 = vunpack.c.l.b16 %v5750
    %v5893 = vunpack.c.l.b16 %v5751
    %v5894 = vunpack.c.l.b16 %v5752
    %v5895 = vunpack.c.l.b16 %v5753
    %v5896 = vunpack.c.l.b16 %v5754
    %v5897 = vunpack.c.l.b16 %v5755
    %v5898 = vunpack.c.l.b16 %v5756
    %v5899 = vunpack.c.l.b16 %v5757
    %v5900 = vunpack.c.l.b16 %v5758
    %v5901 = vunpack.c.l.b16 %v5759
    %v5902 = vunpack.c.l.b16 %v5760
    %v5903 = vunpack.c.l.b16 %v5761
    %v5904 = vunpack.c.l.b16 %v5762
    %v5905 = vunpack.c.l.b16 %v5763
    %v5906 = vunpack.c.l.b16 %v5764
    %v5907 = vunpack.c.l.b16 %v5765
    %v5908 = vunpack.c.l.b16 %v5766
    %v5909 = vunpack.c.l.b16 %v5767
    %v5910 = vunpack.c.l.b16 %v5768
    %v5911 = vunpack.c.l.b16 %v5769
    %v5912 = vunpack.c.l.b16 %v5770
    %v5913 = vunpack.c.l.b16 %v5771
    %v5914 = vunpack.c.l.b16 %v5772
    %v5915 = vunpack.c.l.b16 %v5773
    %v5916 = vunpack.c.l.b16 %v5774
    %v5917 = vunpack.c.l.b16 %v5775
    %v5918 = vunpack.c.l.b16 %v5776
    %v5919 = vunpack.c.l.b16 %v5777
    %v5920 = vunpack.c.l.b16 %v5778
    %v5921 = vunpack.c.l.b16 %v5779
    %v5922 = vunpack.c.l.b16 %v5780
    %v5923 = vunpack.c.l.b16 %v5781
    %v5924 = vunpack.c.l.b16 %v5782
    %v5925 = vunpack.c.l.b16 %v5783
    %v5926 = vunpack.c.l.b16 %v5784
    %v5927 = vunpack.c.l.b16 %v5785
    %v5928 = vunpack.c.l.b16 %v5786
    %v5929 = vunpack.c.l.b16 %v5787
    %v5930 = vunpack.c.l.b16 %v5788
    %v5931 = vunpack.c.l.b16 %v5789
    %v5932 = vunpack.c.l.b16 %v5790
    %v5933 = vunpack.c.l.b16 %v5791
    %v5934 = vunpack.c.l.b16 %v5792
    %v5935 = vunpack.c.l.b16 %v5793
    %v5936 = vunpack.c.l.b16 %v5794
    %v5937 = vunpack.c.l.b16 %v5795
    %v5938 = vrot.slane %v5875, 7
    %vm5939 = vcmask 1041409
    %v5940 = vsel %vm5939, %v5938, %v5874
    %v5941 = vrot.slane %v5876, 6
    %vm5942 = vcmask 1042434
    %v5943 = vsel %vm5942, %v5941, %v5940
    %v5944 = vrot.slane %v5877, 5
    %vm5945 = vcmask 1043459
    %v5946 = vsel %vm5945, %v5944, %v5943
    %v5947 = vrot.slane %v5878, 4
    %vm5948 = vcmask 1044484
    %v5949 = vsel %vm5948, %v5947, %v5946
    %v5950 = vrot.slane %v5879, 3
    %vm5951 = vcmask 1045509
    %v5952 = vsel %vm5951, %v5950, %v5949
    %v5953 = vrot.slane %v5880, 2
    %vm5954 = vcmask 1046534
    %v5955 = vsel %vm5954, %v5953, %v5952
    %v5956 = vrot.slane %v5881, 1
    %vm5957 = vcmask 1047559
    %v5958 = vsel %vm5957, %v5956, %v5955
    %v5959 = vrot.slane %v5883, 7
    %v5960 = vsel %vm5939, %v5959, %v5882
    %v5961 = vrot.slane %v5884, 6
    %v5962 = vsel %vm5942, %v5961, %v5960
    %v5963 = vrot.slane %v5885, 5
    %v5964 = vsel %vm5945, %v5963, %v5962
    %v5965 = vrot.slane %v5886, 4
    %v5966 = vsel %vm5948, %v5965, %v5964
    %v5967 = vrot.slane %v5887, 3
    %v5968 = vsel %vm5951, %v5967, %v5966
    %v5969 = vrot.slane %v5888, 2
    %v5970 = vsel %vm5954, %v5969, %v5968
    %v5971 = vrot.slane %v5889, 1
    %v5972 = vsel %vm5957, %v5971, %v5970
    %v5973 = vrot.slane %v5891, 7
    %v5974 = vsel %vm5939, %v5973, %v5890
    %v5975 = vrot.slane %v5892, 6
    %v5976 = vsel %vm5942, %v5975, %v5974
    %v5977 = vrot.slane %v5893, 5
    %v5978 = vsel %vm5945, %v5977, %v5976
    %v5979 = vrot.slane %v5894, 4
    %v5980 = vsel %vm5948, %v5979, %v5978
    %v5981 = vrot.slane %v5895, 3
    %v5982 = vsel %vm5951, %v5981, %v5980
    %v5983 = vrot.slane %v5896, 2
    %v5984 = vsel %vm5954, %v5983, %v5982
    %v5985 = vrot.slane %v5897, 1
    %v5986 = vsel %vm5957, %v5985, %v5984
    %v5987 = vrot.slane %v5899, 7
    %v5988 = vsel %vm5939, %v5987, %v5898
    %v5989 = vrot.slane %v5900, 6
    %v5990 = vsel %vm5942, %v5989, %v5988
    %v5991 = vrot.slane %v5901, 5
    %v5992 = vsel %vm5945, %v5991, %v5990
    %v5993 = vrot.slane %v5902, 4
    %v5994 = vsel %vm5948, %v5993, %v5992
    %v5995 = vrot.slane %v5903, 3
    %v5996 = vsel %vm5951, %v5995, %v5994
    %v5997 = vrot.slane %v5904, 2
    %v5998 = vsel %vm5954, %v5997, %v5996
    %v5999 = vrot.slane %v5905, 1
    %v6000 = vsel %vm5957, %v5999, %v5998
    %v6001 = vrot.slane %v5907, 7
    %v6002 = vsel %vm5939, %v6001, %v5906
    %v6003 = vrot.slane %v5908, 6
    %v6004 = vsel %vm5942, %v6003, %v6002
    %v6005 = vrot.slane %v5909, 5
    %v6006 = vsel %vm5945, %v6005, %v6004
    %v6007 = vrot.slane %v5910, 4
    %v6008 = vsel %vm5948, %v6007, %v6006
    %v6009 = vrot.slane %v5911, 3
    %v6010 = vsel %vm5951, %v6009, %v6008
    %v6011 = vrot.slane %v5912, 2
    %v6012 = vsel %vm5954, %v6011, %v6010
    %v6013 = vrot.slane %v5913, 1
    %v6014 = vsel %vm5957, %v6013, %v6012
    %v6015 = vrot.slane %v5915, 7
    %v6016 = vsel %vm5939, %v6015, %v5914
    %v6017 = vrot.slane %v5916, 6
    %v6018 = vsel %vm5942, %v6017, %v6016
    %v6019 = vrot.slane %v5917, 5
    %v6020 = vsel %vm5945, %v6019, %v6018
    %v6021 = vrot.slane %v5918, 4
    %v6022 = vsel %vm5948, %v6021, %v6020
    %v6023 = vrot.slane %v5919, 3
    %v6024 = vsel %vm5951, %v6023, %v6022
    %v6025 = vrot.slane %v5920, 2
    %v6026 = vsel %vm5954, %v6025, %v6024
    %v6027 = vrot.slane %v5921, 1
    %v6028 = vsel %vm5957, %v6027, %v6026
    %v6029 = vrot.slane %v5923, 7
    %v6030 = vsel %vm5939, %v6029, %v5922
    %v6031 = vrot.slane %v5924, 6
    %v6032 = vsel %vm5942, %v6031, %v6030
    %v6033 = vrot.slane %v5925, 5
    %v6034 = vsel %vm5945, %v6033, %v6032
    %v6035 = vrot.slane %v5926, 4
    %v6036 = vsel %vm5948, %v6035, %v6034
    %v6037 = vrot.slane %v5927, 3
    %v6038 = vsel %vm5951, %v6037, %v6036
    %v6039 = vrot.slane %v5928, 2
    %v6040 = vsel %vm5954, %v6039, %v6038
    %v6041 = vrot.slane %v5929, 1
    %v6042 = vsel %vm5957, %v6041, %v6040
    %v6043 = vrot.slane %v5931, 7
    %v6044 = vsel %vm5939, %v6043, %v5930
    %v6045 = vrot.slane %v5932, 6
    %v6046 = vsel %vm5942, %v6045, %v6044
    %v6047 = vrot.slane %v5933, 5
    %v6048 = vsel %vm5945, %v6047, %v6046
    %v6049 = vrot.slane %v5934, 4
    %v6050 = vsel %vm5948, %v6049, %v6048
    %v6051 = vrot.slane %v5935, 3
    %v6052 = vsel %vm5951, %v6051, %v6050
    %v6053 = vrot.slane %v5936, 2
    %v6054 = vsel %vm5954, %v6053, %v6052
    %v6055 = vrot.slane %v5937, 1
    %v6056 = vsel %vm5957, %v6055, %v6054
    %v6057 = vpack.c.b16 %v5972, %v5958
    %v6058 = vpack.c.b16 %v6000, %v5986
    %v6059 = vpack.c.b16 %v6028, %v6014
    %v6060 = vpack.c.b16 %v6056, %v6042
    %v6065 = vunpack.c.l.b16 %v68
    %v6066 = vunpack.c.l.b16 %v69
    %v6067 = vunpack.c.l.b16 %v70
    %v6068 = vunpack.c.l.b16 %v71
    %v6069 = vpack.c.b16 %v6066, %v6065
    %v6070 = vpack.c.b16 %v6068, %v6067
    %v6074 = vsel %vm207, %v6057, 0
    %v6077 = vsel %vm207, %v6058, 0
    %v6080 = vsel %vm207, %v6059, 0
    %v6083 = vsel %vm207, %v6060, 0
    %6085 = vmatprep.subr.bf16.mxu0 0
    %6086 = vmatpush1.bf16.msra.mxu0 %v6069
    %6087 = vmatprep.subr.bf16.mxu0 0
    %6088 = vmatpush1.bf16.msra.mxu0 %v6070
    %6089 = vmatprep.subr.bf16.mxu0 0
    %6090 = vmatpush1.bf16.msra.mxu0 0
    %6091 = vmatprep.subr.bf16.mxu0 0
    %6092 = vmatpush1.bf16.msra.mxu0 0
    %6093 = vmatprep.subr.bf16.mxu0 0
    %6094 = vmatpush1.bf16.msra.mxu0 0
    %6095 = vmatprep.subr.bf16.mxu0 0
    %6096 = vmatpush1.bf16.msra.mxu0 0
    %6097 = vmatprep.subr.bf16.mxu0 0
    %6098 = vmatpush1.bf16.msra.mxu0 0
    %6099 = vmatprep.subr.bf16.mxu0 0
    %6100 = vmatpush1.bf16.msra.mxu0 0
    %6101 = vmatprep.subr.bf16.mxu0 0
    %6102 = vmatpush1.bf16.msra.mxu0 0
    %6103 = vmatprep.subr.bf16.mxu0 0
    %6104 = vmatpush1.bf16.msra.mxu0 0
    %6105 = vmatprep.subr.bf16.mxu0 0
    %6106 = vmatpush1.bf16.msra.mxu0 0
    %6107 = vmatprep.subr.bf16.mxu0 0
    %6108 = vmatpush1.bf16.msra.mxu0 0
    %6109 = vmatprep.subr.bf16.mxu0 0
    %6110 = vmatpush1.bf16.msra.mxu0 0
    %6111 = vmatprep.subr.bf16.mxu0 0
    %6112 = vmatpush1.bf16.msra.mxu0 0
    %6113 = vmatprep.subr.bf16.mxu0 0
    %6114 = vmatpush1.bf16.msra.mxu0 0
    %6115 = vmatprep.subr.bf16.mxu0 0
    %6116 = vmatpush1.bf16.msra.mxu0 0
    %6117 = vmatprep.mubr.bf16.mxu0 0
    %6118 = vmatmul.mubr.bf16.gmra.mrb[0].mxu0 %v6074
    %v6119 = vpop.f32.mrb[0].mxu0
    %v6120 = vadd.f32 %v5802, %v6119
    %v6121 = vpop.f32.mrb[0].mxu0
    %v6122 = vpop.f32.mrb[0].mxu0
    %v6123 = vadd.f32 %v5803, %v6122
    %v6124 = vpop.f32.mrb[0].mxu0
    %6125 = vmatprep.mubr.bf16.mxu0 0
    %6126 = vmatmul.mubr.bf16.gmra.mrb[0].mxu0 %v6077
    %v6127 = vpop.f32.mrb[0].mxu0
    %v6128 = vadd.f32 %v5804, %v6127
    %v6129 = vpop.f32.mrb[0].mxu0
    %v6130 = vpop.f32.mrb[0].mxu0
    %v6131 = vadd.f32 %v5805, %v6130
    %v6132 = vpop.f32.mrb[0].mxu0
    %6133 = vmatprep.mubr.bf16.mxu0 0
    %6134 = vmatmul.mubr.bf16.gmra.mrb[0].mxu0 %v6080
    %v6135 = vpop.f32.mrb[0].mxu0
    %v6136 = vadd.f32 %v5806, %v6135
    %v6137 = vpop.f32.mrb[0].mxu0
    %v6138 = vpop.f32.mrb[0].mxu0
    %v6139 = vadd.f32 %v5807, %v6138
    %v6140 = vpop.f32.mrb[0].mxu0
    %6141 = vmatprep.mubr.bf16.mxu0 0
    %6142 = vmatmul.mubr.bf16.gmra.mrb[0].mxu0 %v6083
    %v6143 = vpop.f32.mrb[0].mxu0
    %v6144 = vadd.f32 %v5808, %v6143
    %v6145 = vpop.f32.mrb[0].mxu0
    %v6146 = vpop.f32.mrb[0].mxu0
    %v6147 = vadd.f32 %v5809, %v6146
    %v6148 = vpop.f32.mrb[0].mxu0
    %6149 = vdwg.mxu0
    %v6150 = vmax.f32 %v6120, 0.0
    %v6151 = vmax.f32 %v6123, 0.0
    %v6152 = vmax.f32 %v6128, 0.0
    %v6153 = vmax.f32 %v6131, 0.0
    %v6154 = vmax.f32 %v6136, 0.0
    %v6155 = vmax.f32 %v6139, 0.0
    %v6156 = vmax.f32 %v6144, 0.0
    %v6157 = vmax.f32 %v6147, 0.0
    %v6158 = vld [vmem:[%s8] sm:$0x1]
    %v6159 = vpack.c.bf16 %v6151, %v6150
    %v6160 = vpack.c.bf16 %v6153, %v6152
    %v6161 = vpack.c.bf16 %v6155, %v6154
    %v6162 = vpack.c.bf16 %v6157, %v6156
    %s6163 = sld [smem:[#allocation2]]
    %v6164 = vstv %s6163
    %v6166 = vsel %vm207, %v6158, 0
    %v6169 = vsel %vm207, %v6159, 0
    %v6172 = vsel %vm207, %v6160, 0
    %v6175 = vsel %vm207, %v6161, 0
    %v6178 = vsel %vm207, %v6162, 0
    %6180 = vmatprep.subr.bf16.mxu0 0
    %6181 = vmatpush1.bf16.xpose.msra.mxu0 %v6169
    %6182 = vmatprep.subr.bf16.mxu0 0
    %6183 = vmatpush1.bf16.xpose.msra.mxu0 %v6172
    %6184 = vmatprep.subr.bf16.mxu0 0
    %6185 = vmatpush1.bf16.xpose.msra.mxu0 %v6175
    %6186 = vmatprep.subr.bf16.mxu0 0
    %6187 = vmatpush1.bf16.xpose.msra.mxu0 %v6178
    %6188 = vmatprep.subr.bf16.mxu0 0
    %6189 = vmatpush1.bf16.xpose.msra.mxu0 0
    %6190 = vmatprep.subr.bf16.mxu0 0
    %6191 = vmatpush1.bf16.xpose.msra.mxu0 0
    %6192 = vmatprep.subr.bf16.mxu0 0
    %6193 = vmatpush1.bf16.xpose.msra.mxu0 0
    %6194 = vmatprep.subr.bf16.mxu0 0
    %6195 = vmatpush1.bf16.xpose.msra.mxu0 0
    %6196 = vmatprep.subr.bf16.mxu0 0
    %6197 = vmatpush1.bf16.xpose.msra.mxu0 0
    %6198 = vmatprep.subr.bf16.mxu0 0
    %6199 = vmatpush1.bf16.xpose.msra.mxu0 0
    %6200 = vmatprep.subr.bf16.mxu0 0
    %6201 = vmatpush1.bf16.xpose.msra.mxu0 0
    %6202 = vmatprep.subr.bf16.mxu0 0
    %6203 = vmatpush1.bf16.xpose.msra.mxu0 0
    %6204 = vmatprep.subr.bf16.mxu0 0
    %6205 = vmatpush1.bf16.xpose.msra.mxu0 0
    %6206 = vmatprep.subr.bf16.mxu0 0
    %6207 = vmatpush1.bf16.xpose.msra.mxu0 0
    %6208 = vmatprep.subr.bf16.mxu0 0
    %6209 = vmatpush1.bf16.xpose.msra.mxu0 0
    %6210 = vmatprep.subr.bf16.mxu0 0
    %6211 = vmatpush1.bf16.xpose.msra.mxu0 0
    %6212 = vmatprep.mubr.bf16.mxu0 0
    %6213 = vmatmul.mubr.bf16.gmra.mrb[0].mxu0 %v6166
    %v6214 = vpop.f32.mrb[0].mxu0
    %v6215 = vadd.f32 %v6164, %v6214
    %v6216 = vpop.f32.mrb[0].mxu0
    %v6217 = vpop.f32.mrb[0].mxu0
    %v6218 = vpop.f32.mrb[0].mxu0
    %6219 = vdwg.mxu0
    %vm6220 = vcmask 516096
    %v6221 = vsel %vm6220, %v6215, -inf
    %6222 = vmax.xlane.f32.xlu0 %v6221
    %v6223 = vpop.xlane.xlu0 %6222
    %v6224 = vsub.f32 %v6215, %v6223
    %v6225 = vmul.f32 %v6224, 1.442695
    %v6226 = vpow.pop %v6225
    %v6227 = vsel %vm6220, %v6226, 0.0
    %6228 = vadd.xlane.f32.xlu0 %v6227
    %v6229 = vpop.xlane.xlu0 %6228
    %v6230 = vrcp.pop %v6229
    %v6231 = vmul.f32 %v6226, %v6230
    %6232 = vst.msk [vmem:[#allocation3] sm:$0x1] %vm6220, %v6231
    // Predicated region
    $region42: #{face_classifier_forward.5} parent=1 // pred_check
      _
    $region43: #{face_classifier_forward.5} parent=1 // pred_check_branch
      %6234 = sbr.rel (0) target = $region45
    $region44: #{face_classifier_forward.5} parent=1 // pred_region
      %s6236 = ssub.s32 16, 16
      %6237 = vsyncadd [#allocation4], %s6236
      %s6239 = sshll.u32 [#allocation3], 4
      %s6240 = int_to_ptr.vmem [resolvable:$true] %s6239
      %6242 = dma.vmem_to_hbm [thread:$0]  %s6240, 16, %s10, [#allocation4]
    $region45: #{face_classifier_forward.5} parent=1 // pred_fallthru
      _
    // Predicated region
    $region46: #{face_classifier_forward.5} parent=1 // pred_check
      _
    $region47: #{face_classifier_forward.5} parent=1 // pred_check_branch
      %6244 = sbr.rel (0) target = $region49
    $region48: #{face_classifier_forward.5} parent=1 // pred_region
      %6245 = dma.done [#allocation4], 16
    $region49: #{face_classifier_forward.5} parent=1 // pred_fallthru
      _
    %6246 = vsyncpa [#allocation4], 1

</llo_original>
